<compile_context>
chip_gen: v7x
topology: tpu7x:2x2x1
jax: 0.10.0
libtpu: 0.0.40
codegen_flags: <defaults>
</compile_context>

<pallas_src>
import numpy as np
import jax
import jax.numpy as jnp
from jax import lax
from jax.experimental import pallas as pl
from jax.experimental.pallas import tpu as pltpu


KS = (3, 5, 7)                    # split_block kernel sizes (s1, s2, s3)
MAXP = max(KS) // 2               # 3 -> 7x7 neighbourhood of boundary offsets
NOFF = 2 * MAXP + 1               # 7
NTAPS = NOFF * NOFF               # 49
HIDDEN = 16                       # fc_share width (fixed by the module)
BN_EPS = 1e-5                     # nn.BatchNorm1d default eps


# --------------------------------------------------------------------------------------
# Pallas kernel
# --------------------------------------------------------------------------------------
def _make_kernel(H, W, C):
    HW = H * W

    def kernel(x_ref, mask_ref,
               w1s_ref, b1s_ref, wk3_ref, wk5_ref, wk7_ref, bk_ref,
               wsh_ref, bsh_ref, wfc_ref, bfc_ref, wfin_ref, bfin_ref,
               o_ref,
               acc_ref, col_ref, y_ref, z_ref):
        card = pl.program_id(1)                         # cardinal block index (0 / 1)
        xf = x_ref[0].astype(jnp.float32)               # (C, HW)

        # Grid axis 1 reduces over the two cardinal blocks: seed the accumulator with the
        # residual + the final 1x1-conv bias on the first step.
        @pl.when(card == 0)
        def _init():
            acc_ref[...] = xf + bfin_ref[...]

        # --- three split 1x1 convs fused into one (3C, C) @ (C, HW) bf16 MXU matmul ----
        x_b = xf.astype(jnp.bfloat16)
        y_ref[...] = (jnp.dot(w1s_ref[card], x_b, preferred_element_type=jnp.float32)
                      + b1s_ref[card])

        wk_refs = (wk3_ref, wk5_ref, wk7_ref)
        bk_all = bk_ref[card]                            # (3C, 1) f32

        # --- kxk 'same' convs: lane-rolled + boundary-masked copies of y are staged into
        #     a bf16 im2col buffer, then the whole conv is one (C, k*k*C) @ (k*k*C, HW)
        #     matmul per split. Elementwise math stays f32; bf16 only at the col boundary.
        for si, k in enumerate(KS):
            p = k // 2
            y = y_ref[si * C:(si + 1) * C, :]            # (C, HW) f32, one load per split
            for dy in range(k):
                for dx in range(k):
                    oy, ox = dy - p, dx - p
                    s = oy * W + ox                      # flat spatial shift
                    t = dy * k + dx
                    if s == 0:
                        piece = y
                    else:
                        m = (oy + MAXP) * NOFF + (ox + MAXP)
                        piece = pltpu.roll(y, (-s) % HW, 1) * mask_ref[m:m + 1, :]
                    col_ref[t * C:(t + 1) * C, :] = piece.astype(jnp.bfloat16)
            z = jnp.dot(wk_refs[si][card], col_ref[:k * k * C, :],
                        preferred_element_type=jnp.float32)
            z_ref[si] = z + bk_all[si * C:(si + 1) * C, :]

        # --- split attention (tiny matmuls, kept f32) -----------------------------------
        t_sum = z_ref[0] + z_ref[1] + z_ref[2]
        pooled = jnp.mean(t_sum, axis=1, keepdims=True)                 # (C, 1)
        h = jnp.dot(wsh_ref[card], pooled,
                    preferred_element_type=jnp.float32) + bsh_ref[card]
        h = jnp.maximum(h, 0.0)                          # fc_share (BN folded) + ReLU

        wfc = wfc_ref[card]                              # (3, C, 16)
        bfc = bfc_ref[card]                              # (3, C, 1)
        gated = None
        for si in range(3):
            logits = jnp.dot(wfc[si], h, preferred_element_type=jnp.float32) + bfc[si]
            logits = logits - jnp.max(logits, axis=0, keepdims=True)
            e = jnp.exp(logits)
            gate = e / jnp.sum(e, axis=0, keepdims=True)                # softmax over C
            term = gate * z_ref[si]
            gated = term if gated is None else gated + term

        # --- this cardinal's half of the final (2C -> C) 1x1 conv, accumulated ----------
        acc_ref[...] += jnp.dot(wfin_ref[card], gated.astype(jnp.bfloat16),
                                preferred_element_type=jnp.float32)

        @pl.when(card == pl.num_programs(1) - 1)
        def _finalize():
            o_ref[0] = acc_ref[...].astype(o_ref.dtype)

    return kernel


# --------------------------------------------------------------------------------------
# Constant boundary masks (resident input; built once with numpy)
# --------------------------------------------------------------------------------------
def _boundary_masks(H, W):
    """(49, H*W) f32 validity masks for every (oy, ox) in the 7x7 offset neighbourhood."""
    pi = np.arange(H * W) // W
    pj = np.arange(H * W) % W
    rows = []
    for oy in range(-MAXP, MAXP + 1):
        for ox in range(-MAXP, MAXP + 1):
            ok = (pi + oy >= 0) & (pi + oy < H) & (pj + ox >= 0) & (pj + ox < W)
            rows.append(ok)
    return jnp.asarray(np.stack(rows).astype(np.float32))


# --------------------------------------------------------------------------------------
# Parameter packing (PyTorch-convention params -> resident kernel layout)
# --------------------------------------------------------------------------------------
def _fold_bn_into_linear(w, b, gamma, beta, mean, var, eps=BN_EPS):
    """Fold inference-mode BatchNorm1d into the preceding Linear layer."""
    scale = gamma / jnp.sqrt(var + eps)
    return w * scale[:, None], b * scale + (beta - mean * scale)


def _pack_params(params, C):
    cards = params["cardinals"]
    wdt = jnp.bfloat16                      # conv weights feed the MXU directly

    def stack2(fn):
        return jnp.stack([fn(cards[0]), fn(cards[1])])

    def tap_matrix(cp, i, k):
        # (Cout, Cin, k, k) -> (Cout, k*k*Cin); column block t = dy*k+dx holds w[:, :, dy, dx]
        w = cp["splits"][i]["wk"]
        return w.transpose(0, 2, 3, 1).reshape(C, k * k * C)

    w1s = stack2(lambda cp: jnp.concatenate(
        [cp["splits"][i]["w1x1"] for i in range(3)], axis=0)).astype(wdt)        # (2,3C,C)
    b1s = stack2(lambda cp: jnp.concatenate(
        [cp["splits"][i]["b1x1"] for i in range(3)]))[..., None]                 # (2,3C,1)
    wk3 = stack2(lambda cp: tap_matrix(cp, 0, 3)).astype(wdt)                    # (2,C,9C)
    wk5 = stack2(lambda cp: tap_matrix(cp, 1, 5)).astype(wdt)                    # (2,C,25C)
    wk7 = stack2(lambda cp: tap_matrix(cp, 2, 7)).astype(wdt)                    # (2,C,49C)
    bk = stack2(lambda cp: jnp.concatenate(
        [cp["splits"][i]["bk"] for i in range(3)]))[..., None]                   # (2,3C,1)

    def folded(cp, which):
        a = cp["att"]
        return _fold_bn_into_linear(a["w_share"], a["b_share"], a["bn_gamma"],
                                    a["bn_beta"], a["bn_mean"], a["bn_var"])[which]

    wsh = stack2(lambda cp: folded(cp, 0))                                       # (2,16,C)
    bsh = stack2(lambda cp: folded(cp, 1))[..., None]                            # (2,16,1)
    wfc = stack2(lambda cp: jnp.stack([cp["att"][f"w_fc{i + 1}"] for i in range(3)]))  # (2,3,C,16)
    bfc = stack2(lambda cp: jnp.stack([cp["att"][f"b_fc{i + 1}"] for i in range(3)]))[..., None]

    wfin = jnp.stack([params["w_final"][:, :C], params["w_final"][:, C:]]).astype(wdt)  # (2,C,C)
    bfin = params["b_final"][:, None]                                            # (C,1)
    return (w1s, b1s, wk3, wk5, wk7, bk, wsh, bsh, wfc, bfc, wfin, bfin)


# --------------------------------------------------------------------------------------
# Wrapper
# --------------------------------------------------------------------------------------
def _vmem_cap_bytes():
    try:
        return int(pltpu.get_tpu_info().vmem_capacity_bytes)
    except Exception:
        return 64 * 2 ** 20                 # assume the smallest (v7x-sized) VMEM


def resnest_block(x_nchw, params):
    """REsNeSt_block forward (inference). x_nchw: (B, C, H, W), PyTorch NCHW layout."""
    B, C, H, W = x_nchw.shape
    HW = H * W
    if HW % 128 != 0:
        raise ValueError(f"H*W={HW} must be a multiple of 128 for lane-dense stores")
    if C % 8 != 0:
        raise ValueError(f"C={C} must be a multiple of 8 for sublane-aligned channel slices")

    x_flat = x_nchw.reshape(B, C, HW)
    masks = _boundary_masks(H, W)
    packed = _pack_params(params, C)
    kernel = _make_kernel(H, W, C)

    def resident(a):
        zeros = (0,) * a.ndim
        return pl.BlockSpec(a.shape, lambda b, c, zeros=zeros: zeros)

    in_specs = [pl.BlockSpec((1, C, HW), lambda b, c: (b, 0, 0)),   # x: one batch row
                resident(masks)]
    in_specs += [resident(w) for w in packed]                        # resident weights

    itemsize = x_flat.dtype.itemsize
    n_taps = sum(k * k for k in KS)
    weight_bytes = int(masks.size) * masks.dtype.itemsize + sum(
        int(w.size) * w.dtype.itemsize for w in packed)

    flops = int(2 * B * 2 * C * C * HW * (3 + n_taps + 1)
                + 2 * B * 2 * (HIDDEN * C + 3 * C * HIDDEN))
    transcendentals = int(B * 2 * 3 * C)
    bytes_accessed = int(2 * B * C * HW * itemsize + weight_bytes)   # weights fetched once

    scratch_bytes = (C * HW * 4                     # f32 accumulator
                     + NTAPS * C * HW * 2           # bf16 im2col buffer
                     + 3 * C * HW * 4               # fused 1x1 outputs
                     + 3 * C * HW * 4)              # split kxk outputs
    vmem_estimate = (scratch_bytes + 2 * 2 * C * HW * itemsize       # x/out double-buffered
                     + 2 * weight_bytes + 12 * C * HW * 4)           # weights + temporaries
    cap = max(32 * 2 ** 20, min(100 * 2 ** 20, _vmem_cap_bytes() - 12 * 2 ** 20))
    vmem_limit = int(min(cap, max(32 * 2 ** 20, 2 * vmem_estimate)))

    out_flat = pl.pallas_call(
        kernel,
        out_shape=jax.ShapeDtypeStruct((B, C, HW), x_nchw.dtype),
        grid=(B, 2),
        in_specs=in_specs,
        out_specs=pl.BlockSpec((1, C, HW), lambda b, c: (b, 0, 0)),
        scratch_shapes=[
            pltpu.VMEM((C, HW), jnp.float32),                  # output accumulator
            pltpu.VMEM((NTAPS * C, HW), jnp.bfloat16),         # bf16 im2col staging buffer
            pltpu.VMEM((3 * C, HW), jnp.float32),              # fused 1x1-conv outputs
            pltpu.VMEM((3, C, HW), jnp.float32),               # split kxk-conv outputs
        ],
        compiler_params=pltpu.CompilerParams(
            dimension_semantics=("parallel", "arbitrary"),
            vmem_limit_bytes=vmem_limit),
        cost_estimate=pl.CostEstimate(
            flops=flops, transcendentals=transcendentals, bytes_accessed=bytes_accessed),
    )(x_flat, masks, *packed)

    return out_flat.reshape(B, C, H, W)


# --------------------------------------------------------------------------------------
# Pure-JAX reference (independent path through lax.conv) for correctness checking
# --------------------------------------------------------------------------------------
def _conv2d(x, w, b, pad):
    out = lax.conv_general_dilated(
        x, w, window_strides=(1, 1), padding=[(pad, pad), (pad, pad)],
        dimension_numbers=("NCHW", "OIHW", "NCHW"))
    return out + b[None, :, None, None]


def _reference(x, params):
    def split(x, sp, k):
        y = _conv2d(x, sp["w1x1"][:, :, None, None], sp["b1x1"], 0)
        return _conv2d(y, sp["wk"], sp["bk"], k // 2)

    def cardinal(x, cp):
        zs = [split(x, cp["splits"][i], k) for i, k in enumerate(KS)]
        a = cp["att"]
        pooled = (zs[0] + zs[1] + zs[2]).mean(axis=(2, 3))               # (B, C)
        h = pooled @ a["w_share"].T + a["b_share"]
        h = (h - a["bn_mean"]) / jnp.sqrt(a["bn_var"] + BN_EPS) * a["bn_gamma"] + a["bn_beta"]
        h = jnp.maximum(h, 0.0)
        out = 0.0
        for i in range(3):
            g = jax.nn.softmax(h @ a[f"w_fc{i + 1}"].T + a[f"b_fc{i + 1}"], axis=1)
            out = out + g[:, :, None, None] * zs[i]
        return out

    c1 = cardinal(x, params["cardinals"][0])
    c2 = cardinal(x, params["cardinals"][1])
    cat = jnp.concatenate([c1, c2], axis=1)
    out = _conv2d(cat, params["w_final"][:, :, None, None], params["b_final"], 0)
    return out + x


# --------------------------------------------------------------------------------------
# Deterministic synthetic parameters (PyTorch layer shapes / conventions)
# --------------------------------------------------------------------------------------
def _init_params(key, C):
    keys = iter(jax.random.split(key, 128))

    def nrm(shape, scale):
        return jax.random.normal(next(keys), shape, jnp.float32) * scale

    def cardinal_params():
        splits = []
        for k in KS:
            splits.append(dict(
                w1x1=nrm((C, C), C ** -0.5),
                b1x1=nrm((C,), 0.05),
                wk=nrm((C, C, k, k), (C * k * k) ** -0.5),
                bk=nrm((C,), 0.05),
            ))
        att = dict(
            w_share=nrm((HIDDEN, C), C ** -0.5),
            b_share=nrm((HIDDEN,), 0.05),
            bn_gamma=1.0 + nrm((HIDDEN,), 0.1),
            bn_beta=nrm((HIDDEN,), 0.1),
            bn_mean=nrm((HIDDEN,), 0.1),
            bn_var=1.0 + jnp.abs(nrm((HIDDEN,), 0.1)),
        )
        for i in range(3):
            att[f"w_fc{i + 1}"] = nrm((C, HIDDEN), HIDDEN ** -0.5)
            att[f"b_fc{i + 1}"] = nrm((C,), 0.05)
        return dict(splits=splits, att=att)

    return dict(
        cardinals=[cardinal_params(), cardinal_params()],
        w_final=nrm((C, 2 * C), (2 * C) ** -0.5),
        b_final=nrm((C,), 0.05),
    )


if __name__ == "__main__":
    B, C, H, W = 2, 32, 16, 16      # input_dim = 32 channels, 16x16 feature map

    key = jax.random.PRNGKey(0)
    kx, kp = jax.random.split(key)
    x = jax.random.normal(kx, (B, C, H, W), dtype=jnp.float32)
    params = _init_params(kp, C)

    fwd = jax.jit(resnest_block)
    out = jax.block_until_ready(fwd(x, params))

    ref = _reference(x, params)
    assert out.shape == (B, C, H, W)
    max_err = float(jnp.max(jnp.abs(out - ref)))
    # bf16 MXU operands with f32 accumulation: tolerance loosened accordingly.
    assert jnp.allclose(out, ref, atol=3e-2, rtol=3e-2), \
        f"mismatch vs reference (max abs err {max_err})"

    print("KERNEL_OK")
</pallas_src>

<mosaic_0001>
module attributes {stable_mosaic.version = 11 : i64} {
  func.func @kernel(%arg0: i32, %arg1: i32, %arg2: memref<1x32x256xf32, #tpu.memory_space<vmem>>, %arg3: memref<49x256xf32, #tpu.memory_space<vmem>>, %arg4: memref<2x96x32xbf16, #tpu.memory_space<vmem>>, %arg5: memref<2x96x1xf32, #tpu.memory_space<vmem>>, %arg6: memref<2x32x288xbf16, #tpu.memory_space<vmem>>, %arg7: memref<2x32x800xbf16, #tpu.memory_space<vmem>>, %arg8: memref<2x32x1568xbf16, #tpu.memory_space<vmem>>, %arg9: memref<2x96x1xf32, #tpu.memory_space<vmem>>, %arg10: memref<2x16x32xf32, #tpu.memory_space<vmem>>, %arg11: memref<2x16x1xf32, #tpu.memory_space<vmem>>, %arg12: memref<2x3x32x16xf32, #tpu.memory_space<vmem>>, %arg13: memref<2x3x32x1xf32, #tpu.memory_space<vmem>>, %arg14: memref<2x32x32xbf16, #tpu.memory_space<vmem>>, %arg15: memref<32x1xf32, #tpu.memory_space<vmem>>, %arg16: memref<1x32x256xf32, #tpu.memory_space<vmem>>, %arg17: memref<32x256xf32, #tpu.memory_space<vmem>>, %arg18: memref<1568x256xbf16, #tpu.memory_space<vmem>>, %arg19: memref<96x256xf32, #tpu.memory_space<vmem>>, %arg20: memref<3x32x256xf32, #tpu.memory_space<vmem>>) attributes {dimension_semantics = [#tpu.dimension_semantics<parallel>, #tpu.dimension_semantics<arbitrary>], iteration_bounds = array<i64: 2, 2>, scalar_prefetch = 0 : i64, scratch_operands = 4 : i64, tpu.core_type = #tpu.core_type<tc>, window_params = [{transform_indices = @transform_0, window_bounds = array<i64: 1, 32, 256>}, {pipeline_mode = #tpu.pipeline_mode<synchronous>, transform_indices = @transform_1, window_bounds = array<i64: 49, 256>}, {pipeline_mode = #tpu.pipeline_mode<synchronous>, transform_indices = @transform_2, window_bounds = array<i64: 2, 96, 32>}, {pipeline_mode = #tpu.pipeline_mode<synchronous>, transform_indices = @transform_3, window_bounds = array<i64: 2, 96, 1>}, {pipeline_mode = #tpu.pipeline_mode<synchronous>, transform_indices = @transform_4, window_bounds = array<i64: 2, 32, 288>}, {pipeline_mode = #tpu.pipeline_mode<synchronous>, transform_indices = @transform_5, window_bounds = array<i64: 2, 32, 800>}, {pipeline_mode = #tpu.pipeline_mode<synchronous>, transform_indices = @transform_6, window_bounds = array<i64: 2, 32, 1568>}, {pipeline_mode = #tpu.pipeline_mode<synchronous>, transform_indices = @transform_7, window_bounds = array<i64: 2, 96, 1>}, {pipeline_mode = #tpu.pipeline_mode<synchronous>, transform_indices = @transform_8, window_bounds = array<i64: 2, 16, 32>}, {pipeline_mode = #tpu.pipeline_mode<synchronous>, transform_indices = @transform_9, window_bounds = array<i64: 2, 16, 1>}, {pipeline_mode = #tpu.pipeline_mode<synchronous>, transform_indices = @transform_10, window_bounds = array<i64: 2, 3, 32, 16>}, {pipeline_mode = #tpu.pipeline_mode<synchronous>, transform_indices = @transform_11, window_bounds = array<i64: 2, 3, 32, 1>}, {pipeline_mode = #tpu.pipeline_mode<synchronous>, transform_indices = @transform_12, window_bounds = array<i64: 2, 32, 32>}, {pipeline_mode = #tpu.pipeline_mode<synchronous>, transform_indices = @transform_13, window_bounds = array<i64: 32, 1>}, {transform_indices = @transform_14, window_bounds = array<i64: 1, 32, 256>}]} {
    %c0 = arith.constant 0 : index
    %c0_0 = arith.constant 0 : index
    %c0_1 = arith.constant 0 : index
    %0 = vector.load %arg2[%c0, %c0_0, %c0_1] : memref<1x32x256xf32, #tpu.memory_space<vmem>>, vector<1x32x256xf32>
    %1 = vector.shape_cast %0 : vector<1x32x256xf32> to vector<32x256xf32>
    %c0_i32 = arith.constant 0 : i32
    %2 = arith.cmpi eq, %arg1, %c0_i32 : i32
    %3 = arith.extui %2 : i1 to i32
    %c0_i32_2 = arith.constant 0 : i32
    %4 = arith.cmpi ne, %3, %c0_i32_2 : i32
    scf.if %4 {
      %c0_355 = arith.constant 0 : index
      %c0_356 = arith.constant 0 : index
      %639 = vector.load %arg15[%c0_355, %c0_356] : memref<32x1xf32, #tpu.memory_space<vmem>>, vector<32x1xf32>
      %640 = vector.broadcast %639 : vector<32x1xf32> to vector<32x256xf32>
      %641 = arith.addf %1, %640 : vector<32x256xf32>
      %c0_357 = arith.constant 0 : index
      %c0_358 = arith.constant 0 : index
      %642 = vector.load %arg17[%c0_357, %c0_358] : memref<32x256xf32, #tpu.memory_space<vmem>>, vector<32x256xf32>
      tpu.vector_store %arg17[%c0_357, %c0_358], %641 {strides = array<i32>} : memref<32x256xf32, #tpu.memory_space<vmem>>, vector<32x256xf32>,
    } else {
    }
    %5 = arith.truncf %1 : vector<32x256xf32> to vector<32x256xbf16>
    %6 = arith.index_cast %arg1 : i32 to index
    %c0_3 = arith.constant 0 : index
    %c0_4 = arith.constant 0 : index
    %7 = vector.load %arg4[%6, %c0_3, %c0_4] : memref<2x96x32xbf16, #tpu.memory_space<vmem>>, vector<1x96x32xbf16>
    %8 = vector.shape_cast %7 : vector<1x96x32xbf16> to vector<96x32xbf16>
    %cst = arith.constant dense<0.000000e+00> : vector<96x256xf32>
    %9 = tpu.matmul %8, %5, %cst {dimension_numbers = #tpu.dot_dimension_numbers<[1], [0], [0], [1], [0, 0, 1, 1], [], []>} : vector<96x32xbf16>, vector<32x256xbf16>, vector<96x256xf32> -> vector<96x256xf32>
    %10 = arith.index_cast %arg1 : i32 to index
    %c0_5 = arith.constant 0 : index
    %c0_6 = arith.constant 0 : index
    %11 = vector.load %arg5[%10, %c0_5, %c0_6] : memref<2x96x1xf32, #tpu.memory_space<vmem>>, vector<1x96x1xf32>
    %12 = vector.shape_cast %11 : vector<1x96x1xf32> to vector<96x1xf32>
    %13 = vector.broadcast %12 : vector<96x1xf32> to vector<96x256xf32>
    %14 = arith.addf %9, %13 : vector<96x256xf32>
    %c0_7 = arith.constant 0 : index
    %c0_8 = arith.constant 0 : index
    %15 = vector.load %arg19[%c0_7, %c0_8] : memref<96x256xf32, #tpu.memory_space<vmem>>, vector<96x256xf32>
    tpu.vector_store %arg19[%c0_7, %c0_8], %14 {strides = array<i32>} : memref<96x256xf32, #tpu.memory_space<vmem>>, vector<96x256xf32>,
    %16 = arith.index_cast %arg1 : i32 to index
    %c0_9 = arith.constant 0 : index
    %c0_10 = arith.constant 0 : index
    %17 = vector.load %arg9[%16, %c0_9, %c0_10] : memref<2x96x1xf32, #tpu.memory_space<vmem>>, vector<1x96x1xf32>
    %18 = vector.shape_cast %17 : vector<1x96x1xf32> to vector<96x1xf32>
    %c0_11 = arith.constant 0 : index
    %c0_12 = arith.constant 0 : index
    %19 = vector.load %arg19[%c0_11, %c0_12] : memref<96x256xf32, #tpu.memory_space<vmem>>, vector<32x256xf32>
    %c17_i32 = arith.constant 17 : i32
    %20 = tpu.dynamic_rotate %19 by %c17_i32 dim 1 : vector<32x256xf32>, i32 -> vector<32x256xf32>
    %c16 = arith.constant 16 : index
    %c0_13 = arith.constant 0 : index
    %21 = vector.load %arg3[%c16, %c0_13] : memref<49x256xf32, #tpu.memory_space<vmem>>, vector<1x256xf32>
    %22 = vector.broadcast %21 : vector<1x256xf32> to vector<32x256xf32>
    %23 = arith.mulf %20, %22 : vector<32x256xf32>
    %24 = arith.truncf %23 : vector<32x256xf32> to vector<32x256xbf16>
    %c0_14 = arith.constant 0 : index
    %c0_15 = arith.constant 0 : index
    %25 = vector.load %arg18[%c0_14, %c0_15] : memref<1568x256xbf16, #tpu.memory_space<vmem>>, vector<32x256xbf16>
    tpu.vector_store %arg18[%c0_14, %c0_15], %24 {strides = array<i32>} : memref<1568x256xbf16, #tpu.memory_space<vmem>>, vector<32x256xbf16>,
    %c16_i32 = arith.constant 16 : i32
    %26 = tpu.dynamic_rotate %19 by %c16_i32 dim 1 : vector<32x256xf32>, i32 -> vector<32x256xf32>
    %c17 = arith.constant 17 : index
    %c0_16 = arith.constant 0 : index
    %27 = vector.load %arg3[%c17, %c0_16] : memref<49x256xf32, #tpu.memory_space<vmem>>, vector<1x256xf32>
    %28 = vector.broadcast %27 : vector<1x256xf32> to vector<32x256xf32>
    %29 = arith.mulf %26, %28 : vector<32x256xf32>
    %30 = arith.truncf %29 : vector<32x256xf32> to vector<32x256xbf16>
    %c32 = arith.constant 32 : index
    %c0_17 = arith.constant 0 : index
    %31 = vector.load %arg18[%c32, %c0_17] : memref<1568x256xbf16, #tpu.memory_space<vmem>>, vector<32x256xbf16>
    tpu.vector_store %arg18[%c32, %c0_17], %30 {strides = array<i32>} : memref<1568x256xbf16, #tpu.memory_space<vmem>>, vector<32x256xbf16>,
    %c15_i32 = arith.constant 15 : i32
    %32 = tpu.dynamic_rotate %19 by %c15_i32 dim 1 : vector<32x256xf32>, i32 -> vector<32x256xf32>
    %c18 = arith.constant 18 : index
    %c0_18 = arith.constant 0 : index
    %33 = vector.load %arg3[%c18, %c0_18] : memref<49x256xf32, #tpu.memory_space<vmem>>, vector<1x256xf32>
    %34 = vector.broadcast %33 : vector<1x256xf32> to vector<32x256xf32>
    %35 = arith.mulf %32, %34 : vector<32x256xf32>
    %36 = arith.truncf %35 : vector<32x256xf32> to vector<32x256xbf16>
    %c64 = arith.constant 64 : index
    %c0_19 = arith.constant 0 : index
    %37 = vector.load %arg18[%c64, %c0_19] : memref<1568x256xbf16, #tpu.memory_space<vmem>>, vector<32x256xbf16>
    tpu.vector_store %arg18[%c64, %c0_19], %36 {strides = array<i32>} : memref<1568x256xbf16, #tpu.memory_space<vmem>>, vector<32x256xbf16>,
    %c1_i32 = arith.constant 1 : i32
    %38 = tpu.dynamic_rotate %19 by %c1_i32 dim 1 : vector<32x256xf32>, i32 -> vector<32x256xf32>
    %c23 = arith.constant 23 : index
    %c0_20 = arith.constant 0 : index
    %39 = vector.load %arg3[%c23, %c0_20] : memref<49x256xf32, #tpu.memory_space<vmem>>, vector<1x256xf32>
    %40 = vector.broadcast %39 : vector<1x256xf32> to vector<32x256xf32>
    %41 = arith.mulf %38, %40 : vector<32x256xf32>
    %42 = arith.truncf %41 : vector<32x256xf32> to vector<32x256xbf16>
    %c96 = arith.constant 96 : index
    %c0_21 = arith.constant 0 : index
    %43 = vector.load %arg18[%c96, %c0_21] : memref<1568x256xbf16, #tpu.memory_space<vmem>>, vector<32x256xbf16>
    tpu.vector_store %arg18[%c96, %c0_21], %42 {strides = array<i32>} : memref<1568x256xbf16, #tpu.memory_space<vmem>>, vector<32x256xbf16>,
    %44 = arith.truncf %19 : vector<32x256xf32> to vector<32x256xbf16>
    %c128 = arith.constant 128 : index
    %c0_22 = arith.constant 0 : index
    %45 = vector.load %arg18[%c128, %c0_22] : memref<1568x256xbf16, #tpu.memory_space<vmem>>, vector<32x256xbf16>
    tpu.vector_store %arg18[%c128, %c0_22], %44 {strides = array<i32>} : memref<1568x256xbf16, #tpu.memory_space<vmem>>, vector<32x256xbf16>,
    %c255_i32 = arith.constant 255 : i32
    %46 = tpu.dynamic_rotate %19 by %c255_i32 dim 1 : vector<32x256xf32>, i32 -> vector<32x256xf32>
    %c25 = arith.constant 25 : index
    %c0_23 = arith.constant 0 : index
    %47 = vector.load %arg3[%c25, %c0_23] : memref<49x256xf32, #tpu.memory_space<vmem>>, vector<1x256xf32>
    %48 = vector.broadcast %47 : vector<1x256xf32> to vector<32x256xf32>
    %49 = arith.mulf %46, %48 : vector<32x256xf32>
    %50 = arith.truncf %49 : vector<32x256xf32> to vector<32x256xbf16>
    %c160 = arith.constant 160 : index
    %c0_24 = arith.constant 0 : index
    %51 = vector.load %arg18[%c160, %c0_24] : memref<1568x256xbf16, #tpu.memory_space<vmem>>, vector<32x256xbf16>
    tpu.vector_store %arg18[%c160, %c0_24], %50 {strides = array<i32>} : memref<1568x256xbf16, #tpu.memory_space<vmem>>, vector<32x256xbf16>,
    %c241_i32 = arith.constant 241 : i32
    %52 = tpu.dynamic_rotate %19 by %c241_i32 dim 1 : vector<32x256xf32>, i32 -> vector<32x256xf32>
    %c30 = arith.constant 30 : index
    %c0_25 = arith.constant 0 : index
    %53 = vector.load %arg3[%c30, %c0_25] : memref<49x256xf32, #tpu.memory_space<vmem>>, vector<1x256xf32>
    %54 = vector.broadcast %53 : vector<1x256xf32> to vector<32x256xf32>
    %55 = arith.mulf %52, %54 : vector<32x256xf32>
    %56 = arith.truncf %55 : vector<32x256xf32> to vector<32x256xbf16>
    %c192 = arith.constant 192 : index
    %c0_26 = arith.constant 0 : index
    %57 = vector.load %arg18[%c192, %c0_26] : memref<1568x256xbf16, #tpu.memory_space<vmem>>, vector<32x256xbf16>
    tpu.vector_store %arg18[%c192, %c0_26], %56 {strides = array<i32>} : memref<1568x256xbf16, #tpu.memory_space<vmem>>, vector<32x256xbf16>,
    %c240_i32 = arith.constant 240 : i32
    %58 = tpu.dynamic_rotate %19 by %c240_i32 dim 1 : vector<32x256xf32>, i32 -> vector<32x256xf32>
    %c31 = arith.constant 31 : index
    %c0_27 = arith.constant 0 : index
    %59 = vector.load %arg3[%c31, %c0_27] : memref<49x256xf32, #tpu.memory_space<vmem>>, vector<1x256xf32>
    %60 = vector.broadcast %59 : vector<1x256xf32> to vector<32x256xf32>
    %61 = arith.mulf %58, %60 : vector<32x256xf32>
    %62 = arith.truncf %61 : vector<32x256xf32> to vector<32x256xbf16>
    %c224 = arith.constant 224 : index
    %c0_28 = arith.constant 0 : index
    %63 = vector.load %arg18[%c224, %c0_28] : memref<1568x256xbf16, #tpu.memory_space<vmem>>, vector<32x256xbf16>
    tpu.vector_store %arg18[%c224, %c0_28], %62 {strides = array<i32>} : memref<1568x256xbf16, #tpu.memory_space<vmem>>, vector<32x256xbf16>,
    %c239_i32 = arith.constant 239 : i32
    %64 = tpu.dynamic_rotate %19 by %c239_i32 dim 1 : vector<32x256xf32>, i32 -> vector<32x256xf32>
    %c32_29 = arith.constant 32 : index
    %c0_30 = arith.constant 0 : index
    %65 = vector.load %arg3[%c32_29, %c0_30] : memref<49x256xf32, #tpu.memory_space<vmem>>, vector<1x256xf32>
    %66 = vector.broadcast %65 : vector<1x256xf32> to vector<32x256xf32>
    %67 = arith.mulf %64, %66 : vector<32x256xf32>
    %68 = arith.truncf %67 : vector<32x256xf32> to vector<32x256xbf16>
    %c256 = arith.constant 256 : index
    %c0_31 = arith.constant 0 : index
    %69 = vector.load %arg18[%c256, %c0_31] : memref<1568x256xbf16, #tpu.memory_space<vmem>>, vector<32x256xbf16>
    tpu.vector_store %arg18[%c256, %c0_31], %68 {strides = array<i32>} : memref<1568x256xbf16, #tpu.memory_space<vmem>>, vector<32x256xbf16>,
    %70 = arith.index_cast %arg1 : i32 to index
    %c0_32 = arith.constant 0 : index
    %c0_33 = arith.constant 0 : index
    %71 = vector.load %arg6[%70, %c0_32, %c0_33] : memref<2x32x288xbf16, #tpu.memory_space<vmem>>, vector<1x32x288xbf16>
    %72 = vector.shape_cast %71 : vector<1x32x288xbf16> to vector<32x288xbf16>
    %c0_34 = arith.constant 0 : index
    %c0_35 = arith.constant 0 : index
    %73 = vector.load %arg18[%c0_34, %c0_35] : memref<1568x256xbf16, #tpu.memory_space<vmem>>, vector<288x256xbf16>
    %cst_36 = arith.constant dense<0.000000e+00> : vector<32x256xf32>
    %74 = tpu.matmul %72, %73, %cst_36 {dimension_numbers = #tpu.dot_dimension_numbers<[1], [0], [0], [1], [0, 0, 1, 1], [], []>} : vector<32x288xbf16>, vector<288x256xbf16>, vector<32x256xf32> -> vector<32x256xf32>
    %75 = vector.extract_strided_slice %18 {offsets = [0, 0], sizes = [32, 1], strides = [1, 1]} : vector<96x1xf32> to vector<32x1xf32>
    %76 = vector.broadcast %75 : vector<32x1xf32> to vector<32x256xf32>
    %77 = arith.addf %74, %76 : vector<32x256xf32>
    %c0_37 = arith.constant 0 : index
    %c0_38 = arith.constant 0 : index
    %c0_39 = arith.constant 0 : index
    %78 = vector.load %arg20[%c0_37, %c0_38, %c0_39] : memref<3x32x256xf32, #tpu.memory_space<vmem>>, vector<1x32x256xf32>
    %79 = vector.shape_cast %78 : vector<1x32x256xf32> to vector<32x256xf32>
    %80 = vector.shape_cast %77 : vector<32x256xf32> to vector<1x32x256xf32>
    tpu.vector_store %arg20[%c0_37, %c0_38, %c0_39], %80 {strides = array<i32>} : memref<3x32x256xf32, #tpu.memory_space<vmem>>, vector<1x32x256xf32>,
    %c32_40 = arith.constant 32 : index
    %c0_41 = arith.constant 0 : index
    %81 = vector.load %arg19[%c32_40, %c0_41] : memref<96x256xf32, #tpu.memory_space<vmem>>, vector<32x256xf32>
    %c34_i32 = arith.constant 34 : i32
    %82 = tpu.dynamic_rotate %81 by %c34_i32 dim 1 : vector<32x256xf32>, i32 -> vector<32x256xf32>
    %c8 = arith.constant 8 : index
    %c0_42 = arith.constant 0 : index
    %83 = vector.load %arg3[%c8, %c0_42] : memref<49x256xf32, #tpu.memory_space<vmem>>, vector<1x256xf32>
    %84 = vector.broadcast %83 : vector<1x256xf32> to vector<32x256xf32>
    %85 = arith.mulf %82, %84 : vector<32x256xf32>
    %86 = arith.truncf %85 : vector<32x256xf32> to vector<32x256xbf16>
    %c0_43 = arith.constant 0 : index
    %c0_44 = arith.constant 0 : index
    %87 = vector.load %arg18[%c0_43, %c0_44] : memref<1568x256xbf16, #tpu.memory_space<vmem>>, vector<32x256xbf16>
    tpu.vector_store %arg18[%c0_43, %c0_44], %86 {strides = array<i32>} : memref<1568x256xbf16, #tpu.memory_space<vmem>>, vector<32x256xbf16>,
    %c33_i32 = arith.constant 33 : i32
    %88 = tpu.dynamic_rotate %81 by %c33_i32 dim 1 : vector<32x256xf32>, i32 -> vector<32x256xf32>
    %c9 = arith.constant 9 : index
    %c0_45 = arith.constant 0 : index
    %89 = vector.load %arg3[%c9, %c0_45] : memref<49x256xf32, #tpu.memory_space<vmem>>, vector<1x256xf32>
    %90 = vector.broadcast %89 : vector<1x256xf32> to vector<32x256xf32>
    %91 = arith.mulf %88, %90 : vector<32x256xf32>
    %92 = arith.truncf %91 : vector<32x256xf32> to vector<32x256xbf16>
    %c32_46 = arith.constant 32 : index
    %c0_47 = arith.constant 0 : index
    %93 = vector.load %arg18[%c32_46, %c0_47] : memref<1568x256xbf16, #tpu.memory_space<vmem>>, vector<32x256xbf16>
    tpu.vector_store %arg18[%c32_46, %c0_47], %92 {strides = array<i32>} : memref<1568x256xbf16, #tpu.memory_space<vmem>>, vector<32x256xbf16>,
    %c32_i32 = arith.constant 32 : i32
    %94 = tpu.dynamic_rotate %81 by %c32_i32 dim 1 : vector<32x256xf32>, i32 -> vector<32x256xf32>
    %c10 = arith.constant 10 : index
    %c0_48 = arith.constant 0 : index
    %95 = vector.load %arg3[%c10, %c0_48] : memref<49x256xf32, #tpu.memory_space<vmem>>, vector<1x256xf32>
    %96 = vector.broadcast %95 : vector<1x256xf32> to vector<32x256xf32>
    %97 = arith.mulf %94, %96 : vector<32x256xf32>
    %98 = arith.truncf %97 : vector<32x256xf32> to vector<32x256xbf16>
    %c64_49 = arith.constant 64 : index
    %c0_50 = arith.constant 0 : index
    %99 = vector.load %arg18[%c64_49, %c0_50] : memref<1568x256xbf16, #tpu.memory_space<vmem>>, vector<32x256xbf16>
    tpu.vector_store %arg18[%c64_49, %c0_50], %98 {strides = array<i32>} : memref<1568x256xbf16, #tpu.memory_space<vmem>>, vector<32x256xbf16>,
    %c31_i32 = arith.constant 31 : i32
    %100 = tpu.dynamic_rotate %81 by %c31_i32 dim 1 : vector<32x256xf32>, i32 -> vector<32x256xf32>
    %c11 = arith.constant 11 : index
    %c0_51 = arith.constant 0 : index
    %101 = vector.load %arg3[%c11, %c0_51] : memref<49x256xf32, #tpu.memory_space<vmem>>, vector<1x256xf32>
    %102 = vector.broadcast %101 : vector<1x256xf32> to vector<32x256xf32>
    %103 = arith.mulf %100, %102 : vector<32x256xf32>
    %104 = arith.truncf %103 : vector<32x256xf32> to vector<32x256xbf16>
    %c96_52 = arith.constant 96 : index
    %c0_53 = arith.constant 0 : index
    %105 = vector.load %arg18[%c96_52, %c0_53] : memref<1568x256xbf16, #tpu.memory_space<vmem>>, vector<32x256xbf16>
    tpu.vector_store %arg18[%c96_52, %c0_53], %104 {strides = array<i32>} : memref<1568x256xbf16, #tpu.memory_space<vmem>>, vector<32x256xbf16>,
    %c30_i32 = arith.constant 30 : i32
    %106 = tpu.dynamic_rotate %81 by %c30_i32 dim 1 : vector<32x256xf32>, i32 -> vector<32x256xf32>
    %c12 = arith.constant 12 : index
    %c0_54 = arith.constant 0 : index
    %107 = vector.load %arg3[%c12, %c0_54] : memref<49x256xf32, #tpu.memory_space<vmem>>, vector<1x256xf32>
    %108 = vector.broadcast %107 : vector<1x256xf32> to vector<32x256xf32>
    %109 = arith.mulf %106, %108 : vector<32x256xf32>
    %110 = arith.truncf %109 : vector<32x256xf32> to vector<32x256xbf16>
    %c128_55 = arith.constant 128 : index
    %c0_56 = arith.constant 0 : index
    %111 = vector.load %arg18[%c128_55, %c0_56] : memref<1568x256xbf16, #tpu.memory_space<vmem>>, vector<32x256xbf16>
    tpu.vector_store %arg18[%c128_55, %c0_56], %110 {strides = array<i32>} : memref<1568x256xbf16, #tpu.memory_space<vmem>>, vector<32x256xbf16>,
    %c18_i32 = arith.constant 18 : i32
    %112 = tpu.dynamic_rotate %81 by %c18_i32 dim 1 : vector<32x256xf32>, i32 -> vector<32x256xf32>
    %c15 = arith.constant 15 : index
    %c0_57 = arith.constant 0 : index
    %113 = vector.load %arg3[%c15, %c0_57] : memref<49x256xf32, #tpu.memory_space<vmem>>, vector<1x256xf32>
    %114 = vector.broadcast %113 : vector<1x256xf32> to vector<32x256xf32>
    %115 = arith.mulf %112, %114 : vector<32x256xf32>
    %116 = arith.truncf %115 : vector<32x256xf32> to vector<32x256xbf16>
    %c160_58 = arith.constant 160 : index
    %c0_59 = arith.constant 0 : index
    %117 = vector.load %arg18[%c160_58, %c0_59] : memref<1568x256xbf16, #tpu.memory_space<vmem>>, vector<32x256xbf16>
    tpu.vector_store %arg18[%c160_58, %c0_59], %116 {strides = array<i32>} : memref<1568x256xbf16, #tpu.memory_space<vmem>>, vector<32x256xbf16>,
    %c17_i32_60 = arith.constant 17 : i32
    %118 = tpu.dynamic_rotate %81 by %c17_i32_60 dim 1 : vector<32x256xf32>, i32 -> vector<32x256xf32>
    %c16_61 = arith.constant 16 : index
    %c0_62 = arith.constant 0 : index
    %119 = vector.load %arg3[%c16_61, %c0_62] : memref<49x256xf32, #tpu.memory_space<vmem>>, vector<1x256xf32>
    %120 = vector.broadcast %119 : vector<1x256xf32> to vector<32x256xf32>
    %121 = arith.mulf %118, %120 : vector<32x256xf32>
    %122 = arith.truncf %121 : vector<32x256xf32> to vector<32x256xbf16>
    %c192_63 = arith.constant 192 : index
    %c0_64 = arith.constant 0 : index
    %123 = vector.load %arg18[%c192_63, %c0_64] : memref<1568x256xbf16, #tpu.memory_space<vmem>>, vector<32x256xbf16>
    tpu.vector_store %arg18[%c192_63, %c0_64], %122 {strides = array<i32>} : memref<1568x256xbf16, #tpu.memory_space<vmem>>, vector<32x256xbf16>,
    %c16_i32_65 = arith.constant 16 : i32
    %124 = tpu.dynamic_rotate %81 by %c16_i32_65 dim 1 : vector<32x256xf32>, i32 -> vector<32x256xf32>
    %c17_66 = arith.constant 17 : index
    %c0_67 = arith.constant 0 : index
    %125 = vector.load %arg3[%c17_66, %c0_67] : memref<49x256xf32, #tpu.memory_space<vmem>>, vector<1x256xf32>
    %126 = vector.broadcast %125 : vector<1x256xf32> to vector<32x256xf32>
    %127 = arith.mulf %124, %126 : vector<32x256xf32>
    %128 = arith.truncf %127 : vector<32x256xf32> to vector<32x256xbf16>
    %c224_68 = arith.constant 224 : index
    %c0_69 = arith.constant 0 : index
    %129 = vector.load %arg18[%c224_68, %c0_69] : memref<1568x256xbf16, #tpu.memory_space<vmem>>, vector<32x256xbf16>
    tpu.vector_store %arg18[%c224_68, %c0_69], %128 {strides = array<i32>} : memref<1568x256xbf16, #tpu.memory_space<vmem>>, vector<32x256xbf16>,
    %c15_i32_70 = arith.constant 15 : i32
    %130 = tpu.dynamic_rotate %81 by %c15_i32_70 dim 1 : vector<32x256xf32>, i32 -> vector<32x256xf32>
    %c18_71 = arith.constant 18 : index
    %c0_72 = arith.constant 0 : index
    %131 = vector.load %arg3[%c18_71, %c0_72] : memref<49x256xf32, #tpu.memory_space<vmem>>, vector<1x256xf32>
    %132 = vector.broadcast %131 : vector<1x256xf32> to vector<32x256xf32>
    %133 = arith.mulf %130, %132 : vector<32x256xf32>
    %134 = arith.truncf %133 : vector<32x256xf32> to vector<32x256xbf16>
    %c256_73 = arith.constant 256 : index
    %c0_74 = arith.constant 0 : index
    %135 = vector.load %arg18[%c256_73, %c0_74] : memref<1568x256xbf16, #tpu.memory_space<vmem>>, vector<32x256xbf16>
    tpu.vector_store %arg18[%c256_73, %c0_74], %134 {strides = array<i32>} : memref<1568x256xbf16, #tpu.memory_space<vmem>>, vector<32x256xbf16>,
    %c14_i32 = arith.constant 14 : i32
    %136 = tpu.dynamic_rotate %81 by %c14_i32 dim 1 : vector<32x256xf32>, i32 -> vector<32x256xf32>
    %c19 = arith.constant 19 : index
    %c0_75 = arith.constant 0 : index
    %137 = vector.load %arg3[%c19, %c0_75] : memref<49x256xf32, #tpu.memory_space<vmem>>, vector<1x256xf32>
    %138 = vector.broadcast %137 : vector<1x256xf32> to vector<32x256xf32>
    %139 = arith.mulf %136, %138 : vector<32x256xf32>
    %140 = arith.truncf %139 : vector<32x256xf32> to vector<32x256xbf16>
    %c288 = arith.constant 288 : index
    %c0_76 = arith.constant 0 : index
    %141 = vector.load %arg18[%c288, %c0_76] : memref<1568x256xbf16, #tpu.memory_space<vmem>>, vector<32x256xbf16>
    tpu.vector_store %arg18[%c288, %c0_76], %140 {strides = array<i32>} : memref<1568x256xbf16, #tpu.memory_space<vmem>>, vector<32x256xbf16>,
    %c2_i32 = arith.constant 2 : i32
    %142 = tpu.dynamic_rotate %81 by %c2_i32 dim 1 : vector<32x256xf32>, i32 -> vector<32x256xf32>
    %c22 = arith.constant 22 : index
    %c0_77 = arith.constant 0 : index
    %143 = vector.load %arg3[%c22, %c0_77] : memref<49x256xf32, #tpu.memory_space<vmem>>, vector<1x256xf32>
    %144 = vector.broadcast %143 : vector<1x256xf32> to vector<32x256xf32>
    %145 = arith.mulf %142, %144 : vector<32x256xf32>
    %146 = arith.truncf %145 : vector<32x256xf32> to vector<32x256xbf16>
    %c320 = arith.constant 320 : index
    %c0_78 = arith.constant 0 : index
    %147 = vector.load %arg18[%c320, %c0_78] : memref<1568x256xbf16, #tpu.memory_space<vmem>>, vector<32x256xbf16>
    tpu.vector_store %arg18[%c320, %c0_78], %146 {strides = array<i32>} : memref<1568x256xbf16, #tpu.memory_space<vmem>>, vector<32x256xbf16>,
    %c1_i32_79 = arith.constant 1 : i32
    %148 = tpu.dynamic_rotate %81 by %c1_i32_79 dim 1 : vector<32x256xf32>, i32 -> vector<32x256xf32>
    %c23_80 = arith.constant 23 : index
    %c0_81 = arith.constant 0 : index
    %149 = vector.load %arg3[%c23_80, %c0_81] : memref<49x256xf32, #tpu.memory_space<vmem>>, vector<1x256xf32>
    %150 = vector.broadcast %149 : vector<1x256xf32> to vector<32x256xf32>
    %151 = arith.mulf %148, %150 : vector<32x256xf32>
    %152 = arith.truncf %151 : vector<32x256xf32> to vector<32x256xbf16>
    %c352 = arith.constant 352 : index
    %c0_82 = arith.constant 0 : index
    %153 = vector.load %arg18[%c352, %c0_82] : memref<1568x256xbf16, #tpu.memory_space<vmem>>, vector<32x256xbf16>
    tpu.vector_store %arg18[%c352, %c0_82], %152 {strides = array<i32>} : memref<1568x256xbf16, #tpu.memory_space<vmem>>, vector<32x256xbf16>,
    %154 = arith.truncf %81 : vector<32x256xf32> to vector<32x256xbf16>
    %c384 = arith.constant 384 : index
    %c0_83 = arith.constant 0 : index
    %155 = vector.load %arg18[%c384, %c0_83] : memref<1568x256xbf16, #tpu.memory_space<vmem>>, vector<32x256xbf16>
    tpu.vector_store %arg18[%c384, %c0_83], %154 {strides = array<i32>} : memref<1568x256xbf16, #tpu.memory_space<vmem>>, vector<32x256xbf16>,
    %c255_i32_84 = arith.constant 255 : i32
    %156 = tpu.dynamic_rotate %81 by %c255_i32_84 dim 1 : vector<32x256xf32>, i32 -> vector<32x256xf32>
    %c25_85 = arith.constant 25 : index
    %c0_86 = arith.constant 0 : index
    %157 = vector.load %arg3[%c25_85, %c0_86] : memref<49x256xf32, #tpu.memory_space<vmem>>, vector<1x256xf32>
    %158 = vector.broadcast %157 : vector<1x256xf32> to vector<32x256xf32>
    %159 = arith.mulf %156, %158 : vector<32x256xf32>
    %160 = arith.truncf %159 : vector<32x256xf32> to vector<32x256xbf16>
    %c416 = arith.constant 416 : index
    %c0_87 = arith.constant 0 : index
    %161 = vector.load %arg18[%c416, %c0_87] : memref<1568x256xbf16, #tpu.memory_space<vmem>>, vector<32x256xbf16>
    tpu.vector_store %arg18[%c416, %c0_87], %160 {strides = array<i32>} : memref<1568x256xbf16, #tpu.memory_space<vmem>>, vector<32x256xbf16>,
    %c254_i32 = arith.constant 254 : i32
    %162 = tpu.dynamic_rotate %81 by %c254_i32 dim 1 : vector<32x256xf32>, i32 -> vector<32x256xf32>
    %c26 = arith.constant 26 : index
    %c0_88 = arith.constant 0 : index
    %163 = vector.load %arg3[%c26, %c0_88] : memref<49x256xf32, #tpu.memory_space<vmem>>, vector<1x256xf32>
    %164 = vector.broadcast %163 : vector<1x256xf32> to vector<32x256xf32>
    %165 = arith.mulf %162, %164 : vector<32x256xf32>
    %166 = arith.truncf %165 : vector<32x256xf32> to vector<32x256xbf16>
    %c448 = arith.constant 448 : index
    %c0_89 = arith.constant 0 : index
    %167 = vector.load %arg18[%c448, %c0_89] : memref<1568x256xbf16, #tpu.memory_space<vmem>>, vector<32x256xbf16>
    tpu.vector_store %arg18[%c448, %c0_89], %166 {strides = array<i32>} : memref<1568x256xbf16, #tpu.memory_space<vmem>>, vector<32x256xbf16>,
    %c242_i32 = arith.constant 242 : i32
    %168 = tpu.dynamic_rotate %81 by %c242_i32 dim 1 : vector<32x256xf32>, i32 -> vector<32x256xf32>
    %c29 = arith.constant 29 : index
    %c0_90 = arith.constant 0 : index
    %169 = vector.load %arg3[%c29, %c0_90] : memref<49x256xf32, #tpu.memory_space<vmem>>, vector<1x256xf32>
    %170 = vector.broadcast %169 : vector<1x256xf32> to vector<32x256xf32>
    %171 = arith.mulf %168, %170 : vector<32x256xf32>
    %172 = arith.truncf %171 : vector<32x256xf32> to vector<32x256xbf16>
    %c480 = arith.constant 480 : index
    %c0_91 = arith.constant 0 : index
    %173 = vector.load %arg18[%c480, %c0_91] : memref<1568x256xbf16, #tpu.memory_space<vmem>>, vector<32x256xbf16>
    tpu.vector_store %arg18[%c480, %c0_91], %172 {strides = array<i32>} : memref<1568x256xbf16, #tpu.memory_space<vmem>>, vector<32x256xbf16>,
    %c241_i32_92 = arith.constant 241 : i32
    %174 = tpu.dynamic_rotate %81 by %c241_i32_92 dim 1 : vector<32x256xf32>, i32 -> vector<32x256xf32>
    %c30_93 = arith.constant 30 : index
    %c0_94 = arith.constant 0 : index
    %175 = vector.load %arg3[%c30_93, %c0_94] : memref<49x256xf32, #tpu.memory_space<vmem>>, vector<1x256xf32>
    %176 = vector.broadcast %175 : vector<1x256xf32> to vector<32x256xf32>
    %177 = arith.mulf %174, %176 : vector<32x256xf32>
    %178 = arith.truncf %177 : vector<32x256xf32> to vector<32x256xbf16>
    %c512 = arith.constant 512 : index
    %c0_95 = arith.constant 0 : index
    %179 = vector.load %arg18[%c512, %c0_95] : memref<1568x256xbf16, #tpu.memory_space<vmem>>, vector<32x256xbf16>
    tpu.vector_store %arg18[%c512, %c0_95], %178 {strides = array<i32>} : memref<1568x256xbf16, #tpu.memory_space<vmem>>, vector<32x256xbf16>,
    %c240_i32_96 = arith.constant 240 : i32
    %180 = tpu.dynamic_rotate %81 by %c240_i32_96 dim 1 : vector<32x256xf32>, i32 -> vector<32x256xf32>
    %c31_97 = arith.constant 31 : index
    %c0_98 = arith.constant 0 : index
    %181 = vector.load %arg3[%c31_97, %c0_98] : memref<49x256xf32, #tpu.memory_space<vmem>>, vector<1x256xf32>
    %182 = vector.broadcast %181 : vector<1x256xf32> to vector<32x256xf32>
    %183 = arith.mulf %180, %182 : vector<32x256xf32>
    %184 = arith.truncf %183 : vector<32x256xf32> to vector<32x256xbf16>
    %c544 = arith.constant 544 : index
    %c0_99 = arith.constant 0 : index
    %185 = vector.load %arg18[%c544, %c0_99] : memref<1568x256xbf16, #tpu.memory_space<vmem>>, vector<32x256xbf16>
    tpu.vector_store %arg18[%c544, %c0_99], %184 {strides = array<i32>} : memref<1568x256xbf16, #tpu.memory_space<vmem>>, vector<32x256xbf16>,
    %c239_i32_100 = arith.constant 239 : i32
    %186 = tpu.dynamic_rotate %81 by %c239_i32_100 dim 1 : vector<32x256xf32>, i32 -> vector<32x256xf32>
    %c32_101 = arith.constant 32 : index
    %c0_102 = arith.constant 0 : index
    %187 = vector.load %arg3[%c32_101, %c0_102] : memref<49x256xf32, #tpu.memory_space<vmem>>, vector<1x256xf32>
    %188 = vector.broadcast %187 : vector<1x256xf32> to vector<32x256xf32>
    %189 = arith.mulf %186, %188 : vector<32x256xf32>
    %190 = arith.truncf %189 : vector<32x256xf32> to vector<32x256xbf16>
    %c576 = arith.constant 576 : index
    %c0_103 = arith.constant 0 : index
    %191 = vector.load %arg18[%c576, %c0_103] : memref<1568x256xbf16, #tpu.memory_space<vmem>>, vector<32x256xbf16>
    tpu.vector_store %arg18[%c576, %c0_103], %190 {strides = array<i32>} : memref<1568x256xbf16, #tpu.memory_space<vmem>>, vector<32x256xbf16>,
    %c238_i32 = arith.constant 238 : i32
    %192 = tpu.dynamic_rotate %81 by %c238_i32 dim 1 : vector<32x256xf32>, i32 -> vector<32x256xf32>
    %c33 = arith.constant 33 : index
    %c0_104 = arith.constant 0 : index
    %193 = vector.load %arg3[%c33, %c0_104] : memref<49x256xf32, #tpu.memory_space<vmem>>, vector<1x256xf32>
    %194 = vector.broadcast %193 : vector<1x256xf32> to vector<32x256xf32>
    %195 = arith.mulf %192, %194 : vector<32x256xf32>
    %196 = arith.truncf %195 : vector<32x256xf32> to vector<32x256xbf16>
    %c608 = arith.constant 608 : index
    %c0_105 = arith.constant 0 : index
    %197 = vector.load %arg18[%c608, %c0_105] : memref<1568x256xbf16, #tpu.memory_space<vmem>>, vector<32x256xbf16>
    tpu.vector_store %arg18[%c608, %c0_105], %196 {strides = array<i32>} : memref<1568x256xbf16, #tpu.memory_space<vmem>>, vector<32x256xbf16>,
    %c226_i32 = arith.constant 226 : i32
    %198 = tpu.dynamic_rotate %81 by %c226_i32 dim 1 : vector<32x256xf32>, i32 -> vector<32x256xf32>
    %c36 = arith.constant 36 : index
    %c0_106 = arith.constant 0 : index
    %199 = vector.load %arg3[%c36, %c0_106] : memref<49x256xf32, #tpu.memory_space<vmem>>, vector<1x256xf32>
    %200 = vector.broadcast %199 : vector<1x256xf32> to vector<32x256xf32>
    %201 = arith.mulf %198, %200 : vector<32x256xf32>
    %202 = arith.truncf %201 : vector<32x256xf32> to vector<32x256xbf16>
    %c640 = arith.constant 640 : index
    %c0_107 = arith.constant 0 : index
    %203 = vector.load %arg18[%c640, %c0_107] : memref<1568x256xbf16, #tpu.memory_space<vmem>>, vector<32x256xbf16>
    tpu.vector_store %arg18[%c640, %c0_107], %202 {strides = array<i32>} : memref<1568x256xbf16, #tpu.memory_space<vmem>>, vector<32x256xbf16>,
    %c225_i32 = arith.constant 225 : i32
    %204 = tpu.dynamic_rotate %81 by %c225_i32 dim 1 : vector<32x256xf32>, i32 -> vector<32x256xf32>
    %c37 = arith.constant 37 : index
    %c0_108 = arith.constant 0 : index
    %205 = vector.load %arg3[%c37, %c0_108] : memref<49x256xf32, #tpu.memory_space<vmem>>, vector<1x256xf32>
    %206 = vector.broadcast %205 : vector<1x256xf32> to vector<32x256xf32>
    %207 = arith.mulf %204, %206 : vector<32x256xf32>
    %208 = arith.truncf %207 : vector<32x256xf32> to vector<32x256xbf16>
    %c672 = arith.constant 672 : index
    %c0_109 = arith.constant 0 : index
    %209 = vector.load %arg18[%c672, %c0_109] : memref<1568x256xbf16, #tpu.memory_space<vmem>>, vector<32x256xbf16>
    tpu.vector_store %arg18[%c672, %c0_109], %208 {strides = array<i32>} : memref<1568x256xbf16, #tpu.memory_space<vmem>>, vector<32x256xbf16>,
    %c224_i32 = arith.constant 224 : i32
    %210 = tpu.dynamic_rotate %81 by %c224_i32 dim 1 : vector<32x256xf32>, i32 -> vector<32x256xf32>
    %c38 = arith.constant 38 : index
    %c0_110 = arith.constant 0 : index
    %211 = vector.load %arg3[%c38, %c0_110] : memref<49x256xf32, #tpu.memory_space<vmem>>, vector<1x256xf32>
    %212 = vector.broadcast %211 : vector<1x256xf32> to vector<32x256xf32>
    %213 = arith.mulf %210, %212 : vector<32x256xf32>
    %214 = arith.truncf %213 : vector<32x256xf32> to vector<32x256xbf16>
    %c704 = arith.constant 704 : index
    %c0_111 = arith.constant 0 : index
    %215 = vector.load %arg18[%c704, %c0_111] : memref<1568x256xbf16, #tpu.memory_space<vmem>>, vector<32x256xbf16>
    tpu.vector_store %arg18[%c704, %c0_111], %214 {strides = array<i32>} : memref<1568x256xbf16, #tpu.memory_space<vmem>>, vector<32x256xbf16>,
    %c223_i32 = arith.constant 223 : i32
    %216 = tpu.dynamic_rotate %81 by %c223_i32 dim 1 : vector<32x256xf32>, i32 -> vector<32x256xf32>
    %c39 = arith.constant 39 : index
    %c0_112 = arith.constant 0 : index
    %217 = vector.load %arg3[%c39, %c0_112] : memref<49x256xf32, #tpu.memory_space<vmem>>, vector<1x256xf32>
    %218 = vector.broadcast %217 : vector<1x256xf32> to vector<32x256xf32>
    %219 = arith.mulf %216, %218 : vector<32x256xf32>
    %220 = arith.truncf %219 : vector<32x256xf32> to vector<32x256xbf16>
    %c736 = arith.constant 736 : index
    %c0_113 = arith.constant 0 : index
    %221 = vector.load %arg18[%c736, %c0_113] : memref<1568x256xbf16, #tpu.memory_space<vmem>>, vector<32x256xbf16>
    tpu.vector_store %arg18[%c736, %c0_113], %220 {strides = array<i32>} : memref<1568x256xbf16, #tpu.memory_space<vmem>>, vector<32x256xbf16>,
    %c222_i32 = arith.constant 222 : i32
    %222 = tpu.dynamic_rotate %81 by %c222_i32 dim 1 : vector<32x256xf32>, i32 -> vector<32x256xf32>
    %c40 = arith.constant 40 : index
    %c0_114 = arith.constant 0 : index
    %223 = vector.load %arg3[%c40, %c0_114] : memref<49x256xf32, #tpu.memory_space<vmem>>, vector<1x256xf32>
    %224 = vector.broadcast %223 : vector<1x256xf32> to vector<32x256xf32>
    %225 = arith.mulf %222, %224 : vector<32x256xf32>
    %226 = arith.truncf %225 : vector<32x256xf32> to vector<32x256xbf16>
    %c768 = arith.constant 768 : index
    %c0_115 = arith.constant 0 : index
    %227 = vector.load %arg18[%c768, %c0_115] : memref<1568x256xbf16, #tpu.memory_space<vmem>>, vector<32x256xbf16>
    tpu.vector_store %arg18[%c768, %c0_115], %226 {strides = array<i32>} : memref<1568x256xbf16, #tpu.memory_space<vmem>>, vector<32x256xbf16>,
    %228 = arith.index_cast %arg1 : i32 to index
    %c0_116 = arith.constant 0 : index
    %c0_117 = arith.constant 0 : index
    %229 = vector.load %arg7[%228, %c0_116, %c0_117] : memref<2x32x800xbf16, #tpu.memory_space<vmem>>, vector<1x32x800xbf16>
    %230 = vector.shape_cast %229 : vector<1x32x800xbf16> to vector<32x800xbf16>
    %c0_118 = arith.constant 0 : index
    %c0_119 = arith.constant 0 : index
    %231 = vector.load %arg18[%c0_118, %c0_119] : memref<1568x256xbf16, #tpu.memory_space<vmem>>, vector<800x256xbf16>
    %cst_120 = arith.constant dense<0.000000e+00> : vector<32x256xf32>
    %232 = tpu.matmul %230, %231, %cst_120 {dimension_numbers = #tpu.dot_dimension_numbers<[1], [0], [0], [1], [0, 0, 1, 1], [], []>} : vector<32x800xbf16>, vector<800x256xbf16>, vector<32x256xf32> -> vector<32x256xf32>
    %233 = vector.extract_strided_slice %18 {offsets = [32, 0], sizes = [32, 1], strides = [1, 1]} : vector<96x1xf32> to vector<32x1xf32>
    %234 = vector.broadcast %233 : vector<32x1xf32> to vector<32x256xf32>
    %235 = arith.addf %232, %234 : vector<32x256xf32>
    %c1 = arith.constant 1 : index
    %c0_121 = arith.constant 0 : index
    %c0_122 = arith.constant 0 : index
    %236 = vector.load %arg20[%c1, %c0_121, %c0_122] : memref<3x32x256xf32, #tpu.memory_space<vmem>>, vector<1x32x256xf32>
    %237 = vector.shape_cast %236 : vector<1x32x256xf32> to vector<32x256xf32>
    %238 = vector.shape_cast %235 : vector<32x256xf32> to vector<1x32x256xf32>
    tpu.vector_store %arg20[%c1, %c0_121, %c0_122], %238 {strides = array<i32>} : memref<3x32x256xf32, #tpu.memory_space<vmem>>, vector<1x32x256xf32>,
    %c64_123 = arith.constant 64 : index
    %c0_124 = arith.constant 0 : index
    %239 = vector.load %arg19[%c64_123, %c0_124] : memref<96x256xf32, #tpu.memory_space<vmem>>, vector<32x256xf32>
    %c51_i32 = arith.constant 51 : i32
    %240 = tpu.dynamic_rotate %239 by %c51_i32 dim 1 : vector<32x256xf32>, i32 -> vector<32x256xf32>
    %c0_125 = arith.constant 0 : index
    %c0_126 = arith.constant 0 : index
    %241 = vector.load %arg3[%c0_125, %c0_126] : memref<49x256xf32, #tpu.memory_space<vmem>>, vector<1x256xf32>
    %242 = vector.broadcast %241 : vector<1x256xf32> to vector<32x256xf32>
    %243 = arith.mulf %240, %242 : vector<32x256xf32>
    %244 = arith.truncf %243 : vector<32x256xf32> to vector<32x256xbf16>
    %c0_127 = arith.constant 0 : index
    %c0_128 = arith.constant 0 : index
    %245 = vector.load %arg18[%c0_127, %c0_128] : memref<1568x256xbf16, #tpu.memory_space<vmem>>, vector<32x256xbf16>
    tpu.vector_store %arg18[%c0_127, %c0_128], %244 {strides = array<i32>} : memref<1568x256xbf16, #tpu.memory_space<vmem>>, vector<32x256xbf16>,
    %c50_i32 = arith.constant 50 : i32
    %246 = tpu.dynamic_rotate %239 by %c50_i32 dim 1 : vector<32x256xf32>, i32 -> vector<32x256xf32>
    %c1_129 = arith.constant 1 : index
    %c0_130 = arith.constant 0 : index
    %247 = vector.load %arg3[%c1_129, %c0_130] : memref<49x256xf32, #tpu.memory_space<vmem>>, vector<1x256xf32>
    %248 = vector.broadcast %247 : vector<1x256xf32> to vector<32x256xf32>
    %249 = arith.mulf %246, %248 : vector<32x256xf32>
    %250 = arith.truncf %249 : vector<32x256xf32> to vector<32x256xbf16>
    %c32_131 = arith.constant 32 : index
    %c0_132 = arith.constant 0 : index
    %251 = vector.load %arg18[%c32_131, %c0_132] : memref<1568x256xbf16, #tpu.memory_space<vmem>>, vector<32x256xbf16>
    tpu.vector_store %arg18[%c32_131, %c0_132], %250 {strides = array<i32>} : memref<1568x256xbf16, #tpu.memory_space<vmem>>, vector<32x256xbf16>,
    %c49_i32 = arith.constant 49 : i32
    %252 = tpu.dynamic_rotate %239 by %c49_i32 dim 1 : vector<32x256xf32>, i32 -> vector<32x256xf32>
    %c2 = arith.constant 2 : index
    %c0_133 = arith.constant 0 : index
    %253 = vector.load %arg3[%c2, %c0_133] : memref<49x256xf32, #tpu.memory_space<vmem>>, vector<1x256xf32>
    %254 = vector.broadcast %253 : vector<1x256xf32> to vector<32x256xf32>
    %255 = arith.mulf %252, %254 : vector<32x256xf32>
    %256 = arith.truncf %255 : vector<32x256xf32> to vector<32x256xbf16>
    %c64_134 = arith.constant 64 : index
    %c0_135 = arith.constant 0 : index
    %257 = vector.load %arg18[%c64_134, %c0_135] : memref<1568x256xbf16, #tpu.memory_space<vmem>>, vector<32x256xbf16>
    tpu.vector_store %arg18[%c64_134, %c0_135], %256 {strides = array<i32>} : memref<1568x256xbf16, #tpu.memory_space<vmem>>, vector<32x256xbf16>,
    %c48_i32 = arith.constant 48 : i32
    %258 = tpu.dynamic_rotate %239 by %c48_i32 dim 1 : vector<32x256xf32>, i32 -> vector<32x256xf32>
    %c3 = arith.constant 3 : index
    %c0_136 = arith.constant 0 : index
    %259 = vector.load %arg3[%c3, %c0_136] : memref<49x256xf32, #tpu.memory_space<vmem>>, vector<1x256xf32>
    %260 = vector.broadcast %259 : vector<1x256xf32> to vector<32x256xf32>
    %261 = arith.mulf %258, %260 : vector<32x256xf32>
    %262 = arith.truncf %261 : vector<32x256xf32> to vector<32x256xbf16>
    %c96_137 = arith.constant 96 : index
    %c0_138 = arith.constant 0 : index
    %263 = vector.load %arg18[%c96_137, %c0_138] : memref<1568x256xbf16, #tpu.memory_space<vmem>>, vector<32x256xbf16>
    tpu.vector_store %arg18[%c96_137, %c0_138], %262 {strides = array<i32>} : memref<1568x256xbf16, #tpu.memory_space<vmem>>, vector<32x256xbf16>,
    %c47_i32 = arith.constant 47 : i32
    %264 = tpu.dynamic_rotate %239 by %c47_i32 dim 1 : vector<32x256xf32>, i32 -> vector<32x256xf32>
    %c4 = arith.constant 4 : index
    %c0_139 = arith.constant 0 : index
    %265 = vector.load %arg3[%c4, %c0_139] : memref<49x256xf32, #tpu.memory_space<vmem>>, vector<1x256xf32>
    %266 = vector.broadcast %265 : vector<1x256xf32> to vector<32x256xf32>
    %267 = arith.mulf %264, %266 : vector<32x256xf32>
    %268 = arith.truncf %267 : vector<32x256xf32> to vector<32x256xbf16>
    %c128_140 = arith.constant 128 : index
    %c0_141 = arith.constant 0 : index
    %269 = vector.load %arg18[%c128_140, %c0_141] : memref<1568x256xbf16, #tpu.memory_space<vmem>>, vector<32x256xbf16>
    tpu.vector_store %arg18[%c128_140, %c0_141], %268 {strides = array<i32>} : memref<1568x256xbf16, #tpu.memory_space<vmem>>, vector<32x256xbf16>,
    %c46_i32 = arith.constant 46 : i32
    %270 = tpu.dynamic_rotate %239 by %c46_i32 dim 1 : vector<32x256xf32>, i32 -> vector<32x256xf32>
    %c5 = arith.constant 5 : index
    %c0_142 = arith.constant 0 : index
    %271 = vector.load %arg3[%c5, %c0_142] : memref<49x256xf32, #tpu.memory_space<vmem>>, vector<1x256xf32>
    %272 = vector.broadcast %271 : vector<1x256xf32> to vector<32x256xf32>
    %273 = arith.mulf %270, %272 : vector<32x256xf32>
    %274 = arith.truncf %273 : vector<32x256xf32> to vector<32x256xbf16>
    %c160_143 = arith.constant 160 : index
    %c0_144 = arith.constant 0 : index
    %275 = vector.load %arg18[%c160_143, %c0_144] : memref<1568x256xbf16, #tpu.memory_space<vmem>>, vector<32x256xbf16>
    tpu.vector_store %arg18[%c160_143, %c0_144], %274 {strides = array<i32>} : memref<1568x256xbf16, #tpu.memory_space<vmem>>, vector<32x256xbf16>,
    %c45_i32 = arith.constant 45 : i32
    %276 = tpu.dynamic_rotate %239 by %c45_i32 dim 1 : vector<32x256xf32>, i32 -> vector<32x256xf32>
    %c6 = arith.constant 6 : index
    %c0_145 = arith.constant 0 : index
    %277 = vector.load %arg3[%c6, %c0_145] : memref<49x256xf32, #tpu.memory_space<vmem>>, vector<1x256xf32>
    %278 = vector.broadcast %277 : vector<1x256xf32> to vector<32x256xf32>
    %279 = arith.mulf %276, %278 : vector<32x256xf32>
    %280 = arith.truncf %279 : vector<32x256xf32> to vector<32x256xbf16>
    %c192_146 = arith.constant 192 : index
    %c0_147 = arith.constant 0 : index
    %281 = vector.load %arg18[%c192_146, %c0_147] : memref<1568x256xbf16, #tpu.memory_space<vmem>>, vector<32x256xbf16>
    tpu.vector_store %arg18[%c192_146, %c0_147], %280 {strides = array<i32>} : memref<1568x256xbf16, #tpu.memory_space<vmem>>, vector<32x256xbf16>,
    %c35_i32 = arith.constant 35 : i32
    %282 = tpu.dynamic_rotate %239 by %c35_i32 dim 1 : vector<32x256xf32>, i32 -> vector<32x256xf32>
    %c7 = arith.constant 7 : index
    %c0_148 = arith.constant 0 : index
    %283 = vector.load %arg3[%c7, %c0_148] : memref<49x256xf32, #tpu.memory_space<vmem>>, vector<1x256xf32>
    %284 = vector.broadcast %283 : vector<1x256xf32> to vector<32x256xf32>
    %285 = arith.mulf %282, %284 : vector<32x256xf32>
    %286 = arith.truncf %285 : vector<32x256xf32> to vector<32x256xbf16>
    %c224_149 = arith.constant 224 : index
    %c0_150 = arith.constant 0 : index
    %287 = vector.load %arg18[%c224_149, %c0_150] : memref<1568x256xbf16, #tpu.memory_space<vmem>>, vector<32x256xbf16>
    tpu.vector_store %arg18[%c224_149, %c0_150], %286 {strides = array<i32>} : memref<1568x256xbf16, #tpu.memory_space<vmem>>, vector<32x256xbf16>,
    %c34_i32_151 = arith.constant 34 : i32
    %288 = tpu.dynamic_rotate %239 by %c34_i32_151 dim 1 : vector<32x256xf32>, i32 -> vector<32x256xf32>
    %c8_152 = arith.constant 8 : index
    %c0_153 = arith.constant 0 : index
    %289 = vector.load %arg3[%c8_152, %c0_153] : memref<49x256xf32, #tpu.memory_space<vmem>>, vector<1x256xf32>
    %290 = vector.broadcast %289 : vector<1x256xf32> to vector<32x256xf32>
    %291 = arith.mulf %288, %290 : vector<32x256xf32>
    %292 = arith.truncf %291 : vector<32x256xf32> to vector<32x256xbf16>
    %c256_154 = arith.constant 256 : index
    %c0_155 = arith.constant 0 : index
    %293 = vector.load %arg18[%c256_154, %c0_155] : memref<1568x256xbf16, #tpu.memory_space<vmem>>, vector<32x256xbf16>
    tpu.vector_store %arg18[%c256_154, %c0_155], %292 {strides = array<i32>} : memref<1568x256xbf16, #tpu.memory_space<vmem>>, vector<32x256xbf16>,
    %c33_i32_156 = arith.constant 33 : i32
    %294 = tpu.dynamic_rotate %239 by %c33_i32_156 dim 1 : vector<32x256xf32>, i32 -> vector<32x256xf32>
    %c9_157 = arith.constant 9 : index
    %c0_158 = arith.constant 0 : index
    %295 = vector.load %arg3[%c9_157, %c0_158] : memref<49x256xf32, #tpu.memory_space<vmem>>, vector<1x256xf32>
    %296 = vector.broadcast %295 : vector<1x256xf32> to vector<32x256xf32>
    %297 = arith.mulf %294, %296 : vector<32x256xf32>
    %298 = arith.truncf %297 : vector<32x256xf32> to vector<32x256xbf16>
    %c288_159 = arith.constant 288 : index
    %c0_160 = arith.constant 0 : index
    %299 = vector.load %arg18[%c288_159, %c0_160] : memref<1568x256xbf16, #tpu.memory_space<vmem>>, vector<32x256xbf16>
    tpu.vector_store %arg18[%c288_159, %c0_160], %298 {strides = array<i32>} : memref<1568x256xbf16, #tpu.memory_space<vmem>>, vector<32x256xbf16>,
    %c32_i32_161 = arith.constant 32 : i32
    %300 = tpu.dynamic_rotate %239 by %c32_i32_161 dim 1 : vector<32x256xf32>, i32 -> vector<32x256xf32>
    %c10_162 = arith.constant 10 : index
    %c0_163 = arith.constant 0 : index
    %301 = vector.load %arg3[%c10_162, %c0_163] : memref<49x256xf32, #tpu.memory_space<vmem>>, vector<1x256xf32>
    %302 = vector.broadcast %301 : vector<1x256xf32> to vector<32x256xf32>
    %303 = arith.mulf %300, %302 : vector<32x256xf32>
    %304 = arith.truncf %303 : vector<32x256xf32> to vector<32x256xbf16>
    %c320_164 = arith.constant 320 : index
    %c0_165 = arith.constant 0 : index
    %305 = vector.load %arg18[%c320_164, %c0_165] : memref<1568x256xbf16, #tpu.memory_space<vmem>>, vector<32x256xbf16>
    tpu.vector_store %arg18[%c320_164, %c0_165], %304 {strides = array<i32>} : memref<1568x256xbf16, #tpu.memory_space<vmem>>, vector<32x256xbf16>,
    %c31_i32_166 = arith.constant 31 : i32
    %306 = tpu.dynamic_rotate %239 by %c31_i32_166 dim 1 : vector<32x256xf32>, i32 -> vector<32x256xf32>
    %c11_167 = arith.constant 11 : index
    %c0_168 = arith.constant 0 : index
    %307 = vector.load %arg3[%c11_167, %c0_168] : memref<49x256xf32, #tpu.memory_space<vmem>>, vector<1x256xf32>
    %308 = vector.broadcast %307 : vector<1x256xf32> to vector<32x256xf32>
    %309 = arith.mulf %306, %308 : vector<32x256xf32>
    %310 = arith.truncf %309 : vector<32x256xf32> to vector<32x256xbf16>
    %c352_169 = arith.constant 352 : index
    %c0_170 = arith.constant 0 : index
    %311 = vector.load %arg18[%c352_169, %c0_170] : memref<1568x256xbf16, #tpu.memory_space<vmem>>, vector<32x256xbf16>
    tpu.vector_store %arg18[%c352_169, %c0_170], %310 {strides = array<i32>} : memref<1568x256xbf16, #tpu.memory_space<vmem>>, vector<32x256xbf16>,
    %c30_i32_171 = arith.constant 30 : i32
    %312 = tpu.dynamic_rotate %239 by %c30_i32_171 dim 1 : vector<32x256xf32>, i32 -> vector<32x256xf32>
    %c12_172 = arith.constant 12 : index
    %c0_173 = arith.constant 0 : index
    %313 = vector.load %arg3[%c12_172, %c0_173] : memref<49x256xf32, #tpu.memory_space<vmem>>, vector<1x256xf32>
    %314 = vector.broadcast %313 : vector<1x256xf32> to vector<32x256xf32>
    %315 = arith.mulf %312, %314 : vector<32x256xf32>
    %316 = arith.truncf %315 : vector<32x256xf32> to vector<32x256xbf16>
    %c384_174 = arith.constant 384 : index
    %c0_175 = arith.constant 0 : index
    %317 = vector.load %arg18[%c384_174, %c0_175] : memref<1568x256xbf16, #tpu.memory_space<vmem>>, vector<32x256xbf16>
    tpu.vector_store %arg18[%c384_174, %c0_175], %316 {strides = array<i32>} : memref<1568x256xbf16, #tpu.memory_space<vmem>>, vector<32x256xbf16>,
    %c29_i32 = arith.constant 29 : i32
    %318 = tpu.dynamic_rotate %239 by %c29_i32 dim 1 : vector<32x256xf32>, i32 -> vector<32x256xf32>
    %c13 = arith.constant 13 : index
    %c0_176 = arith.constant 0 : index
    %319 = vector.load %arg3[%c13, %c0_176] : memref<49x256xf32, #tpu.memory_space<vmem>>, vector<1x256xf32>
    %320 = vector.broadcast %319 : vector<1x256xf32> to vector<32x256xf32>
    %321 = arith.mulf %318, %320 : vector<32x256xf32>
    %322 = arith.truncf %321 : vector<32x256xf32> to vector<32x256xbf16>
    %c416_177 = arith.constant 416 : index
    %c0_178 = arith.constant 0 : index
    %323 = vector.load %arg18[%c416_177, %c0_178] : memref<1568x256xbf16, #tpu.memory_space<vmem>>, vector<32x256xbf16>
    tpu.vector_store %arg18[%c416_177, %c0_178], %322 {strides = array<i32>} : memref<1568x256xbf16, #tpu.memory_space<vmem>>, vector<32x256xbf16>,
    %c19_i32 = arith.constant 19 : i32
    %324 = tpu.dynamic_rotate %239 by %c19_i32 dim 1 : vector<32x256xf32>, i32 -> vector<32x256xf32>
    %c14 = arith.constant 14 : index
    %c0_179 = arith.constant 0 : index
    %325 = vector.load %arg3[%c14, %c0_179] : memref<49x256xf32, #tpu.memory_space<vmem>>, vector<1x256xf32>
    %326 = vector.broadcast %325 : vector<1x256xf32> to vector<32x256xf32>
    %327 = arith.mulf %324, %326 : vector<32x256xf32>
    %328 = arith.truncf %327 : vector<32x256xf32> to vector<32x256xbf16>
    %c448_180 = arith.constant 448 : index
    %c0_181 = arith.constant 0 : index
    %329 = vector.load %arg18[%c448_180, %c0_181] : memref<1568x256xbf16, #tpu.memory_space<vmem>>, vector<32x256xbf16>
    tpu.vector_store %arg18[%c448_180, %c0_181], %328 {strides = array<i32>} : memref<1568x256xbf16, #tpu.memory_space<vmem>>, vector<32x256xbf16>,
    %c18_i32_182 = arith.constant 18 : i32
    %330 = tpu.dynamic_rotate %239 by %c18_i32_182 dim 1 : vector<32x256xf32>, i32 -> vector<32x256xf32>
    %c15_183 = arith.constant 15 : index
    %c0_184 = arith.constant 0 : index
    %331 = vector.load %arg3[%c15_183, %c0_184] : memref<49x256xf32, #tpu.memory_space<vmem>>, vector<1x256xf32>
    %332 = vector.broadcast %331 : vector<1x256xf32> to vector<32x256xf32>
    %333 = arith.mulf %330, %332 : vector<32x256xf32>
    %334 = arith.truncf %333 : vector<32x256xf32> to vector<32x256xbf16>
    %c480_185 = arith.constant 480 : index
    %c0_186 = arith.constant 0 : index
    %335 = vector.load %arg18[%c480_185, %c0_186] : memref<1568x256xbf16, #tpu.memory_space<vmem>>, vector<32x256xbf16>
    tpu.vector_store %arg18[%c480_185, %c0_186], %334 {strides = array<i32>} : memref<1568x256xbf16, #tpu.memory_space<vmem>>, vector<32x256xbf16>,
    %c17_i32_187 = arith.constant 17 : i32
    %336 = tpu.dynamic_rotate %239 by %c17_i32_187 dim 1 : vector<32x256xf32>, i32 -> vector<32x256xf32>
    %c16_188 = arith.constant 16 : index
    %c0_189 = arith.constant 0 : index
    %337 = vector.load %arg3[%c16_188, %c0_189] : memref<49x256xf32, #tpu.memory_space<vmem>>, vector<1x256xf32>
    %338 = vector.broadcast %337 : vector<1x256xf32> to vector<32x256xf32>
    %339 = arith.mulf %336, %338 : vector<32x256xf32>
    %340 = arith.truncf %339 : vector<32x256xf32> to vector<32x256xbf16>
    %c512_190 = arith.constant 512 : index
    %c0_191 = arith.constant 0 : index
    %341 = vector.load %arg18[%c512_190, %c0_191] : memref<1568x256xbf16, #tpu.memory_space<vmem>>, vector<32x256xbf16>
    tpu.vector_store %arg18[%c512_190, %c0_191], %340 {strides = array<i32>} : memref<1568x256xbf16, #tpu.memory_space<vmem>>, vector<32x256xbf16>,
    %c16_i32_192 = arith.constant 16 : i32
    %342 = tpu.dynamic_rotate %239 by %c16_i32_192 dim 1 : vector<32x256xf32>, i32 -> vector<32x256xf32>
    %c17_193 = arith.constant 17 : index
    %c0_194 = arith.constant 0 : index
    %343 = vector.load %arg3[%c17_193, %c0_194] : memref<49x256xf32, #tpu.memory_space<vmem>>, vector<1x256xf32>
    %344 = vector.broadcast %343 : vector<1x256xf32> to vector<32x256xf32>
    %345 = arith.mulf %342, %344 : vector<32x256xf32>
    %346 = arith.truncf %345 : vector<32x256xf32> to vector<32x256xbf16>
    %c544_195 = arith.constant 544 : index
    %c0_196 = arith.constant 0 : index
    %347 = vector.load %arg18[%c544_195, %c0_196] : memref<1568x256xbf16, #tpu.memory_space<vmem>>, vector<32x256xbf16>
    tpu.vector_store %arg18[%c544_195, %c0_196], %346 {strides = array<i32>} : memref<1568x256xbf16, #tpu.memory_space<vmem>>, vector<32x256xbf16>,
    %c15_i32_197 = arith.constant 15 : i32
    %348 = tpu.dynamic_rotate %239 by %c15_i32_197 dim 1 : vector<32x256xf32>, i32 -> vector<32x256xf32>
    %c18_198 = arith.constant 18 : index
    %c0_199 = arith.constant 0 : index
    %349 = vector.load %arg3[%c18_198, %c0_199] : memref<49x256xf32, #tpu.memory_space<vmem>>, vector<1x256xf32>
    %350 = vector.broadcast %349 : vector<1x256xf32> to vector<32x256xf32>
    %351 = arith.mulf %348, %350 : vector<32x256xf32>
    %352 = arith.truncf %351 : vector<32x256xf32> to vector<32x256xbf16>
    %c576_200 = arith.constant 576 : index
    %c0_201 = arith.constant 0 : index
    %353 = vector.load %arg18[%c576_200, %c0_201] : memref<1568x256xbf16, #tpu.memory_space<vmem>>, vector<32x256xbf16>
    tpu.vector_store %arg18[%c576_200, %c0_201], %352 {strides = array<i32>} : memref<1568x256xbf16, #tpu.memory_space<vmem>>, vector<32x256xbf16>,
    %c14_i32_202 = arith.constant 14 : i32
    %354 = tpu.dynamic_rotate %239 by %c14_i32_202 dim 1 : vector<32x256xf32>, i32 -> vector<32x256xf32>
    %c19_203 = arith.constant 19 : index
    %c0_204 = arith.constant 0 : index
    %355 = vector.load %arg3[%c19_203, %c0_204] : memref<49x256xf32, #tpu.memory_space<vmem>>, vector<1x256xf32>
    %356 = vector.broadcast %355 : vector<1x256xf32> to vector<32x256xf32>
    %357 = arith.mulf %354, %356 : vector<32x256xf32>
    %358 = arith.truncf %357 : vector<32x256xf32> to vector<32x256xbf16>
    %c608_205 = arith.constant 608 : index
    %c0_206 = arith.constant 0 : index
    %359 = vector.load %arg18[%c608_205, %c0_206] : memref<1568x256xbf16, #tpu.memory_space<vmem>>, vector<32x256xbf16>
    tpu.vector_store %arg18[%c608_205, %c0_206], %358 {strides = array<i32>} : memref<1568x256xbf16, #tpu.memory_space<vmem>>, vector<32x256xbf16>,
    %c13_i32 = arith.constant 13 : i32
    %360 = tpu.dynamic_rotate %239 by %c13_i32 dim 1 : vector<32x256xf32>, i32 -> vector<32x256xf32>
    %c20 = arith.constant 20 : index
    %c0_207 = arith.constant 0 : index
    %361 = vector.load %arg3[%c20, %c0_207] : memref<49x256xf32, #tpu.memory_space<vmem>>, vector<1x256xf32>
    %362 = vector.broadcast %361 : vector<1x256xf32> to vector<32x256xf32>
    %363 = arith.mulf %360, %362 : vector<32x256xf32>
    %364 = arith.truncf %363 : vector<32x256xf32> to vector<32x256xbf16>
    %c640_208 = arith.constant 640 : index
    %c0_209 = arith.constant 0 : index
    %365 = vector.load %arg18[%c640_208, %c0_209] : memref<1568x256xbf16, #tpu.memory_space<vmem>>, vector<32x256xbf16>
    tpu.vector_store %arg18[%c640_208, %c0_209], %364 {strides = array<i32>} : memref<1568x256xbf16, #tpu.memory_space<vmem>>, vector<32x256xbf16>,
    %c3_i32 = arith.constant 3 : i32
    %366 = tpu.dynamic_rotate %239 by %c3_i32 dim 1 : vector<32x256xf32>, i32 -> vector<32x256xf32>
    %c21 = arith.constant 21 : index
    %c0_210 = arith.constant 0 : index
    %367 = vector.load %arg3[%c21, %c0_210] : memref<49x256xf32, #tpu.memory_space<vmem>>, vector<1x256xf32>
    %368 = vector.broadcast %367 : vector<1x256xf32> to vector<32x256xf32>
    %369 = arith.mulf %366, %368 : vector<32x256xf32>
    %370 = arith.truncf %369 : vector<32x256xf32> to vector<32x256xbf16>
    %c672_211 = arith.constant 672 : index
    %c0_212 = arith.constant 0 : index
    %371 = vector.load %arg18[%c672_211, %c0_212] : memref<1568x256xbf16, #tpu.memory_space<vmem>>, vector<32x256xbf16>
    tpu.vector_store %arg18[%c672_211, %c0_212], %370 {strides = array<i32>} : memref<1568x256xbf16, #tpu.memory_space<vmem>>, vector<32x256xbf16>,
    %c2_i32_213 = arith.constant 2 : i32
    %372 = tpu.dynamic_rotate %239 by %c2_i32_213 dim 1 : vector<32x256xf32>, i32 -> vector<32x256xf32>
    %c22_214 = arith.constant 22 : index
    %c0_215 = arith.constant 0 : index
    %373 = vector.load %arg3[%c22_214, %c0_215] : memref<49x256xf32, #tpu.memory_space<vmem>>, vector<1x256xf32>
    %374 = vector.broadcast %373 : vector<1x256xf32> to vector<32x256xf32>
    %375 = arith.mulf %372, %374 : vector<32x256xf32>
    %376 = arith.truncf %375 : vector<32x256xf32> to vector<32x256xbf16>
    %c704_216 = arith.constant 704 : index
    %c0_217 = arith.constant 0 : index
    %377 = vector.load %arg18[%c704_216, %c0_217] : memref<1568x256xbf16, #tpu.memory_space<vmem>>, vector<32x256xbf16>
    tpu.vector_store %arg18[%c704_216, %c0_217], %376 {strides = array<i32>} : memref<1568x256xbf16, #tpu.memory_space<vmem>>, vector<32x256xbf16>,
    %c1_i32_218 = arith.constant 1 : i32
    %378 = tpu.dynamic_rotate %239 by %c1_i32_218 dim 1 : vector<32x256xf32>, i32 -> vector<32x256xf32>
    %c23_219 = arith.constant 23 : index
    %c0_220 = arith.constant 0 : index
    %379 = vector.load %arg3[%c23_219, %c0_220] : memref<49x256xf32, #tpu.memory_space<vmem>>, vector<1x256xf32>
    %380 = vector.broadcast %379 : vector<1x256xf32> to vector<32x256xf32>
    %381 = arith.mulf %378, %380 : vector<32x256xf32>
    %382 = arith.truncf %381 : vector<32x256xf32> to vector<32x256xbf16>
    %c736_221 = arith.constant 736 : index
    %c0_222 = arith.constant 0 : index
    %383 = vector.load %arg18[%c736_221, %c0_222] : memref<1568x256xbf16, #tpu.memory_space<vmem>>, vector<32x256xbf16>
    tpu.vector_store %arg18[%c736_221, %c0_222], %382 {strides = array<i32>} : memref<1568x256xbf16, #tpu.memory_space<vmem>>, vector<32x256xbf16>,
    %384 = arith.truncf %239 : vector<32x256xf32> to vector<32x256xbf16>
    %c768_223 = arith.constant 768 : index
    %c0_224 = arith.constant 0 : index
    %385 = vector.load %arg18[%c768_223, %c0_224] : memref<1568x256xbf16, #tpu.memory_space<vmem>>, vector<32x256xbf16>
    tpu.vector_store %arg18[%c768_223, %c0_224], %384 {strides = array<i32>} : memref<1568x256xbf16, #tpu.memory_space<vmem>>, vector<32x256xbf16>,
    %c255_i32_225 = arith.constant 255 : i32
    %386 = tpu.dynamic_rotate %239 by %c255_i32_225 dim 1 : vector<32x256xf32>, i32 -> vector<32x256xf32>
    %c25_226 = arith.constant 25 : index
    %c0_227 = arith.constant 0 : index
    %387 = vector.load %arg3[%c25_226, %c0_227] : memref<49x256xf32, #tpu.memory_space<vmem>>, vector<1x256xf32>
    %388 = vector.broadcast %387 : vector<1x256xf32> to vector<32x256xf32>
    %389 = arith.mulf %386, %388 : vector<32x256xf32>
    %390 = arith.truncf %389 : vector<32x256xf32> to vector<32x256xbf16>
    %c800 = arith.constant 800 : index
    %c0_228 = arith.constant 0 : index
    %391 = vector.load %arg18[%c800, %c0_228] : memref<1568x256xbf16, #tpu.memory_space<vmem>>, vector<32x256xbf16>
    tpu.vector_store %arg18[%c800, %c0_228], %390 {strides = array<i32>} : memref<1568x256xbf16, #tpu.memory_space<vmem>>, vector<32x256xbf16>,
    %c254_i32_229 = arith.constant 254 : i32
    %392 = tpu.dynamic_rotate %239 by %c254_i32_229 dim 1 : vector<32x256xf32>, i32 -> vector<32x256xf32>
    %c26_230 = arith.constant 26 : index
    %c0_231 = arith.constant 0 : index
    %393 = vector.load %arg3[%c26_230, %c0_231] : memref<49x256xf32, #tpu.memory_space<vmem>>, vector<1x256xf32>
    %394 = vector.broadcast %393 : vector<1x256xf32> to vector<32x256xf32>
    %395 = arith.mulf %392, %394 : vector<32x256xf32>
    %396 = arith.truncf %395 : vector<32x256xf32> to vector<32x256xbf16>
    %c832 = arith.constant 832 : index
    %c0_232 = arith.constant 0 : index
    %397 = vector.load %arg18[%c832, %c0_232] : memref<1568x256xbf16, #tpu.memory_space<vmem>>, vector<32x256xbf16>
    tpu.vector_store %arg18[%c832, %c0_232], %396 {strides = array<i32>} : memref<1568x256xbf16, #tpu.memory_space<vmem>>, vector<32x256xbf16>,
    %c253_i32 = arith.constant 253 : i32
    %398 = tpu.dynamic_rotate %239 by %c253_i32 dim 1 : vector<32x256xf32>, i32 -> vector<32x256xf32>
    %c27 = arith.constant 27 : index
    %c0_233 = arith.constant 0 : index
    %399 = vector.load %arg3[%c27, %c0_233] : memref<49x256xf32, #tpu.memory_space<vmem>>, vector<1x256xf32>
    %400 = vector.broadcast %399 : vector<1x256xf32> to vector<32x256xf32>
    %401 = arith.mulf %398, %400 : vector<32x256xf32>
    %402 = arith.truncf %401 : vector<32x256xf32> to vector<32x256xbf16>
    %c864 = arith.constant 864 : index
    %c0_234 = arith.constant 0 : index
    %403 = vector.load %arg18[%c864, %c0_234] : memref<1568x256xbf16, #tpu.memory_space<vmem>>, vector<32x256xbf16>
    tpu.vector_store %arg18[%c864, %c0_234], %402 {strides = array<i32>} : memref<1568x256xbf16, #tpu.memory_space<vmem>>, vector<32x256xbf16>,
    %c243_i32 = arith.constant 243 : i32
    %404 = tpu.dynamic_rotate %239 by %c243_i32 dim 1 : vector<32x256xf32>, i32 -> vector<32x256xf32>
    %c28 = arith.constant 28 : index
    %c0_235 = arith.constant 0 : index
    %405 = vector.load %arg3[%c28, %c0_235] : memref<49x256xf32, #tpu.memory_space<vmem>>, vector<1x256xf32>
    %406 = vector.broadcast %405 : vector<1x256xf32> to vector<32x256xf32>
    %407 = arith.mulf %404, %406 : vector<32x256xf32>
    %408 = arith.truncf %407 : vector<32x256xf32> to vector<32x256xbf16>
    %c896 = arith.constant 896 : index
    %c0_236 = arith.constant 0 : index
    %409 = vector.load %arg18[%c896, %c0_236] : memref<1568x256xbf16, #tpu.memory_space<vmem>>, vector<32x256xbf16>
    tpu.vector_store %arg18[%c896, %c0_236], %408 {strides = array<i32>} : memref<1568x256xbf16, #tpu.memory_space<vmem>>, vector<32x256xbf16>,
    %c242_i32_237 = arith.constant 242 : i32
    %410 = tpu.dynamic_rotate %239 by %c242_i32_237 dim 1 : vector<32x256xf32>, i32 -> vector<32x256xf32>
    %c29_238 = arith.constant 29 : index
    %c0_239 = arith.constant 0 : index
    %411 = vector.load %arg3[%c29_238, %c0_239] : memref<49x256xf32, #tpu.memory_space<vmem>>, vector<1x256xf32>
    %412 = vector.broadcast %411 : vector<1x256xf32> to vector<32x256xf32>
    %413 = arith.mulf %410, %412 : vector<32x256xf32>
    %414 = arith.truncf %413 : vector<32x256xf32> to vector<32x256xbf16>
    %c928 = arith.constant 928 : index
    %c0_240 = arith.constant 0 : index
    %415 = vector.load %arg18[%c928, %c0_240] : memref<1568x256xbf16, #tpu.memory_space<vmem>>, vector<32x256xbf16>
    tpu.vector_store %arg18[%c928, %c0_240], %414 {strides = array<i32>} : memref<1568x256xbf16, #tpu.memory_space<vmem>>, vector<32x256xbf16>,
    %c241_i32_241 = arith.constant 241 : i32
    %416 = tpu.dynamic_rotate %239 by %c241_i32_241 dim 1 : vector<32x256xf32>, i32 -> vector<32x256xf32>
    %c30_242 = arith.constant 30 : index
    %c0_243 = arith.constant 0 : index
    %417 = vector.load %arg3[%c30_242, %c0_243] : memref<49x256xf32, #tpu.memory_space<vmem>>, vector<1x256xf32>
    %418 = vector.broadcast %417 : vector<1x256xf32> to vector<32x256xf32>
    %419 = arith.mulf %416, %418 : vector<32x256xf32>
    %420 = arith.truncf %419 : vector<32x256xf32> to vector<32x256xbf16>
    %c960 = arith.constant 960 : index
    %c0_244 = arith.constant 0 : index
    %421 = vector.load %arg18[%c960, %c0_244] : memref<1568x256xbf16, #tpu.memory_space<vmem>>, vector<32x256xbf16>
    tpu.vector_store %arg18[%c960, %c0_244], %420 {strides = array<i32>} : memref<1568x256xbf16, #tpu.memory_space<vmem>>, vector<32x256xbf16>,
    %c240_i32_245 = arith.constant 240 : i32
    %422 = tpu.dynamic_rotate %239 by %c240_i32_245 dim 1 : vector<32x256xf32>, i32 -> vector<32x256xf32>
    %c31_246 = arith.constant 31 : index
    %c0_247 = arith.constant 0 : index
    %423 = vector.load %arg3[%c31_246, %c0_247] : memref<49x256xf32, #tpu.memory_space<vmem>>, vector<1x256xf32>
    %424 = vector.broadcast %423 : vector<1x256xf32> to vector<32x256xf32>
    %425 = arith.mulf %422, %424 : vector<32x256xf32>
    %426 = arith.truncf %425 : vector<32x256xf32> to vector<32x256xbf16>
    %c992 = arith.constant 992 : index
    %c0_248 = arith.constant 0 : index
    %427 = vector.load %arg18[%c992, %c0_248] : memref<1568x256xbf16, #tpu.memory_space<vmem>>, vector<32x256xbf16>
    tpu.vector_store %arg18[%c992, %c0_248], %426 {strides = array<i32>} : memref<1568x256xbf16, #tpu.memory_space<vmem>>, vector<32x256xbf16>,
    %c239_i32_249 = arith.constant 239 : i32
    %428 = tpu.dynamic_rotate %239 by %c239_i32_249 dim 1 : vector<32x256xf32>, i32 -> vector<32x256xf32>
    %c32_250 = arith.constant 32 : index
    %c0_251 = arith.constant 0 : index
    %429 = vector.load %arg3[%c32_250, %c0_251] : memref<49x256xf32, #tpu.memory_space<vmem>>, vector<1x256xf32>
    %430 = vector.broadcast %429 : vector<1x256xf32> to vector<32x256xf32>
    %431 = arith.mulf %428, %430 : vector<32x256xf32>
    %432 = arith.truncf %431 : vector<32x256xf32> to vector<32x256xbf16>
    %c1024 = arith.constant 1024 : index
    %c0_252 = arith.constant 0 : index
    %433 = vector.load %arg18[%c1024, %c0_252] : memref<1568x256xbf16, #tpu.memory_space<vmem>>, vector<32x256xbf16>
    tpu.vector_store %arg18[%c1024, %c0_252], %432 {strides = array<i32>} : memref<1568x256xbf16, #tpu.memory_space<vmem>>, vector<32x256xbf16>,
    %c238_i32_253 = arith.constant 238 : i32
    %434 = tpu.dynamic_rotate %239 by %c238_i32_253 dim 1 : vector<32x256xf32>, i32 -> vector<32x256xf32>
    %c33_254 = arith.constant 33 : index
    %c0_255 = arith.constant 0 : index
    %435 = vector.load %arg3[%c33_254, %c0_255] : memref<49x256xf32, #tpu.memory_space<vmem>>, vector<1x256xf32>
    %436 = vector.broadcast %435 : vector<1x256xf32> to vector<32x256xf32>
    %437 = arith.mulf %434, %436 : vector<32x256xf32>
    %438 = arith.truncf %437 : vector<32x256xf32> to vector<32x256xbf16>
    %c1056 = arith.constant 1056 : index
    %c0_256 = arith.constant 0 : index
    %439 = vector.load %arg18[%c1056, %c0_256] : memref<1568x256xbf16, #tpu.memory_space<vmem>>, vector<32x256xbf16>
    tpu.vector_store %arg18[%c1056, %c0_256], %438 {strides = array<i32>} : memref<1568x256xbf16, #tpu.memory_space<vmem>>, vector<32x256xbf16>,
    %c237_i32 = arith.constant 237 : i32
    %440 = tpu.dynamic_rotate %239 by %c237_i32 dim 1 : vector<32x256xf32>, i32 -> vector<32x256xf32>
    %c34 = arith.constant 34 : index
    %c0_257 = arith.constant 0 : index
    %441 = vector.load %arg3[%c34, %c0_257] : memref<49x256xf32, #tpu.memory_space<vmem>>, vector<1x256xf32>
    %442 = vector.broadcast %441 : vector<1x256xf32> to vector<32x256xf32>
    %443 = arith.mulf %440, %442 : vector<32x256xf32>
    %444 = arith.truncf %443 : vector<32x256xf32> to vector<32x256xbf16>
    %c1088 = arith.constant 1088 : index
    %c0_258 = arith.constant 0 : index
    %445 = vector.load %arg18[%c1088, %c0_258] : memref<1568x256xbf16, #tpu.memory_space<vmem>>, vector<32x256xbf16>
    tpu.vector_store %arg18[%c1088, %c0_258], %444 {strides = array<i32>} : memref<1568x256xbf16, #tpu.memory_space<vmem>>, vector<32x256xbf16>,
    %c227_i32 = arith.constant 227 : i32
    %446 = tpu.dynamic_rotate %239 by %c227_i32 dim 1 : vector<32x256xf32>, i32 -> vector<32x256xf32>
    %c35 = arith.constant 35 : index
    %c0_259 = arith.constant 0 : index
    %447 = vector.load %arg3[%c35, %c0_259] : memref<49x256xf32, #tpu.memory_space<vmem>>, vector<1x256xf32>
    %448 = vector.broadcast %447 : vector<1x256xf32> to vector<32x256xf32>
    %449 = arith.mulf %446, %448 : vector<32x256xf32>
    %450 = arith.truncf %449 : vector<32x256xf32> to vector<32x256xbf16>
    %c1120 = arith.constant 1120 : index
    %c0_260 = arith.constant 0 : index
    %451 = vector.load %arg18[%c1120, %c0_260] : memref<1568x256xbf16, #tpu.memory_space<vmem>>, vector<32x256xbf16>
    tpu.vector_store %arg18[%c1120, %c0_260], %450 {strides = array<i32>} : memref<1568x256xbf16, #tpu.memory_space<vmem>>, vector<32x256xbf16>,
    %c226_i32_261 = arith.constant 226 : i32
    %452 = tpu.dynamic_rotate %239 by %c226_i32_261 dim 1 : vector<32x256xf32>, i32 -> vector<32x256xf32>
    %c36_262 = arith.constant 36 : index
    %c0_263 = arith.constant 0 : index
    %453 = vector.load %arg3[%c36_262, %c0_263] : memref<49x256xf32, #tpu.memory_space<vmem>>, vector<1x256xf32>
    %454 = vector.broadcast %453 : vector<1x256xf32> to vector<32x256xf32>
    %455 = arith.mulf %452, %454 : vector<32x256xf32>
    %456 = arith.truncf %455 : vector<32x256xf32> to vector<32x256xbf16>
    %c1152 = arith.constant 1152 : index
    %c0_264 = arith.constant 0 : index
    %457 = vector.load %arg18[%c1152, %c0_264] : memref<1568x256xbf16, #tpu.memory_space<vmem>>, vector<32x256xbf16>
    tpu.vector_store %arg18[%c1152, %c0_264], %456 {strides = array<i32>} : memref<1568x256xbf16, #tpu.memory_space<vmem>>, vector<32x256xbf16>,
    %c225_i32_265 = arith.constant 225 : i32
    %458 = tpu.dynamic_rotate %239 by %c225_i32_265 dim 1 : vector<32x256xf32>, i32 -> vector<32x256xf32>
    %c37_266 = arith.constant 37 : index
    %c0_267 = arith.constant 0 : index
    %459 = vector.load %arg3[%c37_266, %c0_267] : memref<49x256xf32, #tpu.memory_space<vmem>>, vector<1x256xf32>
    %460 = vector.broadcast %459 : vector<1x256xf32> to vector<32x256xf32>
    %461 = arith.mulf %458, %460 : vector<32x256xf32>
    %462 = arith.truncf %461 : vector<32x256xf32> to vector<32x256xbf16>
    %c1184 = arith.constant 1184 : index
    %c0_268 = arith.constant 0 : index
    %463 = vector.load %arg18[%c1184, %c0_268] : memref<1568x256xbf16, #tpu.memory_space<vmem>>, vector<32x256xbf16>
    tpu.vector_store %arg18[%c1184, %c0_268], %462 {strides = array<i32>} : memref<1568x256xbf16, #tpu.memory_space<vmem>>, vector<32x256xbf16>,
    %c224_i32_269 = arith.constant 224 : i32
    %464 = tpu.dynamic_rotate %239 by %c224_i32_269 dim 1 : vector<32x256xf32>, i32 -> vector<32x256xf32>
    %c38_270 = arith.constant 38 : index
    %c0_271 = arith.constant 0 : index
    %465 = vector.load %arg3[%c38_270, %c0_271] : memref<49x256xf32, #tpu.memory_space<vmem>>, vector<1x256xf32>
    %466 = vector.broadcast %465 : vector<1x256xf32> to vector<32x256xf32>
    %467 = arith.mulf %464, %466 : vector<32x256xf32>
    %468 = arith.truncf %467 : vector<32x256xf32> to vector<32x256xbf16>
    %c1216 = arith.constant 1216 : index
    %c0_272 = arith.constant 0 : index
    %469 = vector.load %arg18[%c1216, %c0_272] : memref<1568x256xbf16, #tpu.memory_space<vmem>>, vector<32x256xbf16>
    tpu.vector_store %arg18[%c1216, %c0_272], %468 {strides = array<i32>} : memref<1568x256xbf16, #tpu.memory_space<vmem>>, vector<32x256xbf16>,
    %c223_i32_273 = arith.constant 223 : i32
    %470 = tpu.dynamic_rotate %239 by %c223_i32_273 dim 1 : vector<32x256xf32>, i32 -> vector<32x256xf32>
    %c39_274 = arith.constant 39 : index
    %c0_275 = arith.constant 0 : index
    %471 = vector.load %arg3[%c39_274, %c0_275] : memref<49x256xf32, #tpu.memory_space<vmem>>, vector<1x256xf32>
    %472 = vector.broadcast %471 : vector<1x256xf32> to vector<32x256xf32>
    %473 = arith.mulf %470, %472 : vector<32x256xf32>
    %474 = arith.truncf %473 : vector<32x256xf32> to vector<32x256xbf16>
    %c1248 = arith.constant 1248 : index
    %c0_276 = arith.constant 0 : index
    %475 = vector.load %arg18[%c1248, %c0_276] : memref<1568x256xbf16, #tpu.memory_space<vmem>>, vector<32x256xbf16>
    tpu.vector_store %arg18[%c1248, %c0_276], %474 {strides = array<i32>} : memref<1568x256xbf16, #tpu.memory_space<vmem>>, vector<32x256xbf16>,
    %c222_i32_277 = arith.constant 222 : i32
    %476 = tpu.dynamic_rotate %239 by %c222_i32_277 dim 1 : vector<32x256xf32>, i32 -> vector<32x256xf32>
    %c40_278 = arith.constant 40 : index
    %c0_279 = arith.constant 0 : index
    %477 = vector.load %arg3[%c40_278, %c0_279] : memref<49x256xf32, #tpu.memory_space<vmem>>, vector<1x256xf32>
    %478 = vector.broadcast %477 : vector<1x256xf32> to vector<32x256xf32>
    %479 = arith.mulf %476, %478 : vector<32x256xf32>
    %480 = arith.truncf %479 : vector<32x256xf32> to vector<32x256xbf16>
    %c1280 = arith.constant 1280 : index
    %c0_280 = arith.constant 0 : index
    %481 = vector.load %arg18[%c1280, %c0_280] : memref<1568x256xbf16, #tpu.memory_space<vmem>>, vector<32x256xbf16>
    tpu.vector_store %arg18[%c1280, %c0_280], %480 {strides = array<i32>} : memref<1568x256xbf16, #tpu.memory_space<vmem>>, vector<32x256xbf16>,
    %c221_i32 = arith.constant 221 : i32
    %482 = tpu.dynamic_rotate %239 by %c221_i32 dim 1 : vector<32x256xf32>, i32 -> vector<32x256xf32>
    %c41 = arith.constant 41 : index
    %c0_281 = arith.constant 0 : index
    %483 = vector.load %arg3[%c41, %c0_281] : memref<49x256xf32, #tpu.memory_space<vmem>>, vector<1x256xf32>
    %484 = vector.broadcast %483 : vector<1x256xf32> to vector<32x256xf32>
    %485 = arith.mulf %482, %484 : vector<32x256xf32>
    %486 = arith.truncf %485 : vector<32x256xf32> to vector<32x256xbf16>
    %c1312 = arith.constant 1312 : index
    %c0_282 = arith.constant 0 : index
    %487 = vector.load %arg18[%c1312, %c0_282] : memref<1568x256xbf16, #tpu.memory_space<vmem>>, vector<32x256xbf16>
    tpu.vector_store %arg18[%c1312, %c0_282], %486 {strides = array<i32>} : memref<1568x256xbf16, #tpu.memory_space<vmem>>, vector<32x256xbf16>,
    %c211_i32 = arith.constant 211 : i32
    %488 = tpu.dynamic_rotate %239 by %c211_i32 dim 1 : vector<32x256xf32>, i32 -> vector<32x256xf32>
    %c42 = arith.constant 42 : index
    %c0_283 = arith.constant 0 : index
    %489 = vector.load %arg3[%c42, %c0_283] : memref<49x256xf32, #tpu.memory_space<vmem>>, vector<1x256xf32>
    %490 = vector.broadcast %489 : vector<1x256xf32> to vector<32x256xf32>
    %491 = arith.mulf %488, %490 : vector<32x256xf32>
    %492 = arith.truncf %491 : vector<32x256xf32> to vector<32x256xbf16>
    %c1344 = arith.constant 1344 : index
    %c0_284 = arith.constant 0 : index
    %493 = vector.load %arg18[%c1344, %c0_284] : memref<1568x256xbf16, #tpu.memory_space<vmem>>, vector<32x256xbf16>
    tpu.vector_store %arg18[%c1344, %c0_284], %492 {strides = array<i32>} : memref<1568x256xbf16, #tpu.memory_space<vmem>>, vector<32x256xbf16>,
    %c210_i32 = arith.constant 210 : i32
    %494 = tpu.dynamic_rotate %239 by %c210_i32 dim 1 : vector<32x256xf32>, i32 -> vector<32x256xf32>
    %c43 = arith.constant 43 : index
    %c0_285 = arith.constant 0 : index
    %495 = vector.load %arg3[%c43, %c0_285] : memref<49x256xf32, #tpu.memory_space<vmem>>, vector<1x256xf32>
    %496 = vector.broadcast %495 : vector<1x256xf32> to vector<32x256xf32>
    %497 = arith.mulf %494, %496 : vector<32x256xf32>
    %498 = arith.truncf %497 : vector<32x256xf32> to vector<32x256xbf16>
    %c1376 = arith.constant 1376 : index
    %c0_286 = arith.constant 0 : index
    %499 = vector.load %arg18[%c1376, %c0_286] : memref<1568x256xbf16, #tpu.memory_space<vmem>>, vector<32x256xbf16>
    tpu.vector_store %arg18[%c1376, %c0_286], %498 {strides = array<i32>} : memref<1568x256xbf16, #tpu.memory_space<vmem>>, vector<32x256xbf16>,
    %c209_i32 = arith.constant 209 : i32
    %500 = tpu.dynamic_rotate %239 by %c209_i32 dim 1 : vector<32x256xf32>, i32 -> vector<32x256xf32>
    %c44 = arith.constant 44 : index
    %c0_287 = arith.constant 0 : index
    %501 = vector.load %arg3[%c44, %c0_287] : memref<49x256xf32, #tpu.memory_space<vmem>>, vector<1x256xf32>
    %502 = vector.broadcast %501 : vector<1x256xf32> to vector<32x256xf32>
    %503 = arith.mulf %500, %502 : vector<32x256xf32>
    %504 = arith.truncf %503 : vector<32x256xf32> to vector<32x256xbf16>
    %c1408 = arith.constant 1408 : index
    %c0_288 = arith.constant 0 : index
    %505 = vector.load %arg18[%c1408, %c0_288] : memref<1568x256xbf16, #tpu.memory_space<vmem>>, vector<32x256xbf16>
    tpu.vector_store %arg18[%c1408, %c0_288], %504 {strides = array<i32>} : memref<1568x256xbf16, #tpu.memory_space<vmem>>, vector<32x256xbf16>,
    %c208_i32 = arith.constant 208 : i32
    %506 = tpu.dynamic_rotate %239 by %c208_i32 dim 1 : vector<32x256xf32>, i32 -> vector<32x256xf32>
    %c45 = arith.constant 45 : index
    %c0_289 = arith.constant 0 : index
    %507 = vector.load %arg3[%c45, %c0_289] : memref<49x256xf32, #tpu.memory_space<vmem>>, vector<1x256xf32>
    %508 = vector.broadcast %507 : vector<1x256xf32> to vector<32x256xf32>
    %509 = arith.mulf %506, %508 : vector<32x256xf32>
    %510 = arith.truncf %509 : vector<32x256xf32> to vector<32x256xbf16>
    %c1440 = arith.constant 1440 : index
    %c0_290 = arith.constant 0 : index
    %511 = vector.load %arg18[%c1440, %c0_290] : memref<1568x256xbf16, #tpu.memory_space<vmem>>, vector<32x256xbf16>
    tpu.vector_store %arg18[%c1440, %c0_290], %510 {strides = array<i32>} : memref<1568x256xbf16, #tpu.memory_space<vmem>>, vector<32x256xbf16>,
    %c207_i32 = arith.constant 207 : i32
    %512 = tpu.dynamic_rotate %239 by %c207_i32 dim 1 : vector<32x256xf32>, i32 -> vector<32x256xf32>
    %c46 = arith.constant 46 : index
    %c0_291 = arith.constant 0 : index
    %513 = vector.load %arg3[%c46, %c0_291] : memref<49x256xf32, #tpu.memory_space<vmem>>, vector<1x256xf32>
    %514 = vector.broadcast %513 : vector<1x256xf32> to vector<32x256xf32>
    %515 = arith.mulf %512, %514 : vector<32x256xf32>
    %516 = arith.truncf %515 : vector<32x256xf32> to vector<32x256xbf16>
    %c1472 = arith.constant 1472 : index
    %c0_292 = arith.constant 0 : index
    %517 = vector.load %arg18[%c1472, %c0_292] : memref<1568x256xbf16, #tpu.memory_space<vmem>>, vector<32x256xbf16>
    tpu.vector_store %arg18[%c1472, %c0_292], %516 {strides = array<i32>} : memref<1568x256xbf16, #tpu.memory_space<vmem>>, vector<32x256xbf16>,
    %c206_i32 = arith.constant 206 : i32
    %518 = tpu.dynamic_rotate %239 by %c206_i32 dim 1 : vector<32x256xf32>, i32 -> vector<32x256xf32>
    %c47 = arith.constant 47 : index
    %c0_293 = arith.constant 0 : index
    %519 = vector.load %arg3[%c47, %c0_293] : memref<49x256xf32, #tpu.memory_space<vmem>>, vector<1x256xf32>
    %520 = vector.broadcast %519 : vector<1x256xf32> to vector<32x256xf32>
    %521 = arith.mulf %518, %520 : vector<32x256xf32>
    %522 = arith.truncf %521 : vector<32x256xf32> to vector<32x256xbf16>
    %c1504 = arith.constant 1504 : index
    %c0_294 = arith.constant 0 : index
    %523 = vector.load %arg18[%c1504, %c0_294] : memref<1568x256xbf16, #tpu.memory_space<vmem>>, vector<32x256xbf16>
    tpu.vector_store %arg18[%c1504, %c0_294], %522 {strides = array<i32>} : memref<1568x256xbf16, #tpu.memory_space<vmem>>, vector<32x256xbf16>,
    %c205_i32 = arith.constant 205 : i32
    %524 = tpu.dynamic_rotate %239 by %c205_i32 dim 1 : vector<32x256xf32>, i32 -> vector<32x256xf32>
    %c48 = arith.constant 48 : index
    %c0_295 = arith.constant 0 : index
    %525 = vector.load %arg3[%c48, %c0_295] : memref<49x256xf32, #tpu.memory_space<vmem>>, vector<1x256xf32>
    %526 = vector.broadcast %525 : vector<1x256xf32> to vector<32x256xf32>
    %527 = arith.mulf %524, %526 : vector<32x256xf32>
    %528 = arith.truncf %527 : vector<32x256xf32> to vector<32x256xbf16>
    %c1536 = arith.constant 1536 : index
    %c0_296 = arith.constant 0 : index
    %529 = vector.load %arg18[%c1536, %c0_296] : memref<1568x256xbf16, #tpu.memory_space<vmem>>, vector<32x256xbf16>
    tpu.vector_store %arg18[%c1536, %c0_296], %528 {strides = array<i32>} : memref<1568x256xbf16, #tpu.memory_space<vmem>>, vector<32x256xbf16>,
    %530 = arith.index_cast %arg1 : i32 to index
    %c0_297 = arith.constant 0 : index
    %c0_298 = arith.constant 0 : index
    %531 = vector.load %arg8[%530, %c0_297, %c0_298] : memref<2x32x1568xbf16, #tpu.memory_space<vmem>>, vector<1x32x1568xbf16>
    %532 = vector.shape_cast %531 : vector<1x32x1568xbf16> to vector<32x1568xbf16>
    %c0_299 = arith.constant 0 : index
    %c0_300 = arith.constant 0 : index
    %533 = vector.load %arg18[%c0_299, %c0_300] : memref<1568x256xbf16, #tpu.memory_space<vmem>>, vector<1568x256xbf16>
    %cst_301 = arith.constant dense<0.000000e+00> : vector<32x256xf32>
    %534 = tpu.matmul %532, %533, %cst_301 {dimension_numbers = #tpu.dot_dimension_numbers<[1], [0], [0], [1], [0, 0, 1, 1], [], []>} : vector<32x1568xbf16>, vector<1568x256xbf16>, vector<32x256xf32> -> vector<32x256xf32>
    %535 = vector.extract_strided_slice %18 {offsets = [64, 0], sizes = [32, 1], strides = [1, 1]} : vector<96x1xf32> to vector<32x1xf32>
    %536 = vector.broadcast %535 : vector<32x1xf32> to vector<32x256xf32>
    %537 = arith.addf %534, %536 : vector<32x256xf32>
    %c2_302 = arith.constant 2 : index
    %c0_303 = arith.constant 0 : index
    %c0_304 = arith.constant 0 : index
    %538 = vector.load %arg20[%c2_302, %c0_303, %c0_304] : memref<3x32x256xf32, #tpu.memory_space<vmem>>, vector<1x32x256xf32>
    %539 = vector.shape_cast %538 : vector<1x32x256xf32> to vector<32x256xf32>
    %540 = vector.shape_cast %537 : vector<32x256xf32> to vector<1x32x256xf32>
    tpu.vector_store %arg20[%c2_302, %c0_303, %c0_304], %540 {strides = array<i32>} : memref<3x32x256xf32, #tpu.memory_space<vmem>>, vector<1x32x256xf32>,
    %c0_305 = arith.constant 0 : index
    %c0_306 = arith.constant 0 : index
    %c0_307 = arith.constant 0 : index
    %541 = vector.load %arg20[%c0_305, %c0_306, %c0_307] : memref<3x32x256xf32, #tpu.memory_space<vmem>>, vector<1x32x256xf32>
    %542 = vector.shape_cast %541 : vector<1x32x256xf32> to vector<32x256xf32>
    %c1_308 = arith.constant 1 : index
    %c0_309 = arith.constant 0 : index
    %c0_310 = arith.constant 0 : index
    %543 = vector.load %arg20[%c1_308, %c0_309, %c0_310] : memref<3x32x256xf32, #tpu.memory_space<vmem>>, vector<1x32x256xf32>
    %544 = vector.shape_cast %543 : vector<1x32x256xf32> to vector<32x256xf32>
    %545 = arith.addf %542, %544 : vector<32x256xf32>
    %c2_311 = arith.constant 2 : index
    %c0_312 = arith.constant 0 : index
    %c0_313 = arith.constant 0 : index
    %546 = vector.load %arg20[%c2_311, %c0_312, %c0_313] : memref<3x32x256xf32, #tpu.memory_space<vmem>>, vector<1x32x256xf32>
    %547 = vector.shape_cast %546 : vector<1x32x256xf32> to vector<32x256xf32>
    %548 = arith.addf %545, %547 : vector<32x256xf32>
    %cst_314 = arith.constant dense<0.000000e+00> : vector<32xf32>
    %549 = vector.multi_reduction <add>, %548, %cst_314 [1] : vector<32x256xf32> to vector<32xf32>
    %550 = vector.shape_cast %549 : vector<32xf32> to vector<32x1xf32>
    %cst_315 = arith.constant 2.560000e+02 : f32
    %551 = vector.broadcast %cst_315 : f32 to vector<32x1xf32>
    %552 = arith.divf %550, %551 : vector<32x1xf32>
    %553 = arith.index_cast %arg1 : i32 to index
    %c0_316 = arith.constant 0 : index
    %c0_317 = arith.constant 0 : index
    %554 = vector.load %arg10[%553, %c0_316, %c0_317] : memref<2x16x32xf32, #tpu.memory_space<vmem>>, vector<1x16x32xf32>
    %555 = vector.shape_cast %554 : vector<1x16x32xf32> to vector<16x32xf32>
    %cst_318 = arith.constant dense<0.000000e+00> : vector<16x1xf32>
    %556 = tpu.matmul %555, %552, %cst_318 {dimension_numbers = #tpu.dot_dimension_numbers<[1], [0], [0], [1], [0, 0, 1, 1], [], []>} : vector<16x32xf32>, vector<32x1xf32>, vector<16x1xf32> -> vector<16x1xf32>
    %557 = arith.index_cast %arg1 : i32 to index
    %c0_319 = arith.constant 0 : index
    %c0_320 = arith.constant 0 : index
    %558 = vector.load %arg11[%557, %c0_319, %c0_320] : memref<2x16x1xf32, #tpu.memory_space<vmem>>, vector<1x16x1xf32>
    %559 = vector.shape_cast %558 : vector<1x16x1xf32> to vector<16x1xf32>
    %560 = arith.addf %556, %559 : vector<16x1xf32>
    %cst_321 = arith.constant 0.000000e+00 : f32
    %561 = vector.broadcast %cst_321 : f32 to vector<16x1xf32>
    %562 = arith.maximumf %560, %561 : vector<16x1xf32>
    %563 = arith.index_cast %arg1 : i32 to index
    %c0_322 = arith.constant 0 : index
    %c0_323 = arith.constant 0 : index
    %c0_324 = arith.constant 0 : index
    %564 = vector.load %arg12[%563, %c0_322, %c0_323, %c0_324] : memref<2x3x32x16xf32, #tpu.memory_space<vmem>>, vector<1x3x32x16xf32>
    %565 = vector.shape_cast %564 : vector<1x3x32x16xf32> to vector<3x32x16xf32>
    %566 = arith.index_cast %arg1 : i32 to index
    %c0_325 = arith.constant 0 : index
    %c0_326 = arith.constant 0 : index
    %c0_327 = arith.constant 0 : index
    %567 = vector.load %arg13[%566, %c0_325, %c0_326, %c0_327] : memref<2x3x32x1xf32, #tpu.memory_space<vmem>>, vector<1x3x32x1xf32>
    %568 = vector.shape_cast %567 : vector<1x3x32x1xf32> to vector<3x32x1xf32>
    %569 = vector.extract_strided_slice %565 {offsets = [0, 0, 0], sizes = [1, 32, 16], strides = [1, 1, 1]} : vector<3x32x16xf32> to vector<1x32x16xf32>
    %570 = vector.shape_cast %569 : vector<1x32x16xf32> to vector<32x16xf32>
    %cst_328 = arith.constant dense<0.000000e+00> : vector<32x1xf32>
    %571 = tpu.matmul %570, %562, %cst_328 {dimension_numbers = #tpu.dot_dimension_numbers<[1], [0], [0], [1], [0, 0, 1, 1], [], []>} : vector<32x16xf32>, vector<16x1xf32>, vector<32x1xf32> -> vector<32x1xf32>
    %572 = vector.extract_strided_slice %568 {offsets = [0, 0, 0], sizes = [1, 32, 1], strides = [1, 1, 1]} : vector<3x32x1xf32> to vector<1x32x1xf32>
    %573 = vector.shape_cast %572 : vector<1x32x1xf32> to vector<32x1xf32>
    %574 = arith.addf %571, %573 : vector<32x1xf32>
    %cst_329 = arith.constant dense<0xFF800000> : vector<1xf32>
    %575 = vector.multi_reduction <maximumf>, %574, %cst_329 [0] : vector<32x1xf32> to vector<1xf32>
    %576 = vector.shape_cast %575 : vector<1xf32> to vector<1x1xf32>
    %577 = vector.broadcast %576 : vector<1x1xf32> to vector<32x1xf32>
    %578 = arith.subf %574, %577 : vector<32x1xf32>
    %579 = math.exp %578 : vector<32x1xf32>
    %cst_330 = arith.constant dense<0.000000e+00> : vector<1xf32>
    %580 = vector.multi_reduction <add>, %579, %cst_330 [0] : vector<32x1xf32> to vector<1xf32>
    %581 = vector.shape_cast %580 : vector<1xf32> to vector<1x1xf32>
    %582 = vector.broadcast %581 : vector<1x1xf32> to vector<32x1xf32>
    %583 = arith.divf %579, %582 : vector<32x1xf32>
    %c0_331 = arith.constant 0 : index
    %c0_332 = arith.constant 0 : index
    %c0_333 = arith.constant 0 : index
    %584 = vector.load %arg20[%c0_331, %c0_332, %c0_333] : memref<3x32x256xf32, #tpu.memory_space<vmem>>, vector<1x32x256xf32>
    %585 = vector.shape_cast %584 : vector<1x32x256xf32> to vector<32x256xf32>
    %586 = vector.broadcast %583 : vector<32x1xf32> to vector<32x256xf32>
    %587 = arith.mulf %586, %585 : vector<32x256xf32>
    %588 = vector.extract_strided_slice %565 {offsets = [1, 0, 0], sizes = [1, 32, 16], strides = [1, 1, 1]} : vector<3x32x16xf32> to vector<1x32x16xf32>
    %589 = vector.shape_cast %588 : vector<1x32x16xf32> to vector<32x16xf32>
    %cst_334 = arith.constant dense<0.000000e+00> : vector<32x1xf32>
    %590 = tpu.matmul %589, %562, %cst_334 {dimension_numbers = #tpu.dot_dimension_numbers<[1], [0], [0], [1], [0, 0, 1, 1], [], []>} : vector<32x16xf32>, vector<16x1xf32>, vector<32x1xf32> -> vector<32x1xf32>
    %591 = vector.extract_strided_slice %568 {offsets = [1, 0, 0], sizes = [1, 32, 1], strides = [1, 1, 1]} : vector<3x32x1xf32> to vector<1x32x1xf32>
    %592 = vector.shape_cast %591 : vector<1x32x1xf32> to vector<32x1xf32>
    %593 = arith.addf %590, %592 : vector<32x1xf32>
    %cst_335 = arith.constant dense<0xFF800000> : vector<1xf32>
    %594 = vector.multi_reduction <maximumf>, %593, %cst_335 [0] : vector<32x1xf32> to vector<1xf32>
    %595 = vector.shape_cast %594 : vector<1xf32> to vector<1x1xf32>
    %596 = vector.broadcast %595 : vector<1x1xf32> to vector<32x1xf32>
    %597 = arith.subf %593, %596 : vector<32x1xf32>
    %598 = math.exp %597 : vector<32x1xf32>
    %cst_336 = arith.constant dense<0.000000e+00> : vector<1xf32>
    %599 = vector.multi_reduction <add>, %598, %cst_336 [0] : vector<32x1xf32> to vector<1xf32>
    %600 = vector.shape_cast %599 : vector<1xf32> to vector<1x1xf32>
    %601 = vector.broadcast %600 : vector<1x1xf32> to vector<32x1xf32>
    %602 = arith.divf %598, %601 : vector<32x1xf32>
    %c1_337 = arith.constant 1 : index
    %c0_338 = arith.constant 0 : index
    %c0_339 = arith.constant 0 : index
    %603 = vector.load %arg20[%c1_337, %c0_338, %c0_339] : memref<3x32x256xf32, #tpu.memory_space<vmem>>, vector<1x32x256xf32>
    %604 = vector.shape_cast %603 : vector<1x32x256xf32> to vector<32x256xf32>
    %605 = vector.broadcast %602 : vector<32x1xf32> to vector<32x256xf32>
    %606 = arith.mulf %605, %604 : vector<32x256xf32>
    %607 = arith.addf %587, %606 : vector<32x256xf32>
    %608 = vector.extract_strided_slice %565 {offsets = [2, 0, 0], sizes = [1, 32, 16], strides = [1, 1, 1]} : vector<3x32x16xf32> to vector<1x32x16xf32>
    %609 = vector.shape_cast %608 : vector<1x32x16xf32> to vector<32x16xf32>
    %cst_340 = arith.constant dense<0.000000e+00> : vector<32x1xf32>
    %610 = tpu.matmul %609, %562, %cst_340 {dimension_numbers = #tpu.dot_dimension_numbers<[1], [0], [0], [1], [0, 0, 1, 1], [], []>} : vector<32x16xf32>, vector<16x1xf32>, vector<32x1xf32> -> vector<32x1xf32>
    %611 = vector.extract_strided_slice %568 {offsets = [2, 0, 0], sizes = [1, 32, 1], strides = [1, 1, 1]} : vector<3x32x1xf32> to vector<1x32x1xf32>
    %612 = vector.shape_cast %611 : vector<1x32x1xf32> to vector<32x1xf32>
    %613 = arith.addf %610, %612 : vector<32x1xf32>
    %cst_341 = arith.constant dense<0xFF800000> : vector<1xf32>
    %614 = vector.multi_reduction <maximumf>, %613, %cst_341 [0] : vector<32x1xf32> to vector<1xf32>
    %615 = vector.shape_cast %614 : vector<1xf32> to vector<1x1xf32>
    %616 = vector.broadcast %615 : vector<1x1xf32> to vector<32x1xf32>
    %617 = arith.subf %613, %616 : vector<32x1xf32>
    %618 = math.exp %617 : vector<32x1xf32>
    %cst_342 = arith.constant dense<0.000000e+00> : vector<1xf32>
    %619 = vector.multi_reduction <add>, %618, %cst_342 [0] : vector<32x1xf32> to vector<1xf32>
    %620 = vector.shape_cast %619 : vector<1xf32> to vector<1x1xf32>
    %621 = vector.broadcast %620 : vector<1x1xf32> to vector<32x1xf32>
    %622 = arith.divf %618, %621 : vector<32x1xf32>
    %c2_343 = arith.constant 2 : index
    %c0_344 = arith.constant 0 : index
    %c0_345 = arith.constant 0 : index
    %623 = vector.load %arg20[%c2_343, %c0_344, %c0_345] : memref<3x32x256xf32, #tpu.memory_space<vmem>>, vector<1x32x256xf32>
    %624 = vector.shape_cast %623 : vector<1x32x256xf32> to vector<32x256xf32>
    %625 = vector.broadcast %622 : vector<32x1xf32> to vector<32x256xf32>
    %626 = arith.mulf %625, %624 : vector<32x256xf32>
    %627 = arith.addf %607, %626 : vector<32x256xf32>
    %c0_346 = arith.constant 0 : index
    %c0_347 = arith.constant 0 : index
    %628 = vector.load %arg17[%c0_346, %c0_347] : memref<32x256xf32, #tpu.memory_space<vmem>>, vector<32x256xf32>
    %629 = arith.index_cast %arg1 : i32 to index
    %c0_348 = arith.constant 0 : index
    %c0_349 = arith.constant 0 : index
    %630 = vector.load %arg14[%629, %c0_348, %c0_349] : memref<2x32x32xbf16, #tpu.memory_space<vmem>>, vector<1x32x32xbf16>
    %631 = vector.shape_cast %630 : vector<1x32x32xbf16> to vector<32x32xbf16>
    %632 = arith.truncf %627 : vector<32x256xf32> to vector<32x256xbf16>
    %cst_350 = arith.constant dense<0.000000e+00> : vector<32x256xf32>
    %633 = tpu.matmul %631, %632, %cst_350 {dimension_numbers = #tpu.dot_dimension_numbers<[1], [0], [0], [1], [0, 0, 1, 1], [], []>} : vector<32x32xbf16>, vector<32x256xbf16>, vector<32x256xf32> -> vector<32x256xf32>
    %634 = arith.addf %628, %633 : vector<32x256xf32>
    %c0_351 = arith.constant 0 : index
    %c0_352 = arith.constant 0 : index
    %635 = vector.load %arg17[%c0_351, %c0_352] : memref<32x256xf32, #tpu.memory_space<vmem>>, vector<32x256xf32>
    tpu.vector_store %arg17[%c0_351, %c0_352], %634 {strides = array<i32>} : memref<32x256xf32, #tpu.memory_space<vmem>>, vector<32x256xf32>,
    %c1_i32_353 = arith.constant 1 : i32
    %636 = arith.cmpi eq, %arg1, %c1_i32_353 : i32
    %637 = arith.extui %636 : i1 to i32
    %c0_i32_354 = arith.constant 0 : i32
    %638 = arith.cmpi ne, %637, %c0_i32_354 : i32
    scf.if %638 {
      %c0_355 = arith.constant 0 : index
      %c0_356 = arith.constant 0 : index
      %639 = vector.load %arg17[%c0_355, %c0_356] : memref<32x256xf32, #tpu.memory_space<vmem>>, vector<32x256xf32>
      %c0_357 = arith.constant 0 : index
      %c0_358 = arith.constant 0 : index
      %c0_359 = arith.constant 0 : index
      %640 = vector.load %arg16[%c0_357, %c0_358, %c0_359] : memref<1x32x256xf32, #tpu.memory_space<vmem>>, vector<1x32x256xf32>
      %641 = vector.shape_cast %640 : vector<1x32x256xf32> to vector<32x256xf32>
      %642 = vector.shape_cast %639 : vector<32x256xf32> to vector<1x32x256xf32>
      tpu.vector_store %arg16[%c0_357, %c0_358, %c0_359], %642 {strides = array<i32>} : memref<1x32x256xf32, #tpu.memory_space<vmem>>, vector<1x32x256xf32>,
    } else {
    }
    return
  }
  func.func @transform_0(%arg0: i32, %arg1: i32) -> (i32, i32, i32) {
    %c0_i32 = arith.constant 0 : i32
    %c0_i32_0 = arith.constant 0 : i32
    %c0_i32_1 = arith.constant 0 : i32
    return %arg0, %c0_i32, %c0_i32_0 : i32, i32, i32
  }
  func.func @transform_1(%arg0: i32, %arg1: i32) -> (i32, i32) {
    %c0_i32 = arith.constant 0 : i32
    %c0_i32_0 = arith.constant 0 : i32
    %c0_i32_1 = arith.constant 0 : i32
    return %c0_i32, %c0_i32_0 : i32, i32
  }
  func.func @transform_2(%arg0: i32, %arg1: i32) -> (i32, i32, i32) {
    %c0_i32 = arith.constant 0 : i32
    %c0_i32_0 = arith.constant 0 : i32
    %c0_i32_1 = arith.constant 0 : i32
    %c0_i32_2 = arith.constant 0 : i32
    return %c0_i32, %c0_i32_0, %c0_i32_1 : i32, i32, i32
  }
  func.func @transform_3(%arg0: i32, %arg1: i32) -> (i32, i32, i32) {
    %c0_i32 = arith.constant 0 : i32
    %c0_i32_0 = arith.constant 0 : i32
    %c0_i32_1 = arith.constant 0 : i32
    %c0_i32_2 = arith.constant 0 : i32
    return %c0_i32, %c0_i32_0, %c0_i32_1 : i32, i32, i32
  }
  func.func @transform_4(%arg0: i32, %arg1: i32) -> (i32, i32, i32) {
    %c0_i32 = arith.constant 0 : i32
    %c0_i32_0 = arith.constant 0 : i32
    %c0_i32_1 = arith.constant 0 : i32
    %c0_i32_2 = arith.constant 0 : i32
    return %c0_i32, %c0_i32_0, %c0_i32_1 : i32, i32, i32
  }
  func.func @transform_5(%arg0: i32, %arg1: i32) -> (i32, i32, i32) {
    %c0_i32 = arith.constant 0 : i32
    %c0_i32_0 = arith.constant 0 : i32
    %c0_i32_1 = arith.constant 0 : i32
    %c0_i32_2 = arith.constant 0 : i32
    return %c0_i32, %c0_i32_0, %c0_i32_1 : i32, i32, i32
  }
  func.func @transform_6(%arg0: i32, %arg1: i32) -> (i32, i32, i32) {
    %c0_i32 = arith.constant 0 : i32
    %c0_i32_0 = arith.constant 0 : i32
    %c0_i32_1 = arith.constant 0 : i32
    %c0_i32_2 = arith.constant 0 : i32
    return %c0_i32, %c0_i32_0, %c0_i32_1 : i32, i32, i32
  }
  func.func @transform_7(%arg0: i32, %arg1: i32) -> (i32, i32, i32) {
    %c0_i32 = arith.constant 0 : i32
    %c0_i32_0 = arith.constant 0 : i32
    %c0_i32_1 = arith.constant 0 : i32
    %c0_i32_2 = arith.constant 0 : i32
    return %c0_i32, %c0_i32_0, %c0_i32_1 : i32, i32, i32
  }
  func.func @transform_8(%arg0: i32, %arg1: i32) -> (i32, i32, i32) {
    %c0_i32 = arith.constant 0 : i32
    %c0_i32_0 = arith.constant 0 : i32
    %c0_i32_1 = arith.constant 0 : i32
    %c0_i32_2 = arith.constant 0 : i32
    return %c0_i32, %c0_i32_0, %c0_i32_1 : i32, i32, i32
  }
  func.func @transform_9(%arg0: i32, %arg1: i32) -> (i32, i32, i32) {
    %c0_i32 = arith.constant 0 : i32
    %c0_i32_0 = arith.constant 0 : i32
    %c0_i32_1 = arith.constant 0 : i32
    %c0_i32_2 = arith.constant 0 : i32
    return %c0_i32, %c0_i32_0, %c0_i32_1 : i32, i32, i32
  }
  func.func @transform_10(%arg0: i32, %arg1: i32) -> (i32, i32, i32, i32) {
    %c0_i32 = arith.constant 0 : i32
    %c0_i32_0 = arith.constant 0 : i32
    %c0_i32_1 = arith.constant 0 : i32
    %c0_i32_2 = arith.constant 0 : i32
    %c0_i32_3 = arith.constant 0 : i32
    return %c0_i32, %c0_i32_0, %c0_i32_1, %c0_i32_2 : i32, i32, i32, i32
  }
  func.func @transform_11(%arg0: i32, %arg1: i32) -> (i32, i32, i32, i32) {
    %c0_i32 = arith.constant 0 : i32
    %c0_i32_0 = arith.constant 0 : i32
    %c0_i32_1 = arith.constant 0 : i32
    %c0_i32_2 = arith.constant 0 : i32
    %c0_i32_3 = arith.constant 0 : i32
    return %c0_i32, %c0_i32_0, %c0_i32_1, %c0_i32_2 : i32, i32, i32, i32
  }
  func.func @transform_12(%arg0: i32, %arg1: i32) -> (i32, i32, i32) {
    %c0_i32 = arith.constant 0 : i32
    %c0_i32_0 = arith.constant 0 : i32
    %c0_i32_1 = arith.constant 0 : i32
    %c0_i32_2 = arith.constant 0 : i32
    return %c0_i32, %c0_i32_0, %c0_i32_1 : i32, i32, i32
  }
  func.func @transform_13(%arg0: i32, %arg1: i32) -> (i32, i32) {
    %c0_i32 = arith.constant 0 : i32
    %c0_i32_0 = arith.constant 0 : i32
    %c0_i32_1 = arith.constant 0 : i32
    return %c0_i32, %c0_i32_0 : i32, i32
  }
  func.func @transform_14(%arg0: i32, %arg1: i32) -> (i32, i32, i32) {
    %c0_i32 = arith.constant 0 : i32
    %c0_i32_0 = arith.constant 0 : i32
    %c0_i32_1 = arith.constant 0 : i32
    return %arg0, %c0_i32, %c0_i32_0 : i32, i32, i32
  }
}

</mosaic_0001>

<llo_original>
// kernel: resnest_block.1
$region0: #{resnest_block.1}
  #allocation0 [shape = 'u32[]', space=smem, size = 0x4, offset = 0x4, fixed_abs, tag = 'smem constant byte address 0x4 - core index']
  #allocation1 [shape = 'u32[144,128]{1,0:T(1,128)}', space=vmem, size = 0x12000, scoped, tag = 'internal scratch']
  #allocation2 [shape = 'f32[32,256]{1,0:T(8,128)}', space=vmem, size = 0x8000, scoped, tag = 'scratch operand']
  #allocation3 [shape = 'bf16[1568,256]{1,0:T(16,128)(2,1)}', space=vmem, size = 0xc4000, scoped, tag = 'scratch operand']
  #allocation4 [shape = 'f32[96,256]{1,0:T(8,128)}', space=vmem, size = 0x18000, scoped, tag = 'scratch operand']
  #allocation5 [shape = 'f32[3,32,256]{2,1,0:T(8,128)}', space=vmem, size = 0x18000, scoped, tag = 'scratch operand']
  %s0 = inlined_call_operand.vmem [shape: f32[2,32,256], index: 0, kind: input, shape index: {}]
  %s1 = inlined_call_operand.vmem [shape: f32[49,256], index: 1, kind: input, shape index: {}]
  %s2 = inlined_call_operand.vmem [shape: bf16[2,96,32], index: 2, kind: input, shape index: {}]
  %s3 = inlined_call_operand.vmem [shape: f32[2,96,1], index: 3, kind: input, shape index: {}]
  %s4 = inlined_call_operand.vmem [shape: bf16[2,32,288], index: 4, kind: input, shape index: {}]
  %s5 = inlined_call_operand.vmem [shape: bf16[2,32,800], index: 5, kind: input, shape index: {}]
  %s6 = inlined_call_operand.vmem [shape: bf16[2,32,1568], index: 6, kind: input, shape index: {}]
  %s7 = inlined_call_operand.vmem [shape: f32[2,96,1], index: 7, kind: input, shape index: {}]
  %s8 = inlined_call_operand.vmem [shape: f32[2,16,32], index: 8, kind: input, shape index: {}]
  %s9 = inlined_call_operand.vmem [shape: f32[2,16,1], index: 9, kind: input, shape index: {}]
  %s10 = inlined_call_operand.vmem [shape: f32[2,3,32,16], index: 10, kind: input, shape index: {}]
  %s11 = inlined_call_operand.vmem [shape: f32[2,3,32,1], index: 11, kind: input, shape index: {}]
  %s12 = inlined_call_operand.vmem [shape: bf16[2,32,32], index: 12, kind: input, shape index: {}]
  %s13 = inlined_call_operand.vmem [shape: f32[32,1], index: 13, kind: input, shape index: {}]
  %s14 = inlined_call_operand.vmem [shape: f32[2,32,256], index: 14, kind: output, shape index: {}]
  %s15 = sld [smem:[#allocation0]]
  $region97: #{resnest_block.1} parent=0
    _
  %s17 = ssub.s32 1, %s15
  %s18 = scalar_select 0, %s17, %s15
  loop: start=0, step=1, limit=6
  $region2: #{resnest_block.1} parent=0 // loop_pre_header
    _
  $region3: #{resnest_block.1} parent=0 // loop_header
    %s20 = sphi 0, %s24
    %p21 = scmp.ge.s32.totalorder %s20, 6
    %s27 = sphi 0, %s39
    %s28 = sphi 0, %s35
    %s29 = sphi 0, %s27
    %s30 = sphi 0, %s28
    %s31 = sphi 0, %s29
    %s32 = sphi 0, %s30
    %s42 = sphi 0, %s44
    %s45 = sphi 0, %s42
    %s46 = sphi 0, %s45
    %s62 = sphi 0, %s46
    %s66 = sphi 0, %s66
    %s68 = sphi 0, %s66
    %s69 = sphi 0, %s68
    %s83 = sphi 0, %s69
    %s87 = sphi 0, %s87
    %s89 = sphi 0, %s87
    %s90 = sphi 0, %s89
    %s104 = sphi 0, %s90
    %s108 = sphi 0, %s108
    %s110 = sphi 0, %s108
    %s111 = sphi 0, %s110
    %s125 = sphi 0, %s111
    %s129 = sphi 0, %s129
    %s131 = sphi 0, %s129
    %s132 = sphi 0, %s131
    %s146 = sphi 0, %s132
    %s150 = sphi 0, %s150
    %s152 = sphi 0, %s150
    %s153 = sphi 0, %s152
    %s167 = sphi 0, %s153
    %s171 = sphi 0, %s171
    %s173 = sphi 0, %s171
    %s174 = sphi 0, %s173
    %s188 = sphi 0, %s174
    %s192 = sphi 0, %s192
    %s194 = sphi 0, %s192
    %s195 = sphi 0, %s194
    %s209 = sphi 0, %s195
    %s213 = sphi 0, %s213
    %s215 = sphi 0, %s213
    %s216 = sphi 0, %s215
    %s230 = sphi 0, %s216
    %s234 = sphi 0, %s234
    %s236 = sphi 0, %s234
    %s237 = sphi 0, %s236
    %s251 = sphi 0, %s237
    %s255 = sphi 0, %s255
    %s257 = sphi 0, %s255
    %s258 = sphi 0, %s257
    %s272 = sphi 0, %s258
    %s276 = sphi 0, %s276
    %s278 = sphi 0, %s276
    %s279 = sphi 0, %s278
    %s293 = sphi 0, %s279
    %s297 = sphi 0, %s297
    %s299 = sphi 0, %s297
    %s300 = sphi 0, %s299
    %s314 = sphi 0, %s300
    %s318 = sphi 0, %s318
    %s320 = sphi 0, %s318
    %s321 = sphi 0, %s320
    %s335 = sphi 0, %s321
    %s341 = sphi 0, %s343
    %s344 = sphi 0, %s341
    %s345 = sphi 0, %s344
    %s361 = sphi 0, %s345
  $region4: #{resnest_block.1} parent=0 // loop_header_branch
    %23 = sbr.rel (%p21) target = $region8
  $region5: #{resnest_block.1} parent=0 // loop_body
    %s25 = ssub.s32 %s20, 1
    %s26 = ssub.s32 %s20, 2
    %s33 = sadd.s32 1, %s28
    %p34 = scmp.ge.s32.totalorder %s33, 2
    %s35 = scalar_select %p34, 0, %s33
    %s36 = sadd.s32 1, %s27
    %s37 = scalar_select %p34, %s36, %s27
    %p38 = scmp.ge.s32.totalorder %s37, 2
    %s39 = scalar_select %p38, 0, %s37
    %s40 = ssub.s32 %s27, %s39
    %p41 = scmp.eq.s32.totalorder %s40, 0
    %s43 = sadd.s32 %s42, 1
    %s44 = scalar_select %p41, %s42, %s43
    %p47 = pneg %p41
    %p48 = scmp.eq.s32.totalorder %s20, 3
    %p49 = por %p47, %p48
    %p50 = scmp.ne.s32.totalorder %s42, %s45
    %p51 = scmp.eq.s32.totalorder %s20, 0
    %p52 = por %p50, %p51
    %p53 = scmp.ne.s32.totalorder %s42, %s45
    %p54 = scmp.eq.s32.totalorder %s25, 3
    %p55 = por %p53, %p54
    %p56 = scmp.ne.s32.totalorder %s45, %s46
    %p57 = scmp.eq.s32.totalorder %s25, 0
    %p58 = por %p56, %p57
    %p59 = scmp.ne.s32.totalorder %s45, %s46
    %p60 = scmp.eq.s32.totalorder %s26, 3
    %p61 = por %p59, %p60
    %p63 = scmp.ne.s32.totalorder %s46, %s62
    %p64 = scmp.eq.s32.totalorder %s26, 0
    %p65 = por %p63, %p64
    %s67 = sadd.s32 %s66, 1
    %p70 = scmp.eq.s32.totalorder %s20, 3
    %p71 = scmp.ne.s32.totalorder %s66, %s68
    %p72 = scmp.eq.s32.totalorder %s20, 0
    %p73 = por %p71, %p72
    %p74 = scmp.ne.s32.totalorder %s66, %s68
    %p75 = scmp.eq.s32.totalorder %s25, 3
    %p76 = por %p74, %p75
    %p77 = scmp.ne.s32.totalorder %s68, %s69
    %p78 = scmp.eq.s32.totalorder %s25, 0
    %p79 = por %p77, %p78
    %p80 = scmp.ne.s32.totalorder %s68, %s69
    %p81 = scmp.eq.s32.totalorder %s26, 3
    %p82 = por %p80, %p81
    %p84 = scmp.ne.s32.totalorder %s69, %s83
    %p85 = scmp.eq.s32.totalorder %s26, 0
    %p86 = por %p84, %p85
    %s88 = sadd.s32 %s87, 1
    %p91 = scmp.eq.s32.totalorder %s20, 3
    %p92 = scmp.ne.s32.totalorder %s87, %s89
    %p93 = scmp.eq.s32.totalorder %s20, 0
    %p94 = por %p92, %p93
    %p95 = scmp.ne.s32.totalorder %s87, %s89
    %p96 = scmp.eq.s32.totalorder %s25, 3
    %p97 = por %p95, %p96
    %p98 = scmp.ne.s32.totalorder %s89, %s90
    %p99 = scmp.eq.s32.totalorder %s25, 0
    %p100 = por %p98, %p99
    %p101 = scmp.ne.s32.totalorder %s89, %s90
    %p102 = scmp.eq.s32.totalorder %s26, 3
    %p103 = por %p101, %p102
    %p105 = scmp.ne.s32.totalorder %s90, %s104
    %p106 = scmp.eq.s32.totalorder %s26, 0
    %p107 = por %p105, %p106
    %s109 = sadd.s32 %s108, 1
    %p112 = scmp.eq.s32.totalorder %s20, 3
    %p113 = scmp.ne.s32.totalorder %s108, %s110
    %p114 = scmp.eq.s32.totalorder %s20, 0
    %p115 = por %p113, %p114
    %p116 = scmp.ne.s32.totalorder %s108, %s110
    %p117 = scmp.eq.s32.totalorder %s25, 3
    %p118 = por %p116, %p117
    %p119 = scmp.ne.s32.totalorder %s110, %s111
    %p120 = scmp.eq.s32.totalorder %s25, 0
    %p121 = por %p119, %p120
    %p122 = scmp.ne.s32.totalorder %s110, %s111
    %p123 = scmp.eq.s32.totalorder %s26, 3
    %p124 = por %p122, %p123
    %p126 = scmp.ne.s32.totalorder %s111, %s125
    %p127 = scmp.eq.s32.totalorder %s26, 0
    %p128 = por %p126, %p127
    %s130 = sadd.s32 %s129, 1
    %p133 = scmp.eq.s32.totalorder %s20, 3
    %p134 = scmp.ne.s32.totalorder %s129, %s131
    %p135 = scmp.eq.s32.totalorder %s20, 0
    %p136 = por %p134, %p135
    %p137 = scmp.ne.s32.totalorder %s129, %s131
    %p138 = scmp.eq.s32.totalorder %s25, 3
    %p139 = por %p137, %p138
    %p140 = scmp.ne.s32.totalorder %s131, %s132
    %p141 = scmp.eq.s32.totalorder %s25, 0
    %p142 = por %p140, %p141
    %p143 = scmp.ne.s32.totalorder %s131, %s132
    %p144 = scmp.eq.s32.totalorder %s26, 3
    %p145 = por %p143, %p144
    %p147 = scmp.ne.s32.totalorder %s132, %s146
    %p148 = scmp.eq.s32.totalorder %s26, 0
    %p149 = por %p147, %p148
    %s151 = sadd.s32 %s150, 1
    %p154 = scmp.eq.s32.totalorder %s20, 3
    %p155 = scmp.ne.s32.totalorder %s150, %s152
    %p156 = scmp.eq.s32.totalorder %s20, 0
    %p157 = por %p155, %p156
    %p158 = scmp.ne.s32.totalorder %s150, %s152
    %p159 = scmp.eq.s32.totalorder %s25, 3
    %p160 = por %p158, %p159
    %p161 = scmp.ne.s32.totalorder %s152, %s153
    %p162 = scmp.eq.s32.totalorder %s25, 0
    %p163 = por %p161, %p162
    %p164 = scmp.ne.s32.totalorder %s152, %s153
    %p165 = scmp.eq.s32.totalorder %s26, 3
    %p166 = por %p164, %p165
    %p168 = scmp.ne.s32.totalorder %s153, %s167
    %p169 = scmp.eq.s32.totalorder %s26, 0
    %p170 = por %p168, %p169
    %s172 = sadd.s32 %s171, 1
    %p175 = scmp.eq.s32.totalorder %s20, 3
    %p176 = scmp.ne.s32.totalorder %s171, %s173
    %p177 = scmp.eq.s32.totalorder %s20, 0
    %p178 = por %p176, %p177
    %p179 = scmp.ne.s32.totalorder %s171, %s173
    %p180 = scmp.eq.s32.totalorder %s25, 3
    %p181 = por %p179, %p180
    %p182 = scmp.ne.s32.totalorder %s173, %s174
    %p183 = scmp.eq.s32.totalorder %s25, 0
    %p184 = por %p182, %p183
    %p185 = scmp.ne.s32.totalorder %s173, %s174
    %p186 = scmp.eq.s32.totalorder %s26, 3
    %p187 = por %p185, %p186
    %p189 = scmp.ne.s32.totalorder %s174, %s188
    %p190 = scmp.eq.s32.totalorder %s26, 0
    %p191 = por %p189, %p190
    %s193 = sadd.s32 %s192, 1
    %p196 = scmp.eq.s32.totalorder %s20, 3
    %p197 = scmp.ne.s32.totalorder %s192, %s194
    %p198 = scmp.eq.s32.totalorder %s20, 0
    %p199 = por %p197, %p198
    %p200 = scmp.ne.s32.totalorder %s192, %s194
    %p201 = scmp.eq.s32.totalorder %s25, 3
    %p202 = por %p200, %p201
    %p203 = scmp.ne.s32.totalorder %s194, %s195
    %p204 = scmp.eq.s32.totalorder %s25, 0
    %p205 = por %p203, %p204
    %p206 = scmp.ne.s32.totalorder %s194, %s195
    %p207 = scmp.eq.s32.totalorder %s26, 3
    %p208 = por %p206, %p207
    %p210 = scmp.ne.s32.totalorder %s195, %s209
    %p211 = scmp.eq.s32.totalorder %s26, 0
    %p212 = por %p210, %p211
    %s214 = sadd.s32 %s213, 1
    %p217 = scmp.eq.s32.totalorder %s20, 3
    %p218 = scmp.ne.s32.totalorder %s213, %s215
    %p219 = scmp.eq.s32.totalorder %s20, 0
    %p220 = por %p218, %p219
    %p221 = scmp.ne.s32.totalorder %s213, %s215
    %p222 = scmp.eq.s32.totalorder %s25, 3
    %p223 = por %p221, %p222
    %p224 = scmp.ne.s32.totalorder %s215, %s216
    %p225 = scmp.eq.s32.totalorder %s25, 0
    %p226 = por %p224, %p225
    %p227 = scmp.ne.s32.totalorder %s215, %s216
    %p228 = scmp.eq.s32.totalorder %s26, 3
    %p229 = por %p227, %p228
    %p231 = scmp.ne.s32.totalorder %s216, %s230
    %p232 = scmp.eq.s32.totalorder %s26, 0
    %p233 = por %p231, %p232
    %s235 = sadd.s32 %s234, 1
    %p238 = scmp.eq.s32.totalorder %s20, 3
    %p239 = scmp.ne.s32.totalorder %s234, %s236
    %p240 = scmp.eq.s32.totalorder %s20, 0
    %p241 = por %p239, %p240
    %p242 = scmp.ne.s32.totalorder %s234, %s236
    %p243 = scmp.eq.s32.totalorder %s25, 3
    %p244 = por %p242, %p243
    %p245 = scmp.ne.s32.totalorder %s236, %s237
    %p246 = scmp.eq.s32.totalorder %s25, 0
    %p247 = por %p245, %p246
    %p248 = scmp.ne.s32.totalorder %s236, %s237
    %p249 = scmp.eq.s32.totalorder %s26, 3
    %p250 = por %p248, %p249
    %p252 = scmp.ne.s32.totalorder %s237, %s251
    %p253 = scmp.eq.s32.totalorder %s26, 0
    %p254 = por %p252, %p253
    %s256 = sadd.s32 %s255, 1
    %p259 = scmp.eq.s32.totalorder %s20, 3
    %p260 = scmp.ne.s32.totalorder %s255, %s257
    %p261 = scmp.eq.s32.totalorder %s20, 0
    %p262 = por %p260, %p261
    %p263 = scmp.ne.s32.totalorder %s255, %s257
    %p264 = scmp.eq.s32.totalorder %s25, 3
    %p265 = por %p263, %p264
    %p266 = scmp.ne.s32.totalorder %s257, %s258
    %p267 = scmp.eq.s32.totalorder %s25, 0
    %p268 = por %p266, %p267
    %p269 = scmp.ne.s32.totalorder %s257, %s258
    %p270 = scmp.eq.s32.totalorder %s26, 3
    %p271 = por %p269, %p270
    %p273 = scmp.ne.s32.totalorder %s258, %s272
    %p274 = scmp.eq.s32.totalorder %s26, 0
    %p275 = por %p273, %p274
    %s277 = sadd.s32 %s276, 1
    %p280 = scmp.eq.s32.totalorder %s20, 3
    %p281 = scmp.ne.s32.totalorder %s276, %s278
    %p282 = scmp.eq.s32.totalorder %s20, 0
    %p283 = por %p281, %p282
    %p284 = scmp.ne.s32.totalorder %s276, %s278
    %p285 = scmp.eq.s32.totalorder %s25, 3
    %p286 = por %p284, %p285
    %p287 = scmp.ne.s32.totalorder %s278, %s279
    %p288 = scmp.eq.s32.totalorder %s25, 0
    %p289 = por %p287, %p288
    %p290 = scmp.ne.s32.totalorder %s278, %s279
    %p291 = scmp.eq.s32.totalorder %s26, 3
    %p292 = por %p290, %p291
    %p294 = scmp.ne.s32.totalorder %s279, %s293
    %p295 = scmp.eq.s32.totalorder %s26, 0
    %p296 = por %p294, %p295
    %s298 = sadd.s32 %s297, 1
    %p301 = scmp.eq.s32.totalorder %s20, 3
    %p302 = scmp.ne.s32.totalorder %s297, %s299
    %p303 = scmp.eq.s32.totalorder %s20, 0
    %p304 = por %p302, %p303
    %p305 = scmp.ne.s32.totalorder %s297, %s299
    %p306 = scmp.eq.s32.totalorder %s25, 3
    %p307 = por %p305, %p306
    %p308 = scmp.ne.s32.totalorder %s299, %s300
    %p309 = scmp.eq.s32.totalorder %s25, 0
    %p310 = por %p308, %p309
    %p311 = scmp.ne.s32.totalorder %s299, %s300
    %p312 = scmp.eq.s32.totalorder %s26, 3
    %p313 = por %p311, %p312
    %p315 = scmp.ne.s32.totalorder %s300, %s314
    %p316 = scmp.eq.s32.totalorder %s26, 0
    %p317 = por %p315, %p316
    %s319 = sadd.s32 %s318, 1
    %p322 = scmp.eq.s32.totalorder %s20, 3
    %p323 = scmp.ne.s32.totalorder %s318, %s320
    %p324 = scmp.eq.s32.totalorder %s20, 0
    %p325 = por %p323, %p324
    %p326 = scmp.ne.s32.totalorder %s318, %s320
    %p327 = scmp.eq.s32.totalorder %s25, 3
    %p328 = por %p326, %p327
    %p329 = scmp.ne.s32.totalorder %s320, %s321
    %p330 = scmp.eq.s32.totalorder %s25, 0
    %p331 = por %p329, %p330
    %p332 = scmp.ne.s32.totalorder %s320, %s321
    %p333 = scmp.eq.s32.totalorder %s26, 3
    %p334 = por %p332, %p333
    %p336 = scmp.ne.s32.totalorder %s321, %s335
    %p337 = scmp.eq.s32.totalorder %s26, 0
    %p338 = por %p336, %p337
    %s339 = ssub.s32 %s27, %s39
    %p340 = scmp.eq.s32.totalorder %s339, 0
    %s342 = sadd.s32 %s341, 1
    %s343 = scalar_select %p340, %s341, %s342
    %p346 = pneg %p340
    %p347 = scmp.eq.s32.totalorder %s20, 3
    %p348 = por %p346, %p347
    %p349 = scmp.ne.s32.totalorder %s341, %s344
    %p350 = scmp.eq.s32.totalorder %s20, 0
    %p351 = por %p349, %p350
    %p352 = scmp.ne.s32.totalorder %s341, %s344
    %p353 = scmp.eq.s32.totalorder %s25, 3
    %p354 = por %p352, %p353
    %p355 = scmp.ne.s32.totalorder %s344, %s345
    %p356 = scmp.eq.s32.totalorder %s25, 0
    %p357 = por %p355, %p356
    %p358 = scmp.ne.s32.totalorder %s344, %s345
    %p359 = scmp.eq.s32.totalorder %s26, 3
    %p360 = por %p358, %p359
    %p362 = scmp.ne.s32.totalorder %s345, %s361
    %p363 = scmp.eq.s32.totalorder %s26, 0
    %p364 = por %p362, %p363
    %p365 = scmp.le.s32.totalorder 1, %s20
    %p366 = scmp.lt.s32.totalorder %s20, 5
    %p367 = pnand %p365, %p366
    %p368 = pneg %p367
    // Predicated region
    $region9: #{resnest_block.1} parent=5 // pred_check
      _
    $region10: #{resnest_block.1} parent=5 // pred_check_branch
      %370 = sbr.rel (%p367) target = $region12
    $region11: #{resnest_block.1} parent=5 // pred_region
      %s371 = ssub.s32 %s20, 1
      // Predicated region
      $region13: #{resnest_block.1} parent=11 // pred_check
        %p372 = pneg %p79
      $region14: #{resnest_block.1} parent=11 // pred_check_branch
        %374 = sbr.rel (%p372) target = $region16
      $region15: #{resnest_block.1} parent=11 // pred_region
        _
      $region16: #{resnest_block.1} parent=11 // pred_fallthru
        _
      // Predicated region
      $region17: #{resnest_block.1} parent=11 // pred_check
        %p375 = pneg %p100
      $region18: #{resnest_block.1} parent=11 // pred_check_branch
        %377 = sbr.rel (%p375) target = $region20
      $region19: #{resnest_block.1} parent=11 // pred_region
        _
      $region20: #{resnest_block.1} parent=11 // pred_fallthru
        _
      // Predicated region
      $region21: #{resnest_block.1} parent=11 // pred_check
        %p378 = pneg %p121
      $region22: #{resnest_block.1} parent=11 // pred_check_branch
        %380 = sbr.rel (%p378) target = $region24
      $region23: #{resnest_block.1} parent=11 // pred_region
        _
      $region24: #{resnest_block.1} parent=11 // pred_fallthru
        _
      // Predicated region
      $region25: #{resnest_block.1} parent=11 // pred_check
        %p381 = pneg %p142
      $region26: #{resnest_block.1} parent=11 // pred_check_branch
        %383 = sbr.rel (%p381) target = $region28
      $region27: #{resnest_block.1} parent=11 // pred_region
        _
      $region28: #{resnest_block.1} parent=11 // pred_fallthru
        _
      // Predicated region
      $region29: #{resnest_block.1} parent=11 // pred_check
        %p384 = pneg %p163
      $region30: #{resnest_block.1} parent=11 // pred_check_branch
        %386 = sbr.rel (%p384) target = $region32
      $region31: #{resnest_block.1} parent=11 // pred_region
        _
      $region32: #{resnest_block.1} parent=11 // pred_fallthru
        _
      // Predicated region
      $region33: #{resnest_block.1} parent=11 // pred_check
        %p387 = pneg %p184
      $region34: #{resnest_block.1} parent=11 // pred_check_branch
        %389 = sbr.rel (%p387) target = $region36
      $region35: #{resnest_block.1} parent=11 // pred_region
        _
      $region36: #{resnest_block.1} parent=11 // pred_fallthru
        _
      // Predicated region
      $region37: #{resnest_block.1} parent=11 // pred_check
        %p390 = pneg %p205
      $region38: #{resnest_block.1} parent=11 // pred_check_branch
        %392 = sbr.rel (%p390) target = $region40
      $region39: #{resnest_block.1} parent=11 // pred_region
        _
      $region40: #{resnest_block.1} parent=11 // pred_fallthru
        _
      // Predicated region
      $region41: #{resnest_block.1} parent=11 // pred_check
        %p393 = pneg %p226
      $region42: #{resnest_block.1} parent=11 // pred_check_branch
        %395 = sbr.rel (%p393) target = $region44
      $region43: #{resnest_block.1} parent=11 // pred_region
        _
      $region44: #{resnest_block.1} parent=11 // pred_fallthru
        _
      // Predicated region
      $region45: #{resnest_block.1} parent=11 // pred_check
        %p396 = pneg %p247
      $region46: #{resnest_block.1} parent=11 // pred_check_branch
        %398 = sbr.rel (%p396) target = $region48
      $region47: #{resnest_block.1} parent=11 // pred_region
        _
      $region48: #{resnest_block.1} parent=11 // pred_fallthru
        _
      // Predicated region
      $region49: #{resnest_block.1} parent=11 // pred_check
        %p399 = pneg %p268
      $region50: #{resnest_block.1} parent=11 // pred_check_branch
        %401 = sbr.rel (%p399) target = $region52
      $region51: #{resnest_block.1} parent=11 // pred_region
        _
      $region52: #{resnest_block.1} parent=11 // pred_fallthru
        _
      // Predicated region
      $region53: #{resnest_block.1} parent=11 // pred_check
        %p402 = pneg %p289
      $region54: #{resnest_block.1} parent=11 // pred_check_branch
        %404 = sbr.rel (%p402) target = $region56
      $region55: #{resnest_block.1} parent=11 // pred_region
        _
      $region56: #{resnest_block.1} parent=11 // pred_fallthru
        _
      // Predicated region
      $region57: #{resnest_block.1} parent=11 // pred_check
        %p405 = pneg %p310
      $region58: #{resnest_block.1} parent=11 // pred_check_branch
        %407 = sbr.rel (%p405) target = $region60
      $region59: #{resnest_block.1} parent=11 // pred_region
        _
      $region60: #{resnest_block.1} parent=11 // pred_fallthru
        _
      // Predicated region
      $region61: #{resnest_block.1} parent=11 // pred_check
        %p408 = pneg %p331
      $region62: #{resnest_block.1} parent=11 // pred_check_branch
        %410 = sbr.rel (%p408) target = $region64
      $region63: #{resnest_block.1} parent=11 // pred_region
        _
      $region64: #{resnest_block.1} parent=11 // pred_fallthru
        _
    $region12: #{resnest_block.1} parent=5 // pred_fallthru
      _
    %p411 = scmp.lt.s32.totalorder %s20, 4
    // Predicated region
    $region65: #{resnest_block.1} parent=5 // pred_check
      %p412 = pneg %p411
    $region66: #{resnest_block.1} parent=5 // pred_check_branch
      %414 = sbr.rel (%p412) target = $region68
    $region67: #{resnest_block.1} parent=5 // pred_region
      // Predicated region
      $region69: #{resnest_block.1} parent=67 // pred_check
        %p415 = pneg %p52
      $region70: #{resnest_block.1} parent=67 // pred_check_branch
        %417 = sbr.rel (%p415) target = $region72
      $region71: #{resnest_block.1} parent=67 // pred_region
        %p418 = scmp.lt.s32.totalorder %s27, 1
        %s419 = scalar_select %p418, %s27, 1
        %s420 = smul.addr %s419, 8
        %s421 = smul.addr %s420, 8
        %s422 = scalar_lea.vmem %s0, %s421
      $region72: #{resnest_block.1} parent=67 // pred_fallthru
        _
    $region68: #{resnest_block.1} parent=5 // pred_fallthru
      _
    %p423 = scmp.le.s32.totalorder 1, %s20
    %p424 = scmp.lt.s32.totalorder %s20, 5
    %p425 = pnand %p423, %p424
    %p426 = pneg %p425
    // Predicated region
    $region73: #{resnest_block.1} parent=5 // pred_check
      _
    $region74: #{resnest_block.1} parent=5 // pred_check_branch
      %428 = sbr.rel (%p425) target = $region76
    $region75: #{resnest_block.1} parent=5 // pred_region
      %s429 = ssub.s32 %s20, 1
      %p430 = scmp.lt.s32.totalorder %s29, 1
      %s431 = scalar_select %p430, %s29, 1
      %s432 = smul.addr %s431, 8
      %s433 = smul.addr %s432, 8
      %s434 = scalar_lea.vmem %s0, %s433
      %p435 = pneg %p58
      %p436 = pneg %p55
      %p437 = pneg %p79
      %p438 = pneg %p76
      %p439 = pneg %p100
      %p440 = pneg %p97
      %p441 = pneg %p121
      %p442 = pneg %p118
      %p443 = pneg %p142
      %p444 = pneg %p139
      %p445 = pneg %p163
      %p446 = pneg %p160
      %p447 = pneg %p184
      %p448 = pneg %p181
      %p449 = pneg %p205
      %p450 = pneg %p202
      %p451 = pneg %p226
      %p452 = pneg %p223
      %p453 = pneg %p247
      %p454 = pneg %p244
      %p455 = pneg %p268
      %p456 = pneg %p265
      %p457 = pneg %p289
      %p458 = pneg %p286
      %p459 = pneg %p310
      %p460 = pneg %p307
      %p461 = pneg %p331
      %p462 = pneg %p328
      %p463 = pneg %p357
      %p464 = pneg %p354
      %p465 = scmp.lt.s32.totalorder %s29, 1
      %s466 = scalar_select %p465, %s29, 1
      %s467 = smul.addr %s466, 8
      %s468 = smul.addr %s467, 8
      %s469 = scalar_lea.vmem %s14, %s468
      %p470 = scmp.lt.s32.totalorder %s29, 1
      %s471 = scalar_select %p470, %s29, 1
      %s472 = smul.addr %s471, 8
      %s473 = smul.addr %s472, 8
      %s474 = scalar_lea.vmem %s0, %s473
      %p475 = scmp.lt.s32.totalorder %s29, 1
      %s476 = scalar_select %p475, %s29, 1
      %s477 = smul.addr %s476, 8
      %s478 = smul.addr %s477, 8
      %s479 = scalar_lea.vmem %s14, %s478
      %v481 = vld [vmem:[%s474] sm:$0xff]
      %v482 = vld [vmem:[%s474 + $0x8] sm:$0xff]
      %v483 = vld [vmem:[%s474 + $0x10] sm:$0xff]
      %v484 = vld [vmem:[%s474 + $0x18] sm:$0xff]
      %v485 = vld [vmem:[%s474 + $0x20] sm:$0xff]
      %v486 = vld [vmem:[%s474 + $0x28] sm:$0xff]
      %v487 = vld [vmem:[%s474 + $0x30] sm:$0xff]
      %v488 = vld [vmem:[%s474 + $0x38] sm:$0xff]
      %p489 = scmp.eq.s32.totalorder %s30, 0
      // Predicated region
      $region77: #{resnest_block.1} parent=75 // pred_check
        %p490 = pneg %p489
      $region78: #{resnest_block.1} parent=75 // pred_check_branch
        %492 = sbr.rel (%p490) target = $region80
      $region79: #{resnest_block.1} parent=75 // pred_region
        %v493 = vld [vmem:[%s13] sm:$0xff]
        %v494 = vld [vmem:[%s13 + $0x8] sm:$0xff]
        %v495 = vld [vmem:[%s13 + $0x10] sm:$0xff]
        %v496 = vld [vmem:[%s13 + $0x18] sm:$0xff]
        %498 = vset.pattern.permute.xlu0 0
        %499 = vperm.xlu0 %498, %v493
        %v500 = vpop.permute.xlu0 %499
        %503 = vset.pattern.permute.xlu0 0
        %504 = vperm.xlu0 %503, %v494
        %v505 = vpop.permute.xlu0 %504
        %508 = vset.pattern.permute.xlu0 0
        %509 = vperm.xlu0 %508, %v495
        %v510 = vpop.permute.xlu0 %509
        %513 = vset.pattern.permute.xlu0 0
        %514 = vperm.xlu0 %513, %v496
        %v515 = vpop.permute.xlu0 %514
        %v517 = vadd.f32 %v481, %v500
        %v518 = vadd.f32 %v482, %v500
        %v519 = vadd.f32 %v483, %v505
        %v520 = vadd.f32 %v484, %v505
        %v521 = vadd.f32 %v485, %v510
        %v522 = vadd.f32 %v486, %v510
        %v523 = vadd.f32 %v487, %v515
        %v524 = vadd.f32 %v488, %v515
        %525 = vst [vmem:[#allocation2] sm:$0xff] %v517
        %526 = vst [vmem:[#allocation2 + $0x8] sm:$0xff] %v518
        %527 = vst [vmem:[#allocation2 + $0x10] sm:$0xff] %v519
        %528 = vst [vmem:[#allocation2 + $0x18] sm:$0xff] %v520
        %529 = vst [vmem:[#allocation2 + $0x20] sm:$0xff] %v521
        %530 = vst [vmem:[#allocation2 + $0x28] sm:$0xff] %v522
        %531 = vst [vmem:[#allocation2 + $0x30] sm:$0xff] %v523
        %532 = vst [vmem:[#allocation2 + $0x38] sm:$0xff] %v524
      $region80: #{resnest_block.1} parent=75 // pred_fallthru
        _
      %v533 = vpack.c.bf16 %v483, %v481
      %v534 = vpack.c.bf16 %v484, %v482
      %v535 = vpack.c.bf16 %v487, %v485
      %v536 = vpack.c.bf16 %v488, %v486
      %s537 = smul.u32 %s30, 12
      %s538 = smul.addr %s537, 4
      %s539 = scalar_lea.vmem %s2, %s538
      %v540 = vld [vmem:[%s539] sm:$0xf]
      %v541 = vld [vmem:[%s539 + $0x4] sm:$0xf]
      %v542 = vld [vmem:[%s539 + $0x8] sm:$0xf]
      %v543 = vld [vmem:[%s539 + $0xc] sm:$0xf]
      %v544 = vld [vmem:[%s539 + $0x10] sm:$0xf]
      %v545 = vld [vmem:[%s539 + $0x14] sm:$0xf]
      %v546 = vld [vmem:[%s539 + $0x18] sm:$0xf]
      %v547 = vld [vmem:[%s539 + $0x1c] sm:$0xf]
      %v548 = vld [vmem:[%s539 + $0x20] sm:$0xf]
      %v549 = vld [vmem:[%s539 + $0x24] sm:$0xf]
      %v550 = vld [vmem:[%s539 + $0x28] sm:$0xf]
      %v551 = vld [vmem:[%s539 + $0x2c] sm:$0xf]
      %s552 = smul.u32 %s30, 96
      %s553 = scalar_lea.vmem %s3, %s552
      %v554 = vld [vmem:[%s553] sm:$0xff]
      %v555 = vld [vmem:[%s553 + $0x8] sm:$0xff]
      %v556 = vld [vmem:[%s553 + $0x10] sm:$0xff]
      %v557 = vld [vmem:[%s553 + $0x18] sm:$0xff]
      %v558 = vld [vmem:[%s553 + $0x20] sm:$0xff]
      %v559 = vld [vmem:[%s553 + $0x28] sm:$0xff]
      %v560 = vld [vmem:[%s553 + $0x30] sm:$0xff]
      %v561 = vld [vmem:[%s553 + $0x38] sm:$0xff]
      %v562 = vld [vmem:[%s553 + $0x40] sm:$0xff]
      %v563 = vld [vmem:[%s553 + $0x48] sm:$0xff]
      %v564 = vld [vmem:[%s553 + $0x50] sm:$0xff]
      %v565 = vld [vmem:[%s553 + $0x58] sm:$0xff]
      %567 = vset.pattern.permute.xlu0 0
      %568 = vperm.xlu0 %567, %v554
      %v569 = vpop.permute.xlu0 %568
      %572 = vset.pattern.permute.xlu0 0
      %573 = vperm.xlu0 %572, %v555
      %v574 = vpop.permute.xlu0 %573
      %577 = vset.pattern.permute.xlu0 0
      %578 = vperm.xlu0 %577, %v556
      %v579 = vpop.permute.xlu0 %578
      %582 = vset.pattern.permute.xlu0 0
      %583 = vperm.xlu0 %582, %v557
      %v584 = vpop.permute.xlu0 %583
      %587 = vset.pattern.permute.xlu0 0
      %588 = vperm.xlu0 %587, %v558
      %v589 = vpop.permute.xlu0 %588
      %592 = vset.pattern.permute.xlu0 0
      %593 = vperm.xlu0 %592, %v559
      %v594 = vpop.permute.xlu0 %593
      %597 = vset.pattern.permute.xlu0 0
      %598 = vperm.xlu0 %597, %v560
      %v599 = vpop.permute.xlu0 %598
      %602 = vset.pattern.permute.xlu0 0
      %603 = vperm.xlu0 %602, %v561
      %v604 = vpop.permute.xlu0 %603
      %607 = vset.pattern.permute.xlu0 0
      %608 = vperm.xlu0 %607, %v562
      %v609 = vpop.permute.xlu0 %608
      %612 = vset.pattern.permute.xlu0 0
      %613 = vperm.xlu0 %612, %v563
      %v614 = vpop.permute.xlu0 %613
      %617 = vset.pattern.permute.xlu0 0
      %618 = vperm.xlu0 %617, %v564
      %v619 = vpop.permute.xlu0 %618
      %622 = vset.pattern.permute.xlu0 0
      %623 = vperm.xlu0 %622, %v565
      %v624 = vpop.permute.xlu0 %623
      %v638 = vunpack.c.l.b16 %v540
      %v639 = vunpack.c.l.b16 %v541
      %v640 = vunpack.c.l.b16 %v542
      %v641 = vunpack.c.l.b16 %v543
      %v642 = vunpack.c.l.b16 %v544
      %v643 = vunpack.c.l.b16 %v545
      %v644 = vunpack.c.l.b16 %v546
      %v645 = vunpack.c.l.b16 %v547
      %v646 = vunpack.c.l.b16 %v548
      %v647 = vunpack.c.l.b16 %v549
      %v648 = vunpack.c.l.b16 %v550
      %v649 = vunpack.c.l.b16 %v551
      %v650 = vpack.c.b16 %v639, %v638
      %v651 = vpack.c.b16 %v641, %v640
      %v652 = vpack.c.b16 %v643, %v642
      %v653 = vpack.c.b16 %v645, %v644
      %v654 = vpack.c.b16 %v647, %v646
      %v655 = vpack.c.b16 %v649, %v648
      %vm656 = vcmask 261120
      %v658 = vsel %vm656, %v650, 0
      %v661 = vsel %vm656, %v651, 0
      %v664 = vsel %vm656, %v652, 0
      %v667 = vsel %vm656, %v653, 0
      %v670 = vsel %vm656, %v654, 0
      %v673 = vsel %vm656, %v655, 0
      %675 = vmatprep.subr.bf16.mxu0 %v534
      %676 = vmatpush1.bf16.msra.mxu0 %v533
      %677 = vmatprep.subr.bf16.mxu0 %v536
      %678 = vmatpush1.bf16.msra.mxu0 %v535
      %679 = vmatprep.subr.bf16.mxu0 0
      %680 = vmatpush1.bf16.msra.mxu0 0
      %681 = vmatprep.subr.bf16.mxu0 0
      %682 = vmatpush1.bf16.msra.mxu0 0
      %683 = vmatprep.subr.bf16.mxu0 0
      %684 = vmatpush1.bf16.msra.mxu0 0
      %685 = vmatprep.subr.bf16.mxu0 0
      %686 = vmatpush1.bf16.msra.mxu0 0
      %687 = vmatprep.subr.bf16.mxu0 0
      %688 = vmatpush1.bf16.msra.mxu0 0
      %689 = vmatprep.subr.bf16.mxu0 0
      %690 = vmatpush1.bf16.msra.mxu0 0
      %691 = vmatprep.subr.bf16.mxu0 0
      %692 = vmatpush1.bf16.msra.mxu0 0
      %693 = vmatprep.subr.bf16.mxu0 0
      %694 = vmatpush1.bf16.msra.mxu0 0
      %695 = vmatprep.subr.bf16.mxu0 0
      %696 = vmatpush1.bf16.msra.mxu0 0
      %697 = vmatprep.subr.bf16.mxu0 0
      %698 = vmatpush1.bf16.msra.mxu0 0
      %699 = vmatprep.subr.bf16.mxu0 0
      %700 = vmatpush1.bf16.msra.mxu0 0
      %701 = vmatprep.subr.bf16.mxu0 0
      %702 = vmatpush1.bf16.msra.mxu0 0
      %703 = vmatprep.subr.bf16.mxu0 0
      %704 = vmatpush1.bf16.msra.mxu0 0
      %705 = vmatprep.subr.bf16.mxu0 0
      %706 = vmatpush1.bf16.msra.mxu0 0
      %707 = vmatprep.mubr.bf16.mxu0 0
      %708 = vmatmul.mubr.bf16.gmra.mrb[0].mxu0 %v658
      %v709 = vpop.f32.mrb[0].mxu0
      %v710 = vadd.f32 %v569, %v709
      %v711 = vpop.f32.mrb[0].mxu0
      %v712 = vadd.f32 %v569, %v711
      %v713 = vpop.f32.mrb[0].mxu0
      %v714 = vadd.f32 %v574, %v713
      %v715 = vpop.f32.mrb[0].mxu0
      %v716 = vadd.f32 %v574, %v715
      %717 = vmatprep.mubr.bf16.mxu0 0
      %718 = vmatmul.mubr.bf16.gmra.mrb[0].mxu0 %v661
      %v719 = vpop.f32.mrb[0].mxu0
      %v720 = vadd.f32 %v579, %v719
      %v721 = vpop.f32.mrb[0].mxu0
      %v722 = vadd.f32 %v579, %v721
      %v723 = vpop.f32.mrb[0].mxu0
      %v724 = vadd.f32 %v584, %v723
      %v725 = vpop.f32.mrb[0].mxu0
      %v726 = vadd.f32 %v584, %v725
      %727 = vmatprep.mubr.bf16.mxu0 0
      %728 = vmatmul.mubr.bf16.gmra.mrb[0].mxu0 %v664
      %v729 = vpop.f32.mrb[0].mxu0
      %v730 = vadd.f32 %v589, %v729
      %v731 = vpop.f32.mrb[0].mxu0
      %v732 = vadd.f32 %v589, %v731
      %v733 = vpop.f32.mrb[0].mxu0
      %v734 = vadd.f32 %v594, %v733
      %v735 = vpop.f32.mrb[0].mxu0
      %v736 = vadd.f32 %v594, %v735
      %737 = vmatprep.mubr.bf16.mxu0 0
      %738 = vmatmul.mubr.bf16.gmra.mrb[0].mxu0 %v667
      %v739 = vpop.f32.mrb[0].mxu0
      %v740 = vadd.f32 %v599, %v739
      %v741 = vpop.f32.mrb[0].mxu0
      %v742 = vadd.f32 %v599, %v741
      %v743 = vpop.f32.mrb[0].mxu0
      %v744 = vadd.f32 %v604, %v743
      %v745 = vpop.f32.mrb[0].mxu0
      %v746 = vadd.f32 %v604, %v745
      %747 = vmatprep.mubr.bf16.mxu0 0
      %748 = vmatmul.mubr.bf16.gmra.mrb[0].mxu0 %v670
      %v749 = vpop.f32.mrb[0].mxu0
      %v750 = vadd.f32 %v609, %v749
      %v751 = vpop.f32.mrb[0].mxu0
      %v752 = vadd.f32 %v609, %v751
      %v753 = vpop.f32.mrb[0].mxu0
      %v754 = vadd.f32 %v614, %v753
      %v755 = vpop.f32.mrb[0].mxu0
      %v756 = vadd.f32 %v614, %v755
      %757 = vmatprep.mubr.bf16.mxu0 0
      %758 = vmatmul.mubr.bf16.gmra.mrb[0].mxu0 %v673
      %v759 = vpop.f32.mrb[0].mxu0
      %v760 = vadd.f32 %v619, %v759
      %v761 = vpop.f32.mrb[0].mxu0
      %v762 = vadd.f32 %v619, %v761
      %v763 = vpop.f32.mrb[0].mxu0
      %v764 = vadd.f32 %v624, %v763
      %v765 = vpop.f32.mrb[0].mxu0
      %v766 = vadd.f32 %v624, %v765
      %767 = vdwg.mxu0
      %768 = vst [vmem:[#allocation4] sm:$0xff] %v710
      %769 = vst [vmem:[#allocation4 + $0x8] sm:$0xff] %v712
      %770 = vst [vmem:[#allocation4 + $0x10] sm:$0xff] %v714
      %771 = vst [vmem:[#allocation4 + $0x18] sm:$0xff] %v716
      %772 = vst [vmem:[#allocation4 + $0x20] sm:$0xff] %v720
      %773 = vst [vmem:[#allocation4 + $0x28] sm:$0xff] %v722
      %774 = vst [vmem:[#allocation4 + $0x30] sm:$0xff] %v724
      %775 = vst [vmem:[#allocation4 + $0x38] sm:$0xff] %v726
      %776 = vst [vmem:[#allocation4 + $0x40] sm:$0xff] %v730
      %777 = vst [vmem:[#allocation4 + $0x48] sm:$0xff] %v732
      %778 = vst [vmem:[#allocation4 + $0x50] sm:$0xff] %v734
      %779 = vst [vmem:[#allocation4 + $0x58] sm:$0xff] %v736
      %780 = vst [vmem:[#allocation4 + $0x60] sm:$0xff] %v740
      %781 = vst [vmem:[#allocation4 + $0x68] sm:$0xff] %v742
      %782 = vst [vmem:[#allocation4 + $0x70] sm:$0xff] %v744
      %783 = vst [vmem:[#allocation4 + $0x78] sm:$0xff] %v746
      %784 = vst [vmem:[#allocation4 + $0x80] sm:$0xff] %v750
      %785 = vst [vmem:[#allocation4 + $0x88] sm:$0xff] %v752
      %786 = vst [vmem:[#allocation4 + $0x90] sm:$0xff] %v754
      %787 = vst [vmem:[#allocation4 + $0x98] sm:$0xff] %v756
      %788 = vst [vmem:[#allocation4 + $0xa0] sm:$0xff] %v760
      %789 = vst [vmem:[#allocation4 + $0xa8] sm:$0xff] %v762
      %790 = vst [vmem:[#allocation4 + $0xb0] sm:$0xff] %v764
      %791 = vst [vmem:[#allocation4 + $0xb8] sm:$0xff] %v766
      %s792 = scalar_lea.vmem %s7, %s552
      %v793 = vld [vmem:[%s792] sm:$0xff]
      %v794 = vld [vmem:[%s792 + $0x8] sm:$0xff]
      %v795 = vld [vmem:[%s792 + $0x10] sm:$0xff]
      %v796 = vld [vmem:[%s792 + $0x18] sm:$0xff]
      %v797 = vld [vmem:[%s792 + $0x20] sm:$0xff]
      %v798 = vld [vmem:[%s792 + $0x28] sm:$0xff]
      %v799 = vld [vmem:[%s792 + $0x30] sm:$0xff]
      %v800 = vld [vmem:[%s792 + $0x38] sm:$0xff]
      %v801 = vld [vmem:[%s792 + $0x40] sm:$0xff]
      %v802 = vld [vmem:[%s792 + $0x48] sm:$0xff]
      %v803 = vld [vmem:[%s792 + $0x50] sm:$0xff]
      %v804 = vld [vmem:[%s792 + $0x58] sm:$0xff]
      %v805 = vld [vmem:[#allocation4] sm:$0xff]
      %v806 = vld [vmem:[#allocation4 + $0x8] sm:$0xff]
      %v807 = vld [vmem:[#allocation4 + $0x10] sm:$0xff]
      %v808 = vld [vmem:[#allocation4 + $0x18] sm:$0xff]
      %v809 = vld [vmem:[#allocation4 + $0x20] sm:$0xff]
      %v810 = vld [vmem:[#allocation4 + $0x28] sm:$0xff]
      %v811 = vld [vmem:[#allocation4 + $0x30] sm:$0xff]
      %v812 = vld [vmem:[#allocation4 + $0x38] sm:$0xff]
      %813 = vrot.lane.b32.xlu0 %v805, 17
      %v814 = vpop.permute.xlu0 %813
      %815 = vrot.lane.b32.xlu0 %v807, 17
      %v816 = vpop.permute.xlu0 %815
      %817 = vrot.lane.b32.xlu0 %v809, 17
      %v818 = vpop.permute.xlu0 %817
      %819 = vrot.lane.b32.xlu0 %v811, 17
      %v820 = vpop.permute.xlu0 %819
      %821 = vrot.lane.b32.xlu0 %v806, 17
      %v822 = vpop.permute.xlu0 %821
      %823 = vrot.lane.b32.xlu0 %v808, 17
      %v824 = vpop.permute.xlu0 %823
      %825 = vrot.lane.b32.xlu0 %v810, 17
      %v826 = vpop.permute.xlu0 %825
      %827 = vrot.lane.b32.xlu0 %v812, 17
      %v828 = vpop.permute.xlu0 %827
      %v829 = vlaneseq
      %v830 = vand.u32 %v829, 127
      %vm831 = vcmp.lt.s32.totalorder %v830, 17
      %v832 = vsel %vm831, %v814, %v822
      %v833 = vsel %vm831, %v816, %v824
      %v834 = vsel %vm831, %v818, %v826
      %v835 = vsel %vm831, %v820, %v828
      %v836 = vsel %vm831, %v822, %v814
      %v837 = vsel %vm831, %v824, %v816
      %v838 = vsel %vm831, %v826, %v818
      %v839 = vsel %vm831, %v828, %v820
      %s840 = scalar_lea.vmem %s1, 32
      %v841 = vld [vmem:[%s840] ss:$8 sm:$0x3]
      %v843 = vlaneseq
      %v844 = vshrl.u32 %v843, 7
      %v845 = vsub.s32 0, %v844
      %v846 = vrot.slane %v841, %v845
      %v847 = vlaneseq
      %v848 = vshrl.u32 %v847, 7
      %v849 = vsub.s32 1, %v848
      %v850 = vrot.slane %v841, %v849
      %v853 = vmul.f32 %v836, %v846
      %v854 = vmul.f32 %v832, %v850
      %v855 = vmul.f32 %v837, %v846
      %v856 = vmul.f32 %v833, %v850
      %v857 = vmul.f32 %v838, %v846
      %v858 = vmul.f32 %v834, %v850
      %v859 = vmul.f32 %v839, %v846
      %v860 = vmul.f32 %v835, %v850
      %v861 = vpack.c.bf16 %v855, %v853
      %v862 = vpack.c.bf16 %v856, %v854
      %v863 = vpack.c.bf16 %v859, %v857
      %v864 = vpack.c.bf16 %v860, %v858
      %865 = vst [vmem:[#allocation3] sm:$0xff] %v861
      %866 = vst [vmem:[#allocation3 + $0x8] sm:$0xff] %v862
      %867 = vst [vmem:[#allocation3 + $0x10] sm:$0xff] %v863
      %868 = vst [vmem:[#allocation3 + $0x18] sm:$0xff] %v864
      %869 = vrot.lane.b32.xlu0 %v805, 16
      %v870 = vpop.permute.xlu0 %869
      %871 = vrot.lane.b32.xlu0 %v807, 16
      %v872 = vpop.permute.xlu0 %871
      %873 = vrot.lane.b32.xlu0 %v809, 16
      %v874 = vpop.permute.xlu0 %873
      %875 = vrot.lane.b32.xlu0 %v811, 16
      %v876 = vpop.permute.xlu0 %875
      %877 = vrot.lane.b32.xlu0 %v806, 16
      %v878 = vpop.permute.xlu0 %877
      %879 = vrot.lane.b32.xlu0 %v808, 16
      %v880 = vpop.permute.xlu0 %879
      %881 = vrot.lane.b32.xlu0 %v810, 16
      %v882 = vpop.permute.xlu0 %881
      %883 = vrot.lane.b32.xlu0 %v812, 16
      %v884 = vpop.permute.xlu0 %883
      %vm885 = vcmp.lt.s32.totalorder %v830, 16
      %v886 = vsel %vm885, %v870, %v878
      %v887 = vsel %vm885, %v872, %v880
      %v888 = vsel %vm885, %v874, %v882
      %v889 = vsel %vm885, %v876, %v884
      %v890 = vsel %vm885, %v878, %v870
      %v891 = vsel %vm885, %v880, %v872
      %v892 = vsel %vm885, %v882, %v874
      %v893 = vsel %vm885, %v884, %v876
      %s894 = scalar_lea.vmem %s1, 33
      %v895 = vld [vmem:[%s894] ss:$8 sm:$0x3]
      %v897 = vlaneseq
      %v898 = vshrl.u32 %v897, 7
      %v899 = vsub.s32 0, %v898
      %v900 = vrot.slane %v895, %v899
      %v901 = vlaneseq
      %v902 = vshrl.u32 %v901, 7
      %v903 = vsub.s32 1, %v902
      %v904 = vrot.slane %v895, %v903
      %v907 = vmul.f32 %v890, %v900
      %v908 = vmul.f32 %v886, %v904
      %v909 = vmul.f32 %v891, %v900
      %v910 = vmul.f32 %v887, %v904
      %v911 = vmul.f32 %v892, %v900
      %v912 = vmul.f32 %v888, %v904
      %v913 = vmul.f32 %v893, %v900
      %v914 = vmul.f32 %v889, %v904
      %v915 = vpack.c.bf16 %v909, %v907
      %v916 = vpack.c.bf16 %v910, %v908
      %v917 = vpack.c.bf16 %v913, %v911
      %v918 = vpack.c.bf16 %v914, %v912
      %919 = vst [vmem:[#allocation3 + $0x20] sm:$0xff] %v915
      %920 = vst [vmem:[#allocation3 + $0x28] sm:$0xff] %v916
      %921 = vst [vmem:[#allocation3 + $0x30] sm:$0xff] %v917
      %922 = vst [vmem:[#allocation3 + $0x38] sm:$0xff] %v918
      %923 = vrot.lane.b32.xlu0 %v805, 15
      %v924 = vpop.permute.xlu0 %923
      %925 = vrot.lane.b32.xlu0 %v807, 15
      %v926 = vpop.permute.xlu0 %925
      %927 = vrot.lane.b32.xlu0 %v809, 15
      %v928 = vpop.permute.xlu0 %927
      %929 = vrot.lane.b32.xlu0 %v811, 15
      %v930 = vpop.permute.xlu0 %929
      %931 = vrot.lane.b32.xlu0 %v806, 15
      %v932 = vpop.permute.xlu0 %931
      %933 = vrot.lane.b32.xlu0 %v808, 15
      %v934 = vpop.permute.xlu0 %933
      %935 = vrot.lane.b32.xlu0 %v810, 15
      %v936 = vpop.permute.xlu0 %935
      %937 = vrot.lane.b32.xlu0 %v812, 15
      %v938 = vpop.permute.xlu0 %937
      %vm939 = vcmp.lt.s32.totalorder %v830, 15
      %v940 = vsel %vm939, %v924, %v932
      %v941 = vsel %vm939, %v926, %v934
      %v942 = vsel %vm939, %v928, %v936
      %v943 = vsel %vm939, %v930, %v938
      %v944 = vsel %vm939, %v932, %v924
      %v945 = vsel %vm939, %v934, %v926
      %v946 = vsel %vm939, %v936, %v928
      %v947 = vsel %vm939, %v938, %v930
      %s948 = scalar_lea.vmem %s1, 34
      %v949 = vld [vmem:[%s948] ss:$8 sm:$0x3]
      %v951 = vlaneseq
      %v952 = vshrl.u32 %v951, 7
      %v953 = vsub.s32 0, %v952
      %v954 = vrot.slane %v949, %v953
      %v955 = vlaneseq
      %v956 = vshrl.u32 %v955, 7
      %v957 = vsub.s32 1, %v956
      %v958 = vrot.slane %v949, %v957
      %v961 = vmul.f32 %v944, %v954
      %v962 = vmul.f32 %v940, %v958
      %v963 = vmul.f32 %v945, %v954
      %v964 = vmul.f32 %v941, %v958
      %v965 = vmul.f32 %v946, %v954
      %v966 = vmul.f32 %v942, %v958
      %v967 = vmul.f32 %v947, %v954
      %v968 = vmul.f32 %v943, %v958
      %v969 = vpack.c.bf16 %v963, %v961
      %v970 = vpack.c.bf16 %v964, %v962
      %v971 = vpack.c.bf16 %v967, %v965
      %v972 = vpack.c.bf16 %v968, %v966
      %973 = vst [vmem:[#allocation3 + $0x40] sm:$0xff] %v969
      %974 = vst [vmem:[#allocation3 + $0x48] sm:$0xff] %v970
      %975 = vst [vmem:[#allocation3 + $0x50] sm:$0xff] %v971
      %976 = vst [vmem:[#allocation3 + $0x58] sm:$0xff] %v972
      %977 = vrot.lane.b32.xlu0 %v805, 1
      %v978 = vpop.permute.xlu0 %977
      %979 = vrot.lane.b32.xlu0 %v807, 1
      %v980 = vpop.permute.xlu0 %979
      %981 = vrot.lane.b32.xlu0 %v809, 1
      %v982 = vpop.permute.xlu0 %981
      %983 = vrot.lane.b32.xlu0 %v811, 1
      %v984 = vpop.permute.xlu0 %983
      %985 = vrot.lane.b32.xlu0 %v806, 1
      %v986 = vpop.permute.xlu0 %985
      %987 = vrot.lane.b32.xlu0 %v808, 1
      %v988 = vpop.permute.xlu0 %987
      %989 = vrot.lane.b32.xlu0 %v810, 1
      %v990 = vpop.permute.xlu0 %989
      %991 = vrot.lane.b32.xlu0 %v812, 1
      %v992 = vpop.permute.xlu0 %991
      %vm993 = vcmp.lt.s32.totalorder %v830, 1
      %v994 = vsel %vm993, %v978, %v986
      %v995 = vsel %vm993, %v980, %v988
      %v996 = vsel %vm993, %v982, %v990
      %v997 = vsel %vm993, %v984, %v992
      %v998 = vsel %vm993, %v986, %v978
      %v999 = vsel %vm993, %v988, %v980
      %v1000 = vsel %vm993, %v990, %v982
      %v1001 = vsel %vm993, %v992, %v984
      %s1002 = scalar_lea.vmem %s1, 39
      %v1003 = vld [vmem:[%s1002] ss:$8 sm:$0x3]
      %v1005 = vlaneseq
      %v1006 = vshrl.u32 %v1005, 7
      %v1007 = vsub.s32 0, %v1006
      %v1008 = vrot.slane %v1003, %v1007
      %v1009 = vlaneseq
      %v1010 = vshrl.u32 %v1009, 7
      %v1011 = vsub.s32 1, %v1010
      %v1012 = vrot.slane %v1003, %v1011
      %v1015 = vmul.f32 %v998, %v1008
      %v1016 = vmul.f32 %v994, %v1012
      %v1017 = vmul.f32 %v999, %v1008
      %v1018 = vmul.f32 %v995, %v1012
      %v1019 = vmul.f32 %v1000, %v1008
      %v1020 = vmul.f32 %v996, %v1012
      %v1021 = vmul.f32 %v1001, %v1008
      %v1022 = vmul.f32 %v997, %v1012
      %v1023 = vpack.c.bf16 %v1017, %v1015
      %v1024 = vpack.c.bf16 %v1018, %v1016
      %v1025 = vpack.c.bf16 %v1021, %v1019
      %v1026 = vpack.c.bf16 %v1022, %v1020
      %1027 = vst [vmem:[#allocation3 + $0x60] sm:$0xff] %v1023
      %1028 = vst [vmem:[#allocation3 + $0x68] sm:$0xff] %v1024
      %1029 = vst [vmem:[#allocation3 + $0x70] sm:$0xff] %v1025
      %1030 = vst [vmem:[#allocation3 + $0x78] sm:$0xff] %v1026
      %v1031 = vpack.c.bf16 %v807, %v805
      %v1032 = vpack.c.bf16 %v808, %v806
      %v1033 = vpack.c.bf16 %v811, %v809
      %v1034 = vpack.c.bf16 %v812, %v810
      %1035 = vst [vmem:[#allocation3 + $0x80] sm:$0xff] %v1031
      %1036 = vst [vmem:[#allocation3 + $0x88] sm:$0xff] %v1032
      %1037 = vst [vmem:[#allocation3 + $0x90] sm:$0xff] %v1033
      %1038 = vst [vmem:[#allocation3 + $0x98] sm:$0xff] %v1034
      %1039 = vrot.lane.b32.xlu0 %v805, 127
      %v1040 = vpop.permute.xlu0 %1039
      %1041 = vrot.lane.b32.xlu0 %v807, 127
      %v1042 = vpop.permute.xlu0 %1041
      %1043 = vrot.lane.b32.xlu0 %v809, 127
      %v1044 = vpop.permute.xlu0 %1043
      %1045 = vrot.lane.b32.xlu0 %v811, 127
      %v1046 = vpop.permute.xlu0 %1045
      %1047 = vrot.lane.b32.xlu0 %v806, 127
      %v1048 = vpop.permute.xlu0 %1047
      %1049 = vrot.lane.b32.xlu0 %v808, 127
      %v1050 = vpop.permute.xlu0 %1049
      %1051 = vrot.lane.b32.xlu0 %v810, 127
      %v1052 = vpop.permute.xlu0 %1051
      %1053 = vrot.lane.b32.xlu0 %v812, 127
      %v1054 = vpop.permute.xlu0 %1053
      %vm1055 = vcmp.lt.s32.totalorder %v830, 127
      %v1056 = vsel %vm1055, %v1040, %v1048
      %v1057 = vsel %vm1055, %v1042, %v1050
      %v1058 = vsel %vm1055, %v1044, %v1052
      %v1059 = vsel %vm1055, %v1046, %v1054
      %v1060 = vsel %vm1055, %v1048, %v1040
      %v1061 = vsel %vm1055, %v1050, %v1042
      %v1062 = vsel %vm1055, %v1052, %v1044
      %v1063 = vsel %vm1055, %v1054, %v1046
      %s1064 = scalar_lea.vmem %s1, 49
      %v1065 = vld [vmem:[%s1064] ss:$8 sm:$0x3]
      %v1067 = vlaneseq
      %v1068 = vshrl.u32 %v1067, 7
      %v1069 = vsub.s32 0, %v1068
      %v1070 = vrot.slane %v1065, %v1069
      %v1071 = vlaneseq
      %v1072 = vshrl.u32 %v1071, 7
      %v1073 = vsub.s32 1, %v1072
      %v1074 = vrot.slane %v1065, %v1073
      %v1077 = vmul.f32 %v1056, %v1070
      %v1078 = vmul.f32 %v1060, %v1074
      %v1079 = vmul.f32 %v1057, %v1070
      %v1080 = vmul.f32 %v1061, %v1074
      %v1081 = vmul.f32 %v1058, %v1070
      %v1082 = vmul.f32 %v1062, %v1074
      %v1083 = vmul.f32 %v1059, %v1070
      %v1084 = vmul.f32 %v1063, %v1074
      %v1085 = vpack.c.bf16 %v1079, %v1077
      %v1086 = vpack.c.bf16 %v1080, %v1078
      %v1087 = vpack.c.bf16 %v1083, %v1081
      %v1088 = vpack.c.bf16 %v1084, %v1082
      %1089 = vst [vmem:[#allocation3 + $0xa0] sm:$0xff] %v1085
      %1090 = vst [vmem:[#allocation3 + $0xa8] sm:$0xff] %v1086
      %1091 = vst [vmem:[#allocation3 + $0xb0] sm:$0xff] %v1087
      %1092 = vst [vmem:[#allocation3 + $0xb8] sm:$0xff] %v1088
      %1093 = vrot.lane.b32.xlu0 %v805, 113
      %v1094 = vpop.permute.xlu0 %1093
      %1095 = vrot.lane.b32.xlu0 %v807, 113
      %v1096 = vpop.permute.xlu0 %1095
      %1097 = vrot.lane.b32.xlu0 %v809, 113
      %v1098 = vpop.permute.xlu0 %1097
      %1099 = vrot.lane.b32.xlu0 %v811, 113
      %v1100 = vpop.permute.xlu0 %1099
      %1101 = vrot.lane.b32.xlu0 %v806, 113
      %v1102 = vpop.permute.xlu0 %1101
      %1103 = vrot.lane.b32.xlu0 %v808, 113
      %v1104 = vpop.permute.xlu0 %1103
      %1105 = vrot.lane.b32.xlu0 %v810, 113
      %v1106 = vpop.permute.xlu0 %1105
      %1107 = vrot.lane.b32.xlu0 %v812, 113
      %v1108 = vpop.permute.xlu0 %1107
      %vm1109 = vcmp.lt.s32.totalorder %v830, 113
      %v1110 = vsel %vm1109, %v1094, %v1102
      %v1111 = vsel %vm1109, %v1096, %v1104
      %v1112 = vsel %vm1109, %v1098, %v1106
      %v1113 = vsel %vm1109, %v1100, %v1108
      %v1114 = vsel %vm1109, %v1102, %v1094
      %v1115 = vsel %vm1109, %v1104, %v1096
      %v1116 = vsel %vm1109, %v1106, %v1098
      %v1117 = vsel %vm1109, %v1108, %v1100
      %s1118 = scalar_lea.vmem %s1, 54
      %v1119 = vld [vmem:[%s1118] ss:$8 sm:$0x3]
      %v1121 = vlaneseq
      %v1122 = vshrl.u32 %v1121, 7
      %v1123 = vsub.s32 0, %v1122
      %v1124 = vrot.slane %v1119, %v1123
      %v1125 = vlaneseq
      %v1126 = vshrl.u32 %v1125, 7
      %v1127 = vsub.s32 1, %v1126
      %v1128 = vrot.slane %v1119, %v1127
      %v1131 = vmul.f32 %v1110, %v1124
      %v1132 = vmul.f32 %v1114, %v1128
      %v1133 = vmul.f32 %v1111, %v1124
      %v1134 = vmul.f32 %v1115, %v1128
      %v1135 = vmul.f32 %v1112, %v1124
      %v1136 = vmul.f32 %v1116, %v1128
      %v1137 = vmul.f32 %v1113, %v1124
      %v1138 = vmul.f32 %v1117, %v1128
      %v1139 = vpack.c.bf16 %v1133, %v1131
      %v1140 = vpack.c.bf16 %v1134, %v1132
      %v1141 = vpack.c.bf16 %v1137, %v1135
      %v1142 = vpack.c.bf16 %v1138, %v1136
      %1143 = vst [vmem:[#allocation3 + $0xc0] sm:$0xff] %v1139
      %1144 = vst [vmem:[#allocation3 + $0xc8] sm:$0xff] %v1140
      %1145 = vst [vmem:[#allocation3 + $0xd0] sm:$0xff] %v1141
      %1146 = vst [vmem:[#allocation3 + $0xd8] sm:$0xff] %v1142
      %1147 = vrot.lane.b32.xlu0 %v805, 112
      %v1148 = vpop.permute.xlu0 %1147
      %1149 = vrot.lane.b32.xlu0 %v807, 112
      %v1150 = vpop.permute.xlu0 %1149
      %1151 = vrot.lane.b32.xlu0 %v809, 112
      %v1152 = vpop.permute.xlu0 %1151
      %1153 = vrot.lane.b32.xlu0 %v811, 112
      %v1154 = vpop.permute.xlu0 %1153
      %1155 = vrot.lane.b32.xlu0 %v806, 112
      %v1156 = vpop.permute.xlu0 %1155
      %1157 = vrot.lane.b32.xlu0 %v808, 112
      %v1158 = vpop.permute.xlu0 %1157
      %1159 = vrot.lane.b32.xlu0 %v810, 112
      %v1160 = vpop.permute.xlu0 %1159
      %1161 = vrot.lane.b32.xlu0 %v812, 112
      %v1162 = vpop.permute.xlu0 %1161
      %vm1163 = vcmp.lt.s32.totalorder %v830, 112
      %v1164 = vsel %vm1163, %v1148, %v1156
      %v1165 = vsel %vm1163, %v1150, %v1158
      %v1166 = vsel %vm1163, %v1152, %v1160
      %v1167 = vsel %vm1163, %v1154, %v1162
      %v1168 = vsel %vm1163, %v1156, %v1148
      %v1169 = vsel %vm1163, %v1158, %v1150
      %v1170 = vsel %vm1163, %v1160, %v1152
      %v1171 = vsel %vm1163, %v1162, %v1154
      %s1172 = scalar_lea.vmem %s1, 55
      %v1173 = vld [vmem:[%s1172] ss:$8 sm:$0x3]
      %v1175 = vlaneseq
      %v1176 = vshrl.u32 %v1175, 7
      %v1177 = vsub.s32 0, %v1176
      %v1178 = vrot.slane %v1173, %v1177
      %v1179 = vlaneseq
      %v1180 = vshrl.u32 %v1179, 7
      %v1181 = vsub.s32 1, %v1180
      %v1182 = vrot.slane %v1173, %v1181
      %v1185 = vmul.f32 %v1164, %v1178
      %v1186 = vmul.f32 %v1168, %v1182
      %v1187 = vmul.f32 %v1165, %v1178
      %v1188 = vmul.f32 %v1169, %v1182
      %v1189 = vmul.f32 %v1166, %v1178
      %v1190 = vmul.f32 %v1170, %v1182
      %v1191 = vmul.f32 %v1167, %v1178
      %v1192 = vmul.f32 %v1171, %v1182
      %v1193 = vpack.c.bf16 %v1187, %v1185
      %v1194 = vpack.c.bf16 %v1188, %v1186
      %v1195 = vpack.c.bf16 %v1191, %v1189
      %v1196 = vpack.c.bf16 %v1192, %v1190
      %1197 = vst [vmem:[#allocation3 + $0xe0] sm:$0xff] %v1193
      %1198 = vst [vmem:[#allocation3 + $0xe8] sm:$0xff] %v1194
      %1199 = vst [vmem:[#allocation3 + $0xf0] sm:$0xff] %v1195
      %1200 = vst [vmem:[#allocation3 + $0xf8] sm:$0xff] %v1196
      %1201 = vrot.lane.b32.xlu0 %v805, 111
      %v1202 = vpop.permute.xlu0 %1201
      %1203 = vrot.lane.b32.xlu0 %v807, 111
      %v1204 = vpop.permute.xlu0 %1203
      %1205 = vrot.lane.b32.xlu0 %v809, 111
      %v1206 = vpop.permute.xlu0 %1205
      %1207 = vrot.lane.b32.xlu0 %v811, 111
      %v1208 = vpop.permute.xlu0 %1207
      %1209 = vrot.lane.b32.xlu0 %v806, 111
      %v1210 = vpop.permute.xlu0 %1209
      %1211 = vrot.lane.b32.xlu0 %v808, 111
      %v1212 = vpop.permute.xlu0 %1211
      %1213 = vrot.lane.b32.xlu0 %v810, 111
      %v1214 = vpop.permute.xlu0 %1213
      %1215 = vrot.lane.b32.xlu0 %v812, 111
      %v1216 = vpop.permute.xlu0 %1215
      %vm1217 = vcmp.lt.s32.totalorder %v830, 111
      %v1218 = vsel %vm1217, %v1202, %v1210
      %v1219 = vsel %vm1217, %v1204, %v1212
      %v1220 = vsel %vm1217, %v1206, %v1214
      %v1221 = vsel %vm1217, %v1208, %v1216
      %v1222 = vsel %vm1217, %v1210, %v1202
      %v1223 = vsel %vm1217, %v1212, %v1204
      %v1224 = vsel %vm1217, %v1214, %v1206
      %v1225 = vsel %vm1217, %v1216, %v1208
      %s1226 = scalar_lea.vmem %s1, 64
      %v1227 = vld [vmem:[%s1226] ss:$8 sm:$0x3]
      %v1229 = vlaneseq
      %v1230 = vshrl.u32 %v1229, 7
      %v1231 = vsub.s32 0, %v1230
      %v1232 = vrot.slane %v1227, %v1231
      %v1233 = vlaneseq
      %v1234 = vshrl.u32 %v1233, 7
      %v1235 = vsub.s32 1, %v1234
      %v1236 = vrot.slane %v1227, %v1235
      %v1239 = vmul.f32 %v1218, %v1232
      %v1240 = vmul.f32 %v1222, %v1236
      %v1241 = vmul.f32 %v1219, %v1232
      %v1242 = vmul.f32 %v1223, %v1236
      %v1243 = vmul.f32 %v1220, %v1232
      %v1244 = vmul.f32 %v1224, %v1236
      %v1245 = vmul.f32 %v1221, %v1232
      %v1246 = vmul.f32 %v1225, %v1236
      %v1247 = vpack.c.bf16 %v1241, %v1239
      %v1248 = vpack.c.bf16 %v1242, %v1240
      %v1249 = vpack.c.bf16 %v1245, %v1243
      %v1250 = vpack.c.bf16 %v1246, %v1244
      %1251 = vst [vmem:[#allocation3 + $0x100] sm:$0xff] %v1247
      %1252 = vst [vmem:[#allocation3 + $0x108] sm:$0xff] %v1248
      %1253 = vst [vmem:[#allocation3 + $0x110] sm:$0xff] %v1249
      %1254 = vst [vmem:[#allocation3 + $0x118] sm:$0xff] %v1250
      %s1255 = smul.addr %s537, 4
      %s1256 = scalar_lea.vmem %s4, %s1255
      %v1257 = vld [vmem:[%s1256] sm:$0xff]
      %v1258 = vld [vmem:[%s1256 + $0x8] sm:$0xf]
      %v1259 = vld [vmem:[%s1256 + $0xc] sm:$0xff]
      %v1260 = vld [vmem:[%s1256 + $0x14] sm:$0xf]
      %v1261 = vld [vmem:[%s1256 + $0x18] sm:$0xff]
      %v1262 = vld [vmem:[%s1256 + $0x20] sm:$0xf]
      %v1263 = vld [vmem:[%s1256 + $0x24] sm:$0xff]
      %v1264 = vld [vmem:[%s1256 + $0x2c] sm:$0xf]
      %v1265 = vld [vmem:[#allocation3] sm:$0xff]
      %v1266 = vld [vmem:[#allocation3 + $0x8] sm:$0xff]
      %v1267 = vld [vmem:[#allocation3 + $0x10] sm:$0xff]
      %v1268 = vld [vmem:[#allocation3 + $0x18] sm:$0xff]
      %v1269 = vld [vmem:[#allocation3 + $0x20] sm:$0xff]
      %v1270 = vld [vmem:[#allocation3 + $0x28] sm:$0xff]
      %v1271 = vld [vmem:[#allocation3 + $0x30] sm:$0xff]
      %v1272 = vld [vmem:[#allocation3 + $0x38] sm:$0xff]
      %v1273 = vld [vmem:[#allocation3 + $0x40] sm:$0xff]
      %v1274 = vld [vmem:[#allocation3 + $0x48] sm:$0xff]
      %v1275 = vld [vmem:[#allocation3 + $0x50] sm:$0xff]
      %v1276 = vld [vmem:[#allocation3 + $0x58] sm:$0xff]
      %v1277 = vld [vmem:[#allocation3 + $0x60] sm:$0xff]
      %v1278 = vld [vmem:[#allocation3 + $0x68] sm:$0xff]
      %v1279 = vld [vmem:[#allocation3 + $0x70] sm:$0xff]
      %v1280 = vld [vmem:[#allocation3 + $0x78] sm:$0xff]
      %v1281 = vld [vmem:[#allocation3 + $0x80] sm:$0xff]
      %v1282 = vld [vmem:[#allocation3 + $0x88] sm:$0xff]
      %v1283 = vld [vmem:[#allocation3 + $0x90] sm:$0xff]
      %v1284 = vld [vmem:[#allocation3 + $0x98] sm:$0xff]
      %v1285 = vld [vmem:[#allocation3 + $0xa0] sm:$0xff]
      %v1286 = vld [vmem:[#allocation3 + $0xa8] sm:$0xff]
      %v1287 = vld [vmem:[#allocation3 + $0xb0] sm:$0xff]
      %v1288 = vld [vmem:[#allocation3 + $0xb8] sm:$0xff]
      %v1289 = vld [vmem:[#allocation3 + $0xc0] sm:$0xff]
      %v1290 = vld [vmem:[#allocation3 + $0xc8] sm:$0xff]
      %v1291 = vld [vmem:[#allocation3 + $0xd0] sm:$0xff]
      %v1292 = vld [vmem:[#allocation3 + $0xd8] sm:$0xff]
      %v1293 = vld [vmem:[#allocation3 + $0xe0] sm:$0xff]
      %v1294 = vld [vmem:[#allocation3 + $0xe8] sm:$0xff]
      %v1295 = vld [vmem:[#allocation3 + $0xf0] sm:$0xff]
      %v1296 = vld [vmem:[#allocation3 + $0xf8] sm:$0xff]
      %v1297 = vld [vmem:[#allocation3 + $0x100] sm:$0xff]
      %v1298 = vld [vmem:[#allocation3 + $0x108] sm:$0xff]
      %v1299 = vld [vmem:[#allocation3 + $0x110] sm:$0xff]
      %v1300 = vld [vmem:[#allocation3 + $0x118] sm:$0xff]
      %1302 = vset.pattern.permute.xlu0 0
      %1303 = vperm.xlu0 %1302, %v793
      %v1304 = vpop.permute.xlu0 %1303
      %1307 = vset.pattern.permute.xlu0 0
      %1308 = vperm.xlu0 %1307, %v794
      %v1309 = vpop.permute.xlu0 %1308
      %1312 = vset.pattern.permute.xlu0 0
      %1313 = vperm.xlu0 %1312, %v795
      %v1314 = vpop.permute.xlu0 %1313
      %1317 = vset.pattern.permute.xlu0 0
      %1318 = vperm.xlu0 %1317, %v796
      %v1319 = vpop.permute.xlu0 %1318
      %v1329 = vunpack.c.l.b16 %v1257
      %v1330 = vunpack.c.h.b16 %v1257
      %v1331 = vunpack.c.l.b16 %v1258
      %v1332 = vunpack.c.l.b16 %v1259
      %v1333 = vunpack.c.h.b16 %v1259
      %v1334 = vunpack.c.l.b16 %v1260
      %v1335 = vunpack.c.l.b16 %v1261
      %v1336 = vunpack.c.h.b16 %v1261
      %v1337 = vunpack.c.l.b16 %v1262
      %v1338 = vunpack.c.l.b16 %v1263
      %v1339 = vunpack.c.h.b16 %v1263
      %v1340 = vunpack.c.l.b16 %v1264
      %v1341 = vpack.c.b16 %v1332, %v1329
      %v1342 = vpack.c.b16 %v1333, %v1330
      %v1343 = vpack.c.b16 %v1334, %v1331
      %v1344 = vpack.c.b16 %v1338, %v1335
      %v1345 = vpack.c.b16 %v1339, %v1336
      %v1346 = vpack.c.b16 %v1340, %v1337
      %v1352 = vsel %vm656, %v1343, 0
      %v1355 = vsel %vm656, %v1346, 0
      %1357 = vmatprep.subr.bf16.mxu0 %v1266
      %1358 = vmatpush1.bf16.msra.mxu0 %v1265
      %1359 = vmatprep.subr.bf16.mxu0 %v1268
      %1360 = vmatpush1.bf16.msra.mxu0 %v1267
      %1361 = vmatprep.subr.bf16.mxu0 %v1270
      %1362 = vmatpush1.bf16.msra.mxu0 %v1269
      %1363 = vmatprep.subr.bf16.mxu0 %v1272
      %1364 = vmatpush1.bf16.msra.mxu0 %v1271
      %1365 = vmatprep.subr.bf16.mxu0 %v1274
      %1366 = vmatpush1.bf16.msra.mxu0 %v1273
      %1367 = vmatprep.subr.bf16.mxu0 %v1276
      %1368 = vmatpush1.bf16.msra.mxu0 %v1275
      %1369 = vmatprep.subr.bf16.mxu0 %v1278
      %1370 = vmatpush1.bf16.msra.mxu0 %v1277
      %1371 = vmatprep.subr.bf16.mxu0 %v1280
      %1372 = vmatpush1.bf16.msra.mxu0 %v1279
      %1373 = vmatprep.subr.bf16.mxu0 %v1282
      %1374 = vmatpush1.bf16.msra.mxu0 %v1281
      %1375 = vmatprep.subr.bf16.mxu0 %v1284
      %1376 = vmatpush1.bf16.msra.mxu0 %v1283
      %1377 = vmatprep.subr.bf16.mxu0 %v1286
      %1378 = vmatpush1.bf16.msra.mxu0 %v1285
      %1379 = vmatprep.subr.bf16.mxu0 %v1288
      %1380 = vmatpush1.bf16.msra.mxu0 %v1287
      %1381 = vmatprep.subr.bf16.mxu0 %v1290
      %1382 = vmatpush1.bf16.msra.mxu0 %v1289
      %1383 = vmatprep.subr.bf16.mxu0 %v1292
      %1384 = vmatpush1.bf16.msra.mxu0 %v1291
      %1385 = vmatprep.subr.bf16.mxu0 %v1294
      %1386 = vmatpush1.bf16.msra.mxu0 %v1293
      %1387 = vmatprep.subr.bf16.mxu0 %v1296
      %1388 = vmatpush1.bf16.msra.mxu0 %v1295
      %1389 = vmatprep.mubr.bf16.mxu0 %v1342
      %1390 = vmatmul.mubr.bf16.gmra.mrb[0].mxu0 %v1341
      %v1391 = vpop.f32.mrb[0].mxu0
      %v1392 = vadd.f32 %v1304, %v1391
      %v1393 = vpop.f32.mrb[0].mxu0
      %v1394 = vadd.f32 %v1304, %v1393
      %v1395 = vpop.f32.mrb[0].mxu0
      %v1396 = vadd.f32 %v1309, %v1395
      %v1397 = vpop.f32.mrb[0].mxu0
      %v1398 = vadd.f32 %v1309, %v1397
      %1399 = vmatprep.mubr.bf16.mxu0 %v1345
      %1400 = vmatmul.mubr.bf16.gmra.mrb[0].mxu0 %v1344
      %v1401 = vpop.f32.mrb[0].mxu0
      %v1402 = vadd.f32 %v1314, %v1401
      %v1403 = vpop.f32.mrb[0].mxu0
      %v1404 = vadd.f32 %v1314, %v1403
      %v1405 = vpop.f32.mrb[0].mxu0
      %v1406 = vadd.f32 %v1319, %v1405
      %v1407 = vpop.f32.mrb[0].mxu0
      %v1408 = vadd.f32 %v1319, %v1407
      %1409 = vdwg.mxu0
      %1410 = vmatprep.subr.bf16.mxu0 %v1298
      %1411 = vmatpush1.bf16.msra.mxu0 %v1297
      %1412 = vmatprep.subr.bf16.mxu0 %v1300
      %1413 = vmatpush1.bf16.msra.mxu0 %v1299
      %1414 = vmatprep.subr.bf16.mxu0 0
      %1415 = vmatpush1.bf16.msra.mxu0 0
      %1416 = vmatprep.subr.bf16.mxu0 0
      %1417 = vmatpush1.bf16.msra.mxu0 0
      %1418 = vmatprep.subr.bf16.mxu0 0
      %1419 = vmatpush1.bf16.msra.mxu0 0
      %1420 = vmatprep.subr.bf16.mxu0 0
      %1421 = vmatpush1.bf16.msra.mxu0 0
      %1422 = vmatprep.subr.bf16.mxu0 0
      %1423 = vmatpush1.bf16.msra.mxu0 0
      %1424 = vmatprep.subr.bf16.mxu0 0
      %1425 = vmatpush1.bf16.msra.mxu0 0
      %1426 = vmatprep.subr.bf16.mxu0 0
      %1427 = vmatpush1.bf16.msra.mxu0 0
      %1428 = vmatprep.subr.bf16.mxu0 0
      %1429 = vmatpush1.bf16.msra.mxu0 0
      %1430 = vmatprep.subr.bf16.mxu0 0
      %1431 = vmatpush1.bf16.msra.mxu0 0
      %1432 = vmatprep.subr.bf16.mxu0 0
      %1433 = vmatpush1.bf16.msra.mxu0 0
      %1434 = vmatprep.subr.bf16.mxu0 0
      %1435 = vmatpush1.bf16.msra.mxu0 0
      %1436 = vmatprep.subr.bf16.mxu0 0
      %1437 = vmatpush1.bf16.msra.mxu0 0
      %1438 = vmatprep.subr.bf16.mxu0 0
      %1439 = vmatpush1.bf16.msra.mxu0 0
      %1440 = vmatprep.subr.bf16.mxu0 0
      %1441 = vmatpush1.bf16.msra.mxu0 0
      %1442 = vmatprep.mubr.bf16.mxu0 0
      %1443 = vmatmul.mubr.bf16.gmra.mrb[0].mxu0 %v1352
      %v1444 = vpop.f32.mrb[0].mxu0
      %v1445 = vadd.f32 %v1392, %v1444
      %v1446 = vpop.f32.mrb[0].mxu0
      %v1447 = vadd.f32 %v1394, %v1446
      %v1448 = vpop.f32.mrb[0].mxu0
      %v1449 = vadd.f32 %v1396, %v1448
      %v1450 = vpop.f32.mrb[0].mxu0
      %v1451 = vadd.f32 %v1398, %v1450
      %1452 = vmatprep.mubr.bf16.mxu0 0
      %1453 = vmatmul.mubr.bf16.gmra.mrb[0].mxu0 %v1355
      %v1454 = vpop.f32.mrb[0].mxu0
      %v1455 = vadd.f32 %v1402, %v1454
      %v1456 = vpop.f32.mrb[0].mxu0
      %v1457 = vadd.f32 %v1404, %v1456
      %v1458 = vpop.f32.mrb[0].mxu0
      %v1459 = vadd.f32 %v1406, %v1458
      %v1460 = vpop.f32.mrb[0].mxu0
      %v1461 = vadd.f32 %v1408, %v1460
      %1462 = vdwg.mxu0
      %1463 = vst [vmem:[#allocation5] sm:$0xff] %v1445
      %1464 = vst [vmem:[#allocation5 + $0x8] sm:$0xff] %v1447
      %1465 = vst [vmem:[#allocation5 + $0x10] sm:$0xff] %v1449
      %1466 = vst [vmem:[#allocation5 + $0x18] sm:$0xff] %v1451
      %1467 = vst [vmem:[#allocation5 + $0x20] sm:$0xff] %v1455
      %1468 = vst [vmem:[#allocation5 + $0x28] sm:$0xff] %v1457
      %1469 = vst [vmem:[#allocation5 + $0x30] sm:$0xff] %v1459
      %1470 = vst [vmem:[#allocation5 + $0x38] sm:$0xff] %v1461
      %v1471 = vld [vmem:[#allocation4 + $0x40] sm:$0xff]
      %v1472 = vld [vmem:[#allocation4 + $0x48] sm:$0xff]
      %v1473 = vld [vmem:[#allocation4 + $0x50] sm:$0xff]
      %v1474 = vld [vmem:[#allocation4 + $0x58] sm:$0xff]
      %v1475 = vld [vmem:[#allocation4 + $0x60] sm:$0xff]
      %v1476 = vld [vmem:[#allocation4 + $0x68] sm:$0xff]
      %v1477 = vld [vmem:[#allocation4 + $0x70] sm:$0xff]
      %v1478 = vld [vmem:[#allocation4 + $0x78] sm:$0xff]
      %1479 = vrot.lane.b32.xlu0 %v1471, 34
      %v1480 = vpop.permute.xlu0 %1479
      %1481 = vrot.lane.b32.xlu0 %v1473, 34
      %v1482 = vpop.permute.xlu0 %1481
      %1483 = vrot.lane.b32.xlu0 %v1475, 34
      %v1484 = vpop.permute.xlu0 %1483
      %1485 = vrot.lane.b32.xlu0 %v1477, 34
      %v1486 = vpop.permute.xlu0 %1485
      %1487 = vrot.lane.b32.xlu0 %v1472, 34
      %v1488 = vpop.permute.xlu0 %1487
      %1489 = vrot.lane.b32.xlu0 %v1474, 34
      %v1490 = vpop.permute.xlu0 %1489
      %1491 = vrot.lane.b32.xlu0 %v1476, 34
      %v1492 = vpop.permute.xlu0 %1491
      %1493 = vrot.lane.b32.xlu0 %v1478, 34
      %v1494 = vpop.permute.xlu0 %1493
      %vm1495 = vcmp.lt.s32.totalorder %v830, 34
      %v1496 = vsel %vm1495, %v1480, %v1488
      %v1497 = vsel %vm1495, %v1482, %v1490
      %v1498 = vsel %vm1495, %v1484, %v1492
      %v1499 = vsel %vm1495, %v1486, %v1494
      %v1500 = vsel %vm1495, %v1488, %v1480
      %v1501 = vsel %vm1495, %v1490, %v1482
      %v1502 = vsel %vm1495, %v1492, %v1484
      %v1503 = vsel %vm1495, %v1494, %v1486
      %s1504 = scalar_lea.vmem %s1, 16
      %v1505 = vld [vmem:[%s1504] ss:$8 sm:$0x3]
      %v1507 = vlaneseq
      %v1508 = vshrl.u32 %v1507, 7
      %v1509 = vsub.s32 0, %v1508
      %v1510 = vrot.slane %v1505, %v1509
      %v1511 = vlaneseq
      %v1512 = vshrl.u32 %v1511, 7
      %v1513 = vsub.s32 1, %v1512
      %v1514 = vrot.slane %v1505, %v1513
      %v1517 = vmul.f32 %v1500, %v1510
      %v1518 = vmul.f32 %v1496, %v1514
      %v1519 = vmul.f32 %v1501, %v1510
      %v1520 = vmul.f32 %v1497, %v1514
      %v1521 = vmul.f32 %v1502, %v1510
      %v1522 = vmul.f32 %v1498, %v1514
      %v1523 = vmul.f32 %v1503, %v1510
      %v1524 = vmul.f32 %v1499, %v1514
      %v1525 = vpack.c.bf16 %v1519, %v1517
      %v1526 = vpack.c.bf16 %v1520, %v1518
      %v1527 = vpack.c.bf16 %v1523, %v1521
      %v1528 = vpack.c.bf16 %v1524, %v1522
      %1529 = vst [vmem:[#allocation3] sm:$0xff] %v1525
      %1530 = vst [vmem:[#allocation3 + $0x8] sm:$0xff] %v1526
      %1531 = vst [vmem:[#allocation3 + $0x10] sm:$0xff] %v1527
      %1532 = vst [vmem:[#allocation3 + $0x18] sm:$0xff] %v1528
      %1533 = vrot.lane.b32.xlu0 %v1471, 33
      %v1534 = vpop.permute.xlu0 %1533
      %1535 = vrot.lane.b32.xlu0 %v1473, 33
      %v1536 = vpop.permute.xlu0 %1535
      %1537 = vrot.lane.b32.xlu0 %v1475, 33
      %v1538 = vpop.permute.xlu0 %1537
      %1539 = vrot.lane.b32.xlu0 %v1477, 33
      %v1540 = vpop.permute.xlu0 %1539
      %1541 = vrot.lane.b32.xlu0 %v1472, 33
      %v1542 = vpop.permute.xlu0 %1541
      %1543 = vrot.lane.b32.xlu0 %v1474, 33
      %v1544 = vpop.permute.xlu0 %1543
      %1545 = vrot.lane.b32.xlu0 %v1476, 33
      %v1546 = vpop.permute.xlu0 %1545
      %1547 = vrot.lane.b32.xlu0 %v1478, 33
      %v1548 = vpop.permute.xlu0 %1547
      %vm1549 = vcmp.lt.s32.totalorder %v830, 33
      %v1550 = vsel %vm1549, %v1534, %v1542
      %v1551 = vsel %vm1549, %v1536, %v1544
      %v1552 = vsel %vm1549, %v1538, %v1546
      %v1553 = vsel %vm1549, %v1540, %v1548
      %v1554 = vsel %vm1549, %v1542, %v1534
      %v1555 = vsel %vm1549, %v1544, %v1536
      %v1556 = vsel %vm1549, %v1546, %v1538
      %v1557 = vsel %vm1549, %v1548, %v1540
      %s1558 = scalar_lea.vmem %s1, 17
      %v1559 = vld [vmem:[%s1558] ss:$8 sm:$0x3]
      %v1561 = vlaneseq
      %v1562 = vshrl.u32 %v1561, 7
      %v1563 = vsub.s32 0, %v1562
      %v1564 = vrot.slane %v1559, %v1563
      %v1565 = vlaneseq
      %v1566 = vshrl.u32 %v1565, 7
      %v1567 = vsub.s32 1, %v1566
      %v1568 = vrot.slane %v1559, %v1567
      %v1571 = vmul.f32 %v1554, %v1564
      %v1572 = vmul.f32 %v1550, %v1568
      %v1573 = vmul.f32 %v1555, %v1564
      %v1574 = vmul.f32 %v1551, %v1568
      %v1575 = vmul.f32 %v1556, %v1564
      %v1576 = vmul.f32 %v1552, %v1568
      %v1577 = vmul.f32 %v1557, %v1564
      %v1578 = vmul.f32 %v1553, %v1568
      %v1579 = vpack.c.bf16 %v1573, %v1571
      %v1580 = vpack.c.bf16 %v1574, %v1572
      %v1581 = vpack.c.bf16 %v1577, %v1575
      %v1582 = vpack.c.bf16 %v1578, %v1576
      %1583 = vst [vmem:[#allocation3 + $0x20] sm:$0xff] %v1579
      %1584 = vst [vmem:[#allocation3 + $0x28] sm:$0xff] %v1580
      %1585 = vst [vmem:[#allocation3 + $0x30] sm:$0xff] %v1581
      %1586 = vst [vmem:[#allocation3 + $0x38] sm:$0xff] %v1582
      %1587 = vrot.lane.b32.xlu0 %v1471, 32
      %v1588 = vpop.permute.xlu0 %1587
      %1589 = vrot.lane.b32.xlu0 %v1473, 32
      %v1590 = vpop.permute.xlu0 %1589
      %1591 = vrot.lane.b32.xlu0 %v1475, 32
      %v1592 = vpop.permute.xlu0 %1591
      %1593 = vrot.lane.b32.xlu0 %v1477, 32
      %v1594 = vpop.permute.xlu0 %1593
      %1595 = vrot.lane.b32.xlu0 %v1472, 32
      %v1596 = vpop.permute.xlu0 %1595
      %1597 = vrot.lane.b32.xlu0 %v1474, 32
      %v1598 = vpop.permute.xlu0 %1597
      %1599 = vrot.lane.b32.xlu0 %v1476, 32
      %v1600 = vpop.permute.xlu0 %1599
      %1601 = vrot.lane.b32.xlu0 %v1478, 32
      %v1602 = vpop.permute.xlu0 %1601
      %vm1603 = vcmp.lt.s32.totalorder %v830, 32
      %v1604 = vsel %vm1603, %v1588, %v1596
      %v1605 = vsel %vm1603, %v1590, %v1598
      %v1606 = vsel %vm1603, %v1592, %v1600
      %v1607 = vsel %vm1603, %v1594, %v1602
      %v1608 = vsel %vm1603, %v1596, %v1588
      %v1609 = vsel %vm1603, %v1598, %v1590
      %v1610 = vsel %vm1603, %v1600, %v1592
      %v1611 = vsel %vm1603, %v1602, %v1594
      %s1612 = scalar_lea.vmem %s1, 18
      %v1613 = vld [vmem:[%s1612] ss:$8 sm:$0x3]
      %v1615 = vlaneseq
      %v1616 = vshrl.u32 %v1615, 7
      %v1617 = vsub.s32 0, %v1616
      %v1618 = vrot.slane %v1613, %v1617
      %v1619 = vlaneseq
      %v1620 = vshrl.u32 %v1619, 7
      %v1621 = vsub.s32 1, %v1620
      %v1622 = vrot.slane %v1613, %v1621
      %v1625 = vmul.f32 %v1608, %v1618
      %v1626 = vmul.f32 %v1604, %v1622
      %v1627 = vmul.f32 %v1609, %v1618
      %v1628 = vmul.f32 %v1605, %v1622
      %v1629 = vmul.f32 %v1610, %v1618
      %v1630 = vmul.f32 %v1606, %v1622
      %v1631 = vmul.f32 %v1611, %v1618
      %v1632 = vmul.f32 %v1607, %v1622
      %v1633 = vpack.c.bf16 %v1627, %v1625
      %v1634 = vpack.c.bf16 %v1628, %v1626
      %v1635 = vpack.c.bf16 %v1631, %v1629
      %v1636 = vpack.c.bf16 %v1632, %v1630
      %1637 = vst [vmem:[#allocation3 + $0x40] sm:$0xff] %v1633
      %1638 = vst [vmem:[#allocation3 + $0x48] sm:$0xff] %v1634
      %1639 = vst [vmem:[#allocation3 + $0x50] sm:$0xff] %v1635
      %1640 = vst [vmem:[#allocation3 + $0x58] sm:$0xff] %v1636
      %1641 = vrot.lane.b32.xlu0 %v1471, 31
      %v1642 = vpop.permute.xlu0 %1641
      %1643 = vrot.lane.b32.xlu0 %v1473, 31
      %v1644 = vpop.permute.xlu0 %1643
      %1645 = vrot.lane.b32.xlu0 %v1475, 31
      %v1646 = vpop.permute.xlu0 %1645
      %1647 = vrot.lane.b32.xlu0 %v1477, 31
      %v1648 = vpop.permute.xlu0 %1647
      %1649 = vrot.lane.b32.xlu0 %v1472, 31
      %v1650 = vpop.permute.xlu0 %1649
      %1651 = vrot.lane.b32.xlu0 %v1474, 31
      %v1652 = vpop.permute.xlu0 %1651
      %1653 = vrot.lane.b32.xlu0 %v1476, 31
      %v1654 = vpop.permute.xlu0 %1653
      %1655 = vrot.lane.b32.xlu0 %v1478, 31
      %v1656 = vpop.permute.xlu0 %1655
      %vm1657 = vcmp.lt.s32.totalorder %v830, 31
      %v1658 = vsel %vm1657, %v1642, %v1650
      %v1659 = vsel %vm1657, %v1644, %v1652
      %v1660 = vsel %vm1657, %v1646, %v1654
      %v1661 = vsel %vm1657, %v1648, %v1656
      %v1662 = vsel %vm1657, %v1650, %v1642
      %v1663 = vsel %vm1657, %v1652, %v1644
      %v1664 = vsel %vm1657, %v1654, %v1646
      %v1665 = vsel %vm1657, %v1656, %v1648
      %s1666 = scalar_lea.vmem %s1, 19
      %v1667 = vld [vmem:[%s1666] ss:$8 sm:$0x3]
      %v1669 = vlaneseq
      %v1670 = vshrl.u32 %v1669, 7
      %v1671 = vsub.s32 0, %v1670
      %v1672 = vrot.slane %v1667, %v1671
      %v1673 = vlaneseq
      %v1674 = vshrl.u32 %v1673, 7
      %v1675 = vsub.s32 1, %v1674
      %v1676 = vrot.slane %v1667, %v1675
      %v1679 = vmul.f32 %v1662, %v1672
      %v1680 = vmul.f32 %v1658, %v1676
      %v1681 = vmul.f32 %v1663, %v1672
      %v1682 = vmul.f32 %v1659, %v1676
      %v1683 = vmul.f32 %v1664, %v1672
      %v1684 = vmul.f32 %v1660, %v1676
      %v1685 = vmul.f32 %v1665, %v1672
      %v1686 = vmul.f32 %v1661, %v1676
      %v1687 = vpack.c.bf16 %v1681, %v1679
      %v1688 = vpack.c.bf16 %v1682, %v1680
      %v1689 = vpack.c.bf16 %v1685, %v1683
      %v1690 = vpack.c.bf16 %v1686, %v1684
      %1691 = vst [vmem:[#allocation3 + $0x60] sm:$0xff] %v1687
      %1692 = vst [vmem:[#allocation3 + $0x68] sm:$0xff] %v1688
      %1693 = vst [vmem:[#allocation3 + $0x70] sm:$0xff] %v1689
      %1694 = vst [vmem:[#allocation3 + $0x78] sm:$0xff] %v1690
      %1695 = vrot.lane.b32.xlu0 %v1471, 30
      %v1696 = vpop.permute.xlu0 %1695
      %1697 = vrot.lane.b32.xlu0 %v1473, 30
      %v1698 = vpop.permute.xlu0 %1697
      %1699 = vrot.lane.b32.xlu0 %v1475, 30
      %v1700 = vpop.permute.xlu0 %1699
      %1701 = vrot.lane.b32.xlu0 %v1477, 30
      %v1702 = vpop.permute.xlu0 %1701
      %1703 = vrot.lane.b32.xlu0 %v1472, 30
      %v1704 = vpop.permute.xlu0 %1703
      %1705 = vrot.lane.b32.xlu0 %v1474, 30
      %v1706 = vpop.permute.xlu0 %1705
      %1707 = vrot.lane.b32.xlu0 %v1476, 30
      %v1708 = vpop.permute.xlu0 %1707
      %1709 = vrot.lane.b32.xlu0 %v1478, 30
      %v1710 = vpop.permute.xlu0 %1709
      %vm1711 = vcmp.lt.s32.totalorder %v830, 30
      %v1712 = vsel %vm1711, %v1696, %v1704
      %v1713 = vsel %vm1711, %v1698, %v1706
      %v1714 = vsel %vm1711, %v1700, %v1708
      %v1715 = vsel %vm1711, %v1702, %v1710
      %v1716 = vsel %vm1711, %v1704, %v1696
      %v1717 = vsel %vm1711, %v1706, %v1698
      %v1718 = vsel %vm1711, %v1708, %v1700
      %v1719 = vsel %vm1711, %v1710, %v1702
      %s1720 = scalar_lea.vmem %s1, 20
      %v1721 = vld [vmem:[%s1720] ss:$8 sm:$0x3]
      %v1723 = vlaneseq
      %v1724 = vshrl.u32 %v1723, 7
      %v1725 = vsub.s32 0, %v1724
      %v1726 = vrot.slane %v1721, %v1725
      %v1727 = vlaneseq
      %v1728 = vshrl.u32 %v1727, 7
      %v1729 = vsub.s32 1, %v1728
      %v1730 = vrot.slane %v1721, %v1729
      %v1733 = vmul.f32 %v1716, %v1726
      %v1734 = vmul.f32 %v1712, %v1730
      %v1735 = vmul.f32 %v1717, %v1726
      %v1736 = vmul.f32 %v1713, %v1730
      %v1737 = vmul.f32 %v1718, %v1726
      %v1738 = vmul.f32 %v1714, %v1730
      %v1739 = vmul.f32 %v1719, %v1726
      %v1740 = vmul.f32 %v1715, %v1730
      %v1741 = vpack.c.bf16 %v1735, %v1733
      %v1742 = vpack.c.bf16 %v1736, %v1734
      %v1743 = vpack.c.bf16 %v1739, %v1737
      %v1744 = vpack.c.bf16 %v1740, %v1738
      %1745 = vst [vmem:[#allocation3 + $0x80] sm:$0xff] %v1741
      %1746 = vst [vmem:[#allocation3 + $0x88] sm:$0xff] %v1742
      %1747 = vst [vmem:[#allocation3 + $0x90] sm:$0xff] %v1743
      %1748 = vst [vmem:[#allocation3 + $0x98] sm:$0xff] %v1744
      %1749 = vrot.lane.b32.xlu0 %v1471, 18
      %v1750 = vpop.permute.xlu0 %1749
      %1751 = vrot.lane.b32.xlu0 %v1473, 18
      %v1752 = vpop.permute.xlu0 %1751
      %1753 = vrot.lane.b32.xlu0 %v1475, 18
      %v1754 = vpop.permute.xlu0 %1753
      %1755 = vrot.lane.b32.xlu0 %v1477, 18
      %v1756 = vpop.permute.xlu0 %1755
      %1757 = vrot.lane.b32.xlu0 %v1472, 18
      %v1758 = vpop.permute.xlu0 %1757
      %1759 = vrot.lane.b32.xlu0 %v1474, 18
      %v1760 = vpop.permute.xlu0 %1759
      %1761 = vrot.lane.b32.xlu0 %v1476, 18
      %v1762 = vpop.permute.xlu0 %1761
      %1763 = vrot.lane.b32.xlu0 %v1478, 18
      %v1764 = vpop.permute.xlu0 %1763
      %vm1765 = vcmp.lt.s32.totalorder %v830, 18
      %v1766 = vsel %vm1765, %v1750, %v1758
      %v1767 = vsel %vm1765, %v1752, %v1760
      %v1768 = vsel %vm1765, %v1754, %v1762
      %v1769 = vsel %vm1765, %v1756, %v1764
      %v1770 = vsel %vm1765, %v1758, %v1750
      %v1771 = vsel %vm1765, %v1760, %v1752
      %v1772 = vsel %vm1765, %v1762, %v1754
      %v1773 = vsel %vm1765, %v1764, %v1756
      %s1774 = scalar_lea.vmem %s1, 23
      %v1775 = vld [vmem:[%s1774] ss:$8 sm:$0x3]
      %v1777 = vlaneseq
      %v1778 = vshrl.u32 %v1777, 7
      %v1779 = vsub.s32 0, %v1778
      %v1780 = vrot.slane %v1775, %v1779
      %v1781 = vlaneseq
      %v1782 = vshrl.u32 %v1781, 7
      %v1783 = vsub.s32 1, %v1782
      %v1784 = vrot.slane %v1775, %v1783
      %v1787 = vmul.f32 %v1770, %v1780
      %v1788 = vmul.f32 %v1766, %v1784
      %v1789 = vmul.f32 %v1771, %v1780
      %v1790 = vmul.f32 %v1767, %v1784
      %v1791 = vmul.f32 %v1772, %v1780
      %v1792 = vmul.f32 %v1768, %v1784
      %v1793 = vmul.f32 %v1773, %v1780
      %v1794 = vmul.f32 %v1769, %v1784
      %v1795 = vpack.c.bf16 %v1789, %v1787
      %v1796 = vpack.c.bf16 %v1790, %v1788
      %v1797 = vpack.c.bf16 %v1793, %v1791
      %v1798 = vpack.c.bf16 %v1794, %v1792
      %1799 = vst [vmem:[#allocation3 + $0xa0] sm:$0xff] %v1795
      %1800 = vst [vmem:[#allocation3 + $0xa8] sm:$0xff] %v1796
      %1801 = vst [vmem:[#allocation3 + $0xb0] sm:$0xff] %v1797
      %1802 = vst [vmem:[#allocation3 + $0xb8] sm:$0xff] %v1798
      %1803 = vrot.lane.b32.xlu0 %v1471, 17
      %v1804 = vpop.permute.xlu0 %1803
      %1805 = vrot.lane.b32.xlu0 %v1473, 17
      %v1806 = vpop.permute.xlu0 %1805
      %1807 = vrot.lane.b32.xlu0 %v1475, 17
      %v1808 = vpop.permute.xlu0 %1807
      %1809 = vrot.lane.b32.xlu0 %v1477, 17
      %v1810 = vpop.permute.xlu0 %1809
      %1811 = vrot.lane.b32.xlu0 %v1472, 17
      %v1812 = vpop.permute.xlu0 %1811
      %1813 = vrot.lane.b32.xlu0 %v1474, 17
      %v1814 = vpop.permute.xlu0 %1813
      %1815 = vrot.lane.b32.xlu0 %v1476, 17
      %v1816 = vpop.permute.xlu0 %1815
      %1817 = vrot.lane.b32.xlu0 %v1478, 17
      %v1818 = vpop.permute.xlu0 %1817
      %v1819 = vsel %vm831, %v1804, %v1812
      %v1820 = vsel %vm831, %v1806, %v1814
      %v1821 = vsel %vm831, %v1808, %v1816
      %v1822 = vsel %vm831, %v1810, %v1818
      %v1823 = vsel %vm831, %v1812, %v1804
      %v1824 = vsel %vm831, %v1814, %v1806
      %v1825 = vsel %vm831, %v1816, %v1808
      %v1826 = vsel %vm831, %v1818, %v1810
      %v1827 = vld [vmem:[%s840] ss:$8 sm:$0x3]
      %v1829 = vlaneseq
      %v1830 = vshrl.u32 %v1829, 7
      %v1831 = vsub.s32 0, %v1830
      %v1832 = vrot.slane %v1827, %v1831
      %v1833 = vlaneseq
      %v1834 = vshrl.u32 %v1833, 7
      %v1835 = vsub.s32 1, %v1834
      %v1836 = vrot.slane %v1827, %v1835
      %v1839 = vmul.f32 %v1823, %v1832
      %v1840 = vmul.f32 %v1819, %v1836
      %v1841 = vmul.f32 %v1824, %v1832
      %v1842 = vmul.f32 %v1820, %v1836
      %v1843 = vmul.f32 %v1825, %v1832
      %v1844 = vmul.f32 %v1821, %v1836
      %v1845 = vmul.f32 %v1826, %v1832
      %v1846 = vmul.f32 %v1822, %v1836
      %v1847 = vpack.c.bf16 %v1841, %v1839
      %v1848 = vpack.c.bf16 %v1842, %v1840
      %v1849 = vpack.c.bf16 %v1845, %v1843
      %v1850 = vpack.c.bf16 %v1846, %v1844
      %1851 = vst [vmem:[#allocation3 + $0xc0] sm:$0xff] %v1847
      %1852 = vst [vmem:[#allocation3 + $0xc8] sm:$0xff] %v1848
      %1853 = vst [vmem:[#allocation3 + $0xd0] sm:$0xff] %v1849
      %1854 = vst [vmem:[#allocation3 + $0xd8] sm:$0xff] %v1850
      %1855 = vrot.lane.b32.xlu0 %v1471, 16
      %v1856 = vpop.permute.xlu0 %1855
      %1857 = vrot.lane.b32.xlu0 %v1473, 16
      %v1858 = vpop.permute.xlu0 %1857
      %1859 = vrot.lane.b32.xlu0 %v1475, 16
      %v1860 = vpop.permute.xlu0 %1859
      %1861 = vrot.lane.b32.xlu0 %v1477, 16
      %v1862 = vpop.permute.xlu0 %1861
      %1863 = vrot.lane.b32.xlu0 %v1472, 16
      %v1864 = vpop.permute.xlu0 %1863
      %1865 = vrot.lane.b32.xlu0 %v1474, 16
      %v1866 = vpop.permute.xlu0 %1865
      %1867 = vrot.lane.b32.xlu0 %v1476, 16
      %v1868 = vpop.permute.xlu0 %1867
      %1869 = vrot.lane.b32.xlu0 %v1478, 16
      %v1870 = vpop.permute.xlu0 %1869
      %v1871 = vsel %vm885, %v1856, %v1864
      %v1872 = vsel %vm885, %v1858, %v1866
      %v1873 = vsel %vm885, %v1860, %v1868
      %v1874 = vsel %vm885, %v1862, %v1870
      %v1875 = vsel %vm885, %v1864, %v1856
      %v1876 = vsel %vm885, %v1866, %v1858
      %v1877 = vsel %vm885, %v1868, %v1860
      %v1878 = vsel %vm885, %v1870, %v1862
      %v1879 = vld [vmem:[%s894] ss:$8 sm:$0x3]
      %v1881 = vlaneseq
      %v1882 = vshrl.u32 %v1881, 7
      %v1883 = vsub.s32 0, %v1882
      %v1884 = vrot.slane %v1879, %v1883
      %v1885 = vlaneseq
      %v1886 = vshrl.u32 %v1885, 7
      %v1887 = vsub.s32 1, %v1886
      %v1888 = vrot.slane %v1879, %v1887
      %v1891 = vmul.f32 %v1875, %v1884
      %v1892 = vmul.f32 %v1871, %v1888
      %v1893 = vmul.f32 %v1876, %v1884
      %v1894 = vmul.f32 %v1872, %v1888
      %v1895 = vmul.f32 %v1877, %v1884
      %v1896 = vmul.f32 %v1873, %v1888
      %v1897 = vmul.f32 %v1878, %v1884
      %v1898 = vmul.f32 %v1874, %v1888
      %v1899 = vpack.c.bf16 %v1893, %v1891
      %v1900 = vpack.c.bf16 %v1894, %v1892
      %v1901 = vpack.c.bf16 %v1897, %v1895
      %v1902 = vpack.c.bf16 %v1898, %v1896
      %1903 = vst [vmem:[#allocation3 + $0xe0] sm:$0xff] %v1899
      %1904 = vst [vmem:[#allocation3 + $0xe8] sm:$0xff] %v1900
      %1905 = vst [vmem:[#allocation3 + $0xf0] sm:$0xff] %v1901
      %1906 = vst [vmem:[#allocation3 + $0xf8] sm:$0xff] %v1902
      %1907 = vrot.lane.b32.xlu0 %v1471, 15
      %v1908 = vpop.permute.xlu0 %1907
      %1909 = vrot.lane.b32.xlu0 %v1473, 15
      %v1910 = vpop.permute.xlu0 %1909
      %1911 = vrot.lane.b32.xlu0 %v1475, 15
      %v1912 = vpop.permute.xlu0 %1911
      %1913 = vrot.lane.b32.xlu0 %v1477, 15
      %v1914 = vpop.permute.xlu0 %1913
      %1915 = vrot.lane.b32.xlu0 %v1472, 15
      %v1916 = vpop.permute.xlu0 %1915
      %1917 = vrot.lane.b32.xlu0 %v1474, 15
      %v1918 = vpop.permute.xlu0 %1917
      %1919 = vrot.lane.b32.xlu0 %v1476, 15
      %v1920 = vpop.permute.xlu0 %1919
      %1921 = vrot.lane.b32.xlu0 %v1478, 15
      %v1922 = vpop.permute.xlu0 %1921
      %v1923 = vsel %vm939, %v1908, %v1916
      %v1924 = vsel %vm939, %v1910, %v1918
      %v1925 = vsel %vm939, %v1912, %v1920
      %v1926 = vsel %vm939, %v1914, %v1922
      %v1927 = vsel %vm939, %v1916, %v1908
      %v1928 = vsel %vm939, %v1918, %v1910
      %v1929 = vsel %vm939, %v1920, %v1912
      %v1930 = vsel %vm939, %v1922, %v1914
      %v1931 = vld [vmem:[%s948] ss:$8 sm:$0x3]
      %v1933 = vlaneseq
      %v1934 = vshrl.u32 %v1933, 7
      %v1935 = vsub.s32 0, %v1934
      %v1936 = vrot.slane %v1931, %v1935
      %v1937 = vlaneseq
      %v1938 = vshrl.u32 %v1937, 7
      %v1939 = vsub.s32 1, %v1938
      %v1940 = vrot.slane %v1931, %v1939
      %v1943 = vmul.f32 %v1927, %v1936
      %v1944 = vmul.f32 %v1923, %v1940
      %v1945 = vmul.f32 %v1928, %v1936
      %v1946 = vmul.f32 %v1924, %v1940
      %v1947 = vmul.f32 %v1929, %v1936
      %v1948 = vmul.f32 %v1925, %v1940
      %v1949 = vmul.f32 %v1930, %v1936
      %v1950 = vmul.f32 %v1926, %v1940
      %v1951 = vpack.c.bf16 %v1945, %v1943
      %v1952 = vpack.c.bf16 %v1946, %v1944
      %v1953 = vpack.c.bf16 %v1949, %v1947
      %v1954 = vpack.c.bf16 %v1950, %v1948
      %1955 = vst [vmem:[#allocation3 + $0x100] sm:$0xff] %v1951
      %1956 = vst [vmem:[#allocation3 + $0x108] sm:$0xff] %v1952
      %1957 = vst [vmem:[#allocation3 + $0x110] sm:$0xff] %v1953
      %1958 = vst [vmem:[#allocation3 + $0x118] sm:$0xff] %v1954
      %1959 = vrot.lane.b32.xlu0 %v1471, 14
      %v1960 = vpop.permute.xlu0 %1959
      %1961 = vrot.lane.b32.xlu0 %v1473, 14
      %v1962 = vpop.permute.xlu0 %1961
      %1963 = vrot.lane.b32.xlu0 %v1475, 14
      %v1964 = vpop.permute.xlu0 %1963
      %1965 = vrot.lane.b32.xlu0 %v1477, 14
      %v1966 = vpop.permute.xlu0 %1965
      %1967 = vrot.lane.b32.xlu0 %v1472, 14
      %v1968 = vpop.permute.xlu0 %1967
      %1969 = vrot.lane.b32.xlu0 %v1474, 14
      %v1970 = vpop.permute.xlu0 %1969
      %1971 = vrot.lane.b32.xlu0 %v1476, 14
      %v1972 = vpop.permute.xlu0 %1971
      %1973 = vrot.lane.b32.xlu0 %v1478, 14
      %v1974 = vpop.permute.xlu0 %1973
      %vm1975 = vcmp.lt.s32.totalorder %v830, 14
      %v1976 = vsel %vm1975, %v1960, %v1968
      %v1977 = vsel %vm1975, %v1962, %v1970
      %v1978 = vsel %vm1975, %v1964, %v1972
      %v1979 = vsel %vm1975, %v1966, %v1974
      %v1980 = vsel %vm1975, %v1968, %v1960
      %v1981 = vsel %vm1975, %v1970, %v1962
      %v1982 = vsel %vm1975, %v1972, %v1964
      %v1983 = vsel %vm1975, %v1974, %v1966
      %s1984 = scalar_lea.vmem %s1, 35
      %v1985 = vld [vmem:[%s1984] ss:$8 sm:$0x3]
      %v1987 = vlaneseq
      %v1988 = vshrl.u32 %v1987, 7
      %v1989 = vsub.s32 0, %v1988
      %v1990 = vrot.slane %v1985, %v1989
      %v1991 = vlaneseq
      %v1992 = vshrl.u32 %v1991, 7
      %v1993 = vsub.s32 1, %v1992
      %v1994 = vrot.slane %v1985, %v1993
      %v1997 = vmul.f32 %v1980, %v1990
      %v1998 = vmul.f32 %v1976, %v1994
      %v1999 = vmul.f32 %v1981, %v1990
      %v2000 = vmul.f32 %v1977, %v1994
      %v2001 = vmul.f32 %v1982, %v1990
      %v2002 = vmul.f32 %v1978, %v1994
      %v2003 = vmul.f32 %v1983, %v1990
      %v2004 = vmul.f32 %v1979, %v1994
      %v2005 = vpack.c.bf16 %v1999, %v1997
      %v2006 = vpack.c.bf16 %v2000, %v1998
      %v2007 = vpack.c.bf16 %v2003, %v2001
      %v2008 = vpack.c.bf16 %v2004, %v2002
      %2009 = vst [vmem:[#allocation3 + $0x120] sm:$0xff] %v2005
      %2010 = vst [vmem:[#allocation3 + $0x128] sm:$0xff] %v2006
      %2011 = vst [vmem:[#allocation3 + $0x130] sm:$0xff] %v2007
      %2012 = vst [vmem:[#allocation3 + $0x138] sm:$0xff] %v2008
      %2013 = vrot.lane.b32.xlu0 %v1471, 2
      %v2014 = vpop.permute.xlu0 %2013
      %2015 = vrot.lane.b32.xlu0 %v1473, 2
      %v2016 = vpop.permute.xlu0 %2015
      %2017 = vrot.lane.b32.xlu0 %v1475, 2
      %v2018 = vpop.permute.xlu0 %2017
      %2019 = vrot.lane.b32.xlu0 %v1477, 2
      %v2020 = vpop.permute.xlu0 %2019
      %2021 = vrot.lane.b32.xlu0 %v1472, 2
      %v2022 = vpop.permute.xlu0 %2021
      %2023 = vrot.lane.b32.xlu0 %v1474, 2
      %v2024 = vpop.permute.xlu0 %2023
      %2025 = vrot.lane.b32.xlu0 %v1476, 2
      %v2026 = vpop.permute.xlu0 %2025
      %2027 = vrot.lane.b32.xlu0 %v1478, 2
      %v2028 = vpop.permute.xlu0 %2027
      %vm2029 = vcmp.lt.s32.totalorder %v830, 2
      %v2030 = vsel %vm2029, %v2014, %v2022
      %v2031 = vsel %vm2029, %v2016, %v2024
      %v2032 = vsel %vm2029, %v2018, %v2026
      %v2033 = vsel %vm2029, %v2020, %v2028
      %v2034 = vsel %vm2029, %v2022, %v2014
      %v2035 = vsel %vm2029, %v2024, %v2016
      %v2036 = vsel %vm2029, %v2026, %v2018
      %v2037 = vsel %vm2029, %v2028, %v2020
      %s2038 = scalar_lea.vmem %s1, 38
      %v2039 = vld [vmem:[%s2038] ss:$8 sm:$0x3]
      %v2041 = vlaneseq
      %v2042 = vshrl.u32 %v2041, 7
      %v2043 = vsub.s32 0, %v2042
      %v2044 = vrot.slane %v2039, %v2043
      %v2045 = vlaneseq
      %v2046 = vshrl.u32 %v2045, 7
      %v2047 = vsub.s32 1, %v2046
      %v2048 = vrot.slane %v2039, %v2047
      %v2051 = vmul.f32 %v2034, %v2044
      %v2052 = vmul.f32 %v2030, %v2048
      %v2053 = vmul.f32 %v2035, %v2044
      %v2054 = vmul.f32 %v2031, %v2048
      %v2055 = vmul.f32 %v2036, %v2044
      %v2056 = vmul.f32 %v2032, %v2048
      %v2057 = vmul.f32 %v2037, %v2044
      %v2058 = vmul.f32 %v2033, %v2048
      %v2059 = vpack.c.bf16 %v2053, %v2051
      %v2060 = vpack.c.bf16 %v2054, %v2052
      %v2061 = vpack.c.bf16 %v2057, %v2055
      %v2062 = vpack.c.bf16 %v2058, %v2056
      %2063 = vst [vmem:[#allocation3 + $0x140] sm:$0xff] %v2059
      %2064 = vst [vmem:[#allocation3 + $0x148] sm:$0xff] %v2060
      %2065 = vst [vmem:[#allocation3 + $0x150] sm:$0xff] %v2061
      %2066 = vst [vmem:[#allocation3 + $0x158] sm:$0xff] %v2062
      %2067 = vrot.lane.b32.xlu0 %v1471, 1
      %v2068 = vpop.permute.xlu0 %2067
      %2069 = vrot.lane.b32.xlu0 %v1473, 1
      %v2070 = vpop.permute.xlu0 %2069
      %2071 = vrot.lane.b32.xlu0 %v1475, 1
      %v2072 = vpop.permute.xlu0 %2071
      %2073 = vrot.lane.b32.xlu0 %v1477, 1
      %v2074 = vpop.permute.xlu0 %2073
      %2075 = vrot.lane.b32.xlu0 %v1472, 1
      %v2076 = vpop.permute.xlu0 %2075
      %2077 = vrot.lane.b32.xlu0 %v1474, 1
      %v2078 = vpop.permute.xlu0 %2077
      %2079 = vrot.lane.b32.xlu0 %v1476, 1
      %v2080 = vpop.permute.xlu0 %2079
      %2081 = vrot.lane.b32.xlu0 %v1478, 1
      %v2082 = vpop.permute.xlu0 %2081
      %v2083 = vsel %vm993, %v2068, %v2076
      %v2084 = vsel %vm993, %v2070, %v2078
      %v2085 = vsel %vm993, %v2072, %v2080
      %v2086 = vsel %vm993, %v2074, %v2082
      %v2087 = vsel %vm993, %v2076, %v2068
      %v2088 = vsel %vm993, %v2078, %v2070
      %v2089 = vsel %vm993, %v2080, %v2072
      %v2090 = vsel %vm993, %v2082, %v2074
      %v2091 = vld [vmem:[%s1002] ss:$8 sm:$0x3]
      %v2093 = vlaneseq
      %v2094 = vshrl.u32 %v2093, 7
      %v2095 = vsub.s32 0, %v2094
      %v2096 = vrot.slane %v2091, %v2095
      %v2097 = vlaneseq
      %v2098 = vshrl.u32 %v2097, 7
      %v2099 = vsub.s32 1, %v2098
      %v2100 = vrot.slane %v2091, %v2099
      %v2103 = vmul.f32 %v2087, %v2096
      %v2104 = vmul.f32 %v2083, %v2100
      %v2105 = vmul.f32 %v2088, %v2096
      %v2106 = vmul.f32 %v2084, %v2100
      %v2107 = vmul.f32 %v2089, %v2096
      %v2108 = vmul.f32 %v2085, %v2100
      %v2109 = vmul.f32 %v2090, %v2096
      %v2110 = vmul.f32 %v2086, %v2100
      %v2111 = vpack.c.bf16 %v2105, %v2103
      %v2112 = vpack.c.bf16 %v2106, %v2104
      %v2113 = vpack.c.bf16 %v2109, %v2107
      %v2114 = vpack.c.bf16 %v2110, %v2108
      %2115 = vst [vmem:[#allocation3 + $0x160] sm:$0xff] %v2111
      %2116 = vst [vmem:[#allocation3 + $0x168] sm:$0xff] %v2112
      %2117 = vst [vmem:[#allocation3 + $0x170] sm:$0xff] %v2113
      %2118 = vst [vmem:[#allocation3 + $0x178] sm:$0xff] %v2114
      %v2119 = vpack.c.bf16 %v1473, %v1471
      %v2120 = vpack.c.bf16 %v1474, %v1472
      %v2121 = vpack.c.bf16 %v1477, %v1475
      %v2122 = vpack.c.bf16 %v1478, %v1476
      %2123 = vst [vmem:[#allocation3 + $0x180] sm:$0xff] %v2119
      %2124 = vst [vmem:[#allocation3 + $0x188] sm:$0xff] %v2120
      %2125 = vst [vmem:[#allocation3 + $0x190] sm:$0xff] %v2121
      %2126 = vst [vmem:[#allocation3 + $0x198] sm:$0xff] %v2122
      %2127 = vrot.lane.b32.xlu0 %v1471, 127
      %v2128 = vpop.permute.xlu0 %2127
      %2129 = vrot.lane.b32.xlu0 %v1473, 127
      %v2130 = vpop.permute.xlu0 %2129
      %2131 = vrot.lane.b32.xlu0 %v1475, 127
      %v2132 = vpop.permute.xlu0 %2131
      %2133 = vrot.lane.b32.xlu0 %v1477, 127
      %v2134 = vpop.permute.xlu0 %2133
      %2135 = vrot.lane.b32.xlu0 %v1472, 127
      %v2136 = vpop.permute.xlu0 %2135
      %2137 = vrot.lane.b32.xlu0 %v1474, 127
      %v2138 = vpop.permute.xlu0 %2137
      %2139 = vrot.lane.b32.xlu0 %v1476, 127
      %v2140 = vpop.permute.xlu0 %2139
      %2141 = vrot.lane.b32.xlu0 %v1478, 127
      %v2142 = vpop.permute.xlu0 %2141
      %v2143 = vsel %vm1055, %v2128, %v2136
      %v2144 = vsel %vm1055, %v2130, %v2138
      %v2145 = vsel %vm1055, %v2132, %v2140
      %v2146 = vsel %vm1055, %v2134, %v2142
      %v2147 = vsel %vm1055, %v2136, %v2128
      %v2148 = vsel %vm1055, %v2138, %v2130
      %v2149 = vsel %vm1055, %v2140, %v2132
      %v2150 = vsel %vm1055, %v2142, %v2134
      %v2151 = vld [vmem:[%s1064] ss:$8 sm:$0x3]
      %v2153 = vlaneseq
      %v2154 = vshrl.u32 %v2153, 7
      %v2155 = vsub.s32 0, %v2154
      %v2156 = vrot.slane %v2151, %v2155
      %v2157 = vlaneseq
      %v2158 = vshrl.u32 %v2157, 7
      %v2159 = vsub.s32 1, %v2158
      %v2160 = vrot.slane %v2151, %v2159
      %v2163 = vmul.f32 %v2143, %v2156
      %v2164 = vmul.f32 %v2147, %v2160
      %v2165 = vmul.f32 %v2144, %v2156
      %v2166 = vmul.f32 %v2148, %v2160
      %v2167 = vmul.f32 %v2145, %v2156
      %v2168 = vmul.f32 %v2149, %v2160
      %v2169 = vmul.f32 %v2146, %v2156
      %v2170 = vmul.f32 %v2150, %v2160
      %v2171 = vpack.c.bf16 %v2165, %v2163
      %v2172 = vpack.c.bf16 %v2166, %v2164
      %v2173 = vpack.c.bf16 %v2169, %v2167
      %v2174 = vpack.c.bf16 %v2170, %v2168
      %2175 = vst [vmem:[#allocation3 + $0x1a0] sm:$0xff] %v2171
      %2176 = vst [vmem:[#allocation3 + $0x1a8] sm:$0xff] %v2172
      %2177 = vst [vmem:[#allocation3 + $0x1b0] sm:$0xff] %v2173
      %2178 = vst [vmem:[#allocation3 + $0x1b8] sm:$0xff] %v2174
      %2179 = vrot.lane.b32.xlu0 %v1471, 126
      %v2180 = vpop.permute.xlu0 %2179
      %2181 = vrot.lane.b32.xlu0 %v1473, 126
      %v2182 = vpop.permute.xlu0 %2181
      %2183 = vrot.lane.b32.xlu0 %v1475, 126
      %v2184 = vpop.permute.xlu0 %2183
      %2185 = vrot.lane.b32.xlu0 %v1477, 126
      %v2186 = vpop.permute.xlu0 %2185
      %2187 = vrot.lane.b32.xlu0 %v1472, 126
      %v2188 = vpop.permute.xlu0 %2187
      %2189 = vrot.lane.b32.xlu0 %v1474, 126
      %v2190 = vpop.permute.xlu0 %2189
      %2191 = vrot.lane.b32.xlu0 %v1476, 126
      %v2192 = vpop.permute.xlu0 %2191
      %2193 = vrot.lane.b32.xlu0 %v1478, 126
      %v2194 = vpop.permute.xlu0 %2193
      %vm2195 = vcmp.lt.s32.totalorder %v830, 126
      %v2196 = vsel %vm2195, %v2180, %v2188
      %v2197 = vsel %vm2195, %v2182, %v2190
      %v2198 = vsel %vm2195, %v2184, %v2192
      %v2199 = vsel %vm2195, %v2186, %v2194
      %v2200 = vsel %vm2195, %v2188, %v2180
      %v2201 = vsel %vm2195, %v2190, %v2182
      %v2202 = vsel %vm2195, %v2192, %v2184
      %v2203 = vsel %vm2195, %v2194, %v2186
      %s2204 = scalar_lea.vmem %s1, 50
      %v2205 = vld [vmem:[%s2204] ss:$8 sm:$0x3]
      %v2207 = vlaneseq
      %v2208 = vshrl.u32 %v2207, 7
      %v2209 = vsub.s32 0, %v2208
      %v2210 = vrot.slane %v2205, %v2209
      %v2211 = vlaneseq
      %v2212 = vshrl.u32 %v2211, 7
      %v2213 = vsub.s32 1, %v2212
      %v2214 = vrot.slane %v2205, %v2213
      %v2217 = vmul.f32 %v2196, %v2210
      %v2218 = vmul.f32 %v2200, %v2214
      %v2219 = vmul.f32 %v2197, %v2210
      %v2220 = vmul.f32 %v2201, %v2214
      %v2221 = vmul.f32 %v2198, %v2210
      %v2222 = vmul.f32 %v2202, %v2214
      %v2223 = vmul.f32 %v2199, %v2210
      %v2224 = vmul.f32 %v2203, %v2214
      %v2225 = vpack.c.bf16 %v2219, %v2217
      %v2226 = vpack.c.bf16 %v2220, %v2218
      %v2227 = vpack.c.bf16 %v2223, %v2221
      %v2228 = vpack.c.bf16 %v2224, %v2222
      %2229 = vst [vmem:[#allocation3 + $0x1c0] sm:$0xff] %v2225
      %2230 = vst [vmem:[#allocation3 + $0x1c8] sm:$0xff] %v2226
      %2231 = vst [vmem:[#allocation3 + $0x1d0] sm:$0xff] %v2227
      %2232 = vst [vmem:[#allocation3 + $0x1d8] sm:$0xff] %v2228
      %2233 = vrot.lane.b32.xlu0 %v1471, 114
      %v2234 = vpop.permute.xlu0 %2233
      %2235 = vrot.lane.b32.xlu0 %v1473, 114
      %v2236 = vpop.permute.xlu0 %2235
      %2237 = vrot.lane.b32.xlu0 %v1475, 114
      %v2238 = vpop.permute.xlu0 %2237
      %2239 = vrot.lane.b32.xlu0 %v1477, 114
      %v2240 = vpop.permute.xlu0 %2239
      %2241 = vrot.lane.b32.xlu0 %v1472, 114
      %v2242 = vpop.permute.xlu0 %2241
      %2243 = vrot.lane.b32.xlu0 %v1474, 114
      %v2244 = vpop.permute.xlu0 %2243
      %2245 = vrot.lane.b32.xlu0 %v1476, 114
      %v2246 = vpop.permute.xlu0 %2245
      %2247 = vrot.lane.b32.xlu0 %v1478, 114
      %v2248 = vpop.permute.xlu0 %2247
      %vm2249 = vcmp.lt.s32.totalorder %v830, 114
      %v2250 = vsel %vm2249, %v2234, %v2242
      %v2251 = vsel %vm2249, %v2236, %v2244
      %v2252 = vsel %vm2249, %v2238, %v2246
      %v2253 = vsel %vm2249, %v2240, %v2248
      %v2254 = vsel %vm2249, %v2242, %v2234
      %v2255 = vsel %vm2249, %v2244, %v2236
      %v2256 = vsel %vm2249, %v2246, %v2238
      %v2257 = vsel %vm2249, %v2248, %v2240
      %s2258 = scalar_lea.vmem %s1, 53
      %v2259 = vld [vmem:[%s2258] ss:$8 sm:$0x3]
      %v2261 = vlaneseq
      %v2262 = vshrl.u32 %v2261, 7
      %v2263 = vsub.s32 0, %v2262
      %v2264 = vrot.slane %v2259, %v2263
      %v2265 = vlaneseq
      %v2266 = vshrl.u32 %v2265, 7
      %v2267 = vsub.s32 1, %v2266
      %v2268 = vrot.slane %v2259, %v2267
      %v2271 = vmul.f32 %v2250, %v2264
      %v2272 = vmul.f32 %v2254, %v2268
      %v2273 = vmul.f32 %v2251, %v2264
      %v2274 = vmul.f32 %v2255, %v2268
      %v2275 = vmul.f32 %v2252, %v2264
      %v2276 = vmul.f32 %v2256, %v2268
      %v2277 = vmul.f32 %v2253, %v2264
      %v2278 = vmul.f32 %v2257, %v2268
      %v2279 = vpack.c.bf16 %v2273, %v2271
      %v2280 = vpack.c.bf16 %v2274, %v2272
      %v2281 = vpack.c.bf16 %v2277, %v2275
      %v2282 = vpack.c.bf16 %v2278, %v2276
      %2283 = vst [vmem:[#allocation3 + $0x1e0] sm:$0xff] %v2279
      %2284 = vst [vmem:[#allocation3 + $0x1e8] sm:$0xff] %v2280
      %2285 = vst [vmem:[#allocation3 + $0x1f0] sm:$0xff] %v2281
      %2286 = vst [vmem:[#allocation3 + $0x1f8] sm:$0xff] %v2282
      %2287 = vrot.lane.b32.xlu0 %v1471, 113
      %v2288 = vpop.permute.xlu0 %2287
      %2289 = vrot.lane.b32.xlu0 %v1473, 113
      %v2290 = vpop.permute.xlu0 %2289
      %2291 = vrot.lane.b32.xlu0 %v1475, 113
      %v2292 = vpop.permute.xlu0 %2291
      %2293 = vrot.lane.b32.xlu0 %v1477, 113
      %v2294 = vpop.permute.xlu0 %2293
      %2295 = vrot.lane.b32.xlu0 %v1472, 113
      %v2296 = vpop.permute.xlu0 %2295
      %2297 = vrot.lane.b32.xlu0 %v1474, 113
      %v2298 = vpop.permute.xlu0 %2297
      %2299 = vrot.lane.b32.xlu0 %v1476, 113
      %v2300 = vpop.permute.xlu0 %2299
      %2301 = vrot.lane.b32.xlu0 %v1478, 113
      %v2302 = vpop.permute.xlu0 %2301
      %v2303 = vsel %vm1109, %v2288, %v2296
      %v2304 = vsel %vm1109, %v2290, %v2298
      %v2305 = vsel %vm1109, %v2292, %v2300
      %v2306 = vsel %vm1109, %v2294, %v2302
      %v2307 = vsel %vm1109, %v2296, %v2288
      %v2308 = vsel %vm1109, %v2298, %v2290
      %v2309 = vsel %vm1109, %v2300, %v2292
      %v2310 = vsel %vm1109, %v2302, %v2294
      %v2311 = vld [vmem:[%s1118] ss:$8 sm:$0x3]
      %v2313 = vlaneseq
      %v2314 = vshrl.u32 %v2313, 7
      %v2315 = vsub.s32 0, %v2314
      %v2316 = vrot.slane %v2311, %v2315
      %v2317 = vlaneseq
      %v2318 = vshrl.u32 %v2317, 7
      %v2319 = vsub.s32 1, %v2318
      %v2320 = vrot.slane %v2311, %v2319
      %v2323 = vmul.f32 %v2303, %v2316
      %v2324 = vmul.f32 %v2307, %v2320
      %v2325 = vmul.f32 %v2304, %v2316
      %v2326 = vmul.f32 %v2308, %v2320
      %v2327 = vmul.f32 %v2305, %v2316
      %v2328 = vmul.f32 %v2309, %v2320
      %v2329 = vmul.f32 %v2306, %v2316
      %v2330 = vmul.f32 %v2310, %v2320
      %v2331 = vpack.c.bf16 %v2325, %v2323
      %v2332 = vpack.c.bf16 %v2326, %v2324
      %v2333 = vpack.c.bf16 %v2329, %v2327
      %v2334 = vpack.c.bf16 %v2330, %v2328
      %2335 = vst [vmem:[#allocation3 + $0x200] sm:$0xff] %v2331
      %2336 = vst [vmem:[#allocation3 + $0x208] sm:$0xff] %v2332
      %2337 = vst [vmem:[#allocation3 + $0x210] sm:$0xff] %v2333
      %2338 = vst [vmem:[#allocation3 + $0x218] sm:$0xff] %v2334
      %2339 = vrot.lane.b32.xlu0 %v1471, 112
      %v2340 = vpop.permute.xlu0 %2339
      %2341 = vrot.lane.b32.xlu0 %v1473, 112
      %v2342 = vpop.permute.xlu0 %2341
      %2343 = vrot.lane.b32.xlu0 %v1475, 112
      %v2344 = vpop.permute.xlu0 %2343
      %2345 = vrot.lane.b32.xlu0 %v1477, 112
      %v2346 = vpop.permute.xlu0 %2345
      %2347 = vrot.lane.b32.xlu0 %v1472, 112
      %v2348 = vpop.permute.xlu0 %2347
      %2349 = vrot.lane.b32.xlu0 %v1474, 112
      %v2350 = vpop.permute.xlu0 %2349
      %2351 = vrot.lane.b32.xlu0 %v1476, 112
      %v2352 = vpop.permute.xlu0 %2351
      %2353 = vrot.lane.b32.xlu0 %v1478, 112
      %v2354 = vpop.permute.xlu0 %2353
      %v2355 = vsel %vm1163, %v2340, %v2348
      %v2356 = vsel %vm1163, %v2342, %v2350
      %v2357 = vsel %vm1163, %v2344, %v2352
      %v2358 = vsel %vm1163, %v2346, %v2354
      %v2359 = vsel %vm1163, %v2348, %v2340
      %v2360 = vsel %vm1163, %v2350, %v2342
      %v2361 = vsel %vm1163, %v2352, %v2344
      %v2362 = vsel %vm1163, %v2354, %v2346
      %v2363 = vld [vmem:[%s1172] ss:$8 sm:$0x3]
      %v2365 = vlaneseq
      %v2366 = vshrl.u32 %v2365, 7
      %v2367 = vsub.s32 0, %v2366
      %v2368 = vrot.slane %v2363, %v2367
      %v2369 = vlaneseq
      %v2370 = vshrl.u32 %v2369, 7
      %v2371 = vsub.s32 1, %v2370
      %v2372 = vrot.slane %v2363, %v2371
      %v2375 = vmul.f32 %v2355, %v2368
      %v2376 = vmul.f32 %v2359, %v2372
      %v2377 = vmul.f32 %v2356, %v2368
      %v2378 = vmul.f32 %v2360, %v2372
      %v2379 = vmul.f32 %v2357, %v2368
      %v2380 = vmul.f32 %v2361, %v2372
      %v2381 = vmul.f32 %v2358, %v2368
      %v2382 = vmul.f32 %v2362, %v2372
      %v2383 = vpack.c.bf16 %v2377, %v2375
      %v2384 = vpack.c.bf16 %v2378, %v2376
      %v2385 = vpack.c.bf16 %v2381, %v2379
      %v2386 = vpack.c.bf16 %v2382, %v2380
      %2387 = vst [vmem:[#allocation3 + $0x220] sm:$0xff] %v2383
      %2388 = vst [vmem:[#allocation3 + $0x228] sm:$0xff] %v2384
      %2389 = vst [vmem:[#allocation3 + $0x230] sm:$0xff] %v2385
      %2390 = vst [vmem:[#allocation3 + $0x238] sm:$0xff] %v2386
      %2391 = vrot.lane.b32.xlu0 %v1471, 111
      %v2392 = vpop.permute.xlu0 %2391
      %2393 = vrot.lane.b32.xlu0 %v1473, 111
      %v2394 = vpop.permute.xlu0 %2393
      %2395 = vrot.lane.b32.xlu0 %v1475, 111
      %v2396 = vpop.permute.xlu0 %2395
      %2397 = vrot.lane.b32.xlu0 %v1477, 111
      %v2398 = vpop.permute.xlu0 %2397
      %2399 = vrot.lane.b32.xlu0 %v1472, 111
      %v2400 = vpop.permute.xlu0 %2399
      %2401 = vrot.lane.b32.xlu0 %v1474, 111
      %v2402 = vpop.permute.xlu0 %2401
      %2403 = vrot.lane.b32.xlu0 %v1476, 111
      %v2404 = vpop.permute.xlu0 %2403
      %2405 = vrot.lane.b32.xlu0 %v1478, 111
      %v2406 = vpop.permute.xlu0 %2405
      %v2407 = vsel %vm1217, %v2392, %v2400
      %v2408 = vsel %vm1217, %v2394, %v2402
      %v2409 = vsel %vm1217, %v2396, %v2404
      %v2410 = vsel %vm1217, %v2398, %v2406
      %v2411 = vsel %vm1217, %v2400, %v2392
      %v2412 = vsel %vm1217, %v2402, %v2394
      %v2413 = vsel %vm1217, %v2404, %v2396
      %v2414 = vsel %vm1217, %v2406, %v2398
      %v2415 = vld [vmem:[%s1226] ss:$8 sm:$0x3]
      %v2417 = vlaneseq
      %v2418 = vshrl.u32 %v2417, 7
      %v2419 = vsub.s32 0, %v2418
      %v2420 = vrot.slane %v2415, %v2419
      %v2421 = vlaneseq
      %v2422 = vshrl.u32 %v2421, 7
      %v2423 = vsub.s32 1, %v2422
      %v2424 = vrot.slane %v2415, %v2423
      %v2427 = vmul.f32 %v2407, %v2420
      %v2428 = vmul.f32 %v2411, %v2424
      %v2429 = vmul.f32 %v2408, %v2420
      %v2430 = vmul.f32 %v2412, %v2424
      %v2431 = vmul.f32 %v2409, %v2420
      %v2432 = vmul.f32 %v2413, %v2424
      %v2433 = vmul.f32 %v2410, %v2420
      %v2434 = vmul.f32 %v2414, %v2424
      %v2435 = vpack.c.bf16 %v2429, %v2427
      %v2436 = vpack.c.bf16 %v2430, %v2428
      %v2437 = vpack.c.bf16 %v2433, %v2431
      %v2438 = vpack.c.bf16 %v2434, %v2432
      %2439 = vst [vmem:[#allocation3 + $0x240] sm:$0xff] %v2435
      %2440 = vst [vmem:[#allocation3 + $0x248] sm:$0xff] %v2436
      %2441 = vst [vmem:[#allocation3 + $0x250] sm:$0xff] %v2437
      %2442 = vst [vmem:[#allocation3 + $0x258] sm:$0xff] %v2438
      %2443 = vrot.lane.b32.xlu0 %v1471, 110
      %v2444 = vpop.permute.xlu0 %2443
      %2445 = vrot.lane.b32.xlu0 %v1473, 110
      %v2446 = vpop.permute.xlu0 %2445
      %2447 = vrot.lane.b32.xlu0 %v1475, 110
      %v2448 = vpop.permute.xlu0 %2447
      %2449 = vrot.lane.b32.xlu0 %v1477, 110
      %v2450 = vpop.permute.xlu0 %2449
      %2451 = vrot.lane.b32.xlu0 %v1472, 110
      %v2452 = vpop.permute.xlu0 %2451
      %2453 = vrot.lane.b32.xlu0 %v1474, 110
      %v2454 = vpop.permute.xlu0 %2453
      %2455 = vrot.lane.b32.xlu0 %v1476, 110
      %v2456 = vpop.permute.xlu0 %2455
      %2457 = vrot.lane.b32.xlu0 %v1478, 110
      %v2458 = vpop.permute.xlu0 %2457
      %vm2459 = vcmp.lt.s32.totalorder %v830, 110
      %v2460 = vsel %vm2459, %v2444, %v2452
      %v2461 = vsel %vm2459, %v2446, %v2454
      %v2462 = vsel %vm2459, %v2448, %v2456
      %v2463 = vsel %vm2459, %v2450, %v2458
      %v2464 = vsel %vm2459, %v2452, %v2444
      %v2465 = vsel %vm2459, %v2454, %v2446
      %v2466 = vsel %vm2459, %v2456, %v2448
      %v2467 = vsel %vm2459, %v2458, %v2450
      %s2468 = scalar_lea.vmem %s1, 65
      %v2469 = vld [vmem:[%s2468] ss:$8 sm:$0x3]
      %v2471 = vlaneseq
      %v2472 = vshrl.u32 %v2471, 7
      %v2473 = vsub.s32 0, %v2472
      %v2474 = vrot.slane %v2469, %v2473
      %v2475 = vlaneseq
      %v2476 = vshrl.u32 %v2475, 7
      %v2477 = vsub.s32 1, %v2476
      %v2478 = vrot.slane %v2469, %v2477
      %v2481 = vmul.f32 %v2460, %v2474
      %v2482 = vmul.f32 %v2464, %v2478
      %v2483 = vmul.f32 %v2461, %v2474
      %v2484 = vmul.f32 %v2465, %v2478
      %v2485 = vmul.f32 %v2462, %v2474
      %v2486 = vmul.f32 %v2466, %v2478
      %v2487 = vmul.f32 %v2463, %v2474
      %v2488 = vmul.f32 %v2467, %v2478
      %v2489 = vpack.c.bf16 %v2483, %v2481
      %v2490 = vpack.c.bf16 %v2484, %v2482
      %v2491 = vpack.c.bf16 %v2487, %v2485
      %v2492 = vpack.c.bf16 %v2488, %v2486
      %2493 = vst [vmem:[#allocation3 + $0x260] sm:$0xff] %v2489
      %2494 = vst [vmem:[#allocation3 + $0x268] sm:$0xff] %v2490
      %2495 = vst [vmem:[#allocation3 + $0x270] sm:$0xff] %v2491
      %2496 = vst [vmem:[#allocation3 + $0x278] sm:$0xff] %v2492
      %2497 = vrot.lane.b32.xlu0 %v1471, 98
      %v2498 = vpop.permute.xlu0 %2497
      %2499 = vrot.lane.b32.xlu0 %v1473, 98
      %v2500 = vpop.permute.xlu0 %2499
      %2501 = vrot.lane.b32.xlu0 %v1475, 98
      %v2502 = vpop.permute.xlu0 %2501
      %2503 = vrot.lane.b32.xlu0 %v1477, 98
      %v2504 = vpop.permute.xlu0 %2503
      %2505 = vrot.lane.b32.xlu0 %v1472, 98
      %v2506 = vpop.permute.xlu0 %2505
      %2507 = vrot.lane.b32.xlu0 %v1474, 98
      %v2508 = vpop.permute.xlu0 %2507
      %2509 = vrot.lane.b32.xlu0 %v1476, 98
      %v2510 = vpop.permute.xlu0 %2509
      %2511 = vrot.lane.b32.xlu0 %v1478, 98
      %v2512 = vpop.permute.xlu0 %2511
      %vm2513 = vcmp.lt.s32.totalorder %v830, 98
      %v2514 = vsel %vm2513, %v2498, %v2506
      %v2515 = vsel %vm2513, %v2500, %v2508
      %v2516 = vsel %vm2513, %v2502, %v2510
      %v2517 = vsel %vm2513, %v2504, %v2512
      %v2518 = vsel %vm2513, %v2506, %v2498
      %v2519 = vsel %vm2513, %v2508, %v2500
      %v2520 = vsel %vm2513, %v2510, %v2502
      %v2521 = vsel %vm2513, %v2512, %v2504
      %s2522 = scalar_lea.vmem %s1, 68
      %v2523 = vld [vmem:[%s2522] ss:$8 sm:$0x3]
      %v2525 = vlaneseq
      %v2526 = vshrl.u32 %v2525, 7
      %v2527 = vsub.s32 0, %v2526
      %v2528 = vrot.slane %v2523, %v2527
      %v2529 = vlaneseq
      %v2530 = vshrl.u32 %v2529, 7
      %v2531 = vsub.s32 1, %v2530
      %v2532 = vrot.slane %v2523, %v2531
      %v2535 = vmul.f32 %v2514, %v2528
      %v2536 = vmul.f32 %v2518, %v2532
      %v2537 = vmul.f32 %v2515, %v2528
      %v2538 = vmul.f32 %v2519, %v2532
      %v2539 = vmul.f32 %v2516, %v2528
      %v2540 = vmul.f32 %v2520, %v2532
      %v2541 = vmul.f32 %v2517, %v2528
      %v2542 = vmul.f32 %v2521, %v2532
      %v2543 = vpack.c.bf16 %v2537, %v2535
      %v2544 = vpack.c.bf16 %v2538, %v2536
      %v2545 = vpack.c.bf16 %v2541, %v2539
      %v2546 = vpack.c.bf16 %v2542, %v2540
      %2547 = vst [vmem:[#allocation3 + $0x280] sm:$0xff] %v2543
      %2548 = vst [vmem:[#allocation3 + $0x288] sm:$0xff] %v2544
      %2549 = vst [vmem:[#allocation3 + $0x290] sm:$0xff] %v2545
      %2550 = vst [vmem:[#allocation3 + $0x298] sm:$0xff] %v2546
      %2551 = vrot.lane.b32.xlu0 %v1471, 97
      %v2552 = vpop.permute.xlu0 %2551
      %2553 = vrot.lane.b32.xlu0 %v1473, 97
      %v2554 = vpop.permute.xlu0 %2553
      %2555 = vrot.lane.b32.xlu0 %v1475, 97
      %v2556 = vpop.permute.xlu0 %2555
      %2557 = vrot.lane.b32.xlu0 %v1477, 97
      %v2558 = vpop.permute.xlu0 %2557
      %2559 = vrot.lane.b32.xlu0 %v1472, 97
      %v2560 = vpop.permute.xlu0 %2559
      %2561 = vrot.lane.b32.xlu0 %v1474, 97
      %v2562 = vpop.permute.xlu0 %2561
      %2563 = vrot.lane.b32.xlu0 %v1476, 97
      %v2564 = vpop.permute.xlu0 %2563
      %2565 = vrot.lane.b32.xlu0 %v1478, 97
      %v2566 = vpop.permute.xlu0 %2565
      %vm2567 = vcmp.lt.s32.totalorder %v830, 97
      %v2568 = vsel %vm2567, %v2552, %v2560
      %v2569 = vsel %vm2567, %v2554, %v2562
      %v2570 = vsel %vm2567, %v2556, %v2564
      %v2571 = vsel %vm2567, %v2558, %v2566
      %v2572 = vsel %vm2567, %v2560, %v2552
      %v2573 = vsel %vm2567, %v2562, %v2554
      %v2574 = vsel %vm2567, %v2564, %v2556
      %v2575 = vsel %vm2567, %v2566, %v2558
      %s2576 = scalar_lea.vmem %s1, 69
      %v2577 = vld [vmem:[%s2576] ss:$8 sm:$0x3]
      %v2579 = vlaneseq
      %v2580 = vshrl.u32 %v2579, 7
      %v2581 = vsub.s32 0, %v2580
      %v2582 = vrot.slane %v2577, %v2581
      %v2583 = vlaneseq
      %v2584 = vshrl.u32 %v2583, 7
      %v2585 = vsub.s32 1, %v2584
      %v2586 = vrot.slane %v2577, %v2585
      %v2589 = vmul.f32 %v2568, %v2582
      %v2590 = vmul.f32 %v2572, %v2586
      %v2591 = vmul.f32 %v2569, %v2582
      %v2592 = vmul.f32 %v2573, %v2586
      %v2593 = vmul.f32 %v2570, %v2582
      %v2594 = vmul.f32 %v2574, %v2586
      %v2595 = vmul.f32 %v2571, %v2582
      %v2596 = vmul.f32 %v2575, %v2586
      %v2597 = vpack.c.bf16 %v2591, %v2589
      %v2598 = vpack.c.bf16 %v2592, %v2590
      %v2599 = vpack.c.bf16 %v2595, %v2593
      %v2600 = vpack.c.bf16 %v2596, %v2594
      %2601 = vst [vmem:[#allocation3 + $0x2a0] sm:$0xff] %v2597
      %2602 = vst [vmem:[#allocation3 + $0x2a8] sm:$0xff] %v2598
      %2603 = vst [vmem:[#allocation3 + $0x2b0] sm:$0xff] %v2599
      %2604 = vst [vmem:[#allocation3 + $0x2b8] sm:$0xff] %v2600
      %2605 = vrot.lane.b32.xlu0 %v1471, 96
      %v2606 = vpop.permute.xlu0 %2605
      %2607 = vrot.lane.b32.xlu0 %v1473, 96
      %v2608 = vpop.permute.xlu0 %2607
      %2609 = vrot.lane.b32.xlu0 %v1475, 96
      %v2610 = vpop.permute.xlu0 %2609
      %2611 = vrot.lane.b32.xlu0 %v1477, 96
      %v2612 = vpop.permute.xlu0 %2611
      %2613 = vrot.lane.b32.xlu0 %v1472, 96
      %v2614 = vpop.permute.xlu0 %2613
      %2615 = vrot.lane.b32.xlu0 %v1474, 96
      %v2616 = vpop.permute.xlu0 %2615
      %2617 = vrot.lane.b32.xlu0 %v1476, 96
      %v2618 = vpop.permute.xlu0 %2617
      %2619 = vrot.lane.b32.xlu0 %v1478, 96
      %v2620 = vpop.permute.xlu0 %2619
      %vm2621 = vcmp.lt.s32.totalorder %v830, 96
      %v2622 = vsel %vm2621, %v2606, %v2614
      %v2623 = vsel %vm2621, %v2608, %v2616
      %v2624 = vsel %vm2621, %v2610, %v2618
      %v2625 = vsel %vm2621, %v2612, %v2620
      %v2626 = vsel %vm2621, %v2614, %v2606
      %v2627 = vsel %vm2621, %v2616, %v2608
      %v2628 = vsel %vm2621, %v2618, %v2610
      %v2629 = vsel %vm2621, %v2620, %v2612
      %s2630 = scalar_lea.vmem %s1, 70
      %v2631 = vld [vmem:[%s2630] ss:$8 sm:$0x3]
      %v2633 = vlaneseq
      %v2634 = vshrl.u32 %v2633, 7
      %v2635 = vsub.s32 0, %v2634
      %v2636 = vrot.slane %v2631, %v2635
      %v2637 = vlaneseq
      %v2638 = vshrl.u32 %v2637, 7
      %v2639 = vsub.s32 1, %v2638
      %v2640 = vrot.slane %v2631, %v2639
      %v2643 = vmul.f32 %v2622, %v2636
      %v2644 = vmul.f32 %v2626, %v2640
      %v2645 = vmul.f32 %v2623, %v2636
      %v2646 = vmul.f32 %v2627, %v2640
      %v2647 = vmul.f32 %v2624, %v2636
      %v2648 = vmul.f32 %v2628, %v2640
      %v2649 = vmul.f32 %v2625, %v2636
      %v2650 = vmul.f32 %v2629, %v2640
      %v2651 = vpack.c.bf16 %v2645, %v2643
      %v2652 = vpack.c.bf16 %v2646, %v2644
      %v2653 = vpack.c.bf16 %v2649, %v2647
      %v2654 = vpack.c.bf16 %v2650, %v2648
      %2655 = vst [vmem:[#allocation3 + $0x2c0] sm:$0xff] %v2651
      %2656 = vst [vmem:[#allocation3 + $0x2c8] sm:$0xff] %v2652
      %2657 = vst [vmem:[#allocation3 + $0x2d0] sm:$0xff] %v2653
      %2658 = vst [vmem:[#allocation3 + $0x2d8] sm:$0xff] %v2654
      %2659 = vrot.lane.b32.xlu0 %v1471, 95
      %v2660 = vpop.permute.xlu0 %2659
      %2661 = vrot.lane.b32.xlu0 %v1473, 95
      %v2662 = vpop.permute.xlu0 %2661
      %2663 = vrot.lane.b32.xlu0 %v1475, 95
      %v2664 = vpop.permute.xlu0 %2663
      %2665 = vrot.lane.b32.xlu0 %v1477, 95
      %v2666 = vpop.permute.xlu0 %2665
      %2667 = vrot.lane.b32.xlu0 %v1472, 95
      %v2668 = vpop.permute.xlu0 %2667
      %2669 = vrot.lane.b32.xlu0 %v1474, 95
      %v2670 = vpop.permute.xlu0 %2669
      %2671 = vrot.lane.b32.xlu0 %v1476, 95
      %v2672 = vpop.permute.xlu0 %2671
      %2673 = vrot.lane.b32.xlu0 %v1478, 95
      %v2674 = vpop.permute.xlu0 %2673
      %vm2675 = vcmp.lt.s32.totalorder %v830, 95
      %v2676 = vsel %vm2675, %v2660, %v2668
      %v2677 = vsel %vm2675, %v2662, %v2670
      %v2678 = vsel %vm2675, %v2664, %v2672
      %v2679 = vsel %vm2675, %v2666, %v2674
      %v2680 = vsel %vm2675, %v2668, %v2660
      %v2681 = vsel %vm2675, %v2670, %v2662
      %v2682 = vsel %vm2675, %v2672, %v2664
      %v2683 = vsel %vm2675, %v2674, %v2666
      %s2684 = scalar_lea.vmem %s1, 71
      %v2685 = vld [vmem:[%s2684] ss:$8 sm:$0x3]
      %v2687 = vlaneseq
      %v2688 = vshrl.u32 %v2687, 7
      %v2689 = vsub.s32 0, %v2688
      %v2690 = vrot.slane %v2685, %v2689
      %v2691 = vlaneseq
      %v2692 = vshrl.u32 %v2691, 7
      %v2693 = vsub.s32 1, %v2692
      %v2694 = vrot.slane %v2685, %v2693
      %v2697 = vmul.f32 %v2676, %v2690
      %v2698 = vmul.f32 %v2680, %v2694
      %v2699 = vmul.f32 %v2677, %v2690
      %v2700 = vmul.f32 %v2681, %v2694
      %v2701 = vmul.f32 %v2678, %v2690
      %v2702 = vmul.f32 %v2682, %v2694
      %v2703 = vmul.f32 %v2679, %v2690
      %v2704 = vmul.f32 %v2683, %v2694
      %v2705 = vpack.c.bf16 %v2699, %v2697
      %v2706 = vpack.c.bf16 %v2700, %v2698
      %v2707 = vpack.c.bf16 %v2703, %v2701
      %v2708 = vpack.c.bf16 %v2704, %v2702
      %2709 = vst [vmem:[#allocation3 + $0x2e0] sm:$0xff] %v2705
      %2710 = vst [vmem:[#allocation3 + $0x2e8] sm:$0xff] %v2706
      %2711 = vst [vmem:[#allocation3 + $0x2f0] sm:$0xff] %v2707
      %2712 = vst [vmem:[#allocation3 + $0x2f8] sm:$0xff] %v2708
      %2713 = vrot.lane.b32.xlu0 %v1471, 94
      %v2714 = vpop.permute.xlu0 %2713
      %2715 = vrot.lane.b32.xlu0 %v1473, 94
      %v2716 = vpop.permute.xlu0 %2715
      %2717 = vrot.lane.b32.xlu0 %v1475, 94
      %v2718 = vpop.permute.xlu0 %2717
      %2719 = vrot.lane.b32.xlu0 %v1477, 94
      %v2720 = vpop.permute.xlu0 %2719
      %2721 = vrot.lane.b32.xlu0 %v1472, 94
      %v2722 = vpop.permute.xlu0 %2721
      %2723 = vrot.lane.b32.xlu0 %v1474, 94
      %v2724 = vpop.permute.xlu0 %2723
      %2725 = vrot.lane.b32.xlu0 %v1476, 94
      %v2726 = vpop.permute.xlu0 %2725
      %2727 = vrot.lane.b32.xlu0 %v1478, 94
      %v2728 = vpop.permute.xlu0 %2727
      %vm2729 = vcmp.lt.s32.totalorder %v830, 94
      %v2730 = vsel %vm2729, %v2714, %v2722
      %v2731 = vsel %vm2729, %v2716, %v2724
      %v2732 = vsel %vm2729, %v2718, %v2726
      %v2733 = vsel %vm2729, %v2720, %v2728
      %v2734 = vsel %vm2729, %v2722, %v2714
      %v2735 = vsel %vm2729, %v2724, %v2716
      %v2736 = vsel %vm2729, %v2726, %v2718
      %v2737 = vsel %vm2729, %v2728, %v2720
      %s2738 = scalar_lea.vmem %s1, 80
      %v2739 = vld [vmem:[%s2738] ss:$8 sm:$0x3]
      %v2741 = vlaneseq
      %v2742 = vshrl.u32 %v2741, 7
      %v2743 = vsub.s32 0, %v2742
      %v2744 = vrot.slane %v2739, %v2743
      %v2745 = vlaneseq
      %v2746 = vshrl.u32 %v2745, 7
      %v2747 = vsub.s32 1, %v2746
      %v2748 = vrot.slane %v2739, %v2747
      %v2751 = vmul.f32 %v2730, %v2744
      %v2752 = vmul.f32 %v2734, %v2748
      %v2753 = vmul.f32 %v2731, %v2744
      %v2754 = vmul.f32 %v2735, %v2748
      %v2755 = vmul.f32 %v2732, %v2744
      %v2756 = vmul.f32 %v2736, %v2748
      %v2757 = vmul.f32 %v2733, %v2744
      %v2758 = vmul.f32 %v2737, %v2748
      %v2759 = vpack.c.bf16 %v2753, %v2751
      %v2760 = vpack.c.bf16 %v2754, %v2752
      %v2761 = vpack.c.bf16 %v2757, %v2755
      %v2762 = vpack.c.bf16 %v2758, %v2756
      %2763 = vst [vmem:[#allocation3 + $0x300] sm:$0xff] %v2759
      %2764 = vst [vmem:[#allocation3 + $0x308] sm:$0xff] %v2760
      %2765 = vst [vmem:[#allocation3 + $0x310] sm:$0xff] %v2761
      %2766 = vst [vmem:[#allocation3 + $0x318] sm:$0xff] %v2762
      %s2767 = smul.u32 %s30, 28
      %s2768 = smul.addr %s2767, 4
      %s2769 = scalar_lea.vmem %s5, %s2768
      %v2770 = vld [vmem:[%s2769] sm:$0xff]
      %v2771 = vld [vmem:[%s2769 + $0x8] sm:$0xff]
      %v2772 = vld [vmem:[%s2769 + $0x10] sm:$0xff]
      %v2773 = vld [vmem:[%s2769 + $0x18] sm:$0xf]
      %v2774 = vld [vmem:[%s2769 + $0x1c] sm:$0xff]
      %v2775 = vld [vmem:[%s2769 + $0x24] sm:$0xff]
      %v2776 = vld [vmem:[%s2769 + $0x2c] sm:$0xff]
      %v2777 = vld [vmem:[%s2769 + $0x34] sm:$0xf]
      %v2778 = vld [vmem:[%s2769 + $0x38] sm:$0xff]
      %v2779 = vld [vmem:[%s2769 + $0x40] sm:$0xff]
      %v2780 = vld [vmem:[%s2769 + $0x48] sm:$0xff]
      %v2781 = vld [vmem:[%s2769 + $0x50] sm:$0xf]
      %v2782 = vld [vmem:[%s2769 + $0x54] sm:$0xff]
      %v2783 = vld [vmem:[%s2769 + $0x5c] sm:$0xff]
      %v2784 = vld [vmem:[%s2769 + $0x64] sm:$0xff]
      %v2785 = vld [vmem:[%s2769 + $0x6c] sm:$0xf]
      %v2786 = vld [vmem:[#allocation3] sm:$0xff]
      %v2787 = vld [vmem:[#allocation3 + $0x8] sm:$0xff]
      %v2788 = vld [vmem:[#allocation3 + $0x10] sm:$0xff]
      %v2789 = vld [vmem:[#allocation3 + $0x18] sm:$0xff]
      %v2790 = vld [vmem:[#allocation3 + $0x20] sm:$0xff]
      %v2791 = vld [vmem:[#allocation3 + $0x28] sm:$0xff]
      %v2792 = vld [vmem:[#allocation3 + $0x30] sm:$0xff]
      %v2793 = vld [vmem:[#allocation3 + $0x38] sm:$0xff]
      %v2794 = vld [vmem:[#allocation3 + $0x40] sm:$0xff]
      %v2795 = vld [vmem:[#allocation3 + $0x48] sm:$0xff]
      %v2796 = vld [vmem:[#allocation3 + $0x50] sm:$0xff]
      %v2797 = vld [vmem:[#allocation3 + $0x58] sm:$0xff]
      %v2798 = vld [vmem:[#allocation3 + $0x60] sm:$0xff]
      %v2799 = vld [vmem:[#allocation3 + $0x68] sm:$0xff]
      %v2800 = vld [vmem:[#allocation3 + $0x70] sm:$0xff]
      %v2801 = vld [vmem:[#allocation3 + $0x78] sm:$0xff]
      %v2802 = vld [vmem:[#allocation3 + $0x80] sm:$0xff]
      %v2803 = vld [vmem:[#allocation3 + $0x88] sm:$0xff]
      %v2804 = vld [vmem:[#allocation3 + $0x90] sm:$0xff]
      %v2805 = vld [vmem:[#allocation3 + $0x98] sm:$0xff]
      %v2806 = vld [vmem:[#allocation3 + $0xa0] sm:$0xff]
      %v2807 = vld [vmem:[#allocation3 + $0xa8] sm:$0xff]
      %v2808 = vld [vmem:[#allocation3 + $0xb0] sm:$0xff]
      %v2809 = vld [vmem:[#allocation3 + $0xb8] sm:$0xff]
      %v2810 = vld [vmem:[#allocation3 + $0xc0] sm:$0xff]
      %v2811 = vld [vmem:[#allocation3 + $0xc8] sm:$0xff]
      %v2812 = vld [vmem:[#allocation3 + $0xd0] sm:$0xff]
      %v2813 = vld [vmem:[#allocation3 + $0xd8] sm:$0xff]
      %v2814 = vld [vmem:[#allocation3 + $0xe0] sm:$0xff]
      %v2815 = vld [vmem:[#allocation3 + $0xe8] sm:$0xff]
      %v2816 = vld [vmem:[#allocation3 + $0xf0] sm:$0xff]
      %v2817 = vld [vmem:[#allocation3 + $0xf8] sm:$0xff]
      %v2818 = vld [vmem:[#allocation3 + $0x100] sm:$0xff]
      %v2819 = vld [vmem:[#allocation3 + $0x108] sm:$0xff]
      %v2820 = vld [vmem:[#allocation3 + $0x110] sm:$0xff]
      %v2821 = vld [vmem:[#allocation3 + $0x118] sm:$0xff]
      %v2822 = vld [vmem:[#allocation3 + $0x120] sm:$0xff]
      %v2823 = vld [vmem:[#allocation3 + $0x128] sm:$0xff]
      %v2824 = vld [vmem:[#allocation3 + $0x130] sm:$0xff]
      %v2825 = vld [vmem:[#allocation3 + $0x138] sm:$0xff]
      %v2826 = vld [vmem:[#allocation3 + $0x140] sm:$0xff]
      %v2827 = vld [vmem:[#allocation3 + $0x148] sm:$0xff]
      %v2828 = vld [vmem:[#allocation3 + $0x150] sm:$0xff]
      %v2829 = vld [vmem:[#allocation3 + $0x158] sm:$0xff]
      %v2830 = vld [vmem:[#allocation3 + $0x160] sm:$0xff]
      %v2831 = vld [vmem:[#allocation3 + $0x168] sm:$0xff]
      %v2832 = vld [vmem:[#allocation3 + $0x170] sm:$0xff]
      %v2833 = vld [vmem:[#allocation3 + $0x178] sm:$0xff]
      %v2834 = vld [vmem:[#allocation3 + $0x180] sm:$0xff]
      %v2835 = vld [vmem:[#allocation3 + $0x188] sm:$0xff]
      %v2836 = vld [vmem:[#allocation3 + $0x190] sm:$0xff]
      %v2837 = vld [vmem:[#allocation3 + $0x198] sm:$0xff]
      %v2838 = vld [vmem:[#allocation3 + $0x1a0] sm:$0xff]
      %v2839 = vld [vmem:[#allocation3 + $0x1a8] sm:$0xff]
      %v2840 = vld [vmem:[#allocation3 + $0x1b0] sm:$0xff]
      %v2841 = vld [vmem:[#allocation3 + $0x1b8] sm:$0xff]
      %v2842 = vld [vmem:[#allocation3 + $0x1c0] sm:$0xff]
      %v2843 = vld [vmem:[#allocation3 + $0x1c8] sm:$0xff]
      %v2844 = vld [vmem:[#allocation3 + $0x1d0] sm:$0xff]
      %v2845 = vld [vmem:[#allocation3 + $0x1d8] sm:$0xff]
      %v2846 = vld [vmem:[#allocation3 + $0x1e0] sm:$0xff]
      %v2847 = vld [vmem:[#allocation3 + $0x1e8] sm:$0xff]
      %v2848 = vld [vmem:[#allocation3 + $0x1f0] sm:$0xff]
      %v2849 = vld [vmem:[#allocation3 + $0x1f8] sm:$0xff]
      %v2850 = vld [vmem:[#allocation3 + $0x200] sm:$0xff]
      %v2851 = vld [vmem:[#allocation3 + $0x208] sm:$0xff]
      %v2852 = vld [vmem:[#allocation3 + $0x210] sm:$0xff]
      %v2853 = vld [vmem:[#allocation3 + $0x218] sm:$0xff]
      %v2854 = vld [vmem:[#allocation3 + $0x220] sm:$0xff]
      %v2855 = vld [vmem:[#allocation3 + $0x228] sm:$0xff]
      %v2856 = vld [vmem:[#allocation3 + $0x230] sm:$0xff]
      %v2857 = vld [vmem:[#allocation3 + $0x238] sm:$0xff]
      %v2858 = vld [vmem:[#allocation3 + $0x240] sm:$0xff]
      %v2859 = vld [vmem:[#allocation3 + $0x248] sm:$0xff]
      %v2860 = vld [vmem:[#allocation3 + $0x250] sm:$0xff]
      %v2861 = vld [vmem:[#allocation3 + $0x258] sm:$0xff]
      %v2862 = vld [vmem:[#allocation3 + $0x260] sm:$0xff]
      %v2863 = vld [vmem:[#allocation3 + $0x268] sm:$0xff]
      %v2864 = vld [vmem:[#allocation3 + $0x270] sm:$0xff]
      %v2865 = vld [vmem:[#allocation3 + $0x278] sm:$0xff]
      %v2866 = vld [vmem:[#allocation3 + $0x280] sm:$0xff]
      %v2867 = vld [vmem:[#allocation3 + $0x288] sm:$0xff]
      %v2868 = vld [vmem:[#allocation3 + $0x290] sm:$0xff]
      %v2869 = vld [vmem:[#allocation3 + $0x298] sm:$0xff]
      %v2870 = vld [vmem:[#allocation3 + $0x2a0] sm:$0xff]
      %v2871 = vld [vmem:[#allocation3 + $0x2a8] sm:$0xff]
      %v2872 = vld [vmem:[#allocation3 + $0x2b0] sm:$0xff]
      %v2873 = vld [vmem:[#allocation3 + $0x2b8] sm:$0xff]
      %v2874 = vld [vmem:[#allocation3 + $0x2c0] sm:$0xff]
      %v2875 = vld [vmem:[#allocation3 + $0x2c8] sm:$0xff]
      %v2876 = vld [vmem:[#allocation3 + $0x2d0] sm:$0xff]
      %v2877 = vld [vmem:[#allocation3 + $0x2d8] sm:$0xff]
      %v2878 = vld [vmem:[#allocation3 + $0x2e0] sm:$0xff]
      %v2879 = vld [vmem:[#allocation3 + $0x2e8] sm:$0xff]
      %v2880 = vld [vmem:[#allocation3 + $0x2f0] sm:$0xff]
      %v2881 = vld [vmem:[#allocation3 + $0x2f8] sm:$0xff]
      %v2882 = vld [vmem:[#allocation3 + $0x300] sm:$0xff]
      %v2883 = vld [vmem:[#allocation3 + $0x308] sm:$0xff]
      %v2884 = vld [vmem:[#allocation3 + $0x310] sm:$0xff]
      %v2885 = vld [vmem:[#allocation3 + $0x318] sm:$0xff]
      %2887 = vset.pattern.permute.xlu0 0
      %2888 = vperm.xlu0 %2887, %v797
      %v2889 = vpop.permute.xlu0 %2888
      %2892 = vset.pattern.permute.xlu0 0
      %2893 = vperm.xlu0 %2892, %v798
      %v2894 = vpop.permute.xlu0 %2893
      %2897 = vset.pattern.permute.xlu0 0
      %2898 = vperm.xlu0 %2897, %v799
      %v2899 = vpop.permute.xlu0 %2898
      %2902 = vset.pattern.permute.xlu0 0
      %2903 = vperm.xlu0 %2902, %v800
      %v2904 = vpop.permute.xlu0 %2903
      %v2922 = vunpack.c.l.b16 %v2770
      %v2923 = vunpack.c.h.b16 %v2770
      %v2924 = vunpack.c.l.b16 %v2771
      %v2925 = vunpack.c.h.b16 %v2771
      %v2926 = vunpack.c.l.b16 %v2772
      %v2927 = vunpack.c.h.b16 %v2772
      %v2928 = vunpack.c.l.b16 %v2773
      %v2929 = vunpack.c.l.b16 %v2774
      %v2930 = vunpack.c.h.b16 %v2774
      %v2931 = vunpack.c.l.b16 %v2775
      %v2932 = vunpack.c.h.b16 %v2775
      %v2933 = vunpack.c.l.b16 %v2776
      %v2934 = vunpack.c.h.b16 %v2776
      %v2935 = vunpack.c.l.b16 %v2777
      %v2936 = vunpack.c.l.b16 %v2778
      %v2937 = vunpack.c.h.b16 %v2778
      %v2938 = vunpack.c.l.b16 %v2779
      %v2939 = vunpack.c.h.b16 %v2779
      %v2940 = vunpack.c.l.b16 %v2780
      %v2941 = vunpack.c.h.b16 %v2780
      %v2942 = vunpack.c.l.b16 %v2781
      %v2943 = vunpack.c.l.b16 %v2782
      %v2944 = vunpack.c.h.b16 %v2782
      %v2945 = vunpack.c.l.b16 %v2783
      %v2946 = vunpack.c.h.b16 %v2783
      %v2947 = vunpack.c.l.b16 %v2784
      %v2948 = vunpack.c.h.b16 %v2784
      %v2949 = vunpack.c.l.b16 %v2785
      %v2950 = vpack.c.b16 %v2929, %v2922
      %v2951 = vpack.c.b16 %v2930, %v2923
      %v2952 = vpack.c.b16 %v2931, %v2924
      %v2953 = vpack.c.b16 %v2932, %v2925
      %v2954 = vpack.c.b16 %v2933, %v2926
      %v2955 = vpack.c.b16 %v2934, %v2927
      %v2956 = vpack.c.b16 %v2935, %v2928
      %v2957 = vpack.c.b16 %v2943, %v2936
      %v2958 = vpack.c.b16 %v2944, %v2937
      %v2959 = vpack.c.b16 %v2945, %v2938
      %v2960 = vpack.c.b16 %v2946, %v2939
      %v2961 = vpack.c.b16 %v2947, %v2940
      %v2962 = vpack.c.b16 %v2948, %v2941
      %v2963 = vpack.c.b16 %v2949, %v2942
      %v2977 = vsel %vm656, %v2956, 0
      %v2980 = vsel %vm656, %v2963, 0
      %2982 = vmatprep.subr.bf16.mxu0 %v2787
      %2983 = vmatpush1.bf16.msra.mxu0 %v2786
      %2984 = vmatprep.subr.bf16.mxu0 %v2789
      %2985 = vmatpush1.bf16.msra.mxu0 %v2788
      %2986 = vmatprep.subr.bf16.mxu0 %v2791
      %2987 = vmatpush1.bf16.msra.mxu0 %v2790
      %2988 = vmatprep.subr.bf16.mxu0 %v2793
      %2989 = vmatpush1.bf16.msra.mxu0 %v2792
      %2990 = vmatprep.subr.bf16.mxu0 %v2795
      %2991 = vmatpush1.bf16.msra.mxu0 %v2794
      %2992 = vmatprep.subr.bf16.mxu0 %v2797
      %2993 = vmatpush1.bf16.msra.mxu0 %v2796
      %2994 = vmatprep.subr.bf16.mxu0 %v2799
      %2995 = vmatpush1.bf16.msra.mxu0 %v2798
      %2996 = vmatprep.subr.bf16.mxu0 %v2801
      %2997 = vmatpush1.bf16.msra.mxu0 %v2800
      %2998 = vmatprep.subr.bf16.mxu0 %v2803
      %2999 = vmatpush1.bf16.msra.mxu0 %v2802
      %3000 = vmatprep.subr.bf16.mxu0 %v2805
      %3001 = vmatpush1.bf16.msra.mxu0 %v2804
      %3002 = vmatprep.subr.bf16.mxu0 %v2807
      %3003 = vmatpush1.bf16.msra.mxu0 %v2806
      %3004 = vmatprep.subr.bf16.mxu0 %v2809
      %3005 = vmatpush1.bf16.msra.mxu0 %v2808
      %3006 = vmatprep.subr.bf16.mxu0 %v2811
      %3007 = vmatpush1.bf16.msra.mxu0 %v2810
      %3008 = vmatprep.subr.bf16.mxu0 %v2813
      %3009 = vmatpush1.bf16.msra.mxu0 %v2812
      %3010 = vmatprep.subr.bf16.mxu0 %v2815
      %3011 = vmatpush1.bf16.msra.mxu0 %v2814
      %3012 = vmatprep.subr.bf16.mxu0 %v2817
      %3013 = vmatpush1.bf16.msra.mxu0 %v2816
      %3014 = vmatprep.mubr.bf16.mxu0 %v2951
      %3015 = vmatmul.mubr.bf16.gmra.mrb[0].mxu0 %v2950
      %v3016 = vpop.f32.mrb[0].mxu0
      %v3017 = vadd.f32 %v2889, %v3016
      %v3018 = vpop.f32.mrb[0].mxu0
      %v3019 = vadd.f32 %v2889, %v3018
      %v3020 = vpop.f32.mrb[0].mxu0
      %v3021 = vadd.f32 %v2894, %v3020
      %v3022 = vpop.f32.mrb[0].mxu0
      %v3023 = vadd.f32 %v2894, %v3022
      %3024 = vmatprep.mubr.bf16.mxu0 %v2958
      %3025 = vmatmul.mubr.bf16.gmra.mrb[0].mxu0 %v2957
      %v3026 = vpop.f32.mrb[0].mxu0
      %v3027 = vadd.f32 %v2899, %v3026
      %v3028 = vpop.f32.mrb[0].mxu0
      %v3029 = vadd.f32 %v2899, %v3028
      %v3030 = vpop.f32.mrb[0].mxu0
      %v3031 = vadd.f32 %v2904, %v3030
      %v3032 = vpop.f32.mrb[0].mxu0
      %v3033 = vadd.f32 %v2904, %v3032
      %3034 = vdwg.mxu0
      %3035 = vmatprep.subr.bf16.mxu0 %v2819
      %3036 = vmatpush1.bf16.msra.mxu0 %v2818
      %3037 = vmatprep.subr.bf16.mxu0 %v2821
      %3038 = vmatpush1.bf16.msra.mxu0 %v2820
      %3039 = vmatprep.subr.bf16.mxu0 %v2823
      %3040 = vmatpush1.bf16.msra.mxu0 %v2822
      %3041 = vmatprep.subr.bf16.mxu0 %v2825
      %3042 = vmatpush1.bf16.msra.mxu0 %v2824
      %3043 = vmatprep.subr.bf16.mxu0 %v2827
      %3044 = vmatpush1.bf16.msra.mxu0 %v2826
      %3045 = vmatprep.subr.bf16.mxu0 %v2829
      %3046 = vmatpush1.bf16.msra.mxu0 %v2828
      %3047 = vmatprep.subr.bf16.mxu0 %v2831
      %3048 = vmatpush1.bf16.msra.mxu0 %v2830
      %3049 = vmatprep.subr.bf16.mxu0 %v2833
      %3050 = vmatpush1.bf16.msra.mxu0 %v2832
      %3051 = vmatprep.subr.bf16.mxu0 %v2835
      %3052 = vmatpush1.bf16.msra.mxu0 %v2834
      %3053 = vmatprep.subr.bf16.mxu0 %v2837
      %3054 = vmatpush1.bf16.msra.mxu0 %v2836
      %3055 = vmatprep.subr.bf16.mxu0 %v2839
      %3056 = vmatpush1.bf16.msra.mxu0 %v2838
      %3057 = vmatprep.subr.bf16.mxu0 %v2841
      %3058 = vmatpush1.bf16.msra.mxu0 %v2840
      %3059 = vmatprep.subr.bf16.mxu0 %v2843
      %3060 = vmatpush1.bf16.msra.mxu0 %v2842
      %3061 = vmatprep.subr.bf16.mxu0 %v2845
      %3062 = vmatpush1.bf16.msra.mxu0 %v2844
      %3063 = vmatprep.subr.bf16.mxu0 %v2847
      %3064 = vmatpush1.bf16.msra.mxu0 %v2846
      %3065 = vmatprep.subr.bf16.mxu0 %v2849
      %3066 = vmatpush1.bf16.msra.mxu0 %v2848
      %3067 = vmatprep.mubr.bf16.mxu0 %v2953
      %3068 = vmatmul.mubr.bf16.gmra.mrb[0].mxu0 %v2952
      %v3069 = vpop.f32.mrb[0].mxu0
      %v3070 = vadd.f32 %v3017, %v3069
      %v3071 = vpop.f32.mrb[0].mxu0
      %v3072 = vadd.f32 %v3019, %v3071
      %v3073 = vpop.f32.mrb[0].mxu0
      %v3074 = vadd.f32 %v3021, %v3073
      %v3075 = vpop.f32.mrb[0].mxu0
      %v3076 = vadd.f32 %v3023, %v3075
      %3077 = vmatprep.mubr.bf16.mxu0 %v2960
      %3078 = vmatmul.mubr.bf16.gmra.mrb[0].mxu0 %v2959
      %v3079 = vpop.f32.mrb[0].mxu0
      %v3080 = vadd.f32 %v3027, %v3079
      %v3081 = vpop.f32.mrb[0].mxu0
      %v3082 = vadd.f32 %v3029, %v3081
      %v3083 = vpop.f32.mrb[0].mxu0
      %v3084 = vadd.f32 %v3031, %v3083
      %v3085 = vpop.f32.mrb[0].mxu0
      %v3086 = vadd.f32 %v3033, %v3085
      %3087 = vdwg.mxu0
      %3088 = vmatprep.subr.bf16.mxu0 %v2851
      %3089 = vmatpush1.bf16.msra.mxu0 %v2850
      %3090 = vmatprep.subr.bf16.mxu0 %v2853
      %3091 = vmatpush1.bf16.msra.mxu0 %v2852
      %3092 = vmatprep.subr.bf16.mxu0 %v2855
      %3093 = vmatpush1.bf16.msra.mxu0 %v2854
      %3094 = vmatprep.subr.bf16.mxu0 %v2857
      %3095 = vmatpush1.bf16.msra.mxu0 %v2856
      %3096 = vmatprep.subr.bf16.mxu0 %v2859
      %3097 = vmatpush1.bf16.msra.mxu0 %v2858
      %3098 = vmatprep.subr.bf16.mxu0 %v2861
      %3099 = vmatpush1.bf16.msra.mxu0 %v2860
      %3100 = vmatprep.subr.bf16.mxu0 %v2863
      %3101 = vmatpush1.bf16.msra.mxu0 %v2862
      %3102 = vmatprep.subr.bf16.mxu0 %v2865
      %3103 = vmatpush1.bf16.msra.mxu0 %v2864
      %3104 = vmatprep.subr.bf16.mxu0 %v2867
      %3105 = vmatpush1.bf16.msra.mxu0 %v2866
      %3106 = vmatprep.subr.bf16.mxu0 %v2869
      %3107 = vmatpush1.bf16.msra.mxu0 %v2868
      %3108 = vmatprep.subr.bf16.mxu0 %v2871
      %3109 = vmatpush1.bf16.msra.mxu0 %v2870
      %3110 = vmatprep.subr.bf16.mxu0 %v2873
      %3111 = vmatpush1.bf16.msra.mxu0 %v2872
      %3112 = vmatprep.subr.bf16.mxu0 %v2875
      %3113 = vmatpush1.bf16.msra.mxu0 %v2874
      %3114 = vmatprep.subr.bf16.mxu0 %v2877
      %3115 = vmatpush1.bf16.msra.mxu0 %v2876
      %3116 = vmatprep.subr.bf16.mxu0 %v2879
      %3117 = vmatpush1.bf16.msra.mxu0 %v2878
      %3118 = vmatprep.subr.bf16.mxu0 %v2881
      %3119 = vmatpush1.bf16.msra.mxu0 %v2880
      %3120 = vmatprep.mubr.bf16.mxu0 %v2955
      %3121 = vmatmul.mubr.bf16.gmra.mrb[0].mxu0 %v2954
      %v3122 = vpop.f32.mrb[0].mxu0
      %v3123 = vadd.f32 %v3070, %v3122
      %v3124 = vpop.f32.mrb[0].mxu0
      %v3125 = vadd.f32 %v3072, %v3124
      %v3126 = vpop.f32.mrb[0].mxu0
      %v3127 = vadd.f32 %v3074, %v3126
      %v3128 = vpop.f32.mrb[0].mxu0
      %v3129 = vadd.f32 %v3076, %v3128
      %3130 = vmatprep.mubr.bf16.mxu0 %v2962
      %3131 = vmatmul.mubr.bf16.gmra.mrb[0].mxu0 %v2961
      %v3132 = vpop.f32.mrb[0].mxu0
      %v3133 = vadd.f32 %v3080, %v3132
      %v3134 = vpop.f32.mrb[0].mxu0
      %v3135 = vadd.f32 %v3082, %v3134
      %v3136 = vpop.f32.mrb[0].mxu0
      %v3137 = vadd.f32 %v3084, %v3136
      %v3138 = vpop.f32.mrb[0].mxu0
      %v3139 = vadd.f32 %v3086, %v3138
      %3140 = vdwg.mxu0
      %3141 = vmatprep.subr.bf16.mxu0 %v2883
      %3142 = vmatpush1.bf16.msra.mxu0 %v2882
      %3143 = vmatprep.subr.bf16.mxu0 %v2885
      %3144 = vmatpush1.bf16.msra.mxu0 %v2884
      %3145 = vmatprep.subr.bf16.mxu0 0
      %3146 = vmatpush1.bf16.msra.mxu0 0
      %3147 = vmatprep.subr.bf16.mxu0 0
      %3148 = vmatpush1.bf16.msra.mxu0 0
      %3149 = vmatprep.subr.bf16.mxu0 0
      %3150 = vmatpush1.bf16.msra.mxu0 0
      %3151 = vmatprep.subr.bf16.mxu0 0
      %3152 = vmatpush1.bf16.msra.mxu0 0
      %3153 = vmatprep.subr.bf16.mxu0 0
      %3154 = vmatpush1.bf16.msra.mxu0 0
      %3155 = vmatprep.subr.bf16.mxu0 0
      %3156 = vmatpush1.bf16.msra.mxu0 0
      %3157 = vmatprep.subr.bf16.mxu0 0
      %3158 = vmatpush1.bf16.msra.mxu0 0
      %3159 = vmatprep.subr.bf16.mxu0 0
      %3160 = vmatpush1.bf16.msra.mxu0 0
      %3161 = vmatprep.subr.bf16.mxu0 0
      %3162 = vmatpush1.bf16.msra.mxu0 0
      %3163 = vmatprep.subr.bf16.mxu0 0
      %3164 = vmatpush1.bf16.msra.mxu0 0
      %3165 = vmatprep.subr.bf16.mxu0 0
      %3166 = vmatpush1.bf16.msra.mxu0 0
      %3167 = vmatprep.subr.bf16.mxu0 0
      %3168 = vmatpush1.bf16.msra.mxu0 0
      %3169 = vmatprep.subr.bf16.mxu0 0
      %3170 = vmatpush1.bf16.msra.mxu0 0
      %3171 = vmatprep.subr.bf16.mxu0 0
      %3172 = vmatpush1.bf16.msra.mxu0 0
      %3173 = vmatprep.mubr.bf16.mxu0 0
      %3174 = vmatmul.mubr.bf16.gmra.mrb[0].mxu0 %v2977
      %v3175 = vpop.f32.mrb[0].mxu0
      %v3176 = vadd.f32 %v3123, %v3175
      %v3177 = vpop.f32.mrb[0].mxu0
      %v3178 = vadd.f32 %v3125, %v3177
      %v3179 = vpop.f32.mrb[0].mxu0
      %v3180 = vadd.f32 %v3127, %v3179
      %v3181 = vpop.f32.mrb[0].mxu0
      %v3182 = vadd.f32 %v3129, %v3181
      %3183 = vmatprep.mubr.bf16.mxu0 0
      %3184 = vmatmul.mubr.bf16.gmra.mrb[0].mxu0 %v2980
      %v3185 = vpop.f32.mrb[0].mxu0
      %v3186 = vadd.f32 %v3133, %v3185
      %v3187 = vpop.f32.mrb[0].mxu0
      %v3188 = vadd.f32 %v3135, %v3187
      %v3189 = vpop.f32.mrb[0].mxu0
      %v3190 = vadd.f32 %v3137, %v3189
      %v3191 = vpop.f32.mrb[0].mxu0
      %v3192 = vadd.f32 %v3139, %v3191
      %3193 = vdwg.mxu0
      %s3194 = scalar_lea.vmem [#allocation5], 64
      %3195 = vst [vmem:[%s3194] sm:$0xff] %v3176
      %3196 = vst [vmem:[%s3194 + $0x8] sm:$0xff] %v3178
      %3197 = vst [vmem:[%s3194 + $0x10] sm:$0xff] %v3180
      %3198 = vst [vmem:[%s3194 + $0x18] sm:$0xff] %v3182
      %3199 = vst [vmem:[%s3194 + $0x20] sm:$0xff] %v3186
      %3200 = vst [vmem:[%s3194 + $0x28] sm:$0xff] %v3188
      %3201 = vst [vmem:[%s3194 + $0x30] sm:$0xff] %v3190
      %3202 = vst [vmem:[%s3194 + $0x38] sm:$0xff] %v3192
      %v3203 = vld [vmem:[#allocation4 + $0x80] sm:$0xff]
      %v3204 = vld [vmem:[#allocation4 + $0x88] sm:$0xff]
      %v3205 = vld [vmem:[#allocation4 + $0x90] sm:$0xff]
      %v3206 = vld [vmem:[#allocation4 + $0x98] sm:$0xff]
      %v3207 = vld [vmem:[#allocation4 + $0xa0] sm:$0xff]
      %v3208 = vld [vmem:[#allocation4 + $0xa8] sm:$0xff]
      %v3209 = vld [vmem:[#allocation4 + $0xb0] sm:$0xff]
      %v3210 = vld [vmem:[#allocation4 + $0xb8] sm:$0xff]
      %3211 = vrot.lane.b32.xlu0 %v3203, 51
      %v3212 = vpop.permute.xlu0 %3211
      %3213 = vrot.lane.b32.xlu0 %v3205, 51
      %v3214 = vpop.permute.xlu0 %3213
      %3215 = vrot.lane.b32.xlu0 %v3207, 51
      %v3216 = vpop.permute.xlu0 %3215
      %3217 = vrot.lane.b32.xlu0 %v3209, 51
      %v3218 = vpop.permute.xlu0 %3217
      %3219 = vrot.lane.b32.xlu0 %v3204, 51
      %v3220 = vpop.permute.xlu0 %3219
      %3221 = vrot.lane.b32.xlu0 %v3206, 51
      %v3222 = vpop.permute.xlu0 %3221
      %3223 = vrot.lane.b32.xlu0 %v3208, 51
      %v3224 = vpop.permute.xlu0 %3223
      %3225 = vrot.lane.b32.xlu0 %v3210, 51
      %v3226 = vpop.permute.xlu0 %3225
      %vm3227 = vcmp.lt.s32.totalorder %v830, 51
      %v3228 = vsel %vm3227, %v3212, %v3220
      %v3229 = vsel %vm3227, %v3214, %v3222
      %v3230 = vsel %vm3227, %v3216, %v3224
      %v3231 = vsel %vm3227, %v3218, %v3226
      %v3232 = vsel %vm3227, %v3220, %v3212
      %v3233 = vsel %vm3227, %v3222, %v3214
      %v3234 = vsel %vm3227, %v3224, %v3216
      %v3235 = vsel %vm3227, %v3226, %v3218
      %v3236 = vld [vmem:[%s1] ss:$8 sm:$0x3]
      %v3238 = vlaneseq
      %v3239 = vshrl.u32 %v3238, 7
      %v3240 = vsub.s32 0, %v3239
      %v3241 = vrot.slane %v3236, %v3240
      %v3242 = vlaneseq
      %v3243 = vshrl.u32 %v3242, 7
      %v3244 = vsub.s32 1, %v3243
      %v3245 = vrot.slane %v3236, %v3244
      %v3248 = vmul.f32 %v3232, %v3241
      %v3249 = vmul.f32 %v3228, %v3245
      %v3250 = vmul.f32 %v3233, %v3241
      %v3251 = vmul.f32 %v3229, %v3245
      %v3252 = vmul.f32 %v3234, %v3241
      %v3253 = vmul.f32 %v3230, %v3245
      %v3254 = vmul.f32 %v3235, %v3241
      %v3255 = vmul.f32 %v3231, %v3245
      %v3256 = vpack.c.bf16 %v3250, %v3248
      %v3257 = vpack.c.bf16 %v3251, %v3249
      %v3258 = vpack.c.bf16 %v3254, %v3252
      %v3259 = vpack.c.bf16 %v3255, %v3253
      %3260 = vst [vmem:[#allocation3] sm:$0xff] %v3256
      %3261 = vst [vmem:[#allocation3 + $0x8] sm:$0xff] %v3257
      %3262 = vst [vmem:[#allocation3 + $0x10] sm:$0xff] %v3258
      %3263 = vst [vmem:[#allocation3 + $0x18] sm:$0xff] %v3259
      %3264 = vrot.lane.b32.xlu0 %v3203, 50
      %v3265 = vpop.permute.xlu0 %3264
      %3266 = vrot.lane.b32.xlu0 %v3205, 50
      %v3267 = vpop.permute.xlu0 %3266
      %3268 = vrot.lane.b32.xlu0 %v3207, 50
      %v3269 = vpop.permute.xlu0 %3268
      %3270 = vrot.lane.b32.xlu0 %v3209, 50
      %v3271 = vpop.permute.xlu0 %3270
      %3272 = vrot.lane.b32.xlu0 %v3204, 50
      %v3273 = vpop.permute.xlu0 %3272
      %3274 = vrot.lane.b32.xlu0 %v3206, 50
      %v3275 = vpop.permute.xlu0 %3274
      %3276 = vrot.lane.b32.xlu0 %v3208, 50
      %v3277 = vpop.permute.xlu0 %3276
      %3278 = vrot.lane.b32.xlu0 %v3210, 50
      %v3279 = vpop.permute.xlu0 %3278
      %vm3280 = vcmp.lt.s32.totalorder %v830, 50
      %v3281 = vsel %vm3280, %v3265, %v3273
      %v3282 = vsel %vm3280, %v3267, %v3275
      %v3283 = vsel %vm3280, %v3269, %v3277
      %v3284 = vsel %vm3280, %v3271, %v3279
      %v3285 = vsel %vm3280, %v3273, %v3265
      %v3286 = vsel %vm3280, %v3275, %v3267
      %v3287 = vsel %vm3280, %v3277, %v3269
      %v3288 = vsel %vm3280, %v3279, %v3271
      %s3289 = scalar_lea.vmem %s1, 1
      %v3290 = vld [vmem:[%s3289] ss:$8 sm:$0x3]
      %v3292 = vlaneseq
      %v3293 = vshrl.u32 %v3292, 7
      %v3294 = vsub.s32 0, %v3293
      %v3295 = vrot.slane %v3290, %v3294
      %v3296 = vlaneseq
      %v3297 = vshrl.u32 %v3296, 7
      %v3298 = vsub.s32 1, %v3297
      %v3299 = vrot.slane %v3290, %v3298
      %v3302 = vmul.f32 %v3285, %v3295
      %v3303 = vmul.f32 %v3281, %v3299
      %v3304 = vmul.f32 %v3286, %v3295
      %v3305 = vmul.f32 %v3282, %v3299
      %v3306 = vmul.f32 %v3287, %v3295
      %v3307 = vmul.f32 %v3283, %v3299
      %v3308 = vmul.f32 %v3288, %v3295
      %v3309 = vmul.f32 %v3284, %v3299
      %v3310 = vpack.c.bf16 %v3304, %v3302
      %v3311 = vpack.c.bf16 %v3305, %v3303
      %v3312 = vpack.c.bf16 %v3308, %v3306
      %v3313 = vpack.c.bf16 %v3309, %v3307
      %3314 = vst [vmem:[#allocation3 + $0x20] sm:$0xff] %v3310
      %3315 = vst [vmem:[#allocation3 + $0x28] sm:$0xff] %v3311
      %3316 = vst [vmem:[#allocation3 + $0x30] sm:$0xff] %v3312
      %3317 = vst [vmem:[#allocation3 + $0x38] sm:$0xff] %v3313
      %3318 = vrot.lane.b32.xlu0 %v3203, 49
      %v3319 = vpop.permute.xlu0 %3318
      %3320 = vrot.lane.b32.xlu0 %v3205, 49
      %v3321 = vpop.permute.xlu0 %3320
      %3322 = vrot.lane.b32.xlu0 %v3207, 49
      %v3323 = vpop.permute.xlu0 %3322
      %3324 = vrot.lane.b32.xlu0 %v3209, 49
      %v3325 = vpop.permute.xlu0 %3324
      %3326 = vrot.lane.b32.xlu0 %v3204, 49
      %v3327 = vpop.permute.xlu0 %3326
      %3328 = vrot.lane.b32.xlu0 %v3206, 49
      %v3329 = vpop.permute.xlu0 %3328
      %3330 = vrot.lane.b32.xlu0 %v3208, 49
      %v3331 = vpop.permute.xlu0 %3330
      %3332 = vrot.lane.b32.xlu0 %v3210, 49
      %v3333 = vpop.permute.xlu0 %3332
      %vm3334 = vcmp.lt.s32.totalorder %v830, 49
      %v3335 = vsel %vm3334, %v3319, %v3327
      %v3336 = vsel %vm3334, %v3321, %v3329
      %v3337 = vsel %vm3334, %v3323, %v3331
      %v3338 = vsel %vm3334, %v3325, %v3333
      %v3339 = vsel %vm3334, %v3327, %v3319
      %v3340 = vsel %vm3334, %v3329, %v3321
      %v3341 = vsel %vm3334, %v3331, %v3323
      %v3342 = vsel %vm3334, %v3333, %v3325
      %s3343 = scalar_lea.vmem %s1, 2
      %v3344 = vld [vmem:[%s3343] ss:$8 sm:$0x3]
      %v3346 = vlaneseq
      %v3347 = vshrl.u32 %v3346, 7
      %v3348 = vsub.s32 0, %v3347
      %v3349 = vrot.slane %v3344, %v3348
      %v3350 = vlaneseq
      %v3351 = vshrl.u32 %v3350, 7
      %v3352 = vsub.s32 1, %v3351
      %v3353 = vrot.slane %v3344, %v3352
      %v3356 = vmul.f32 %v3339, %v3349
      %v3357 = vmul.f32 %v3335, %v3353
      %v3358 = vmul.f32 %v3340, %v3349
      %v3359 = vmul.f32 %v3336, %v3353
      %v3360 = vmul.f32 %v3341, %v3349
      %v3361 = vmul.f32 %v3337, %v3353
      %v3362 = vmul.f32 %v3342, %v3349
      %v3363 = vmul.f32 %v3338, %v3353
      %v3364 = vpack.c.bf16 %v3358, %v3356
      %v3365 = vpack.c.bf16 %v3359, %v3357
      %v3366 = vpack.c.bf16 %v3362, %v3360
      %v3367 = vpack.c.bf16 %v3363, %v3361
      %3368 = vst [vmem:[#allocation3 + $0x40] sm:$0xff] %v3364
      %3369 = vst [vmem:[#allocation3 + $0x48] sm:$0xff] %v3365
      %3370 = vst [vmem:[#allocation3 + $0x50] sm:$0xff] %v3366
      %3371 = vst [vmem:[#allocation3 + $0x58] sm:$0xff] %v3367
      %3372 = vrot.lane.b32.xlu0 %v3203, 48
      %v3373 = vpop.permute.xlu0 %3372
      %3374 = vrot.lane.b32.xlu0 %v3205, 48
      %v3375 = vpop.permute.xlu0 %3374
      %3376 = vrot.lane.b32.xlu0 %v3207, 48
      %v3377 = vpop.permute.xlu0 %3376
      %3378 = vrot.lane.b32.xlu0 %v3209, 48
      %v3379 = vpop.permute.xlu0 %3378
      %3380 = vrot.lane.b32.xlu0 %v3204, 48
      %v3381 = vpop.permute.xlu0 %3380
      %3382 = vrot.lane.b32.xlu0 %v3206, 48
      %v3383 = vpop.permute.xlu0 %3382
      %3384 = vrot.lane.b32.xlu0 %v3208, 48
      %v3385 = vpop.permute.xlu0 %3384
      %3386 = vrot.lane.b32.xlu0 %v3210, 48
      %v3387 = vpop.permute.xlu0 %3386
      %vm3388 = vcmp.lt.s32.totalorder %v830, 48
      %v3389 = vsel %vm3388, %v3373, %v3381
      %v3390 = vsel %vm3388, %v3375, %v3383
      %v3391 = vsel %vm3388, %v3377, %v3385
      %v3392 = vsel %vm3388, %v3379, %v3387
      %v3393 = vsel %vm3388, %v3381, %v3373
      %v3394 = vsel %vm3388, %v3383, %v3375
      %v3395 = vsel %vm3388, %v3385, %v3377
      %v3396 = vsel %vm3388, %v3387, %v3379
      %s3397 = scalar_lea.vmem %s1, 3
      %v3398 = vld [vmem:[%s3397] ss:$8 sm:$0x3]
      %v3400 = vlaneseq
      %v3401 = vshrl.u32 %v3400, 7
      %v3402 = vsub.s32 0, %v3401
      %v3403 = vrot.slane %v3398, %v3402
      %v3404 = vlaneseq
      %v3405 = vshrl.u32 %v3404, 7
      %v3406 = vsub.s32 1, %v3405
      %v3407 = vrot.slane %v3398, %v3406
      %v3410 = vmul.f32 %v3393, %v3403
      %v3411 = vmul.f32 %v3389, %v3407
      %v3412 = vmul.f32 %v3394, %v3403
      %v3413 = vmul.f32 %v3390, %v3407
      %v3414 = vmul.f32 %v3395, %v3403
      %v3415 = vmul.f32 %v3391, %v3407
      %v3416 = vmul.f32 %v3396, %v3403
      %v3417 = vmul.f32 %v3392, %v3407
      %v3418 = vpack.c.bf16 %v3412, %v3410
      %v3419 = vpack.c.bf16 %v3413, %v3411
      %v3420 = vpack.c.bf16 %v3416, %v3414
      %v3421 = vpack.c.bf16 %v3417, %v3415
      %3422 = vst [vmem:[#allocation3 + $0x60] sm:$0xff] %v3418
      %3423 = vst [vmem:[#allocation3 + $0x68] sm:$0xff] %v3419
      %3424 = vst [vmem:[#allocation3 + $0x70] sm:$0xff] %v3420
      %3425 = vst [vmem:[#allocation3 + $0x78] sm:$0xff] %v3421
      %3426 = vrot.lane.b32.xlu0 %v3203, 47
      %v3427 = vpop.permute.xlu0 %3426
      %3428 = vrot.lane.b32.xlu0 %v3205, 47
      %v3429 = vpop.permute.xlu0 %3428
      %3430 = vrot.lane.b32.xlu0 %v3207, 47
      %v3431 = vpop.permute.xlu0 %3430
      %3432 = vrot.lane.b32.xlu0 %v3209, 47
      %v3433 = vpop.permute.xlu0 %3432
      %3434 = vrot.lane.b32.xlu0 %v3204, 47
      %v3435 = vpop.permute.xlu0 %3434
      %3436 = vrot.lane.b32.xlu0 %v3206, 47
      %v3437 = vpop.permute.xlu0 %3436
      %3438 = vrot.lane.b32.xlu0 %v3208, 47
      %v3439 = vpop.permute.xlu0 %3438
      %3440 = vrot.lane.b32.xlu0 %v3210, 47
      %v3441 = vpop.permute.xlu0 %3440
      %vm3442 = vcmp.lt.s32.totalorder %v830, 47
      %v3443 = vsel %vm3442, %v3427, %v3435
      %v3444 = vsel %vm3442, %v3429, %v3437
      %v3445 = vsel %vm3442, %v3431, %v3439
      %v3446 = vsel %vm3442, %v3433, %v3441
      %v3447 = vsel %vm3442, %v3435, %v3427
      %v3448 = vsel %vm3442, %v3437, %v3429
      %v3449 = vsel %vm3442, %v3439, %v3431
      %v3450 = vsel %vm3442, %v3441, %v3433
      %s3451 = scalar_lea.vmem %s1, 4
      %v3452 = vld [vmem:[%s3451] ss:$8 sm:$0x3]
      %v3454 = vlaneseq
      %v3455 = vshrl.u32 %v3454, 7
      %v3456 = vsub.s32 0, %v3455
      %v3457 = vrot.slane %v3452, %v3456
      %v3458 = vlaneseq
      %v3459 = vshrl.u32 %v3458, 7
      %v3460 = vsub.s32 1, %v3459
      %v3461 = vrot.slane %v3452, %v3460
      %v3464 = vmul.f32 %v3447, %v3457
      %v3465 = vmul.f32 %v3443, %v3461
      %v3466 = vmul.f32 %v3448, %v3457
      %v3467 = vmul.f32 %v3444, %v3461
      %v3468 = vmul.f32 %v3449, %v3457
      %v3469 = vmul.f32 %v3445, %v3461
      %v3470 = vmul.f32 %v3450, %v3457
      %v3471 = vmul.f32 %v3446, %v3461
      %v3472 = vpack.c.bf16 %v3466, %v3464
      %v3473 = vpack.c.bf16 %v3467, %v3465
      %v3474 = vpack.c.bf16 %v3470, %v3468
      %v3475 = vpack.c.bf16 %v3471, %v3469
      %3476 = vst [vmem:[#allocation3 + $0x80] sm:$0xff] %v3472
      %3477 = vst [vmem:[#allocation3 + $0x88] sm:$0xff] %v3473
      %3478 = vst [vmem:[#allocation3 + $0x90] sm:$0xff] %v3474
      %3479 = vst [vmem:[#allocation3 + $0x98] sm:$0xff] %v3475
      %3480 = vrot.lane.b32.xlu0 %v3203, 46
      %v3481 = vpop.permute.xlu0 %3480
      %3482 = vrot.lane.b32.xlu0 %v3205, 46
      %v3483 = vpop.permute.xlu0 %3482
      %3484 = vrot.lane.b32.xlu0 %v3207, 46
      %v3485 = vpop.permute.xlu0 %3484
      %3486 = vrot.lane.b32.xlu0 %v3209, 46
      %v3487 = vpop.permute.xlu0 %3486
      %3488 = vrot.lane.b32.xlu0 %v3204, 46
      %v3489 = vpop.permute.xlu0 %3488
      %3490 = vrot.lane.b32.xlu0 %v3206, 46
      %v3491 = vpop.permute.xlu0 %3490
      %3492 = vrot.lane.b32.xlu0 %v3208, 46
      %v3493 = vpop.permute.xlu0 %3492
      %3494 = vrot.lane.b32.xlu0 %v3210, 46
      %v3495 = vpop.permute.xlu0 %3494
      %vm3496 = vcmp.lt.s32.totalorder %v830, 46
      %v3497 = vsel %vm3496, %v3481, %v3489
      %v3498 = vsel %vm3496, %v3483, %v3491
      %v3499 = vsel %vm3496, %v3485, %v3493
      %v3500 = vsel %vm3496, %v3487, %v3495
      %v3501 = vsel %vm3496, %v3489, %v3481
      %v3502 = vsel %vm3496, %v3491, %v3483
      %v3503 = vsel %vm3496, %v3493, %v3485
      %v3504 = vsel %vm3496, %v3495, %v3487
      %s3505 = scalar_lea.vmem %s1, 5
      %v3506 = vld [vmem:[%s3505] ss:$8 sm:$0x3]
      %v3508 = vlaneseq
      %v3509 = vshrl.u32 %v3508, 7
      %v3510 = vsub.s32 0, %v3509
      %v3511 = vrot.slane %v3506, %v3510
      %v3512 = vlaneseq
      %v3513 = vshrl.u32 %v3512, 7
      %v3514 = vsub.s32 1, %v3513
      %v3515 = vrot.slane %v3506, %v3514
      %v3518 = vmul.f32 %v3501, %v3511
      %v3519 = vmul.f32 %v3497, %v3515
      %v3520 = vmul.f32 %v3502, %v3511
      %v3521 = vmul.f32 %v3498, %v3515
      %v3522 = vmul.f32 %v3503, %v3511
      %v3523 = vmul.f32 %v3499, %v3515
      %v3524 = vmul.f32 %v3504, %v3511
      %v3525 = vmul.f32 %v3500, %v3515
      %v3526 = vpack.c.bf16 %v3520, %v3518
      %v3527 = vpack.c.bf16 %v3521, %v3519
      %v3528 = vpack.c.bf16 %v3524, %v3522
      %v3529 = vpack.c.bf16 %v3525, %v3523
      %3530 = vst [vmem:[#allocation3 + $0xa0] sm:$0xff] %v3526
      %3531 = vst [vmem:[#allocation3 + $0xa8] sm:$0xff] %v3527
      %3532 = vst [vmem:[#allocation3 + $0xb0] sm:$0xff] %v3528
      %3533 = vst [vmem:[#allocation3 + $0xb8] sm:$0xff] %v3529
      %3534 = vrot.lane.b32.xlu0 %v3203, 45
      %v3535 = vpop.permute.xlu0 %3534
      %3536 = vrot.lane.b32.xlu0 %v3205, 45
      %v3537 = vpop.permute.xlu0 %3536
      %3538 = vrot.lane.b32.xlu0 %v3207, 45
      %v3539 = vpop.permute.xlu0 %3538
      %3540 = vrot.lane.b32.xlu0 %v3209, 45
      %v3541 = vpop.permute.xlu0 %3540
      %3542 = vrot.lane.b32.xlu0 %v3204, 45
      %v3543 = vpop.permute.xlu0 %3542
      %3544 = vrot.lane.b32.xlu0 %v3206, 45
      %v3545 = vpop.permute.xlu0 %3544
      %3546 = vrot.lane.b32.xlu0 %v3208, 45
      %v3547 = vpop.permute.xlu0 %3546
      %3548 = vrot.lane.b32.xlu0 %v3210, 45
      %v3549 = vpop.permute.xlu0 %3548
      %vm3550 = vcmp.lt.s32.totalorder %v830, 45
      %v3551 = vsel %vm3550, %v3535, %v3543
      %v3552 = vsel %vm3550, %v3537, %v3545
      %v3553 = vsel %vm3550, %v3539, %v3547
      %v3554 = vsel %vm3550, %v3541, %v3549
      %v3555 = vsel %vm3550, %v3543, %v3535
      %v3556 = vsel %vm3550, %v3545, %v3537
      %v3557 = vsel %vm3550, %v3547, %v3539
      %v3558 = vsel %vm3550, %v3549, %v3541
      %s3559 = scalar_lea.vmem %s1, 6
      %v3560 = vld [vmem:[%s3559] ss:$8 sm:$0x3]
      %v3562 = vlaneseq
      %v3563 = vshrl.u32 %v3562, 7
      %v3564 = vsub.s32 0, %v3563
      %v3565 = vrot.slane %v3560, %v3564
      %v3566 = vlaneseq
      %v3567 = vshrl.u32 %v3566, 7
      %v3568 = vsub.s32 1, %v3567
      %v3569 = vrot.slane %v3560, %v3568
      %v3572 = vmul.f32 %v3555, %v3565
      %v3573 = vmul.f32 %v3551, %v3569
      %v3574 = vmul.f32 %v3556, %v3565
      %v3575 = vmul.f32 %v3552, %v3569
      %v3576 = vmul.f32 %v3557, %v3565
      %v3577 = vmul.f32 %v3553, %v3569
      %v3578 = vmul.f32 %v3558, %v3565
      %v3579 = vmul.f32 %v3554, %v3569
      %v3580 = vpack.c.bf16 %v3574, %v3572
      %v3581 = vpack.c.bf16 %v3575, %v3573
      %v3582 = vpack.c.bf16 %v3578, %v3576
      %v3583 = vpack.c.bf16 %v3579, %v3577
      %3584 = vst [vmem:[#allocation3 + $0xc0] sm:$0xff] %v3580
      %3585 = vst [vmem:[#allocation3 + $0xc8] sm:$0xff] %v3581
      %3586 = vst [vmem:[#allocation3 + $0xd0] sm:$0xff] %v3582
      %3587 = vst [vmem:[#allocation3 + $0xd8] sm:$0xff] %v3583
      %3588 = vrot.lane.b32.xlu0 %v3203, 35
      %v3589 = vpop.permute.xlu0 %3588
      %3590 = vrot.lane.b32.xlu0 %v3205, 35
      %v3591 = vpop.permute.xlu0 %3590
      %3592 = vrot.lane.b32.xlu0 %v3207, 35
      %v3593 = vpop.permute.xlu0 %3592
      %3594 = vrot.lane.b32.xlu0 %v3209, 35
      %v3595 = vpop.permute.xlu0 %3594
      %3596 = vrot.lane.b32.xlu0 %v3204, 35
      %v3597 = vpop.permute.xlu0 %3596
      %3598 = vrot.lane.b32.xlu0 %v3206, 35
      %v3599 = vpop.permute.xlu0 %3598
      %3600 = vrot.lane.b32.xlu0 %v3208, 35
      %v3601 = vpop.permute.xlu0 %3600
      %3602 = vrot.lane.b32.xlu0 %v3210, 35
      %v3603 = vpop.permute.xlu0 %3602
      %vm3604 = vcmp.lt.s32.totalorder %v830, 35
      %v3605 = vsel %vm3604, %v3589, %v3597
      %v3606 = vsel %vm3604, %v3591, %v3599
      %v3607 = vsel %vm3604, %v3593, %v3601
      %v3608 = vsel %vm3604, %v3595, %v3603
      %v3609 = vsel %vm3604, %v3597, %v3589
      %v3610 = vsel %vm3604, %v3599, %v3591
      %v3611 = vsel %vm3604, %v3601, %v3593
      %v3612 = vsel %vm3604, %v3603, %v3595
      %s3613 = scalar_lea.vmem %s1, 7
      %v3614 = vld [vmem:[%s3613] ss:$8 sm:$0x3]
      %v3616 = vlaneseq
      %v3617 = vshrl.u32 %v3616, 7
      %v3618 = vsub.s32 0, %v3617
      %v3619 = vrot.slane %v3614, %v3618
      %v3620 = vlaneseq
      %v3621 = vshrl.u32 %v3620, 7
      %v3622 = vsub.s32 1, %v3621
      %v3623 = vrot.slane %v3614, %v3622
      %v3626 = vmul.f32 %v3609, %v3619
      %v3627 = vmul.f32 %v3605, %v3623
      %v3628 = vmul.f32 %v3610, %v3619
      %v3629 = vmul.f32 %v3606, %v3623
      %v3630 = vmul.f32 %v3611, %v3619
      %v3631 = vmul.f32 %v3607, %v3623
      %v3632 = vmul.f32 %v3612, %v3619
      %v3633 = vmul.f32 %v3608, %v3623
      %v3634 = vpack.c.bf16 %v3628, %v3626
      %v3635 = vpack.c.bf16 %v3629, %v3627
      %v3636 = vpack.c.bf16 %v3632, %v3630
      %v3637 = vpack.c.bf16 %v3633, %v3631
      %3638 = vst [vmem:[#allocation3 + $0xe0] sm:$0xff] %v3634
      %3639 = vst [vmem:[#allocation3 + $0xe8] sm:$0xff] %v3635
      %3640 = vst [vmem:[#allocation3 + $0xf0] sm:$0xff] %v3636
      %3641 = vst [vmem:[#allocation3 + $0xf8] sm:$0xff] %v3637
      %3642 = vrot.lane.b32.xlu0 %v3203, 34
      %v3643 = vpop.permute.xlu0 %3642
      %3644 = vrot.lane.b32.xlu0 %v3205, 34
      %v3645 = vpop.permute.xlu0 %3644
      %3646 = vrot.lane.b32.xlu0 %v3207, 34
      %v3647 = vpop.permute.xlu0 %3646
      %3648 = vrot.lane.b32.xlu0 %v3209, 34
      %v3649 = vpop.permute.xlu0 %3648
      %3650 = vrot.lane.b32.xlu0 %v3204, 34
      %v3651 = vpop.permute.xlu0 %3650
      %3652 = vrot.lane.b32.xlu0 %v3206, 34
      %v3653 = vpop.permute.xlu0 %3652
      %3654 = vrot.lane.b32.xlu0 %v3208, 34
      %v3655 = vpop.permute.xlu0 %3654
      %3656 = vrot.lane.b32.xlu0 %v3210, 34
      %v3657 = vpop.permute.xlu0 %3656
      %v3658 = vsel %vm1495, %v3643, %v3651
      %v3659 = vsel %vm1495, %v3645, %v3653
      %v3660 = vsel %vm1495, %v3647, %v3655
      %v3661 = vsel %vm1495, %v3649, %v3657
      %v3662 = vsel %vm1495, %v3651, %v3643
      %v3663 = vsel %vm1495, %v3653, %v3645
      %v3664 = vsel %vm1495, %v3655, %v3647
      %v3665 = vsel %vm1495, %v3657, %v3649
      %v3666 = vld [vmem:[%s1504] ss:$8 sm:$0x3]
      %v3668 = vlaneseq
      %v3669 = vshrl.u32 %v3668, 7
      %v3670 = vsub.s32 0, %v3669
      %v3671 = vrot.slane %v3666, %v3670
      %v3672 = vlaneseq
      %v3673 = vshrl.u32 %v3672, 7
      %v3674 = vsub.s32 1, %v3673
      %v3675 = vrot.slane %v3666, %v3674
      %v3678 = vmul.f32 %v3662, %v3671
      %v3679 = vmul.f32 %v3658, %v3675
      %v3680 = vmul.f32 %v3663, %v3671
      %v3681 = vmul.f32 %v3659, %v3675
      %v3682 = vmul.f32 %v3664, %v3671
      %v3683 = vmul.f32 %v3660, %v3675
      %v3684 = vmul.f32 %v3665, %v3671
      %v3685 = vmul.f32 %v3661, %v3675
      %v3686 = vpack.c.bf16 %v3680, %v3678
      %v3687 = vpack.c.bf16 %v3681, %v3679
      %v3688 = vpack.c.bf16 %v3684, %v3682
      %v3689 = vpack.c.bf16 %v3685, %v3683
      %3690 = vst [vmem:[#allocation3 + $0x100] sm:$0xff] %v3686
      %3691 = vst [vmem:[#allocation3 + $0x108] sm:$0xff] %v3687
      %3692 = vst [vmem:[#allocation3 + $0x110] sm:$0xff] %v3688
      %3693 = vst [vmem:[#allocation3 + $0x118] sm:$0xff] %v3689
      %3694 = vrot.lane.b32.xlu0 %v3203, 33
      %v3695 = vpop.permute.xlu0 %3694
      %3696 = vrot.lane.b32.xlu0 %v3205, 33
      %v3697 = vpop.permute.xlu0 %3696
      %3698 = vrot.lane.b32.xlu0 %v3207, 33
      %v3699 = vpop.permute.xlu0 %3698
      %3700 = vrot.lane.b32.xlu0 %v3209, 33
      %v3701 = vpop.permute.xlu0 %3700
      %3702 = vrot.lane.b32.xlu0 %v3204, 33
      %v3703 = vpop.permute.xlu0 %3702
      %3704 = vrot.lane.b32.xlu0 %v3206, 33
      %v3705 = vpop.permute.xlu0 %3704
      %3706 = vrot.lane.b32.xlu0 %v3208, 33
      %v3707 = vpop.permute.xlu0 %3706
      %3708 = vrot.lane.b32.xlu0 %v3210, 33
      %v3709 = vpop.permute.xlu0 %3708
      %v3710 = vsel %vm1549, %v3695, %v3703
      %v3711 = vsel %vm1549, %v3697, %v3705
      %v3712 = vsel %vm1549, %v3699, %v3707
      %v3713 = vsel %vm1549, %v3701, %v3709
      %v3714 = vsel %vm1549, %v3703, %v3695
      %v3715 = vsel %vm1549, %v3705, %v3697
      %v3716 = vsel %vm1549, %v3707, %v3699
      %v3717 = vsel %vm1549, %v3709, %v3701
      %v3718 = vld [vmem:[%s1558] ss:$8 sm:$0x3]
      %v3720 = vlaneseq
      %v3721 = vshrl.u32 %v3720, 7
      %v3722 = vsub.s32 0, %v3721
      %v3723 = vrot.slane %v3718, %v3722
      %v3724 = vlaneseq
      %v3725 = vshrl.u32 %v3724, 7
      %v3726 = vsub.s32 1, %v3725
      %v3727 = vrot.slane %v3718, %v3726
      %v3730 = vmul.f32 %v3714, %v3723
      %v3731 = vmul.f32 %v3710, %v3727
      %v3732 = vmul.f32 %v3715, %v3723
      %v3733 = vmul.f32 %v3711, %v3727
      %v3734 = vmul.f32 %v3716, %v3723
      %v3735 = vmul.f32 %v3712, %v3727
      %v3736 = vmul.f32 %v3717, %v3723
      %v3737 = vmul.f32 %v3713, %v3727
      %v3738 = vpack.c.bf16 %v3732, %v3730
      %v3739 = vpack.c.bf16 %v3733, %v3731
      %v3740 = vpack.c.bf16 %v3736, %v3734
      %v3741 = vpack.c.bf16 %v3737, %v3735
      %3742 = vst [vmem:[#allocation3 + $0x120] sm:$0xff] %v3738
      %3743 = vst [vmem:[#allocation3 + $0x128] sm:$0xff] %v3739
      %3744 = vst [vmem:[#allocation3 + $0x130] sm:$0xff] %v3740
      %3745 = vst [vmem:[#allocation3 + $0x138] sm:$0xff] %v3741
      %3746 = vrot.lane.b32.xlu0 %v3203, 32
      %v3747 = vpop.permute.xlu0 %3746
      %3748 = vrot.lane.b32.xlu0 %v3205, 32
      %v3749 = vpop.permute.xlu0 %3748
      %3750 = vrot.lane.b32.xlu0 %v3207, 32
      %v3751 = vpop.permute.xlu0 %3750
      %3752 = vrot.lane.b32.xlu0 %v3209, 32
      %v3753 = vpop.permute.xlu0 %3752
      %3754 = vrot.lane.b32.xlu0 %v3204, 32
      %v3755 = vpop.permute.xlu0 %3754
      %3756 = vrot.lane.b32.xlu0 %v3206, 32
      %v3757 = vpop.permute.xlu0 %3756
      %3758 = vrot.lane.b32.xlu0 %v3208, 32
      %v3759 = vpop.permute.xlu0 %3758
      %3760 = vrot.lane.b32.xlu0 %v3210, 32
      %v3761 = vpop.permute.xlu0 %3760
      %v3762 = vsel %vm1603, %v3747, %v3755
      %v3763 = vsel %vm1603, %v3749, %v3757
      %v3764 = vsel %vm1603, %v3751, %v3759
      %v3765 = vsel %vm1603, %v3753, %v3761
      %v3766 = vsel %vm1603, %v3755, %v3747
      %v3767 = vsel %vm1603, %v3757, %v3749
      %v3768 = vsel %vm1603, %v3759, %v3751
      %v3769 = vsel %vm1603, %v3761, %v3753
      %v3770 = vld [vmem:[%s1612] ss:$8 sm:$0x3]
      %v3772 = vlaneseq
      %v3773 = vshrl.u32 %v3772, 7
      %v3774 = vsub.s32 0, %v3773
      %v3775 = vrot.slane %v3770, %v3774
      %v3776 = vlaneseq
      %v3777 = vshrl.u32 %v3776, 7
      %v3778 = vsub.s32 1, %v3777
      %v3779 = vrot.slane %v3770, %v3778
      %v3782 = vmul.f32 %v3766, %v3775
      %v3783 = vmul.f32 %v3762, %v3779
      %v3784 = vmul.f32 %v3767, %v3775
      %v3785 = vmul.f32 %v3763, %v3779
      %v3786 = vmul.f32 %v3768, %v3775
      %v3787 = vmul.f32 %v3764, %v3779
      %v3788 = vmul.f32 %v3769, %v3775
      %v3789 = vmul.f32 %v3765, %v3779
      %v3790 = vpack.c.bf16 %v3784, %v3782
      %v3791 = vpack.c.bf16 %v3785, %v3783
      %v3792 = vpack.c.bf16 %v3788, %v3786
      %v3793 = vpack.c.bf16 %v3789, %v3787
      %3794 = vst [vmem:[#allocation3 + $0x140] sm:$0xff] %v3790
      %3795 = vst [vmem:[#allocation3 + $0x148] sm:$0xff] %v3791
      %3796 = vst [vmem:[#allocation3 + $0x150] sm:$0xff] %v3792
      %3797 = vst [vmem:[#allocation3 + $0x158] sm:$0xff] %v3793
      %3798 = vrot.lane.b32.xlu0 %v3203, 31
      %v3799 = vpop.permute.xlu0 %3798
      %3800 = vrot.lane.b32.xlu0 %v3205, 31
      %v3801 = vpop.permute.xlu0 %3800
      %3802 = vrot.lane.b32.xlu0 %v3207, 31
      %v3803 = vpop.permute.xlu0 %3802
      %3804 = vrot.lane.b32.xlu0 %v3209, 31
      %v3805 = vpop.permute.xlu0 %3804
      %3806 = vrot.lane.b32.xlu0 %v3204, 31
      %v3807 = vpop.permute.xlu0 %3806
      %3808 = vrot.lane.b32.xlu0 %v3206, 31
      %v3809 = vpop.permute.xlu0 %3808
      %3810 = vrot.lane.b32.xlu0 %v3208, 31
      %v3811 = vpop.permute.xlu0 %3810
      %3812 = vrot.lane.b32.xlu0 %v3210, 31
      %v3813 = vpop.permute.xlu0 %3812
      %v3814 = vsel %vm1657, %v3799, %v3807
      %v3815 = vsel %vm1657, %v3801, %v3809
      %v3816 = vsel %vm1657, %v3803, %v3811
      %v3817 = vsel %vm1657, %v3805, %v3813
      %v3818 = vsel %vm1657, %v3807, %v3799
      %v3819 = vsel %vm1657, %v3809, %v3801
      %v3820 = vsel %vm1657, %v3811, %v3803
      %v3821 = vsel %vm1657, %v3813, %v3805
      %v3822 = vld [vmem:[%s1666] ss:$8 sm:$0x3]
      %v3824 = vlaneseq
      %v3825 = vshrl.u32 %v3824, 7
      %v3826 = vsub.s32 0, %v3825
      %v3827 = vrot.slane %v3822, %v3826
      %v3828 = vlaneseq
      %v3829 = vshrl.u32 %v3828, 7
      %v3830 = vsub.s32 1, %v3829
      %v3831 = vrot.slane %v3822, %v3830
      %v3834 = vmul.f32 %v3818, %v3827
      %v3835 = vmul.f32 %v3814, %v3831
      %v3836 = vmul.f32 %v3819, %v3827
      %v3837 = vmul.f32 %v3815, %v3831
      %v3838 = vmul.f32 %v3820, %v3827
      %v3839 = vmul.f32 %v3816, %v3831
      %v3840 = vmul.f32 %v3821, %v3827
      %v3841 = vmul.f32 %v3817, %v3831
      %v3842 = vpack.c.bf16 %v3836, %v3834
      %v3843 = vpack.c.bf16 %v3837, %v3835
      %v3844 = vpack.c.bf16 %v3840, %v3838
      %v3845 = vpack.c.bf16 %v3841, %v3839
      %3846 = vst [vmem:[#allocation3 + $0x160] sm:$0xff] %v3842
      %3847 = vst [vmem:[#allocation3 + $0x168] sm:$0xff] %v3843
      %3848 = vst [vmem:[#allocation3 + $0x170] sm:$0xff] %v3844
      %3849 = vst [vmem:[#allocation3 + $0x178] sm:$0xff] %v3845
      %3850 = vrot.lane.b32.xlu0 %v3203, 30
      %v3851 = vpop.permute.xlu0 %3850
      %3852 = vrot.lane.b32.xlu0 %v3205, 30
      %v3853 = vpop.permute.xlu0 %3852
      %3854 = vrot.lane.b32.xlu0 %v3207, 30
      %v3855 = vpop.permute.xlu0 %3854
      %3856 = vrot.lane.b32.xlu0 %v3209, 30
      %v3857 = vpop.permute.xlu0 %3856
      %3858 = vrot.lane.b32.xlu0 %v3204, 30
      %v3859 = vpop.permute.xlu0 %3858
      %3860 = vrot.lane.b32.xlu0 %v3206, 30
      %v3861 = vpop.permute.xlu0 %3860
      %3862 = vrot.lane.b32.xlu0 %v3208, 30
      %v3863 = vpop.permute.xlu0 %3862
      %3864 = vrot.lane.b32.xlu0 %v3210, 30
      %v3865 = vpop.permute.xlu0 %3864
      %v3866 = vsel %vm1711, %v3851, %v3859
      %v3867 = vsel %vm1711, %v3853, %v3861
      %v3868 = vsel %vm1711, %v3855, %v3863
      %v3869 = vsel %vm1711, %v3857, %v3865
      %v3870 = vsel %vm1711, %v3859, %v3851
      %v3871 = vsel %vm1711, %v3861, %v3853
      %v3872 = vsel %vm1711, %v3863, %v3855
      %v3873 = vsel %vm1711, %v3865, %v3857
      %v3874 = vld [vmem:[%s1720] ss:$8 sm:$0x3]
      %v3876 = vlaneseq
      %v3877 = vshrl.u32 %v3876, 7
      %v3878 = vsub.s32 0, %v3877
      %v3879 = vrot.slane %v3874, %v3878
      %v3880 = vlaneseq
      %v3881 = vshrl.u32 %v3880, 7
      %v3882 = vsub.s32 1, %v3881
      %v3883 = vrot.slane %v3874, %v3882
      %v3886 = vmul.f32 %v3870, %v3879
      %v3887 = vmul.f32 %v3866, %v3883
      %v3888 = vmul.f32 %v3871, %v3879
      %v3889 = vmul.f32 %v3867, %v3883
      %v3890 = vmul.f32 %v3872, %v3879
      %v3891 = vmul.f32 %v3868, %v3883
      %v3892 = vmul.f32 %v3873, %v3879
      %v3893 = vmul.f32 %v3869, %v3883
      %v3894 = vpack.c.bf16 %v3888, %v3886
      %v3895 = vpack.c.bf16 %v3889, %v3887
      %v3896 = vpack.c.bf16 %v3892, %v3890
      %v3897 = vpack.c.bf16 %v3893, %v3891
      %3898 = vst [vmem:[#allocation3 + $0x180] sm:$0xff] %v3894
      %3899 = vst [vmem:[#allocation3 + $0x188] sm:$0xff] %v3895
      %3900 = vst [vmem:[#allocation3 + $0x190] sm:$0xff] %v3896
      %3901 = vst [vmem:[#allocation3 + $0x198] sm:$0xff] %v3897
      %3902 = vrot.lane.b32.xlu0 %v3203, 29
      %v3903 = vpop.permute.xlu0 %3902
      %3904 = vrot.lane.b32.xlu0 %v3205, 29
      %v3905 = vpop.permute.xlu0 %3904
      %3906 = vrot.lane.b32.xlu0 %v3207, 29
      %v3907 = vpop.permute.xlu0 %3906
      %3908 = vrot.lane.b32.xlu0 %v3209, 29
      %v3909 = vpop.permute.xlu0 %3908
      %3910 = vrot.lane.b32.xlu0 %v3204, 29
      %v3911 = vpop.permute.xlu0 %3910
      %3912 = vrot.lane.b32.xlu0 %v3206, 29
      %v3913 = vpop.permute.xlu0 %3912
      %3914 = vrot.lane.b32.xlu0 %v3208, 29
      %v3915 = vpop.permute.xlu0 %3914
      %3916 = vrot.lane.b32.xlu0 %v3210, 29
      %v3917 = vpop.permute.xlu0 %3916
      %vm3918 = vcmp.lt.s32.totalorder %v830, 29
      %v3919 = vsel %vm3918, %v3903, %v3911
      %v3920 = vsel %vm3918, %v3905, %v3913
      %v3921 = vsel %vm3918, %v3907, %v3915
      %v3922 = vsel %vm3918, %v3909, %v3917
      %v3923 = vsel %vm3918, %v3911, %v3903
      %v3924 = vsel %vm3918, %v3913, %v3905
      %v3925 = vsel %vm3918, %v3915, %v3907
      %v3926 = vsel %vm3918, %v3917, %v3909
      %s3927 = scalar_lea.vmem %s1, 21
      %v3928 = vld [vmem:[%s3927] ss:$8 sm:$0x3]
      %v3930 = vlaneseq
      %v3931 = vshrl.u32 %v3930, 7
      %v3932 = vsub.s32 0, %v3931
      %v3933 = vrot.slane %v3928, %v3932
      %v3934 = vlaneseq
      %v3935 = vshrl.u32 %v3934, 7
      %v3936 = vsub.s32 1, %v3935
      %v3937 = vrot.slane %v3928, %v3936
      %v3940 = vmul.f32 %v3923, %v3933
      %v3941 = vmul.f32 %v3919, %v3937
      %v3942 = vmul.f32 %v3924, %v3933
      %v3943 = vmul.f32 %v3920, %v3937
      %v3944 = vmul.f32 %v3925, %v3933
      %v3945 = vmul.f32 %v3921, %v3937
      %v3946 = vmul.f32 %v3926, %v3933
      %v3947 = vmul.f32 %v3922, %v3937
      %v3948 = vpack.c.bf16 %v3942, %v3940
      %v3949 = vpack.c.bf16 %v3943, %v3941
      %v3950 = vpack.c.bf16 %v3946, %v3944
      %v3951 = vpack.c.bf16 %v3947, %v3945
      %3952 = vst [vmem:[#allocation3 + $0x1a0] sm:$0xff] %v3948
      %3953 = vst [vmem:[#allocation3 + $0x1a8] sm:$0xff] %v3949
      %3954 = vst [vmem:[#allocation3 + $0x1b0] sm:$0xff] %v3950
      %3955 = vst [vmem:[#allocation3 + $0x1b8] sm:$0xff] %v3951
      %3956 = vrot.lane.b32.xlu0 %v3203, 19
      %v3957 = vpop.permute.xlu0 %3956
      %3958 = vrot.lane.b32.xlu0 %v3205, 19
      %v3959 = vpop.permute.xlu0 %3958
      %3960 = vrot.lane.b32.xlu0 %v3207, 19
      %v3961 = vpop.permute.xlu0 %3960
      %3962 = vrot.lane.b32.xlu0 %v3209, 19
      %v3963 = vpop.permute.xlu0 %3962
      %3964 = vrot.lane.b32.xlu0 %v3204, 19
      %v3965 = vpop.permute.xlu0 %3964
      %3966 = vrot.lane.b32.xlu0 %v3206, 19
      %v3967 = vpop.permute.xlu0 %3966
      %3968 = vrot.lane.b32.xlu0 %v3208, 19
      %v3969 = vpop.permute.xlu0 %3968
      %3970 = vrot.lane.b32.xlu0 %v3210, 19
      %v3971 = vpop.permute.xlu0 %3970
      %vm3972 = vcmp.lt.s32.totalorder %v830, 19
      %v3973 = vsel %vm3972, %v3957, %v3965
      %v3974 = vsel %vm3972, %v3959, %v3967
      %v3975 = vsel %vm3972, %v3961, %v3969
      %v3976 = vsel %vm3972, %v3963, %v3971
      %v3977 = vsel %vm3972, %v3965, %v3957
      %v3978 = vsel %vm3972, %v3967, %v3959
      %v3979 = vsel %vm3972, %v3969, %v3961
      %v3980 = vsel %vm3972, %v3971, %v3963
      %s3981 = scalar_lea.vmem %s1, 22
      %v3982 = vld [vmem:[%s3981] ss:$8 sm:$0x3]
      %v3984 = vlaneseq
      %v3985 = vshrl.u32 %v3984, 7
      %v3986 = vsub.s32 0, %v3985
      %v3987 = vrot.slane %v3982, %v3986
      %v3988 = vlaneseq
      %v3989 = vshrl.u32 %v3988, 7
      %v3990 = vsub.s32 1, %v3989
      %v3991 = vrot.slane %v3982, %v3990
      %v3994 = vmul.f32 %v3977, %v3987
      %v3995 = vmul.f32 %v3973, %v3991
      %v3996 = vmul.f32 %v3978, %v3987
      %v3997 = vmul.f32 %v3974, %v3991
      %v3998 = vmul.f32 %v3979, %v3987
      %v3999 = vmul.f32 %v3975, %v3991
      %v4000 = vmul.f32 %v3980, %v3987
      %v4001 = vmul.f32 %v3976, %v3991
      %v4002 = vpack.c.bf16 %v3996, %v3994
      %v4003 = vpack.c.bf16 %v3997, %v3995
      %v4004 = vpack.c.bf16 %v4000, %v3998
      %v4005 = vpack.c.bf16 %v4001, %v3999
      %4006 = vst [vmem:[#allocation3 + $0x1c0] sm:$0xff] %v4002
      %4007 = vst [vmem:[#allocation3 + $0x1c8] sm:$0xff] %v4003
      %4008 = vst [vmem:[#allocation3 + $0x1d0] sm:$0xff] %v4004
      %4009 = vst [vmem:[#allocation3 + $0x1d8] sm:$0xff] %v4005
      %4010 = vrot.lane.b32.xlu0 %v3203, 18
      %v4011 = vpop.permute.xlu0 %4010
      %4012 = vrot.lane.b32.xlu0 %v3205, 18
      %v4013 = vpop.permute.xlu0 %4012
      %4014 = vrot.lane.b32.xlu0 %v3207, 18
      %v4015 = vpop.permute.xlu0 %4014
      %4016 = vrot.lane.b32.xlu0 %v3209, 18
      %v4017 = vpop.permute.xlu0 %4016
      %4018 = vrot.lane.b32.xlu0 %v3204, 18
      %v4019 = vpop.permute.xlu0 %4018
      %4020 = vrot.lane.b32.xlu0 %v3206, 18
      %v4021 = vpop.permute.xlu0 %4020
      %4022 = vrot.lane.b32.xlu0 %v3208, 18
      %v4023 = vpop.permute.xlu0 %4022
      %4024 = vrot.lane.b32.xlu0 %v3210, 18
      %v4025 = vpop.permute.xlu0 %4024
      %v4026 = vsel %vm1765, %v4011, %v4019
      %v4027 = vsel %vm1765, %v4013, %v4021
      %v4028 = vsel %vm1765, %v4015, %v4023
      %v4029 = vsel %vm1765, %v4017, %v4025
      %v4030 = vsel %vm1765, %v4019, %v4011
      %v4031 = vsel %vm1765, %v4021, %v4013
      %v4032 = vsel %vm1765, %v4023, %v4015
      %v4033 = vsel %vm1765, %v4025, %v4017
      %v4034 = vld [vmem:[%s1774] ss:$8 sm:$0x3]
      %v4036 = vlaneseq
      %v4037 = vshrl.u32 %v4036, 7
      %v4038 = vsub.s32 0, %v4037
      %v4039 = vrot.slane %v4034, %v4038
      %v4040 = vlaneseq
      %v4041 = vshrl.u32 %v4040, 7
      %v4042 = vsub.s32 1, %v4041
      %v4043 = vrot.slane %v4034, %v4042
      %v4046 = vmul.f32 %v4030, %v4039
      %v4047 = vmul.f32 %v4026, %v4043
      %v4048 = vmul.f32 %v4031, %v4039
      %v4049 = vmul.f32 %v4027, %v4043
      %v4050 = vmul.f32 %v4032, %v4039
      %v4051 = vmul.f32 %v4028, %v4043
      %v4052 = vmul.f32 %v4033, %v4039
      %v4053 = vmul.f32 %v4029, %v4043
      %v4054 = vpack.c.bf16 %v4048, %v4046
      %v4055 = vpack.c.bf16 %v4049, %v4047
      %v4056 = vpack.c.bf16 %v4052, %v4050
      %v4057 = vpack.c.bf16 %v4053, %v4051
      %4058 = vst [vmem:[#allocation3 + $0x1e0] sm:$0xff] %v4054
      %4059 = vst [vmem:[#allocation3 + $0x1e8] sm:$0xff] %v4055
      %4060 = vst [vmem:[#allocation3 + $0x1f0] sm:$0xff] %v4056
      %4061 = vst [vmem:[#allocation3 + $0x1f8] sm:$0xff] %v4057
      %4062 = vrot.lane.b32.xlu0 %v3203, 17
      %v4063 = vpop.permute.xlu0 %4062
      %4064 = vrot.lane.b32.xlu0 %v3205, 17
      %v4065 = vpop.permute.xlu0 %4064
      %4066 = vrot.lane.b32.xlu0 %v3207, 17
      %v4067 = vpop.permute.xlu0 %4066
      %4068 = vrot.lane.b32.xlu0 %v3209, 17
      %v4069 = vpop.permute.xlu0 %4068
      %4070 = vrot.lane.b32.xlu0 %v3204, 17
      %v4071 = vpop.permute.xlu0 %4070
      %4072 = vrot.lane.b32.xlu0 %v3206, 17
      %v4073 = vpop.permute.xlu0 %4072
      %4074 = vrot.lane.b32.xlu0 %v3208, 17
      %v4075 = vpop.permute.xlu0 %4074
      %4076 = vrot.lane.b32.xlu0 %v3210, 17
      %v4077 = vpop.permute.xlu0 %4076
      %v4078 = vsel %vm831, %v4063, %v4071
      %v4079 = vsel %vm831, %v4065, %v4073
      %v4080 = vsel %vm831, %v4067, %v4075
      %v4081 = vsel %vm831, %v4069, %v4077
      %v4082 = vsel %vm831, %v4071, %v4063
      %v4083 = vsel %vm831, %v4073, %v4065
      %v4084 = vsel %vm831, %v4075, %v4067
      %v4085 = vsel %vm831, %v4077, %v4069
      %v4086 = vld [vmem:[%s840] ss:$8 sm:$0x3]
      %v4088 = vlaneseq
      %v4089 = vshrl.u32 %v4088, 7
      %v4090 = vsub.s32 0, %v4089
      %v4091 = vrot.slane %v4086, %v4090
      %v4092 = vlaneseq
      %v4093 = vshrl.u32 %v4092, 7
      %v4094 = vsub.s32 1, %v4093
      %v4095 = vrot.slane %v4086, %v4094
      %v4098 = vmul.f32 %v4082, %v4091
      %v4099 = vmul.f32 %v4078, %v4095
      %v4100 = vmul.f32 %v4083, %v4091
      %v4101 = vmul.f32 %v4079, %v4095
      %v4102 = vmul.f32 %v4084, %v4091
      %v4103 = vmul.f32 %v4080, %v4095
      %v4104 = vmul.f32 %v4085, %v4091
      %v4105 = vmul.f32 %v4081, %v4095
      %v4106 = vpack.c.bf16 %v4100, %v4098
      %v4107 = vpack.c.bf16 %v4101, %v4099
      %v4108 = vpack.c.bf16 %v4104, %v4102
      %v4109 = vpack.c.bf16 %v4105, %v4103
      %4110 = vst [vmem:[#allocation3 + $0x200] sm:$0xff] %v4106
      %4111 = vst [vmem:[#allocation3 + $0x208] sm:$0xff] %v4107
      %4112 = vst [vmem:[#allocation3 + $0x210] sm:$0xff] %v4108
      %4113 = vst [vmem:[#allocation3 + $0x218] sm:$0xff] %v4109
      %4114 = vrot.lane.b32.xlu0 %v3203, 16
      %v4115 = vpop.permute.xlu0 %4114
      %4116 = vrot.lane.b32.xlu0 %v3205, 16
      %v4117 = vpop.permute.xlu0 %4116
      %4118 = vrot.lane.b32.xlu0 %v3207, 16
      %v4119 = vpop.permute.xlu0 %4118
      %4120 = vrot.lane.b32.xlu0 %v3209, 16
      %v4121 = vpop.permute.xlu0 %4120
      %4122 = vrot.lane.b32.xlu0 %v3204, 16
      %v4123 = vpop.permute.xlu0 %4122
      %4124 = vrot.lane.b32.xlu0 %v3206, 16
      %v4125 = vpop.permute.xlu0 %4124
      %4126 = vrot.lane.b32.xlu0 %v3208, 16
      %v4127 = vpop.permute.xlu0 %4126
      %4128 = vrot.lane.b32.xlu0 %v3210, 16
      %v4129 = vpop.permute.xlu0 %4128
      %v4130 = vsel %vm885, %v4115, %v4123
      %v4131 = vsel %vm885, %v4117, %v4125
      %v4132 = vsel %vm885, %v4119, %v4127
      %v4133 = vsel %vm885, %v4121, %v4129
      %v4134 = vsel %vm885, %v4123, %v4115
      %v4135 = vsel %vm885, %v4125, %v4117
      %v4136 = vsel %vm885, %v4127, %v4119
      %v4137 = vsel %vm885, %v4129, %v4121
      %v4138 = vld [vmem:[%s894] ss:$8 sm:$0x3]
      %v4140 = vlaneseq
      %v4141 = vshrl.u32 %v4140, 7
      %v4142 = vsub.s32 0, %v4141
      %v4143 = vrot.slane %v4138, %v4142
      %v4144 = vlaneseq
      %v4145 = vshrl.u32 %v4144, 7
      %v4146 = vsub.s32 1, %v4145
      %v4147 = vrot.slane %v4138, %v4146
      %v4150 = vmul.f32 %v4134, %v4143
      %v4151 = vmul.f32 %v4130, %v4147
      %v4152 = vmul.f32 %v4135, %v4143
      %v4153 = vmul.f32 %v4131, %v4147
      %v4154 = vmul.f32 %v4136, %v4143
      %v4155 = vmul.f32 %v4132, %v4147
      %v4156 = vmul.f32 %v4137, %v4143
      %v4157 = vmul.f32 %v4133, %v4147
      %v4158 = vpack.c.bf16 %v4152, %v4150
      %v4159 = vpack.c.bf16 %v4153, %v4151
      %v4160 = vpack.c.bf16 %v4156, %v4154
      %v4161 = vpack.c.bf16 %v4157, %v4155
      %4162 = vst [vmem:[#allocation3 + $0x220] sm:$0xff] %v4158
      %4163 = vst [vmem:[#allocation3 + $0x228] sm:$0xff] %v4159
      %4164 = vst [vmem:[#allocation3 + $0x230] sm:$0xff] %v4160
      %4165 = vst [vmem:[#allocation3 + $0x238] sm:$0xff] %v4161
      %4166 = vrot.lane.b32.xlu0 %v3203, 15
      %v4167 = vpop.permute.xlu0 %4166
      %4168 = vrot.lane.b32.xlu0 %v3205, 15
      %v4169 = vpop.permute.xlu0 %4168
      %4170 = vrot.lane.b32.xlu0 %v3207, 15
      %v4171 = vpop.permute.xlu0 %4170
      %4172 = vrot.lane.b32.xlu0 %v3209, 15
      %v4173 = vpop.permute.xlu0 %4172
      %4174 = vrot.lane.b32.xlu0 %v3204, 15
      %v4175 = vpop.permute.xlu0 %4174
      %4176 = vrot.lane.b32.xlu0 %v3206, 15
      %v4177 = vpop.permute.xlu0 %4176
      %4178 = vrot.lane.b32.xlu0 %v3208, 15
      %v4179 = vpop.permute.xlu0 %4178
      %4180 = vrot.lane.b32.xlu0 %v3210, 15
      %v4181 = vpop.permute.xlu0 %4180
      %v4182 = vsel %vm939, %v4167, %v4175
      %v4183 = vsel %vm939, %v4169, %v4177
      %v4184 = vsel %vm939, %v4171, %v4179
      %v4185 = vsel %vm939, %v4173, %v4181
      %v4186 = vsel %vm939, %v4175, %v4167
      %v4187 = vsel %vm939, %v4177, %v4169
      %v4188 = vsel %vm939, %v4179, %v4171
      %v4189 = vsel %vm939, %v4181, %v4173
      %v4190 = vld [vmem:[%s948] ss:$8 sm:$0x3]
      %v4192 = vlaneseq
      %v4193 = vshrl.u32 %v4192, 7
      %v4194 = vsub.s32 0, %v4193
      %v4195 = vrot.slane %v4190, %v4194
      %v4196 = vlaneseq
      %v4197 = vshrl.u32 %v4196, 7
      %v4198 = vsub.s32 1, %v4197
      %v4199 = vrot.slane %v4190, %v4198
      %v4202 = vmul.f32 %v4186, %v4195
      %v4203 = vmul.f32 %v4182, %v4199
      %v4204 = vmul.f32 %v4187, %v4195
      %v4205 = vmul.f32 %v4183, %v4199
      %v4206 = vmul.f32 %v4188, %v4195
      %v4207 = vmul.f32 %v4184, %v4199
      %v4208 = vmul.f32 %v4189, %v4195
      %v4209 = vmul.f32 %v4185, %v4199
      %v4210 = vpack.c.bf16 %v4204, %v4202
      %v4211 = vpack.c.bf16 %v4205, %v4203
      %v4212 = vpack.c.bf16 %v4208, %v4206
      %v4213 = vpack.c.bf16 %v4209, %v4207
      %4214 = vst [vmem:[#allocation3 + $0x240] sm:$0xff] %v4210
      %4215 = vst [vmem:[#allocation3 + $0x248] sm:$0xff] %v4211
      %4216 = vst [vmem:[#allocation3 + $0x250] sm:$0xff] %v4212
      %4217 = vst [vmem:[#allocation3 + $0x258] sm:$0xff] %v4213
      %4218 = vrot.lane.b32.xlu0 %v3203, 14
      %v4219 = vpop.permute.xlu0 %4218
      %4220 = vrot.lane.b32.xlu0 %v3205, 14
      %v4221 = vpop.permute.xlu0 %4220
      %4222 = vrot.lane.b32.xlu0 %v3207, 14
      %v4223 = vpop.permute.xlu0 %4222
      %4224 = vrot.lane.b32.xlu0 %v3209, 14
      %v4225 = vpop.permute.xlu0 %4224
      %4226 = vrot.lane.b32.xlu0 %v3204, 14
      %v4227 = vpop.permute.xlu0 %4226
      %4228 = vrot.lane.b32.xlu0 %v3206, 14
      %v4229 = vpop.permute.xlu0 %4228
      %4230 = vrot.lane.b32.xlu0 %v3208, 14
      %v4231 = vpop.permute.xlu0 %4230
      %4232 = vrot.lane.b32.xlu0 %v3210, 14
      %v4233 = vpop.permute.xlu0 %4232
      %v4234 = vsel %vm1975, %v4219, %v4227
      %v4235 = vsel %vm1975, %v4221, %v4229
      %v4236 = vsel %vm1975, %v4223, %v4231
      %v4237 = vsel %vm1975, %v4225, %v4233
      %v4238 = vsel %vm1975, %v4227, %v4219
      %v4239 = vsel %vm1975, %v4229, %v4221
      %v4240 = vsel %vm1975, %v4231, %v4223
      %v4241 = vsel %vm1975, %v4233, %v4225
      %v4242 = vld [vmem:[%s1984] ss:$8 sm:$0x3]
      %v4244 = vlaneseq
      %v4245 = vshrl.u32 %v4244, 7
      %v4246 = vsub.s32 0, %v4245
      %v4247 = vrot.slane %v4242, %v4246
      %v4248 = vlaneseq
      %v4249 = vshrl.u32 %v4248, 7
      %v4250 = vsub.s32 1, %v4249
      %v4251 = vrot.slane %v4242, %v4250
      %v4254 = vmul.f32 %v4238, %v4247
      %v4255 = vmul.f32 %v4234, %v4251
      %v4256 = vmul.f32 %v4239, %v4247
      %v4257 = vmul.f32 %v4235, %v4251
      %v4258 = vmul.f32 %v4240, %v4247
      %v4259 = vmul.f32 %v4236, %v4251
      %v4260 = vmul.f32 %v4241, %v4247
      %v4261 = vmul.f32 %v4237, %v4251
      %v4262 = vpack.c.bf16 %v4256, %v4254
      %v4263 = vpack.c.bf16 %v4257, %v4255
      %v4264 = vpack.c.bf16 %v4260, %v4258
      %v4265 = vpack.c.bf16 %v4261, %v4259
      %4266 = vst [vmem:[#allocation3 + $0x260] sm:$0xff] %v4262
      %4267 = vst [vmem:[#allocation3 + $0x268] sm:$0xff] %v4263
      %4268 = vst [vmem:[#allocation3 + $0x270] sm:$0xff] %v4264
      %4269 = vst [vmem:[#allocation3 + $0x278] sm:$0xff] %v4265
      %4270 = vrot.lane.b32.xlu0 %v3203, 13
      %v4271 = vpop.permute.xlu0 %4270
      %4272 = vrot.lane.b32.xlu0 %v3205, 13
      %v4273 = vpop.permute.xlu0 %4272
      %4274 = vrot.lane.b32.xlu0 %v3207, 13
      %v4275 = vpop.permute.xlu0 %4274
      %4276 = vrot.lane.b32.xlu0 %v3209, 13
      %v4277 = vpop.permute.xlu0 %4276
      %4278 = vrot.lane.b32.xlu0 %v3204, 13
      %v4279 = vpop.permute.xlu0 %4278
      %4280 = vrot.lane.b32.xlu0 %v3206, 13
      %v4281 = vpop.permute.xlu0 %4280
      %4282 = vrot.lane.b32.xlu0 %v3208, 13
      %v4283 = vpop.permute.xlu0 %4282
      %4284 = vrot.lane.b32.xlu0 %v3210, 13
      %v4285 = vpop.permute.xlu0 %4284
      %vm4286 = vcmp.lt.s32.totalorder %v830, 13
      %v4287 = vsel %vm4286, %v4271, %v4279
      %v4288 = vsel %vm4286, %v4273, %v4281
      %v4289 = vsel %vm4286, %v4275, %v4283
      %v4290 = vsel %vm4286, %v4277, %v4285
      %v4291 = vsel %vm4286, %v4279, %v4271
      %v4292 = vsel %vm4286, %v4281, %v4273
      %v4293 = vsel %vm4286, %v4283, %v4275
      %v4294 = vsel %vm4286, %v4285, %v4277
      %s4295 = scalar_lea.vmem %s1, 36
      %v4296 = vld [vmem:[%s4295] ss:$8 sm:$0x3]
      %v4298 = vlaneseq
      %v4299 = vshrl.u32 %v4298, 7
      %v4300 = vsub.s32 0, %v4299
      %v4301 = vrot.slane %v4296, %v4300
      %v4302 = vlaneseq
      %v4303 = vshrl.u32 %v4302, 7
      %v4304 = vsub.s32 1, %v4303
      %v4305 = vrot.slane %v4296, %v4304
      %v4308 = vmul.f32 %v4291, %v4301
      %v4309 = vmul.f32 %v4287, %v4305
      %v4310 = vmul.f32 %v4292, %v4301
      %v4311 = vmul.f32 %v4288, %v4305
      %v4312 = vmul.f32 %v4293, %v4301
      %v4313 = vmul.f32 %v4289, %v4305
      %v4314 = vmul.f32 %v4294, %v4301
      %v4315 = vmul.f32 %v4290, %v4305
      %v4316 = vpack.c.bf16 %v4310, %v4308
      %v4317 = vpack.c.bf16 %v4311, %v4309
      %v4318 = vpack.c.bf16 %v4314, %v4312
      %v4319 = vpack.c.bf16 %v4315, %v4313
      %4320 = vst [vmem:[#allocation3 + $0x280] sm:$0xff] %v4316
      %4321 = vst [vmem:[#allocation3 + $0x288] sm:$0xff] %v4317
      %4322 = vst [vmem:[#allocation3 + $0x290] sm:$0xff] %v4318
      %4323 = vst [vmem:[#allocation3 + $0x298] sm:$0xff] %v4319
      %4324 = vrot.lane.b32.xlu0 %v3203, 3
      %v4325 = vpop.permute.xlu0 %4324
      %4326 = vrot.lane.b32.xlu0 %v3205, 3
      %v4327 = vpop.permute.xlu0 %4326
      %4328 = vrot.lane.b32.xlu0 %v3207, 3
      %v4329 = vpop.permute.xlu0 %4328
      %4330 = vrot.lane.b32.xlu0 %v3209, 3
      %v4331 = vpop.permute.xlu0 %4330
      %4332 = vrot.lane.b32.xlu0 %v3204, 3
      %v4333 = vpop.permute.xlu0 %4332
      %4334 = vrot.lane.b32.xlu0 %v3206, 3
      %v4335 = vpop.permute.xlu0 %4334
      %4336 = vrot.lane.b32.xlu0 %v3208, 3
      %v4337 = vpop.permute.xlu0 %4336
      %4338 = vrot.lane.b32.xlu0 %v3210, 3
      %v4339 = vpop.permute.xlu0 %4338
      %vm4340 = vcmp.lt.s32.totalorder %v830, 3
      %v4341 = vsel %vm4340, %v4325, %v4333
      %v4342 = vsel %vm4340, %v4327, %v4335
      %v4343 = vsel %vm4340, %v4329, %v4337
      %v4344 = vsel %vm4340, %v4331, %v4339
      %v4345 = vsel %vm4340, %v4333, %v4325
      %v4346 = vsel %vm4340, %v4335, %v4327
      %v4347 = vsel %vm4340, %v4337, %v4329
      %v4348 = vsel %vm4340, %v4339, %v4331
      %s4349 = scalar_lea.vmem %s1, 37
      %v4350 = vld [vmem:[%s4349] ss:$8 sm:$0x3]
      %v4352 = vlaneseq
      %v4353 = vshrl.u32 %v4352, 7
      %v4354 = vsub.s32 0, %v4353
      %v4355 = vrot.slane %v4350, %v4354
      %v4356 = vlaneseq
      %v4357 = vshrl.u32 %v4356, 7
      %v4358 = vsub.s32 1, %v4357
      %v4359 = vrot.slane %v4350, %v4358
      %v4362 = vmul.f32 %v4345, %v4355
      %v4363 = vmul.f32 %v4341, %v4359
      %v4364 = vmul.f32 %v4346, %v4355
      %v4365 = vmul.f32 %v4342, %v4359
      %v4366 = vmul.f32 %v4347, %v4355
      %v4367 = vmul.f32 %v4343, %v4359
      %v4368 = vmul.f32 %v4348, %v4355
      %v4369 = vmul.f32 %v4344, %v4359
      %v4370 = vpack.c.bf16 %v4364, %v4362
      %v4371 = vpack.c.bf16 %v4365, %v4363
      %v4372 = vpack.c.bf16 %v4368, %v4366
      %v4373 = vpack.c.bf16 %v4369, %v4367
      %4374 = vst [vmem:[#allocation3 + $0x2a0] sm:$0xff] %v4370
      %4375 = vst [vmem:[#allocation3 + $0x2a8] sm:$0xff] %v4371
      %4376 = vst [vmem:[#allocation3 + $0x2b0] sm:$0xff] %v4372
      %4377 = vst [vmem:[#allocation3 + $0x2b8] sm:$0xff] %v4373
      %4378 = vrot.lane.b32.xlu0 %v3203, 2
      %v4379 = vpop.permute.xlu0 %4378
      %4380 = vrot.lane.b32.xlu0 %v3205, 2
      %v4381 = vpop.permute.xlu0 %4380
      %4382 = vrot.lane.b32.xlu0 %v3207, 2
      %v4383 = vpop.permute.xlu0 %4382
      %4384 = vrot.lane.b32.xlu0 %v3209, 2
      %v4385 = vpop.permute.xlu0 %4384
      %4386 = vrot.lane.b32.xlu0 %v3204, 2
      %v4387 = vpop.permute.xlu0 %4386
      %4388 = vrot.lane.b32.xlu0 %v3206, 2
      %v4389 = vpop.permute.xlu0 %4388
      %4390 = vrot.lane.b32.xlu0 %v3208, 2
      %v4391 = vpop.permute.xlu0 %4390
      %4392 = vrot.lane.b32.xlu0 %v3210, 2
      %v4393 = vpop.permute.xlu0 %4392
      %v4394 = vsel %vm2029, %v4379, %v4387
      %v4395 = vsel %vm2029, %v4381, %v4389
      %v4396 = vsel %vm2029, %v4383, %v4391
      %v4397 = vsel %vm2029, %v4385, %v4393
      %v4398 = vsel %vm2029, %v4387, %v4379
      %v4399 = vsel %vm2029, %v4389, %v4381
      %v4400 = vsel %vm2029, %v4391, %v4383
      %v4401 = vsel %vm2029, %v4393, %v4385
      %v4402 = vld [vmem:[%s2038] ss:$8 sm:$0x3]
      %v4404 = vlaneseq
      %v4405 = vshrl.u32 %v4404, 7
      %v4406 = vsub.s32 0, %v4405
      %v4407 = vrot.slane %v4402, %v4406
      %v4408 = vlaneseq
      %v4409 = vshrl.u32 %v4408, 7
      %v4410 = vsub.s32 1, %v4409
      %v4411 = vrot.slane %v4402, %v4410
      %v4414 = vmul.f32 %v4398, %v4407
      %v4415 = vmul.f32 %v4394, %v4411
      %v4416 = vmul.f32 %v4399, %v4407
      %v4417 = vmul.f32 %v4395, %v4411
      %v4418 = vmul.f32 %v4400, %v4407
      %v4419 = vmul.f32 %v4396, %v4411
      %v4420 = vmul.f32 %v4401, %v4407
      %v4421 = vmul.f32 %v4397, %v4411
      %v4422 = vpack.c.bf16 %v4416, %v4414
      %v4423 = vpack.c.bf16 %v4417, %v4415
      %v4424 = vpack.c.bf16 %v4420, %v4418
      %v4425 = vpack.c.bf16 %v4421, %v4419
      %4426 = vst [vmem:[#allocation3 + $0x2c0] sm:$0xff] %v4422
      %4427 = vst [vmem:[#allocation3 + $0x2c8] sm:$0xff] %v4423
      %4428 = vst [vmem:[#allocation3 + $0x2d0] sm:$0xff] %v4424
      %4429 = vst [vmem:[#allocation3 + $0x2d8] sm:$0xff] %v4425
      %4430 = vrot.lane.b32.xlu0 %v3203, 1
      %v4431 = vpop.permute.xlu0 %4430
      %4432 = vrot.lane.b32.xlu0 %v3205, 1
      %v4433 = vpop.permute.xlu0 %4432
      %4434 = vrot.lane.b32.xlu0 %v3207, 1
      %v4435 = vpop.permute.xlu0 %4434
      %4436 = vrot.lane.b32.xlu0 %v3209, 1
      %v4437 = vpop.permute.xlu0 %4436
      %4438 = vrot.lane.b32.xlu0 %v3204, 1
      %v4439 = vpop.permute.xlu0 %4438
      %4440 = vrot.lane.b32.xlu0 %v3206, 1
      %v4441 = vpop.permute.xlu0 %4440
      %4442 = vrot.lane.b32.xlu0 %v3208, 1
      %v4443 = vpop.permute.xlu0 %4442
      %4444 = vrot.lane.b32.xlu0 %v3210, 1
      %v4445 = vpop.permute.xlu0 %4444
      %v4446 = vsel %vm993, %v4431, %v4439
      %v4447 = vsel %vm993, %v4433, %v4441
      %v4448 = vsel %vm993, %v4435, %v4443
      %v4449 = vsel %vm993, %v4437, %v4445
      %v4450 = vsel %vm993, %v4439, %v4431
      %v4451 = vsel %vm993, %v4441, %v4433
      %v4452 = vsel %vm993, %v4443, %v4435
      %v4453 = vsel %vm993, %v4445, %v4437
      %v4454 = vld [vmem:[%s1002] ss:$8 sm:$0x3]
      %v4456 = vlaneseq
      %v4457 = vshrl.u32 %v4456, 7
      %v4458 = vsub.s32 0, %v4457
      %v4459 = vrot.slane %v4454, %v4458
      %v4460 = vlaneseq
      %v4461 = vshrl.u32 %v4460, 7
      %v4462 = vsub.s32 1, %v4461
      %v4463 = vrot.slane %v4454, %v4462
      %v4466 = vmul.f32 %v4450, %v4459
      %v4467 = vmul.f32 %v4446, %v4463
      %v4468 = vmul.f32 %v4451, %v4459
      %v4469 = vmul.f32 %v4447, %v4463
      %v4470 = vmul.f32 %v4452, %v4459
      %v4471 = vmul.f32 %v4448, %v4463
      %v4472 = vmul.f32 %v4453, %v4459
      %v4473 = vmul.f32 %v4449, %v4463
      %v4474 = vpack.c.bf16 %v4468, %v4466
      %v4475 = vpack.c.bf16 %v4469, %v4467
      %v4476 = vpack.c.bf16 %v4472, %v4470
      %v4477 = vpack.c.bf16 %v4473, %v4471
      %4478 = vst [vmem:[#allocation3 + $0x2e0] sm:$0xff] %v4474
      %4479 = vst [vmem:[#allocation3 + $0x2e8] sm:$0xff] %v4475
      %4480 = vst [vmem:[#allocation3 + $0x2f0] sm:$0xff] %v4476
      %4481 = vst [vmem:[#allocation3 + $0x2f8] sm:$0xff] %v4477
      %v4482 = vpack.c.bf16 %v3205, %v3203
      %v4483 = vpack.c.bf16 %v3206, %v3204
      %v4484 = vpack.c.bf16 %v3209, %v3207
      %v4485 = vpack.c.bf16 %v3210, %v3208
      %4486 = vst [vmem:[#allocation3 + $0x300] sm:$0xff] %v4482
      %4487 = vst [vmem:[#allocation3 + $0x308] sm:$0xff] %v4483
      %4488 = vst [vmem:[#allocation3 + $0x310] sm:$0xff] %v4484
      %4489 = vst [vmem:[#allocation3 + $0x318] sm:$0xff] %v4485
      %4490 = vrot.lane.b32.xlu0 %v3203, 127
      %v4491 = vpop.permute.xlu0 %4490
      %4492 = vrot.lane.b32.xlu0 %v3205, 127
      %v4493 = vpop.permute.xlu0 %4492
      %4494 = vrot.lane.b32.xlu0 %v3207, 127
      %v4495 = vpop.permute.xlu0 %4494
      %4496 = vrot.lane.b32.xlu0 %v3209, 127
      %v4497 = vpop.permute.xlu0 %4496
      %4498 = vrot.lane.b32.xlu0 %v3204, 127
      %v4499 = vpop.permute.xlu0 %4498
      %4500 = vrot.lane.b32.xlu0 %v3206, 127
      %v4501 = vpop.permute.xlu0 %4500
      %4502 = vrot.lane.b32.xlu0 %v3208, 127
      %v4503 = vpop.permute.xlu0 %4502
      %4504 = vrot.lane.b32.xlu0 %v3210, 127
      %v4505 = vpop.permute.xlu0 %4504
      %v4506 = vsel %vm1055, %v4491, %v4499
      %v4507 = vsel %vm1055, %v4493, %v4501
      %v4508 = vsel %vm1055, %v4495, %v4503
      %v4509 = vsel %vm1055, %v4497, %v4505
      %v4510 = vsel %vm1055, %v4499, %v4491
      %v4511 = vsel %vm1055, %v4501, %v4493
      %v4512 = vsel %vm1055, %v4503, %v4495
      %v4513 = vsel %vm1055, %v4505, %v4497
      %v4514 = vld [vmem:[%s1064] ss:$8 sm:$0x3]
      %v4516 = vlaneseq
      %v4517 = vshrl.u32 %v4516, 7
      %v4518 = vsub.s32 0, %v4517
      %v4519 = vrot.slane %v4514, %v4518
      %v4520 = vlaneseq
      %v4521 = vshrl.u32 %v4520, 7
      %v4522 = vsub.s32 1, %v4521
      %v4523 = vrot.slane %v4514, %v4522
      %v4526 = vmul.f32 %v4506, %v4519
      %v4527 = vmul.f32 %v4510, %v4523
      %v4528 = vmul.f32 %v4507, %v4519
      %v4529 = vmul.f32 %v4511, %v4523
      %v4530 = vmul.f32 %v4508, %v4519
      %v4531 = vmul.f32 %v4512, %v4523
      %v4532 = vmul.f32 %v4509, %v4519
      %v4533 = vmul.f32 %v4513, %v4523
      %v4534 = vpack.c.bf16 %v4528, %v4526
      %v4535 = vpack.c.bf16 %v4529, %v4527
      %v4536 = vpack.c.bf16 %v4532, %v4530
      %v4537 = vpack.c.bf16 %v4533, %v4531
      %4538 = vst [vmem:[#allocation3 + $0x320] sm:$0xff] %v4534
      %4539 = vst [vmem:[#allocation3 + $0x328] sm:$0xff] %v4535
      %4540 = vst [vmem:[#allocation3 + $0x330] sm:$0xff] %v4536
      %4541 = vst [vmem:[#allocation3 + $0x338] sm:$0xff] %v4537
      %4542 = vrot.lane.b32.xlu0 %v3203, 126
      %v4543 = vpop.permute.xlu0 %4542
      %4544 = vrot.lane.b32.xlu0 %v3205, 126
      %v4545 = vpop.permute.xlu0 %4544
      %4546 = vrot.lane.b32.xlu0 %v3207, 126
      %v4547 = vpop.permute.xlu0 %4546
      %4548 = vrot.lane.b32.xlu0 %v3209, 126
      %v4549 = vpop.permute.xlu0 %4548
      %4550 = vrot.lane.b32.xlu0 %v3204, 126
      %v4551 = vpop.permute.xlu0 %4550
      %4552 = vrot.lane.b32.xlu0 %v3206, 126
      %v4553 = vpop.permute.xlu0 %4552
      %4554 = vrot.lane.b32.xlu0 %v3208, 126
      %v4555 = vpop.permute.xlu0 %4554
      %4556 = vrot.lane.b32.xlu0 %v3210, 126
      %v4557 = vpop.permute.xlu0 %4556
      %v4558 = vsel %vm2195, %v4543, %v4551
      %v4559 = vsel %vm2195, %v4545, %v4553
      %v4560 = vsel %vm2195, %v4547, %v4555
      %v4561 = vsel %vm2195, %v4549, %v4557
      %v4562 = vsel %vm2195, %v4551, %v4543
      %v4563 = vsel %vm2195, %v4553, %v4545
      %v4564 = vsel %vm2195, %v4555, %v4547
      %v4565 = vsel %vm2195, %v4557, %v4549
      %v4566 = vld [vmem:[%s2204] ss:$8 sm:$0x3]
      %v4568 = vlaneseq
      %v4569 = vshrl.u32 %v4568, 7
      %v4570 = vsub.s32 0, %v4569
      %v4571 = vrot.slane %v4566, %v4570
      %v4572 = vlaneseq
      %v4573 = vshrl.u32 %v4572, 7
      %v4574 = vsub.s32 1, %v4573
      %v4575 = vrot.slane %v4566, %v4574
      %v4578 = vmul.f32 %v4558, %v4571
      %v4579 = vmul.f32 %v4562, %v4575
      %v4580 = vmul.f32 %v4559, %v4571
      %v4581 = vmul.f32 %v4563, %v4575
      %v4582 = vmul.f32 %v4560, %v4571
      %v4583 = vmul.f32 %v4564, %v4575
      %v4584 = vmul.f32 %v4561, %v4571
      %v4585 = vmul.f32 %v4565, %v4575
      %v4586 = vpack.c.bf16 %v4580, %v4578
      %v4587 = vpack.c.bf16 %v4581, %v4579
      %v4588 = vpack.c.bf16 %v4584, %v4582
      %v4589 = vpack.c.bf16 %v4585, %v4583
      %4590 = vst [vmem:[#allocation3 + $0x340] sm:$0xff] %v4586
      %4591 = vst [vmem:[#allocation3 + $0x348] sm:$0xff] %v4587
      %4592 = vst [vmem:[#allocation3 + $0x350] sm:$0xff] %v4588
      %4593 = vst [vmem:[#allocation3 + $0x358] sm:$0xff] %v4589
      %4594 = vrot.lane.b32.xlu0 %v3203, 125
      %v4595 = vpop.permute.xlu0 %4594
      %4596 = vrot.lane.b32.xlu0 %v3205, 125
      %v4597 = vpop.permute.xlu0 %4596
      %4598 = vrot.lane.b32.xlu0 %v3207, 125
      %v4599 = vpop.permute.xlu0 %4598
      %4600 = vrot.lane.b32.xlu0 %v3209, 125
      %v4601 = vpop.permute.xlu0 %4600
      %4602 = vrot.lane.b32.xlu0 %v3204, 125
      %v4603 = vpop.permute.xlu0 %4602
      %4604 = vrot.lane.b32.xlu0 %v3206, 125
      %v4605 = vpop.permute.xlu0 %4604
      %4606 = vrot.lane.b32.xlu0 %v3208, 125
      %v4607 = vpop.permute.xlu0 %4606
      %4608 = vrot.lane.b32.xlu0 %v3210, 125
      %v4609 = vpop.permute.xlu0 %4608
      %vm4610 = vcmp.lt.s32.totalorder %v830, 125
      %v4611 = vsel %vm4610, %v4595, %v4603
      %v4612 = vsel %vm4610, %v4597, %v4605
      %v4613 = vsel %vm4610, %v4599, %v4607
      %v4614 = vsel %vm4610, %v4601, %v4609
      %v4615 = vsel %vm4610, %v4603, %v4595
      %v4616 = vsel %vm4610, %v4605, %v4597
      %v4617 = vsel %vm4610, %v4607, %v4599
      %v4618 = vsel %vm4610, %v4609, %v4601
      %s4619 = scalar_lea.vmem %s1, 51
      %v4620 = vld [vmem:[%s4619] ss:$8 sm:$0x3]
      %v4622 = vlaneseq
      %v4623 = vshrl.u32 %v4622, 7
      %v4624 = vsub.s32 0, %v4623
      %v4625 = vrot.slane %v4620, %v4624
      %v4626 = vlaneseq
      %v4627 = vshrl.u32 %v4626, 7
      %v4628 = vsub.s32 1, %v4627
      %v4629 = vrot.slane %v4620, %v4628
      %v4632 = vmul.f32 %v4611, %v4625
      %v4633 = vmul.f32 %v4615, %v4629
      %v4634 = vmul.f32 %v4612, %v4625
      %v4635 = vmul.f32 %v4616, %v4629
      %v4636 = vmul.f32 %v4613, %v4625
      %v4637 = vmul.f32 %v4617, %v4629
      %v4638 = vmul.f32 %v4614, %v4625
      %v4639 = vmul.f32 %v4618, %v4629
      %v4640 = vpack.c.bf16 %v4634, %v4632
      %v4641 = vpack.c.bf16 %v4635, %v4633
      %v4642 = vpack.c.bf16 %v4638, %v4636
      %v4643 = vpack.c.bf16 %v4639, %v4637
      %4644 = vst [vmem:[#allocation3 + $0x360] sm:$0xff] %v4640
      %4645 = vst [vmem:[#allocation3 + $0x368] sm:$0xff] %v4641
      %4646 = vst [vmem:[#allocation3 + $0x370] sm:$0xff] %v4642
      %4647 = vst [vmem:[#allocation3 + $0x378] sm:$0xff] %v4643
      %4648 = vrot.lane.b32.xlu0 %v3203, 115
      %v4649 = vpop.permute.xlu0 %4648
      %4650 = vrot.lane.b32.xlu0 %v3205, 115
      %v4651 = vpop.permute.xlu0 %4650
      %4652 = vrot.lane.b32.xlu0 %v3207, 115
      %v4653 = vpop.permute.xlu0 %4652
      %4654 = vrot.lane.b32.xlu0 %v3209, 115
      %v4655 = vpop.permute.xlu0 %4654
      %4656 = vrot.lane.b32.xlu0 %v3204, 115
      %v4657 = vpop.permute.xlu0 %4656
      %4658 = vrot.lane.b32.xlu0 %v3206, 115
      %v4659 = vpop.permute.xlu0 %4658
      %4660 = vrot.lane.b32.xlu0 %v3208, 115
      %v4661 = vpop.permute.xlu0 %4660
      %4662 = vrot.lane.b32.xlu0 %v3210, 115
      %v4663 = vpop.permute.xlu0 %4662
      %vm4664 = vcmp.lt.s32.totalorder %v830, 115
      %v4665 = vsel %vm4664, %v4649, %v4657
      %v4666 = vsel %vm4664, %v4651, %v4659
      %v4667 = vsel %vm4664, %v4653, %v4661
      %v4668 = vsel %vm4664, %v4655, %v4663
      %v4669 = vsel %vm4664, %v4657, %v4649
      %v4670 = vsel %vm4664, %v4659, %v4651
      %v4671 = vsel %vm4664, %v4661, %v4653
      %v4672 = vsel %vm4664, %v4663, %v4655
      %s4673 = scalar_lea.vmem %s1, 52
      %v4674 = vld [vmem:[%s4673] ss:$8 sm:$0x3]
      %v4676 = vlaneseq
      %v4677 = vshrl.u32 %v4676, 7
      %v4678 = vsub.s32 0, %v4677
      %v4679 = vrot.slane %v4674, %v4678
      %v4680 = vlaneseq
      %v4681 = vshrl.u32 %v4680, 7
      %v4682 = vsub.s32 1, %v4681
      %v4683 = vrot.slane %v4674, %v4682
      %v4686 = vmul.f32 %v4665, %v4679
      %v4687 = vmul.f32 %v4669, %v4683
      %v4688 = vmul.f32 %v4666, %v4679
      %v4689 = vmul.f32 %v4670, %v4683
      %v4690 = vmul.f32 %v4667, %v4679
      %v4691 = vmul.f32 %v4671, %v4683
      %v4692 = vmul.f32 %v4668, %v4679
      %v4693 = vmul.f32 %v4672, %v4683
      %v4694 = vpack.c.bf16 %v4688, %v4686
      %v4695 = vpack.c.bf16 %v4689, %v4687
      %v4696 = vpack.c.bf16 %v4692, %v4690
      %v4697 = vpack.c.bf16 %v4693, %v4691
      %4698 = vst [vmem:[#allocation3 + $0x380] sm:$0xff] %v4694
      %4699 = vst [vmem:[#allocation3 + $0x388] sm:$0xff] %v4695
      %4700 = vst [vmem:[#allocation3 + $0x390] sm:$0xff] %v4696
      %4701 = vst [vmem:[#allocation3 + $0x398] sm:$0xff] %v4697
      %4702 = vrot.lane.b32.xlu0 %v3203, 114
      %v4703 = vpop.permute.xlu0 %4702
      %4704 = vrot.lane.b32.xlu0 %v3205, 114
      %v4705 = vpop.permute.xlu0 %4704
      %4706 = vrot.lane.b32.xlu0 %v3207, 114
      %v4707 = vpop.permute.xlu0 %4706
      %4708 = vrot.lane.b32.xlu0 %v3209, 114
      %v4709 = vpop.permute.xlu0 %4708
      %4710 = vrot.lane.b32.xlu0 %v3204, 114
      %v4711 = vpop.permute.xlu0 %4710
      %4712 = vrot.lane.b32.xlu0 %v3206, 114
      %v4713 = vpop.permute.xlu0 %4712
      %4714 = vrot.lane.b32.xlu0 %v3208, 114
      %v4715 = vpop.permute.xlu0 %4714
      %4716 = vrot.lane.b32.xlu0 %v3210, 114
      %v4717 = vpop.permute.xlu0 %4716
      %v4718 = vsel %vm2249, %v4703, %v4711
      %v4719 = vsel %vm2249, %v4705, %v4713
      %v4720 = vsel %vm2249, %v4707, %v4715
      %v4721 = vsel %vm2249, %v4709, %v4717
      %v4722 = vsel %vm2249, %v4711, %v4703
      %v4723 = vsel %vm2249, %v4713, %v4705
      %v4724 = vsel %vm2249, %v4715, %v4707
      %v4725 = vsel %vm2249, %v4717, %v4709
      %v4726 = vld [vmem:[%s2258] ss:$8 sm:$0x3]
      %v4728 = vlaneseq
      %v4729 = vshrl.u32 %v4728, 7
      %v4730 = vsub.s32 0, %v4729
      %v4731 = vrot.slane %v4726, %v4730
      %v4732 = vlaneseq
      %v4733 = vshrl.u32 %v4732, 7
      %v4734 = vsub.s32 1, %v4733
      %v4735 = vrot.slane %v4726, %v4734
      %v4738 = vmul.f32 %v4718, %v4731
      %v4739 = vmul.f32 %v4722, %v4735
      %v4740 = vmul.f32 %v4719, %v4731
      %v4741 = vmul.f32 %v4723, %v4735
      %v4742 = vmul.f32 %v4720, %v4731
      %v4743 = vmul.f32 %v4724, %v4735
      %v4744 = vmul.f32 %v4721, %v4731
      %v4745 = vmul.f32 %v4725, %v4735
      %v4746 = vpack.c.bf16 %v4740, %v4738
      %v4747 = vpack.c.bf16 %v4741, %v4739
      %v4748 = vpack.c.bf16 %v4744, %v4742
      %v4749 = vpack.c.bf16 %v4745, %v4743
      %4750 = vst [vmem:[#allocation3 + $0x3a0] sm:$0xff] %v4746
      %4751 = vst [vmem:[#allocation3 + $0x3a8] sm:$0xff] %v4747
      %4752 = vst [vmem:[#allocation3 + $0x3b0] sm:$0xff] %v4748
      %4753 = vst [vmem:[#allocation3 + $0x3b8] sm:$0xff] %v4749
      %4754 = vrot.lane.b32.xlu0 %v3203, 113
      %v4755 = vpop.permute.xlu0 %4754
      %4756 = vrot.lane.b32.xlu0 %v3205, 113
      %v4757 = vpop.permute.xlu0 %4756
      %4758 = vrot.lane.b32.xlu0 %v3207, 113
      %v4759 = vpop.permute.xlu0 %4758
      %4760 = vrot.lane.b32.xlu0 %v3209, 113
      %v4761 = vpop.permute.xlu0 %4760
      %4762 = vrot.lane.b32.xlu0 %v3204, 113
      %v4763 = vpop.permute.xlu0 %4762
      %4764 = vrot.lane.b32.xlu0 %v3206, 113
      %v4765 = vpop.permute.xlu0 %4764
      %4766 = vrot.lane.b32.xlu0 %v3208, 113
      %v4767 = vpop.permute.xlu0 %4766
      %4768 = vrot.lane.b32.xlu0 %v3210, 113
      %v4769 = vpop.permute.xlu0 %4768
      %v4770 = vsel %vm1109, %v4755, %v4763
      %v4771 = vsel %vm1109, %v4757, %v4765
      %v4772 = vsel %vm1109, %v4759, %v4767
      %v4773 = vsel %vm1109, %v4761, %v4769
      %v4774 = vsel %vm1109, %v4763, %v4755
      %v4775 = vsel %vm1109, %v4765, %v4757
      %v4776 = vsel %vm1109, %v4767, %v4759
      %v4777 = vsel %vm1109, %v4769, %v4761
      %v4778 = vld [vmem:[%s1118] ss:$8 sm:$0x3]
      %v4780 = vlaneseq
      %v4781 = vshrl.u32 %v4780, 7
      %v4782 = vsub.s32 0, %v4781
      %v4783 = vrot.slane %v4778, %v4782
      %v4784 = vlaneseq
      %v4785 = vshrl.u32 %v4784, 7
      %v4786 = vsub.s32 1, %v4785
      %v4787 = vrot.slane %v4778, %v4786
      %v4790 = vmul.f32 %v4770, %v4783
      %v4791 = vmul.f32 %v4774, %v4787
      %v4792 = vmul.f32 %v4771, %v4783
      %v4793 = vmul.f32 %v4775, %v4787
      %v4794 = vmul.f32 %v4772, %v4783
      %v4795 = vmul.f32 %v4776, %v4787
      %v4796 = vmul.f32 %v4773, %v4783
      %v4797 = vmul.f32 %v4777, %v4787
      %v4798 = vpack.c.bf16 %v4792, %v4790
      %v4799 = vpack.c.bf16 %v4793, %v4791
      %v4800 = vpack.c.bf16 %v4796, %v4794
      %v4801 = vpack.c.bf16 %v4797, %v4795
      %4802 = vst [vmem:[#allocation3 + $0x3c0] sm:$0xff] %v4798
      %4803 = vst [vmem:[#allocation3 + $0x3c8] sm:$0xff] %v4799
      %4804 = vst [vmem:[#allocation3 + $0x3d0] sm:$0xff] %v4800
      %4805 = vst [vmem:[#allocation3 + $0x3d8] sm:$0xff] %v4801
      %4806 = vrot.lane.b32.xlu0 %v3203, 112
      %v4807 = vpop.permute.xlu0 %4806
      %4808 = vrot.lane.b32.xlu0 %v3205, 112
      %v4809 = vpop.permute.xlu0 %4808
      %4810 = vrot.lane.b32.xlu0 %v3207, 112
      %v4811 = vpop.permute.xlu0 %4810
      %4812 = vrot.lane.b32.xlu0 %v3209, 112
      %v4813 = vpop.permute.xlu0 %4812
      %4814 = vrot.lane.b32.xlu0 %v3204, 112
      %v4815 = vpop.permute.xlu0 %4814
      %4816 = vrot.lane.b32.xlu0 %v3206, 112
      %v4817 = vpop.permute.xlu0 %4816
      %4818 = vrot.lane.b32.xlu0 %v3208, 112
      %v4819 = vpop.permute.xlu0 %4818
      %4820 = vrot.lane.b32.xlu0 %v3210, 112
      %v4821 = vpop.permute.xlu0 %4820
      %v4822 = vsel %vm1163, %v4807, %v4815
      %v4823 = vsel %vm1163, %v4809, %v4817
      %v4824 = vsel %vm1163, %v4811, %v4819
      %v4825 = vsel %vm1163, %v4813, %v4821
      %v4826 = vsel %vm1163, %v4815, %v4807
      %v4827 = vsel %vm1163, %v4817, %v4809
      %v4828 = vsel %vm1163, %v4819, %v4811
      %v4829 = vsel %vm1163, %v4821, %v4813
      %v4830 = vld [vmem:[%s1172] ss:$8 sm:$0x3]
      %v4832 = vlaneseq
      %v4833 = vshrl.u32 %v4832, 7
      %v4834 = vsub.s32 0, %v4833
      %v4835 = vrot.slane %v4830, %v4834
      %v4836 = vlaneseq
      %v4837 = vshrl.u32 %v4836, 7
      %v4838 = vsub.s32 1, %v4837
      %v4839 = vrot.slane %v4830, %v4838
      %v4842 = vmul.f32 %v4822, %v4835
      %v4843 = vmul.f32 %v4826, %v4839
      %v4844 = vmul.f32 %v4823, %v4835
      %v4845 = vmul.f32 %v4827, %v4839
      %v4846 = vmul.f32 %v4824, %v4835
      %v4847 = vmul.f32 %v4828, %v4839
      %v4848 = vmul.f32 %v4825, %v4835
      %v4849 = vmul.f32 %v4829, %v4839
      %v4850 = vpack.c.bf16 %v4844, %v4842
      %v4851 = vpack.c.bf16 %v4845, %v4843
      %v4852 = vpack.c.bf16 %v4848, %v4846
      %v4853 = vpack.c.bf16 %v4849, %v4847
      %4854 = vst [vmem:[#allocation3 + $0x3e0] sm:$0xff] %v4850
      %4855 = vst [vmem:[#allocation3 + $0x3e8] sm:$0xff] %v4851
      %4856 = vst [vmem:[#allocation3 + $0x3f0] sm:$0xff] %v4852
      %4857 = vst [vmem:[#allocation3 + $0x3f8] sm:$0xff] %v4853
      %4858 = vrot.lane.b32.xlu0 %v3203, 111
      %v4859 = vpop.permute.xlu0 %4858
      %4860 = vrot.lane.b32.xlu0 %v3205, 111
      %v4861 = vpop.permute.xlu0 %4860
      %4862 = vrot.lane.b32.xlu0 %v3207, 111
      %v4863 = vpop.permute.xlu0 %4862
      %4864 = vrot.lane.b32.xlu0 %v3209, 111
      %v4865 = vpop.permute.xlu0 %4864
      %4866 = vrot.lane.b32.xlu0 %v3204, 111
      %v4867 = vpop.permute.xlu0 %4866
      %4868 = vrot.lane.b32.xlu0 %v3206, 111
      %v4869 = vpop.permute.xlu0 %4868
      %4870 = vrot.lane.b32.xlu0 %v3208, 111
      %v4871 = vpop.permute.xlu0 %4870
      %4872 = vrot.lane.b32.xlu0 %v3210, 111
      %v4873 = vpop.permute.xlu0 %4872
      %v4874 = vsel %vm1217, %v4859, %v4867
      %v4875 = vsel %vm1217, %v4861, %v4869
      %v4876 = vsel %vm1217, %v4863, %v4871
      %v4877 = vsel %vm1217, %v4865, %v4873
      %v4878 = vsel %vm1217, %v4867, %v4859
      %v4879 = vsel %vm1217, %v4869, %v4861
      %v4880 = vsel %vm1217, %v4871, %v4863
      %v4881 = vsel %vm1217, %v4873, %v4865
      %v4882 = vld [vmem:[%s1226] ss:$8 sm:$0x3]
      %v4884 = vlaneseq
      %v4885 = vshrl.u32 %v4884, 7
      %v4886 = vsub.s32 0, %v4885
      %v4887 = vrot.slane %v4882, %v4886
      %v4888 = vlaneseq
      %v4889 = vshrl.u32 %v4888, 7
      %v4890 = vsub.s32 1, %v4889
      %v4891 = vrot.slane %v4882, %v4890
      %v4894 = vmul.f32 %v4874, %v4887
      %v4895 = vmul.f32 %v4878, %v4891
      %v4896 = vmul.f32 %v4875, %v4887
      %v4897 = vmul.f32 %v4879, %v4891
      %v4898 = vmul.f32 %v4876, %v4887
      %v4899 = vmul.f32 %v4880, %v4891
      %v4900 = vmul.f32 %v4877, %v4887
      %v4901 = vmul.f32 %v4881, %v4891
      %v4902 = vpack.c.bf16 %v4896, %v4894
      %v4903 = vpack.c.bf16 %v4897, %v4895
      %v4904 = vpack.c.bf16 %v4900, %v4898
      %v4905 = vpack.c.bf16 %v4901, %v4899
      %4906 = vst [vmem:[#allocation3 + $0x400] sm:$0xff] %v4902
      %4907 = vst [vmem:[#allocation3 + $0x408] sm:$0xff] %v4903
      %4908 = vst [vmem:[#allocation3 + $0x410] sm:$0xff] %v4904
      %4909 = vst [vmem:[#allocation3 + $0x418] sm:$0xff] %v4905
      %4910 = vrot.lane.b32.xlu0 %v3203, 110
      %v4911 = vpop.permute.xlu0 %4910
      %4912 = vrot.lane.b32.xlu0 %v3205, 110
      %v4913 = vpop.permute.xlu0 %4912
      %4914 = vrot.lane.b32.xlu0 %v3207, 110
      %v4915 = vpop.permute.xlu0 %4914
      %4916 = vrot.lane.b32.xlu0 %v3209, 110
      %v4917 = vpop.permute.xlu0 %4916
      %4918 = vrot.lane.b32.xlu0 %v3204, 110
      %v4919 = vpop.permute.xlu0 %4918
      %4920 = vrot.lane.b32.xlu0 %v3206, 110
      %v4921 = vpop.permute.xlu0 %4920
      %4922 = vrot.lane.b32.xlu0 %v3208, 110
      %v4923 = vpop.permute.xlu0 %4922
      %4924 = vrot.lane.b32.xlu0 %v3210, 110
      %v4925 = vpop.permute.xlu0 %4924
      %v4926 = vsel %vm2459, %v4911, %v4919
      %v4927 = vsel %vm2459, %v4913, %v4921
      %v4928 = vsel %vm2459, %v4915, %v4923
      %v4929 = vsel %vm2459, %v4917, %v4925
      %v4930 = vsel %vm2459, %v4919, %v4911
      %v4931 = vsel %vm2459, %v4921, %v4913
      %v4932 = vsel %vm2459, %v4923, %v4915
      %v4933 = vsel %vm2459, %v4925, %v4917
      %v4934 = vld [vmem:[%s2468] ss:$8 sm:$0x3]
      %v4936 = vlaneseq
      %v4937 = vshrl.u32 %v4936, 7
      %v4938 = vsub.s32 0, %v4937
      %v4939 = vrot.slane %v4934, %v4938
      %v4940 = vlaneseq
      %v4941 = vshrl.u32 %v4940, 7
      %v4942 = vsub.s32 1, %v4941
      %v4943 = vrot.slane %v4934, %v4942
      %v4946 = vmul.f32 %v4926, %v4939
      %v4947 = vmul.f32 %v4930, %v4943
      %v4948 = vmul.f32 %v4927, %v4939
      %v4949 = vmul.f32 %v4931, %v4943
      %v4950 = vmul.f32 %v4928, %v4939
      %v4951 = vmul.f32 %v4932, %v4943
      %v4952 = vmul.f32 %v4929, %v4939
      %v4953 = vmul.f32 %v4933, %v4943
      %v4954 = vpack.c.bf16 %v4948, %v4946
      %v4955 = vpack.c.bf16 %v4949, %v4947
      %v4956 = vpack.c.bf16 %v4952, %v4950
      %v4957 = vpack.c.bf16 %v4953, %v4951
      %4958 = vst [vmem:[#allocation3 + $0x420] sm:$0xff] %v4954
      %4959 = vst [vmem:[#allocation3 + $0x428] sm:$0xff] %v4955
      %4960 = vst [vmem:[#allocation3 + $0x430] sm:$0xff] %v4956
      %4961 = vst [vmem:[#allocation3 + $0x438] sm:$0xff] %v4957
      %4962 = vrot.lane.b32.xlu0 %v3203, 109
      %v4963 = vpop.permute.xlu0 %4962
      %4964 = vrot.lane.b32.xlu0 %v3205, 109
      %v4965 = vpop.permute.xlu0 %4964
      %4966 = vrot.lane.b32.xlu0 %v3207, 109
      %v4967 = vpop.permute.xlu0 %4966
      %4968 = vrot.lane.b32.xlu0 %v3209, 109
      %v4969 = vpop.permute.xlu0 %4968
      %4970 = vrot.lane.b32.xlu0 %v3204, 109
      %v4971 = vpop.permute.xlu0 %4970
      %4972 = vrot.lane.b32.xlu0 %v3206, 109
      %v4973 = vpop.permute.xlu0 %4972
      %4974 = vrot.lane.b32.xlu0 %v3208, 109
      %v4975 = vpop.permute.xlu0 %4974
      %4976 = vrot.lane.b32.xlu0 %v3210, 109
      %v4977 = vpop.permute.xlu0 %4976
      %vm4978 = vcmp.lt.s32.totalorder %v830, 109
      %v4979 = vsel %vm4978, %v4963, %v4971
      %v4980 = vsel %vm4978, %v4965, %v4973
      %v4981 = vsel %vm4978, %v4967, %v4975
      %v4982 = vsel %vm4978, %v4969, %v4977
      %v4983 = vsel %vm4978, %v4971, %v4963
      %v4984 = vsel %vm4978, %v4973, %v4965
      %v4985 = vsel %vm4978, %v4975, %v4967
      %v4986 = vsel %vm4978, %v4977, %v4969
      %s4987 = scalar_lea.vmem %s1, 66
      %v4988 = vld [vmem:[%s4987] ss:$8 sm:$0x3]
      %v4990 = vlaneseq
      %v4991 = vshrl.u32 %v4990, 7
      %v4992 = vsub.s32 0, %v4991
      %v4993 = vrot.slane %v4988, %v4992
      %v4994 = vlaneseq
      %v4995 = vshrl.u32 %v4994, 7
      %v4996 = vsub.s32 1, %v4995
      %v4997 = vrot.slane %v4988, %v4996
      %v5000 = vmul.f32 %v4979, %v4993
      %v5001 = vmul.f32 %v4983, %v4997
      %v5002 = vmul.f32 %v4980, %v4993
      %v5003 = vmul.f32 %v4984, %v4997
      %v5004 = vmul.f32 %v4981, %v4993
      %v5005 = vmul.f32 %v4985, %v4997
      %v5006 = vmul.f32 %v4982, %v4993
      %v5007 = vmul.f32 %v4986, %v4997
      %v5008 = vpack.c.bf16 %v5002, %v5000
      %v5009 = vpack.c.bf16 %v5003, %v5001
      %v5010 = vpack.c.bf16 %v5006, %v5004
      %v5011 = vpack.c.bf16 %v5007, %v5005
      %5012 = vst [vmem:[#allocation3 + $0x440] sm:$0xff] %v5008
      %5013 = vst [vmem:[#allocation3 + $0x448] sm:$0xff] %v5009
      %5014 = vst [vmem:[#allocation3 + $0x450] sm:$0xff] %v5010
      %5015 = vst [vmem:[#allocation3 + $0x458] sm:$0xff] %v5011
      %5016 = vrot.lane.b32.xlu0 %v3203, 99
      %v5017 = vpop.permute.xlu0 %5016
      %5018 = vrot.lane.b32.xlu0 %v3205, 99
      %v5019 = vpop.permute.xlu0 %5018
      %5020 = vrot.lane.b32.xlu0 %v3207, 99
      %v5021 = vpop.permute.xlu0 %5020
      %5022 = vrot.lane.b32.xlu0 %v3209, 99
      %v5023 = vpop.permute.xlu0 %5022
      %5024 = vrot.lane.b32.xlu0 %v3204, 99
      %v5025 = vpop.permute.xlu0 %5024
      %5026 = vrot.lane.b32.xlu0 %v3206, 99
      %v5027 = vpop.permute.xlu0 %5026
      %5028 = vrot.lane.b32.xlu0 %v3208, 99
      %v5029 = vpop.permute.xlu0 %5028
      %5030 = vrot.lane.b32.xlu0 %v3210, 99
      %v5031 = vpop.permute.xlu0 %5030
      %vm5032 = vcmp.lt.s32.totalorder %v830, 99
      %v5033 = vsel %vm5032, %v5017, %v5025
      %v5034 = vsel %vm5032, %v5019, %v5027
      %v5035 = vsel %vm5032, %v5021, %v5029
      %v5036 = vsel %vm5032, %v5023, %v5031
      %v5037 = vsel %vm5032, %v5025, %v5017
      %v5038 = vsel %vm5032, %v5027, %v5019
      %v5039 = vsel %vm5032, %v5029, %v5021
      %v5040 = vsel %vm5032, %v5031, %v5023
      %s5041 = scalar_lea.vmem %s1, 67
      %v5042 = vld [vmem:[%s5041] ss:$8 sm:$0x3]
      %v5044 = vlaneseq
      %v5045 = vshrl.u32 %v5044, 7
      %v5046 = vsub.s32 0, %v5045
      %v5047 = vrot.slane %v5042, %v5046
      %v5048 = vlaneseq
      %v5049 = vshrl.u32 %v5048, 7
      %v5050 = vsub.s32 1, %v5049
      %v5051 = vrot.slane %v5042, %v5050
      %v5054 = vmul.f32 %v5033, %v5047
      %v5055 = vmul.f32 %v5037, %v5051
      %v5056 = vmul.f32 %v5034, %v5047
      %v5057 = vmul.f32 %v5038, %v5051
      %v5058 = vmul.f32 %v5035, %v5047
      %v5059 = vmul.f32 %v5039, %v5051
      %v5060 = vmul.f32 %v5036, %v5047
      %v5061 = vmul.f32 %v5040, %v5051
      %v5062 = vpack.c.bf16 %v5056, %v5054
      %v5063 = vpack.c.bf16 %v5057, %v5055
      %v5064 = vpack.c.bf16 %v5060, %v5058
      %v5065 = vpack.c.bf16 %v5061, %v5059
      %5066 = vst [vmem:[#allocation3 + $0x460] sm:$0xff] %v5062
      %5067 = vst [vmem:[#allocation3 + $0x468] sm:$0xff] %v5063
      %5068 = vst [vmem:[#allocation3 + $0x470] sm:$0xff] %v5064
      %5069 = vst [vmem:[#allocation3 + $0x478] sm:$0xff] %v5065
      %5070 = vrot.lane.b32.xlu0 %v3203, 98
      %v5071 = vpop.permute.xlu0 %5070
      %5072 = vrot.lane.b32.xlu0 %v3205, 98
      %v5073 = vpop.permute.xlu0 %5072
      %5074 = vrot.lane.b32.xlu0 %v3207, 98
      %v5075 = vpop.permute.xlu0 %5074
      %5076 = vrot.lane.b32.xlu0 %v3209, 98
      %v5077 = vpop.permute.xlu0 %5076
      %5078 = vrot.lane.b32.xlu0 %v3204, 98
      %v5079 = vpop.permute.xlu0 %5078
      %5080 = vrot.lane.b32.xlu0 %v3206, 98
      %v5081 = vpop.permute.xlu0 %5080
      %5082 = vrot.lane.b32.xlu0 %v3208, 98
      %v5083 = vpop.permute.xlu0 %5082
      %5084 = vrot.lane.b32.xlu0 %v3210, 98
      %v5085 = vpop.permute.xlu0 %5084
      %v5086 = vsel %vm2513, %v5071, %v5079
      %v5087 = vsel %vm2513, %v5073, %v5081
      %v5088 = vsel %vm2513, %v5075, %v5083
      %v5089 = vsel %vm2513, %v5077, %v5085
      %v5090 = vsel %vm2513, %v5079, %v5071
      %v5091 = vsel %vm2513, %v5081, %v5073
      %v5092 = vsel %vm2513, %v5083, %v5075
      %v5093 = vsel %vm2513, %v5085, %v5077
      %v5094 = vld [vmem:[%s2522] ss:$8 sm:$0x3]
      %v5096 = vlaneseq
      %v5097 = vshrl.u32 %v5096, 7
      %v5098 = vsub.s32 0, %v5097
      %v5099 = vrot.slane %v5094, %v5098
      %v5100 = vlaneseq
      %v5101 = vshrl.u32 %v5100, 7
      %v5102 = vsub.s32 1, %v5101
      %v5103 = vrot.slane %v5094, %v5102
      %v5106 = vmul.f32 %v5086, %v5099
      %v5107 = vmul.f32 %v5090, %v5103
      %v5108 = vmul.f32 %v5087, %v5099
      %v5109 = vmul.f32 %v5091, %v5103
      %v5110 = vmul.f32 %v5088, %v5099
      %v5111 = vmul.f32 %v5092, %v5103
      %v5112 = vmul.f32 %v5089, %v5099
      %v5113 = vmul.f32 %v5093, %v5103
      %v5114 = vpack.c.bf16 %v5108, %v5106
      %v5115 = vpack.c.bf16 %v5109, %v5107
      %v5116 = vpack.c.bf16 %v5112, %v5110
      %v5117 = vpack.c.bf16 %v5113, %v5111
      %5118 = vst [vmem:[#allocation3 + $0x480] sm:$0xff] %v5114
      %5119 = vst [vmem:[#allocation3 + $0x488] sm:$0xff] %v5115
      %5120 = vst [vmem:[#allocation3 + $0x490] sm:$0xff] %v5116
      %5121 = vst [vmem:[#allocation3 + $0x498] sm:$0xff] %v5117
      %5122 = vrot.lane.b32.xlu0 %v3203, 97
      %v5123 = vpop.permute.xlu0 %5122
      %5124 = vrot.lane.b32.xlu0 %v3205, 97
      %v5125 = vpop.permute.xlu0 %5124
      %5126 = vrot.lane.b32.xlu0 %v3207, 97
      %v5127 = vpop.permute.xlu0 %5126
      %5128 = vrot.lane.b32.xlu0 %v3209, 97
      %v5129 = vpop.permute.xlu0 %5128
      %5130 = vrot.lane.b32.xlu0 %v3204, 97
      %v5131 = vpop.permute.xlu0 %5130
      %5132 = vrot.lane.b32.xlu0 %v3206, 97
      %v5133 = vpop.permute.xlu0 %5132
      %5134 = vrot.lane.b32.xlu0 %v3208, 97
      %v5135 = vpop.permute.xlu0 %5134
      %5136 = vrot.lane.b32.xlu0 %v3210, 97
      %v5137 = vpop.permute.xlu0 %5136
      %v5138 = vsel %vm2567, %v5123, %v5131
      %v5139 = vsel %vm2567, %v5125, %v5133
      %v5140 = vsel %vm2567, %v5127, %v5135
      %v5141 = vsel %vm2567, %v5129, %v5137
      %v5142 = vsel %vm2567, %v5131, %v5123
      %v5143 = vsel %vm2567, %v5133, %v5125
      %v5144 = vsel %vm2567, %v5135, %v5127
      %v5145 = vsel %vm2567, %v5137, %v5129
      %v5146 = vld [vmem:[%s2576] ss:$8 sm:$0x3]
      %v5148 = vlaneseq
      %v5149 = vshrl.u32 %v5148, 7
      %v5150 = vsub.s32 0, %v5149
      %v5151 = vrot.slane %v5146, %v5150
      %v5152 = vlaneseq
      %v5153 = vshrl.u32 %v5152, 7
      %v5154 = vsub.s32 1, %v5153
      %v5155 = vrot.slane %v5146, %v5154
      %v5158 = vmul.f32 %v5138, %v5151
      %v5159 = vmul.f32 %v5142, %v5155
      %v5160 = vmul.f32 %v5139, %v5151
      %v5161 = vmul.f32 %v5143, %v5155
      %v5162 = vmul.f32 %v5140, %v5151
      %v5163 = vmul.f32 %v5144, %v5155
      %v5164 = vmul.f32 %v5141, %v5151
      %v5165 = vmul.f32 %v5145, %v5155
      %v5166 = vpack.c.bf16 %v5160, %v5158
      %v5167 = vpack.c.bf16 %v5161, %v5159
      %v5168 = vpack.c.bf16 %v5164, %v5162
      %v5169 = vpack.c.bf16 %v5165, %v5163
      %5170 = vst [vmem:[#allocation3 + $0x4a0] sm:$0xff] %v5166
      %5171 = vst [vmem:[#allocation3 + $0x4a8] sm:$0xff] %v5167
      %5172 = vst [vmem:[#allocation3 + $0x4b0] sm:$0xff] %v5168
      %5173 = vst [vmem:[#allocation3 + $0x4b8] sm:$0xff] %v5169
      %5174 = vrot.lane.b32.xlu0 %v3203, 96
      %v5175 = vpop.permute.xlu0 %5174
      %5176 = vrot.lane.b32.xlu0 %v3205, 96
      %v5177 = vpop.permute.xlu0 %5176
      %5178 = vrot.lane.b32.xlu0 %v3207, 96
      %v5179 = vpop.permute.xlu0 %5178
      %5180 = vrot.lane.b32.xlu0 %v3209, 96
      %v5181 = vpop.permute.xlu0 %5180
      %5182 = vrot.lane.b32.xlu0 %v3204, 96
      %v5183 = vpop.permute.xlu0 %5182
      %5184 = vrot.lane.b32.xlu0 %v3206, 96
      %v5185 = vpop.permute.xlu0 %5184
      %5186 = vrot.lane.b32.xlu0 %v3208, 96
      %v5187 = vpop.permute.xlu0 %5186
      %5188 = vrot.lane.b32.xlu0 %v3210, 96
      %v5189 = vpop.permute.xlu0 %5188
      %v5190 = vsel %vm2621, %v5175, %v5183
      %v5191 = vsel %vm2621, %v5177, %v5185
      %v5192 = vsel %vm2621, %v5179, %v5187
      %v5193 = vsel %vm2621, %v5181, %v5189
      %v5194 = vsel %vm2621, %v5183, %v5175
      %v5195 = vsel %vm2621, %v5185, %v5177
      %v5196 = vsel %vm2621, %v5187, %v5179
      %v5197 = vsel %vm2621, %v5189, %v5181
      %v5198 = vld [vmem:[%s2630] ss:$8 sm:$0x3]
      %v5200 = vlaneseq
      %v5201 = vshrl.u32 %v5200, 7
      %v5202 = vsub.s32 0, %v5201
      %v5203 = vrot.slane %v5198, %v5202
      %v5204 = vlaneseq
      %v5205 = vshrl.u32 %v5204, 7
      %v5206 = vsub.s32 1, %v5205
      %v5207 = vrot.slane %v5198, %v5206
      %v5210 = vmul.f32 %v5190, %v5203
      %v5211 = vmul.f32 %v5194, %v5207
      %v5212 = vmul.f32 %v5191, %v5203
      %v5213 = vmul.f32 %v5195, %v5207
      %v5214 = vmul.f32 %v5192, %v5203
      %v5215 = vmul.f32 %v5196, %v5207
      %v5216 = vmul.f32 %v5193, %v5203
      %v5217 = vmul.f32 %v5197, %v5207
      %v5218 = vpack.c.bf16 %v5212, %v5210
      %v5219 = vpack.c.bf16 %v5213, %v5211
      %v5220 = vpack.c.bf16 %v5216, %v5214
      %v5221 = vpack.c.bf16 %v5217, %v5215
      %5222 = vst [vmem:[#allocation3 + $0x4c0] sm:$0xff] %v5218
      %5223 = vst [vmem:[#allocation3 + $0x4c8] sm:$0xff] %v5219
      %5224 = vst [vmem:[#allocation3 + $0x4d0] sm:$0xff] %v5220
      %5225 = vst [vmem:[#allocation3 + $0x4d8] sm:$0xff] %v5221
      %5226 = vrot.lane.b32.xlu0 %v3203, 95
      %v5227 = vpop.permute.xlu0 %5226
      %5228 = vrot.lane.b32.xlu0 %v3205, 95
      %v5229 = vpop.permute.xlu0 %5228
      %5230 = vrot.lane.b32.xlu0 %v3207, 95
      %v5231 = vpop.permute.xlu0 %5230
      %5232 = vrot.lane.b32.xlu0 %v3209, 95
      %v5233 = vpop.permute.xlu0 %5232
      %5234 = vrot.lane.b32.xlu0 %v3204, 95
      %v5235 = vpop.permute.xlu0 %5234
      %5236 = vrot.lane.b32.xlu0 %v3206, 95
      %v5237 = vpop.permute.xlu0 %5236
      %5238 = vrot.lane.b32.xlu0 %v3208, 95
      %v5239 = vpop.permute.xlu0 %5238
      %5240 = vrot.lane.b32.xlu0 %v3210, 95
      %v5241 = vpop.permute.xlu0 %5240
      %v5242 = vsel %vm2675, %v5227, %v5235
      %v5243 = vsel %vm2675, %v5229, %v5237
      %v5244 = vsel %vm2675, %v5231, %v5239
      %v5245 = vsel %vm2675, %v5233, %v5241
      %v5246 = vsel %vm2675, %v5235, %v5227
      %v5247 = vsel %vm2675, %v5237, %v5229
      %v5248 = vsel %vm2675, %v5239, %v5231
      %v5249 = vsel %vm2675, %v5241, %v5233
      %v5250 = vld [vmem:[%s2684] ss:$8 sm:$0x3]
      %v5252 = vlaneseq
      %v5253 = vshrl.u32 %v5252, 7
      %v5254 = vsub.s32 0, %v5253
      %v5255 = vrot.slane %v5250, %v5254
      %v5256 = vlaneseq
      %v5257 = vshrl.u32 %v5256, 7
      %v5258 = vsub.s32 1, %v5257
      %v5259 = vrot.slane %v5250, %v5258
      %v5262 = vmul.f32 %v5242, %v5255
      %v5263 = vmul.f32 %v5246, %v5259
      %v5264 = vmul.f32 %v5243, %v5255
      %v5265 = vmul.f32 %v5247, %v5259
      %v5266 = vmul.f32 %v5244, %v5255
      %v5267 = vmul.f32 %v5248, %v5259
      %v5268 = vmul.f32 %v5245, %v5255
      %v5269 = vmul.f32 %v5249, %v5259
      %v5270 = vpack.c.bf16 %v5264, %v5262
      %v5271 = vpack.c.bf16 %v5265, %v5263
      %v5272 = vpack.c.bf16 %v5268, %v5266
      %v5273 = vpack.c.bf16 %v5269, %v5267
      %5274 = vst [vmem:[#allocation3 + $0x4e0] sm:$0xff] %v5270
      %5275 = vst [vmem:[#allocation3 + $0x4e8] sm:$0xff] %v5271
      %5276 = vst [vmem:[#allocation3 + $0x4f0] sm:$0xff] %v5272
      %5277 = vst [vmem:[#allocation3 + $0x4f8] sm:$0xff] %v5273
      %5278 = vrot.lane.b32.xlu0 %v3203, 94
      %v5279 = vpop.permute.xlu0 %5278
      %5280 = vrot.lane.b32.xlu0 %v3205, 94
      %v5281 = vpop.permute.xlu0 %5280
      %5282 = vrot.lane.b32.xlu0 %v3207, 94
      %v5283 = vpop.permute.xlu0 %5282
      %5284 = vrot.lane.b32.xlu0 %v3209, 94
      %v5285 = vpop.permute.xlu0 %5284
      %5286 = vrot.lane.b32.xlu0 %v3204, 94
      %v5287 = vpop.permute.xlu0 %5286
      %5288 = vrot.lane.b32.xlu0 %v3206, 94
      %v5289 = vpop.permute.xlu0 %5288
      %5290 = vrot.lane.b32.xlu0 %v3208, 94
      %v5291 = vpop.permute.xlu0 %5290
      %5292 = vrot.lane.b32.xlu0 %v3210, 94
      %v5293 = vpop.permute.xlu0 %5292
      %v5294 = vsel %vm2729, %v5279, %v5287
      %v5295 = vsel %vm2729, %v5281, %v5289
      %v5296 = vsel %vm2729, %v5283, %v5291
      %v5297 = vsel %vm2729, %v5285, %v5293
      %v5298 = vsel %vm2729, %v5287, %v5279
      %v5299 = vsel %vm2729, %v5289, %v5281
      %v5300 = vsel %vm2729, %v5291, %v5283
      %v5301 = vsel %vm2729, %v5293, %v5285
      %v5302 = vld [vmem:[%s2738] ss:$8 sm:$0x3]
      %v5304 = vlaneseq
      %v5305 = vshrl.u32 %v5304, 7
      %v5306 = vsub.s32 0, %v5305
      %v5307 = vrot.slane %v5302, %v5306
      %v5308 = vlaneseq
      %v5309 = vshrl.u32 %v5308, 7
      %v5310 = vsub.s32 1, %v5309
      %v5311 = vrot.slane %v5302, %v5310
      %v5314 = vmul.f32 %v5294, %v5307
      %v5315 = vmul.f32 %v5298, %v5311
      %v5316 = vmul.f32 %v5295, %v5307
      %v5317 = vmul.f32 %v5299, %v5311
      %v5318 = vmul.f32 %v5296, %v5307
      %v5319 = vmul.f32 %v5300, %v5311
      %v5320 = vmul.f32 %v5297, %v5307
      %v5321 = vmul.f32 %v5301, %v5311
      %v5322 = vpack.c.bf16 %v5316, %v5314
      %v5323 = vpack.c.bf16 %v5317, %v5315
      %v5324 = vpack.c.bf16 %v5320, %v5318
      %v5325 = vpack.c.bf16 %v5321, %v5319
      %5326 = vst [vmem:[#allocation3 + $0x500] sm:$0xff] %v5322
      %5327 = vst [vmem:[#allocation3 + $0x508] sm:$0xff] %v5323
      %5328 = vst [vmem:[#allocation3 + $0x510] sm:$0xff] %v5324
      %5329 = vst [vmem:[#allocation3 + $0x518] sm:$0xff] %v5325
      %5330 = vrot.lane.b32.xlu0 %v3203, 93
      %v5331 = vpop.permute.xlu0 %5330
      %5332 = vrot.lane.b32.xlu0 %v3205, 93
      %v5333 = vpop.permute.xlu0 %5332
      %5334 = vrot.lane.b32.xlu0 %v3207, 93
      %v5335 = vpop.permute.xlu0 %5334
      %5336 = vrot.lane.b32.xlu0 %v3209, 93
      %v5337 = vpop.permute.xlu0 %5336
      %5338 = vrot.lane.b32.xlu0 %v3204, 93
      %v5339 = vpop.permute.xlu0 %5338
      %5340 = vrot.lane.b32.xlu0 %v3206, 93
      %v5341 = vpop.permute.xlu0 %5340
      %5342 = vrot.lane.b32.xlu0 %v3208, 93
      %v5343 = vpop.permute.xlu0 %5342
      %5344 = vrot.lane.b32.xlu0 %v3210, 93
      %v5345 = vpop.permute.xlu0 %5344
      %vm5346 = vcmp.lt.s32.totalorder %v830, 93
      %v5347 = vsel %vm5346, %v5331, %v5339
      %v5348 = vsel %vm5346, %v5333, %v5341
      %v5349 = vsel %vm5346, %v5335, %v5343
      %v5350 = vsel %vm5346, %v5337, %v5345
      %v5351 = vsel %vm5346, %v5339, %v5331
      %v5352 = vsel %vm5346, %v5341, %v5333
      %v5353 = vsel %vm5346, %v5343, %v5335
      %v5354 = vsel %vm5346, %v5345, %v5337
      %s5355 = scalar_lea.vmem %s1, 81
      %v5356 = vld [vmem:[%s5355] ss:$8 sm:$0x3]
      %v5358 = vlaneseq
      %v5359 = vshrl.u32 %v5358, 7
      %v5360 = vsub.s32 0, %v5359
      %v5361 = vrot.slane %v5356, %v5360
      %v5362 = vlaneseq
      %v5363 = vshrl.u32 %v5362, 7
      %v5364 = vsub.s32 1, %v5363
      %v5365 = vrot.slane %v5356, %v5364
      %v5368 = vmul.f32 %v5347, %v5361
      %v5369 = vmul.f32 %v5351, %v5365
      %v5370 = vmul.f32 %v5348, %v5361
      %v5371 = vmul.f32 %v5352, %v5365
      %v5372 = vmul.f32 %v5349, %v5361
      %v5373 = vmul.f32 %v5353, %v5365
      %v5374 = vmul.f32 %v5350, %v5361
      %v5375 = vmul.f32 %v5354, %v5365
      %v5376 = vpack.c.bf16 %v5370, %v5368
      %v5377 = vpack.c.bf16 %v5371, %v5369
      %v5378 = vpack.c.bf16 %v5374, %v5372
      %v5379 = vpack.c.bf16 %v5375, %v5373
      %5380 = vst [vmem:[#allocation3 + $0x520] sm:$0xff] %v5376
      %5381 = vst [vmem:[#allocation3 + $0x528] sm:$0xff] %v5377
      %5382 = vst [vmem:[#allocation3 + $0x530] sm:$0xff] %v5378
      %5383 = vst [vmem:[#allocation3 + $0x538] sm:$0xff] %v5379
      %5384 = vrot.lane.b32.xlu0 %v3203, 83
      %v5385 = vpop.permute.xlu0 %5384
      %5386 = vrot.lane.b32.xlu0 %v3205, 83
      %v5387 = vpop.permute.xlu0 %5386
      %5388 = vrot.lane.b32.xlu0 %v3207, 83
      %v5389 = vpop.permute.xlu0 %5388
      %5390 = vrot.lane.b32.xlu0 %v3209, 83
      %v5391 = vpop.permute.xlu0 %5390
      %5392 = vrot.lane.b32.xlu0 %v3204, 83
      %v5393 = vpop.permute.xlu0 %5392
      %5394 = vrot.lane.b32.xlu0 %v3206, 83
      %v5395 = vpop.permute.xlu0 %5394
      %5396 = vrot.lane.b32.xlu0 %v3208, 83
      %v5397 = vpop.permute.xlu0 %5396
      %5398 = vrot.lane.b32.xlu0 %v3210, 83
      %v5399 = vpop.permute.xlu0 %5398
      %vm5400 = vcmp.lt.s32.totalorder %v830, 83
      %v5401 = vsel %vm5400, %v5385, %v5393
      %v5402 = vsel %vm5400, %v5387, %v5395
      %v5403 = vsel %vm5400, %v5389, %v5397
      %v5404 = vsel %vm5400, %v5391, %v5399
      %v5405 = vsel %vm5400, %v5393, %v5385
      %v5406 = vsel %vm5400, %v5395, %v5387
      %v5407 = vsel %vm5400, %v5397, %v5389
      %v5408 = vsel %vm5400, %v5399, %v5391
      %s5409 = scalar_lea.vmem %s1, 82
      %v5410 = vld [vmem:[%s5409] ss:$8 sm:$0x3]
      %v5412 = vlaneseq
      %v5413 = vshrl.u32 %v5412, 7
      %v5414 = vsub.s32 0, %v5413
      %v5415 = vrot.slane %v5410, %v5414
      %v5416 = vlaneseq
      %v5417 = vshrl.u32 %v5416, 7
      %v5418 = vsub.s32 1, %v5417
      %v5419 = vrot.slane %v5410, %v5418
      %v5422 = vmul.f32 %v5401, %v5415
      %v5423 = vmul.f32 %v5405, %v5419
      %v5424 = vmul.f32 %v5402, %v5415
      %v5425 = vmul.f32 %v5406, %v5419
      %v5426 = vmul.f32 %v5403, %v5415
      %v5427 = vmul.f32 %v5407, %v5419
      %v5428 = vmul.f32 %v5404, %v5415
      %v5429 = vmul.f32 %v5408, %v5419
      %v5430 = vpack.c.bf16 %v5424, %v5422
      %v5431 = vpack.c.bf16 %v5425, %v5423
      %v5432 = vpack.c.bf16 %v5428, %v5426
      %v5433 = vpack.c.bf16 %v5429, %v5427
      %5434 = vst [vmem:[#allocation3 + $0x540] sm:$0xff] %v5430
      %5435 = vst [vmem:[#allocation3 + $0x548] sm:$0xff] %v5431
      %5436 = vst [vmem:[#allocation3 + $0x550] sm:$0xff] %v5432
      %5437 = vst [vmem:[#allocation3 + $0x558] sm:$0xff] %v5433
      %5438 = vrot.lane.b32.xlu0 %v3203, 82
      %v5439 = vpop.permute.xlu0 %5438
      %5440 = vrot.lane.b32.xlu0 %v3205, 82
      %v5441 = vpop.permute.xlu0 %5440
      %5442 = vrot.lane.b32.xlu0 %v3207, 82
      %v5443 = vpop.permute.xlu0 %5442
      %5444 = vrot.lane.b32.xlu0 %v3209, 82
      %v5445 = vpop.permute.xlu0 %5444
      %5446 = vrot.lane.b32.xlu0 %v3204, 82
      %v5447 = vpop.permute.xlu0 %5446
      %5448 = vrot.lane.b32.xlu0 %v3206, 82
      %v5449 = vpop.permute.xlu0 %5448
      %5450 = vrot.lane.b32.xlu0 %v3208, 82
      %v5451 = vpop.permute.xlu0 %5450
      %5452 = vrot.lane.b32.xlu0 %v3210, 82
      %v5453 = vpop.permute.xlu0 %5452
      %vm5454 = vcmp.lt.s32.totalorder %v830, 82
      %v5455 = vsel %vm5454, %v5439, %v5447
      %v5456 = vsel %vm5454, %v5441, %v5449
      %v5457 = vsel %vm5454, %v5443, %v5451
      %v5458 = vsel %vm5454, %v5445, %v5453
      %v5459 = vsel %vm5454, %v5447, %v5439
      %v5460 = vsel %vm5454, %v5449, %v5441
      %v5461 = vsel %vm5454, %v5451, %v5443
      %v5462 = vsel %vm5454, %v5453, %v5445
      %s5463 = scalar_lea.vmem %s1, 83
      %v5464 = vld [vmem:[%s5463] ss:$8 sm:$0x3]
      %v5466 = vlaneseq
      %v5467 = vshrl.u32 %v5466, 7
      %v5468 = vsub.s32 0, %v5467
      %v5469 = vrot.slane %v5464, %v5468
      %v5470 = vlaneseq
      %v5471 = vshrl.u32 %v5470, 7
      %v5472 = vsub.s32 1, %v5471
      %v5473 = vrot.slane %v5464, %v5472
      %v5476 = vmul.f32 %v5455, %v5469
      %v5477 = vmul.f32 %v5459, %v5473
      %v5478 = vmul.f32 %v5456, %v5469
      %v5479 = vmul.f32 %v5460, %v5473
      %v5480 = vmul.f32 %v5457, %v5469
      %v5481 = vmul.f32 %v5461, %v5473
      %v5482 = vmul.f32 %v5458, %v5469
      %v5483 = vmul.f32 %v5462, %v5473
      %v5484 = vpack.c.bf16 %v5478, %v5476
      %v5485 = vpack.c.bf16 %v5479, %v5477
      %v5486 = vpack.c.bf16 %v5482, %v5480
      %v5487 = vpack.c.bf16 %v5483, %v5481
      %5488 = vst [vmem:[#allocation3 + $0x560] sm:$0xff] %v5484
      %5489 = vst [vmem:[#allocation3 + $0x568] sm:$0xff] %v5485
      %5490 = vst [vmem:[#allocation3 + $0x570] sm:$0xff] %v5486
      %5491 = vst [vmem:[#allocation3 + $0x578] sm:$0xff] %v5487
      %5492 = vrot.lane.b32.xlu0 %v3203, 81
      %v5493 = vpop.permute.xlu0 %5492
      %5494 = vrot.lane.b32.xlu0 %v3205, 81
      %v5495 = vpop.permute.xlu0 %5494
      %5496 = vrot.lane.b32.xlu0 %v3207, 81
      %v5497 = vpop.permute.xlu0 %5496
      %5498 = vrot.lane.b32.xlu0 %v3209, 81
      %v5499 = vpop.permute.xlu0 %5498
      %5500 = vrot.lane.b32.xlu0 %v3204, 81
      %v5501 = vpop.permute.xlu0 %5500
      %5502 = vrot.lane.b32.xlu0 %v3206, 81
      %v5503 = vpop.permute.xlu0 %5502
      %5504 = vrot.lane.b32.xlu0 %v3208, 81
      %v5505 = vpop.permute.xlu0 %5504
      %5506 = vrot.lane.b32.xlu0 %v3210, 81
      %v5507 = vpop.permute.xlu0 %5506
      %vm5508 = vcmp.lt.s32.totalorder %v830, 81
      %v5509 = vsel %vm5508, %v5493, %v5501
      %v5510 = vsel %vm5508, %v5495, %v5503
      %v5511 = vsel %vm5508, %v5497, %v5505
      %v5512 = vsel %vm5508, %v5499, %v5507
      %v5513 = vsel %vm5508, %v5501, %v5493
      %v5514 = vsel %vm5508, %v5503, %v5495
      %v5515 = vsel %vm5508, %v5505, %v5497
      %v5516 = vsel %vm5508, %v5507, %v5499
      %s5517 = scalar_lea.vmem %s1, 84
      %v5518 = vld [vmem:[%s5517] ss:$8 sm:$0x3]
      %v5520 = vlaneseq
      %v5521 = vshrl.u32 %v5520, 7
      %v5522 = vsub.s32 0, %v5521
      %v5523 = vrot.slane %v5518, %v5522
      %v5524 = vlaneseq
      %v5525 = vshrl.u32 %v5524, 7
      %v5526 = vsub.s32 1, %v5525
      %v5527 = vrot.slane %v5518, %v5526
      %v5530 = vmul.f32 %v5509, %v5523
      %v5531 = vmul.f32 %v5513, %v5527
      %v5532 = vmul.f32 %v5510, %v5523
      %v5533 = vmul.f32 %v5514, %v5527
      %v5534 = vmul.f32 %v5511, %v5523
      %v5535 = vmul.f32 %v5515, %v5527
      %v5536 = vmul.f32 %v5512, %v5523
      %v5537 = vmul.f32 %v5516, %v5527
      %v5538 = vpack.c.bf16 %v5532, %v5530
      %v5539 = vpack.c.bf16 %v5533, %v5531
      %v5540 = vpack.c.bf16 %v5536, %v5534
      %v5541 = vpack.c.bf16 %v5537, %v5535
      %5542 = vst [vmem:[#allocation3 + $0x580] sm:$0xff] %v5538
      %5543 = vst [vmem:[#allocation3 + $0x588] sm:$0xff] %v5539
      %5544 = vst [vmem:[#allocation3 + $0x590] sm:$0xff] %v5540
      %5545 = vst [vmem:[#allocation3 + $0x598] sm:$0xff] %v5541
      %5546 = vrot.lane.b32.xlu0 %v3203, 80
      %v5547 = vpop.permute.xlu0 %5546
      %5548 = vrot.lane.b32.xlu0 %v3205, 80
      %v5549 = vpop.permute.xlu0 %5548
      %5550 = vrot.lane.b32.xlu0 %v3207, 80
      %v5551 = vpop.permute.xlu0 %5550
      %5552 = vrot.lane.b32.xlu0 %v3209, 80
      %v5553 = vpop.permute.xlu0 %5552
      %5554 = vrot.lane.b32.xlu0 %v3204, 80
      %v5555 = vpop.permute.xlu0 %5554
      %5556 = vrot.lane.b32.xlu0 %v3206, 80
      %v5557 = vpop.permute.xlu0 %5556
      %5558 = vrot.lane.b32.xlu0 %v3208, 80
      %v5559 = vpop.permute.xlu0 %5558
      %5560 = vrot.lane.b32.xlu0 %v3210, 80
      %v5561 = vpop.permute.xlu0 %5560
      %vm5562 = vcmp.lt.s32.totalorder %v830, 80
      %v5563 = vsel %vm5562, %v5547, %v5555
      %v5564 = vsel %vm5562, %v5549, %v5557
      %v5565 = vsel %vm5562, %v5551, %v5559
      %v5566 = vsel %vm5562, %v5553, %v5561
      %v5567 = vsel %vm5562, %v5555, %v5547
      %v5568 = vsel %vm5562, %v5557, %v5549
      %v5569 = vsel %vm5562, %v5559, %v5551
      %v5570 = vsel %vm5562, %v5561, %v5553
      %s5571 = scalar_lea.vmem %s1, 85
      %v5572 = vld [vmem:[%s5571] ss:$8 sm:$0x3]
      %v5574 = vlaneseq
      %v5575 = vshrl.u32 %v5574, 7
      %v5576 = vsub.s32 0, %v5575
      %v5577 = vrot.slane %v5572, %v5576
      %v5578 = vlaneseq
      %v5579 = vshrl.u32 %v5578, 7
      %v5580 = vsub.s32 1, %v5579
      %v5581 = vrot.slane %v5572, %v5580
      %v5584 = vmul.f32 %v5563, %v5577
      %v5585 = vmul.f32 %v5567, %v5581
      %v5586 = vmul.f32 %v5564, %v5577
      %v5587 = vmul.f32 %v5568, %v5581
      %v5588 = vmul.f32 %v5565, %v5577
      %v5589 = vmul.f32 %v5569, %v5581
      %v5590 = vmul.f32 %v5566, %v5577
      %v5591 = vmul.f32 %v5570, %v5581
      %v5592 = vpack.c.bf16 %v5586, %v5584
      %v5593 = vpack.c.bf16 %v5587, %v5585
      %v5594 = vpack.c.bf16 %v5590, %v5588
      %v5595 = vpack.c.bf16 %v5591, %v5589
      %5596 = vst [vmem:[#allocation3 + $0x5a0] sm:$0xff] %v5592
      %5597 = vst [vmem:[#allocation3 + $0x5a8] sm:$0xff] %v5593
      %5598 = vst [vmem:[#allocation3 + $0x5b0] sm:$0xff] %v5594
      %5599 = vst [vmem:[#allocation3 + $0x5b8] sm:$0xff] %v5595
      %5600 = vrot.lane.b32.xlu0 %v3203, 79
      %v5601 = vpop.permute.xlu0 %5600
      %5602 = vrot.lane.b32.xlu0 %v3205, 79
      %v5603 = vpop.permute.xlu0 %5602
      %5604 = vrot.lane.b32.xlu0 %v3207, 79
      %v5605 = vpop.permute.xlu0 %5604
      %5606 = vrot.lane.b32.xlu0 %v3209, 79
      %v5607 = vpop.permute.xlu0 %5606
      %5608 = vrot.lane.b32.xlu0 %v3204, 79
      %v5609 = vpop.permute.xlu0 %5608
      %5610 = vrot.lane.b32.xlu0 %v3206, 79
      %v5611 = vpop.permute.xlu0 %5610
      %5612 = vrot.lane.b32.xlu0 %v3208, 79
      %v5613 = vpop.permute.xlu0 %5612
      %5614 = vrot.lane.b32.xlu0 %v3210, 79
      %v5615 = vpop.permute.xlu0 %5614
      %vm5616 = vcmp.lt.s32.totalorder %v830, 79
      %v5617 = vsel %vm5616, %v5601, %v5609
      %v5618 = vsel %vm5616, %v5603, %v5611
      %v5619 = vsel %vm5616, %v5605, %v5613
      %v5620 = vsel %vm5616, %v5607, %v5615
      %v5621 = vsel %vm5616, %v5609, %v5601
      %v5622 = vsel %vm5616, %v5611, %v5603
      %v5623 = vsel %vm5616, %v5613, %v5605
      %v5624 = vsel %vm5616, %v5615, %v5607
      %s5625 = scalar_lea.vmem %s1, 86
      %v5626 = vld [vmem:[%s5625] ss:$8 sm:$0x3]
      %v5628 = vlaneseq
      %v5629 = vshrl.u32 %v5628, 7
      %v5630 = vsub.s32 0, %v5629
      %v5631 = vrot.slane %v5626, %v5630
      %v5632 = vlaneseq
      %v5633 = vshrl.u32 %v5632, 7
      %v5634 = vsub.s32 1, %v5633
      %v5635 = vrot.slane %v5626, %v5634
      %v5638 = vmul.f32 %v5617, %v5631
      %v5639 = vmul.f32 %v5621, %v5635
      %v5640 = vmul.f32 %v5618, %v5631
      %v5641 = vmul.f32 %v5622, %v5635
      %v5642 = vmul.f32 %v5619, %v5631
      %v5643 = vmul.f32 %v5623, %v5635
      %v5644 = vmul.f32 %v5620, %v5631
      %v5645 = vmul.f32 %v5624, %v5635
      %v5646 = vpack.c.bf16 %v5640, %v5638
      %v5647 = vpack.c.bf16 %v5641, %v5639
      %v5648 = vpack.c.bf16 %v5644, %v5642
      %v5649 = vpack.c.bf16 %v5645, %v5643
      %5650 = vst [vmem:[#allocation3 + $0x5c0] sm:$0xff] %v5646
      %5651 = vst [vmem:[#allocation3 + $0x5c8] sm:$0xff] %v5647
      %5652 = vst [vmem:[#allocation3 + $0x5d0] sm:$0xff] %v5648
      %5653 = vst [vmem:[#allocation3 + $0x5d8] sm:$0xff] %v5649
      %5654 = vrot.lane.b32.xlu0 %v3203, 78
      %v5655 = vpop.permute.xlu0 %5654
      %5656 = vrot.lane.b32.xlu0 %v3205, 78
      %v5657 = vpop.permute.xlu0 %5656
      %5658 = vrot.lane.b32.xlu0 %v3207, 78
      %v5659 = vpop.permute.xlu0 %5658
      %5660 = vrot.lane.b32.xlu0 %v3209, 78
      %v5661 = vpop.permute.xlu0 %5660
      %5662 = vrot.lane.b32.xlu0 %v3204, 78
      %v5663 = vpop.permute.xlu0 %5662
      %5664 = vrot.lane.b32.xlu0 %v3206, 78
      %v5665 = vpop.permute.xlu0 %5664
      %5666 = vrot.lane.b32.xlu0 %v3208, 78
      %v5667 = vpop.permute.xlu0 %5666
      %5668 = vrot.lane.b32.xlu0 %v3210, 78
      %v5669 = vpop.permute.xlu0 %5668
      %vm5670 = vcmp.lt.s32.totalorder %v830, 78
      %v5671 = vsel %vm5670, %v5655, %v5663
      %v5672 = vsel %vm5670, %v5657, %v5665
      %v5673 = vsel %vm5670, %v5659, %v5667
      %v5674 = vsel %vm5670, %v5661, %v5669
      %v5675 = vsel %vm5670, %v5663, %v5655
      %v5676 = vsel %vm5670, %v5665, %v5657
      %v5677 = vsel %vm5670, %v5667, %v5659
      %v5678 = vsel %vm5670, %v5669, %v5661
      %s5679 = scalar_lea.vmem %s1, 87
      %v5680 = vld [vmem:[%s5679] ss:$8 sm:$0x3]
      %v5682 = vlaneseq
      %v5683 = vshrl.u32 %v5682, 7
      %v5684 = vsub.s32 0, %v5683
      %v5685 = vrot.slane %v5680, %v5684
      %v5686 = vlaneseq
      %v5687 = vshrl.u32 %v5686, 7
      %v5688 = vsub.s32 1, %v5687
      %v5689 = vrot.slane %v5680, %v5688
      %v5692 = vmul.f32 %v5671, %v5685
      %v5693 = vmul.f32 %v5675, %v5689
      %v5694 = vmul.f32 %v5672, %v5685
      %v5695 = vmul.f32 %v5676, %v5689
      %v5696 = vmul.f32 %v5673, %v5685
      %v5697 = vmul.f32 %v5677, %v5689
      %v5698 = vmul.f32 %v5674, %v5685
      %v5699 = vmul.f32 %v5678, %v5689
      %v5700 = vpack.c.bf16 %v5694, %v5692
      %v5701 = vpack.c.bf16 %v5695, %v5693
      %v5702 = vpack.c.bf16 %v5698, %v5696
      %v5703 = vpack.c.bf16 %v5699, %v5697
      %5704 = vst [vmem:[#allocation3 + $0x5e0] sm:$0xff] %v5700
      %5705 = vst [vmem:[#allocation3 + $0x5e8] sm:$0xff] %v5701
      %5706 = vst [vmem:[#allocation3 + $0x5f0] sm:$0xff] %v5702
      %5707 = vst [vmem:[#allocation3 + $0x5f8] sm:$0xff] %v5703
      %5708 = vrot.lane.b32.xlu0 %v3203, 77
      %v5709 = vpop.permute.xlu0 %5708
      %5710 = vrot.lane.b32.xlu0 %v3205, 77
      %v5711 = vpop.permute.xlu0 %5710
      %5712 = vrot.lane.b32.xlu0 %v3207, 77
      %v5713 = vpop.permute.xlu0 %5712
      %5714 = vrot.lane.b32.xlu0 %v3209, 77
      %v5715 = vpop.permute.xlu0 %5714
      %5716 = vrot.lane.b32.xlu0 %v3204, 77
      %v5717 = vpop.permute.xlu0 %5716
      %5718 = vrot.lane.b32.xlu0 %v3206, 77
      %v5719 = vpop.permute.xlu0 %5718
      %5720 = vrot.lane.b32.xlu0 %v3208, 77
      %v5721 = vpop.permute.xlu0 %5720
      %5722 = vrot.lane.b32.xlu0 %v3210, 77
      %v5723 = vpop.permute.xlu0 %5722
      %vm5724 = vcmp.lt.s32.totalorder %v830, 77
      %v5725 = vsel %vm5724, %v5709, %v5717
      %v5726 = vsel %vm5724, %v5711, %v5719
      %v5727 = vsel %vm5724, %v5713, %v5721
      %v5728 = vsel %vm5724, %v5715, %v5723
      %v5729 = vsel %vm5724, %v5717, %v5709
      %v5730 = vsel %vm5724, %v5719, %v5711
      %v5731 = vsel %vm5724, %v5721, %v5713
      %v5732 = vsel %vm5724, %v5723, %v5715
      %s5733 = scalar_lea.vmem %s1, 96
      %v5734 = vld [vmem:[%s5733] ss:$8 sm:$0x3]
      %v5736 = vlaneseq
      %v5737 = vshrl.u32 %v5736, 7
      %v5738 = vsub.s32 0, %v5737
      %v5739 = vrot.slane %v5734, %v5738
      %v5740 = vlaneseq
      %v5741 = vshrl.u32 %v5740, 7
      %v5742 = vsub.s32 1, %v5741
      %v5743 = vrot.slane %v5734, %v5742
      %v5746 = vmul.f32 %v5725, %v5739
      %v5747 = vmul.f32 %v5729, %v5743
      %v5748 = vmul.f32 %v5726, %v5739
      %v5749 = vmul.f32 %v5730, %v5743
      %v5750 = vmul.f32 %v5727, %v5739
      %v5751 = vmul.f32 %v5731, %v5743
      %v5752 = vmul.f32 %v5728, %v5739
      %v5753 = vmul.f32 %v5732, %v5743
      %v5754 = vpack.c.bf16 %v5748, %v5746
      %v5755 = vpack.c.bf16 %v5749, %v5747
      %v5756 = vpack.c.bf16 %v5752, %v5750
      %v5757 = vpack.c.bf16 %v5753, %v5751
      %5758 = vst [vmem:[#allocation3 + $0x600] sm:$0xff] %v5754
      %5759 = vst [vmem:[#allocation3 + $0x608] sm:$0xff] %v5755
      %5760 = vst [vmem:[#allocation3 + $0x610] sm:$0xff] %v5756
      %5761 = vst [vmem:[#allocation3 + $0x618] sm:$0xff] %v5757
      %s5762 = smul.u32 %s30, 52
      %s5763 = smul.addr %s5762, 4
      %s5764 = scalar_lea.vmem %s6, %s5763
      %v5765 = vld [vmem:[%s5764] sm:$0xff]
      %v5766 = vld [vmem:[%s5764 + $0x8] sm:$0xff]
      %v5767 = vld [vmem:[%s5764 + $0x10] sm:$0xff]
      %v5768 = vld [vmem:[%s5764 + $0x18] sm:$0xff]
      %v5769 = vld [vmem:[%s5764 + $0x20] sm:$0xff]
      %v5770 = vld [vmem:[%s5764 + $0x28] sm:$0xff]
      %v5771 = vld [vmem:[%s5764 + $0x30] sm:$0xf]
      %v5772 = vld [vmem:[%s5764 + $0x34] sm:$0xff]
      %v5773 = vld [vmem:[%s5764 + $0x3c] sm:$0xff]
      %v5774 = vld [vmem:[%s5764 + $0x44] sm:$0xff]
      %v5775 = vld [vmem:[%s5764 + $0x4c] sm:$0xff]
      %v5776 = vld [vmem:[%s5764 + $0x54] sm:$0xff]
      %v5777 = vld [vmem:[%s5764 + $0x5c] sm:$0xff]
      %v5778 = vld [vmem:[%s5764 + $0x64] sm:$0xf]
      %v5779 = vld [vmem:[%s5764 + $0x68] sm:$0xff]
      %v5780 = vld [vmem:[%s5764 + $0x70] sm:$0xff]
      %v5781 = vld [vmem:[%s5764 + $0x78] sm:$0xff]
      %v5782 = vld [vmem:[%s5764 + $0x80] sm:$0xff]
      %v5783 = vld [vmem:[%s5764 + $0x88] sm:$0xff]
      %v5784 = vld [vmem:[%s5764 + $0x90] sm:$0xff]
      %v5785 = vld [vmem:[%s5764 + $0x98] sm:$0xf]
      %v5786 = vld [vmem:[%s5764 + $0x9c] sm:$0xff]
      %v5787 = vld [vmem:[%s5764 + $0xa4] sm:$0xff]
      %v5788 = vld [vmem:[%s5764 + $0xac] sm:$0xff]
      %v5789 = vld [vmem:[%s5764 + $0xb4] sm:$0xff]
      %v5790 = vld [vmem:[%s5764 + $0xbc] sm:$0xff]
      %v5791 = vld [vmem:[%s5764 + $0xc4] sm:$0xff]
      %v5792 = vld [vmem:[%s5764 + $0xcc] sm:$0xf]
      %v5793 = vld [vmem:[#allocation3] sm:$0xff]
      %v5794 = vld [vmem:[#allocation3 + $0x8] sm:$0xff]
      %v5795 = vld [vmem:[#allocation3 + $0x10] sm:$0xff]
      %v5796 = vld [vmem:[#allocation3 + $0x18] sm:$0xff]
      %v5797 = vld [vmem:[#allocation3 + $0x20] sm:$0xff]
      %v5798 = vld [vmem:[#allocation3 + $0x28] sm:$0xff]
      %v5799 = vld [vmem:[#allocation3 + $0x30] sm:$0xff]
      %v5800 = vld [vmem:[#allocation3 + $0x38] sm:$0xff]
      %v5801 = vld [vmem:[#allocation3 + $0x40] sm:$0xff]
      %v5802 = vld [vmem:[#allocation3 + $0x48] sm:$0xff]
      %v5803 = vld [vmem:[#allocation3 + $0x50] sm:$0xff]
      %v5804 = vld [vmem:[#allocation3 + $0x58] sm:$0xff]
      %v5805 = vld [vmem:[#allocation3 + $0x60] sm:$0xff]
      %v5806 = vld [vmem:[#allocation3 + $0x68] sm:$0xff]
      %v5807 = vld [vmem:[#allocation3 + $0x70] sm:$0xff]
      %v5808 = vld [vmem:[#allocation3 + $0x78] sm:$0xff]
      %v5809 = vld [vmem:[#allocation3 + $0x80] sm:$0xff]
      %v5810 = vld [vmem:[#allocation3 + $0x88] sm:$0xff]
      %v5811 = vld [vmem:[#allocation3 + $0x90] sm:$0xff]
      %v5812 = vld [vmem:[#allocation3 + $0x98] sm:$0xff]
      %v5813 = vld [vmem:[#allocation3 + $0xa0] sm:$0xff]
      %v5814 = vld [vmem:[#allocation3 + $0xa8] sm:$0xff]
      %v5815 = vld [vmem:[#allocation3 + $0xb0] sm:$0xff]
      %v5816 = vld [vmem:[#allocation3 + $0xb8] sm:$0xff]
      %v5817 = vld [vmem:[#allocation3 + $0xc0] sm:$0xff]
      %v5818 = vld [vmem:[#allocation3 + $0xc8] sm:$0xff]
      %v5819 = vld [vmem:[#allocation3 + $0xd0] sm:$0xff]
      %v5820 = vld [vmem:[#allocation3 + $0xd8] sm:$0xff]
      %v5821 = vld [vmem:[#allocation3 + $0xe0] sm:$0xff]
      %v5822 = vld [vmem:[#allocation3 + $0xe8] sm:$0xff]
      %v5823 = vld [vmem:[#allocation3 + $0xf0] sm:$0xff]
      %v5824 = vld [vmem:[#allocation3 + $0xf8] sm:$0xff]
      %v5825 = vld [vmem:[#allocation3 + $0x100] sm:$0xff]
      %v5826 = vld [vmem:[#allocation3 + $0x108] sm:$0xff]
      %v5827 = vld [vmem:[#allocation3 + $0x110] sm:$0xff]
      %v5828 = vld [vmem:[#allocation3 + $0x118] sm:$0xff]
      %v5829 = vld [vmem:[#allocation3 + $0x120] sm:$0xff]
      %v5830 = vld [vmem:[#allocation3 + $0x128] sm:$0xff]
      %v5831 = vld [vmem:[#allocation3 + $0x130] sm:$0xff]
      %v5832 = vld [vmem:[#allocation3 + $0x138] sm:$0xff]
      %v5833 = vld [vmem:[#allocation3 + $0x140] sm:$0xff]
      %v5834 = vld [vmem:[#allocation3 + $0x148] sm:$0xff]
      %v5835 = vld [vmem:[#allocation3 + $0x150] sm:$0xff]
      %v5836 = vld [vmem:[#allocation3 + $0x158] sm:$0xff]
      %v5837 = vld [vmem:[#allocation3 + $0x160] sm:$0xff]
      %v5838 = vld [vmem:[#allocation3 + $0x168] sm:$0xff]
      %v5839 = vld [vmem:[#allocation3 + $0x170] sm:$0xff]
      %v5840 = vld [vmem:[#allocation3 + $0x178] sm:$0xff]
      %v5841 = vld [vmem:[#allocation3 + $0x180] sm:$0xff]
      %v5842 = vld [vmem:[#allocation3 + $0x188] sm:$0xff]
      %v5843 = vld [vmem:[#allocation3 + $0x190] sm:$0xff]
      %v5844 = vld [vmem:[#allocation3 + $0x198] sm:$0xff]
      %v5845 = vld [vmem:[#allocation3 + $0x1a0] sm:$0xff]
      %v5846 = vld [vmem:[#allocation3 + $0x1a8] sm:$0xff]
      %v5847 = vld [vmem:[#allocation3 + $0x1b0] sm:$0xff]
      %v5848 = vld [vmem:[#allocation3 + $0x1b8] sm:$0xff]
      %v5849 = vld [vmem:[#allocation3 + $0x1c0] sm:$0xff]
      %v5850 = vld [vmem:[#allocation3 + $0x1c8] sm:$0xff]
      %v5851 = vld [vmem:[#allocation3 + $0x1d0] sm:$0xff]
      %v5852 = vld [vmem:[#allocation3 + $0x1d8] sm:$0xff]
      %v5853 = vld [vmem:[#allocation3 + $0x1e0] sm:$0xff]
      %v5854 = vld [vmem:[#allocation3 + $0x1e8] sm:$0xff]
      %v5855 = vld [vmem:[#allocation3 + $0x1f0] sm:$0xff]
      %v5856 = vld [vmem:[#allocation3 + $0x1f8] sm:$0xff]
      %v5857 = vld [vmem:[#allocation3 + $0x200] sm:$0xff]
      %v5858 = vld [vmem:[#allocation3 + $0x208] sm:$0xff]
      %v5859 = vld [vmem:[#allocation3 + $0x210] sm:$0xff]
      %v5860 = vld [vmem:[#allocation3 + $0x218] sm:$0xff]
      %v5861 = vld [vmem:[#allocation3 + $0x220] sm:$0xff]
      %v5862 = vld [vmem:[#allocation3 + $0x228] sm:$0xff]
      %v5863 = vld [vmem:[#allocation3 + $0x230] sm:$0xff]
      %v5864 = vld [vmem:[#allocation3 + $0x238] sm:$0xff]
      %v5865 = vld [vmem:[#allocation3 + $0x240] sm:$0xff]
      %v5866 = vld [vmem:[#allocation3 + $0x248] sm:$0xff]
      %v5867 = vld [vmem:[#allocation3 + $0x250] sm:$0xff]
      %v5868 = vld [vmem:[#allocation3 + $0x258] sm:$0xff]
      %v5869 = vld [vmem:[#allocation3 + $0x260] sm:$0xff]
      %v5870 = vld [vmem:[#allocation3 + $0x268] sm:$0xff]
      %v5871 = vld [vmem:[#allocation3 + $0x270] sm:$0xff]
      %v5872 = vld [vmem:[#allocation3 + $0x278] sm:$0xff]
      %v5873 = vld [vmem:[#allocation3 + $0x280] sm:$0xff]
      %v5874 = vld [vmem:[#allocation3 + $0x288] sm:$0xff]
      %v5875 = vld [vmem:[#allocation3 + $0x290] sm:$0xff]
      %v5876 = vld [vmem:[#allocation3 + $0x298] sm:$0xff]
      %v5877 = vld [vmem:[#allocation3 + $0x2a0] sm:$0xff]
      %v5878 = vld [vmem:[#allocation3 + $0x2a8] sm:$0xff]
      %v5879 = vld [vmem:[#allocation3 + $0x2b0] sm:$0xff]
      %v5880 = vld [vmem:[#allocation3 + $0x2b8] sm:$0xff]
      %v5881 = vld [vmem:[#allocation3 + $0x2c0] sm:$0xff]
      %v5882 = vld [vmem:[#allocation3 + $0x2c8] sm:$0xff]
      %v5883 = vld [vmem:[#allocation3 + $0x2d0] sm:$0xff]
      %v5884 = vld [vmem:[#allocation3 + $0x2d8] sm:$0xff]
      %v5885 = vld [vmem:[#allocation3 + $0x2e0] sm:$0xff]
      %v5886 = vld [vmem:[#allocation3 + $0x2e8] sm:$0xff]
      %v5887 = vld [vmem:[#allocation3 + $0x2f0] sm:$0xff]
      %v5888 = vld [vmem:[#allocation3 + $0x2f8] sm:$0xff]
      %v5889 = vld [vmem:[#allocation3 + $0x300] sm:$0xff]
      %v5890 = vld [vmem:[#allocation3 + $0x308] sm:$0xff]
      %v5891 = vld [vmem:[#allocation3 + $0x310] sm:$0xff]
      %v5892 = vld [vmem:[#allocation3 + $0x318] sm:$0xff]
      %v5893 = vld [vmem:[#allocation3 + $0x320] sm:$0xff]
      %v5894 = vld [vmem:[#allocation3 + $0x328] sm:$0xff]
      %v5895 = vld [vmem:[#allocation3 + $0x330] sm:$0xff]
      %v5896 = vld [vmem:[#allocation3 + $0x338] sm:$0xff]
      %v5897 = vld [vmem:[#allocation3 + $0x340] sm:$0xff]
      %v5898 = vld [vmem:[#allocation3 + $0x348] sm:$0xff]
      %v5899 = vld [vmem:[#allocation3 + $0x350] sm:$0xff]
      %v5900 = vld [vmem:[#allocation3 + $0x358] sm:$0xff]
      %v5901 = vld [vmem:[#allocation3 + $0x360] sm:$0xff]
      %v5902 = vld [vmem:[#allocation3 + $0x368] sm:$0xff]
      %v5903 = vld [vmem:[#allocation3 + $0x370] sm:$0xff]
      %v5904 = vld [vmem:[#allocation3 + $0x378] sm:$0xff]
      %v5905 = vld [vmem:[#allocation3 + $0x380] sm:$0xff]
      %v5906 = vld [vmem:[#allocation3 + $0x388] sm:$0xff]
      %v5907 = vld [vmem:[#allocation3 + $0x390] sm:$0xff]
      %v5908 = vld [vmem:[#allocation3 + $0x398] sm:$0xff]
      %v5909 = vld [vmem:[#allocation3 + $0x3a0] sm:$0xff]
      %v5910 = vld [vmem:[#allocation3 + $0x3a8] sm:$0xff]
      %v5911 = vld [vmem:[#allocation3 + $0x3b0] sm:$0xff]
      %v5912 = vld [vmem:[#allocation3 + $0x3b8] sm:$0xff]
      %v5913 = vld [vmem:[#allocation3 + $0x3c0] sm:$0xff]
      %v5914 = vld [vmem:[#allocation3 + $0x3c8] sm:$0xff]
      %v5915 = vld [vmem:[#allocation3 + $0x3d0] sm:$0xff]
      %v5916 = vld [vmem:[#allocation3 + $0x3d8] sm:$0xff]
      %v5917 = vld [vmem:[#allocation3 + $0x3e0] sm:$0xff]
      %v5918 = vld [vmem:[#allocation3 + $0x3e8] sm:$0xff]
      %v5919 = vld [vmem:[#allocation3 + $0x3f0] sm:$0xff]
      %v5920 = vld [vmem:[#allocation3 + $0x3f8] sm:$0xff]
      %v5921 = vld [vmem:[#allocation3 + $0x400] sm:$0xff]
      %v5922 = vld [vmem:[#allocation3 + $0x408] sm:$0xff]
      %v5923 = vld [vmem:[#allocation3 + $0x410] sm:$0xff]
      %v5924 = vld [vmem:[#allocation3 + $0x418] sm:$0xff]
      %v5925 = vld [vmem:[#allocation3 + $0x420] sm:$0xff]
      %v5926 = vld [vmem:[#allocation3 + $0x428] sm:$0xff]
      %v5927 = vld [vmem:[#allocation3 + $0x430] sm:$0xff]
      %v5928 = vld [vmem:[#allocation3 + $0x438] sm:$0xff]
      %v5929 = vld [vmem:[#allocation3 + $0x440] sm:$0xff]
      %v5930 = vld [vmem:[#allocation3 + $0x448] sm:$0xff]
      %v5931 = vld [vmem:[#allocation3 + $0x450] sm:$0xff]
      %v5932 = vld [vmem:[#allocation3 + $0x458] sm:$0xff]
      %v5933 = vld [vmem:[#allocation3 + $0x460] sm:$0xff]
      %v5934 = vld [vmem:[#allocation3 + $0x468] sm:$0xff]
      %v5935 = vld [vmem:[#allocation3 + $0x470] sm:$0xff]
      %v5936 = vld [vmem:[#allocation3 + $0x478] sm:$0xff]
      %v5937 = vld [vmem:[#allocation3 + $0x480] sm:$0xff]
      %v5938 = vld [vmem:[#allocation3 + $0x488] sm:$0xff]
      %v5939 = vld [vmem:[#allocation3 + $0x490] sm:$0xff]
      %v5940 = vld [vmem:[#allocation3 + $0x498] sm:$0xff]
      %v5941 = vld [vmem:[#allocation3 + $0x4a0] sm:$0xff]
      %v5942 = vld [vmem:[#allocation3 + $0x4a8] sm:$0xff]
      %v5943 = vld [vmem:[#allocation3 + $0x4b0] sm:$0xff]
      %v5944 = vld [vmem:[#allocation3 + $0x4b8] sm:$0xff]
      %v5945 = vld [vmem:[#allocation3 + $0x4c0] sm:$0xff]
      %v5946 = vld [vmem:[#allocation3 + $0x4c8] sm:$0xff]
      %v5947 = vld [vmem:[#allocation3 + $0x4d0] sm:$0xff]
      %v5948 = vld [vmem:[#allocation3 + $0x4d8] sm:$0xff]
      %v5949 = vld [vmem:[#allocation3 + $0x4e0] sm:$0xff]
      %v5950 = vld [vmem:[#allocation3 + $0x4e8] sm:$0xff]
      %v5951 = vld [vmem:[#allocation3 + $0x4f0] sm:$0xff]
      %v5952 = vld [vmem:[#allocation3 + $0x4f8] sm:$0xff]
      %v5953 = vld [vmem:[#allocation3 + $0x500] sm:$0xff]
      %v5954 = vld [vmem:[#allocation3 + $0x508] sm:$0xff]
      %v5955 = vld [vmem:[#allocation3 + $0x510] sm:$0xff]
      %v5956 = vld [vmem:[#allocation3 + $0x518] sm:$0xff]
      %v5957 = vld [vmem:[#allocation3 + $0x520] sm:$0xff]
      %v5958 = vld [vmem:[#allocation3 + $0x528] sm:$0xff]
      %v5959 = vld [vmem:[#allocation3 + $0x530] sm:$0xff]
      %v5960 = vld [vmem:[#allocation3 + $0x538] sm:$0xff]
      %v5961 = vld [vmem:[#allocation3 + $0x540] sm:$0xff]
      %v5962 = vld [vmem:[#allocation3 + $0x548] sm:$0xff]
      %v5963 = vld [vmem:[#allocation3 + $0x550] sm:$0xff]
      %v5964 = vld [vmem:[#allocation3 + $0x558] sm:$0xff]
      %v5965 = vld [vmem:[#allocation3 + $0x560] sm:$0xff]
      %v5966 = vld [vmem:[#allocation3 + $0x568] sm:$0xff]
      %v5967 = vld [vmem:[#allocation3 + $0x570] sm:$0xff]
      %v5968 = vld [vmem:[#allocation3 + $0x578] sm:$0xff]
      %v5969 = vld [vmem:[#allocation3 + $0x580] sm:$0xff]
      %v5970 = vld [vmem:[#allocation3 + $0x588] sm:$0xff]
      %v5971 = vld [vmem:[#allocation3 + $0x590] sm:$0xff]
      %v5972 = vld [vmem:[#allocation3 + $0x598] sm:$0xff]
      %v5973 = vld [vmem:[#allocation3 + $0x5a0] sm:$0xff]
      %v5974 = vld [vmem:[#allocation3 + $0x5a8] sm:$0xff]
      %v5975 = vld [vmem:[#allocation3 + $0x5b0] sm:$0xff]
      %v5976 = vld [vmem:[#allocation3 + $0x5b8] sm:$0xff]
      %v5977 = vld [vmem:[#allocation3 + $0x5c0] sm:$0xff]
      %v5978 = vld [vmem:[#allocation3 + $0x5c8] sm:$0xff]
      %v5979 = vld [vmem:[#allocation3 + $0x5d0] sm:$0xff]
      %v5980 = vld [vmem:[#allocation3 + $0x5d8] sm:$0xff]
      %v5981 = vld [vmem:[#allocation3 + $0x5e0] sm:$0xff]
      %v5982 = vld [vmem:[#allocation3 + $0x5e8] sm:$0xff]
      %v5983 = vld [vmem:[#allocation3 + $0x5f0] sm:$0xff]
      %v5984 = vld [vmem:[#allocation3 + $0x5f8] sm:$0xff]
      %v5985 = vld [vmem:[#allocation3 + $0x600] sm:$0xff]
      %v5986 = vld [vmem:[#allocation3 + $0x608] sm:$0xff]
      %v5987 = vld [vmem:[#allocation3 + $0x610] sm:$0xff]
      %v5988 = vld [vmem:[#allocation3 + $0x618] sm:$0xff]
      %5990 = vset.pattern.permute.xlu0 0
      %5991 = vperm.xlu0 %5990, %v801
      %v5992 = vpop.permute.xlu0 %5991
      %5995 = vset.pattern.permute.xlu0 0
      %5996 = vperm.xlu0 %5995, %v802
      %v5997 = vpop.permute.xlu0 %5996
      %6000 = vset.pattern.permute.xlu0 0
      %6001 = vperm.xlu0 %6000, %v803
      %v6002 = vpop.permute.xlu0 %6001
      %6005 = vset.pattern.permute.xlu0 0
      %6006 = vperm.xlu0 %6005, %v804
      %v6007 = vpop.permute.xlu0 %6006
      %v6037 = vunpack.c.l.b16 %v5765
      %v6038 = vunpack.c.h.b16 %v5765
      %v6039 = vunpack.c.l.b16 %v5766
      %v6040 = vunpack.c.h.b16 %v5766
      %v6041 = vunpack.c.l.b16 %v5767
      %v6042 = vunpack.c.h.b16 %v5767
      %v6043 = vunpack.c.l.b16 %v5768
      %v6044 = vunpack.c.h.b16 %v5768
      %v6045 = vunpack.c.l.b16 %v5769
      %v6046 = vunpack.c.h.b16 %v5769
      %v6047 = vunpack.c.l.b16 %v5770
      %v6048 = vunpack.c.h.b16 %v5770
      %v6049 = vunpack.c.l.b16 %v5771
      %v6050 = vunpack.c.l.b16 %v5772
      %v6051 = vunpack.c.h.b16 %v5772
      %v6052 = vunpack.c.l.b16 %v5773
      %v6053 = vunpack.c.h.b16 %v5773
      %v6054 = vunpack.c.l.b16 %v5774
      %v6055 = vunpack.c.h.b16 %v5774
      %v6056 = vunpack.c.l.b16 %v5775
      %v6057 = vunpack.c.h.b16 %v5775
      %v6058 = vunpack.c.l.b16 %v5776
      %v6059 = vunpack.c.h.b16 %v5776
      %v6060 = vunpack.c.l.b16 %v5777
      %v6061 = vunpack.c.h.b16 %v5777
      %v6062 = vunpack.c.l.b16 %v5778
      %v6063 = vunpack.c.l.b16 %v5779
      %v6064 = vunpack.c.h.b16 %v5779
      %v6065 = vunpack.c.l.b16 %v5780
      %v6066 = vunpack.c.h.b16 %v5780
      %v6067 = vunpack.c.l.b16 %v5781
      %v6068 = vunpack.c.h.b16 %v5781
      %v6069 = vunpack.c.l.b16 %v5782
      %v6070 = vunpack.c.h.b16 %v5782
      %v6071 = vunpack.c.l.b16 %v5783
      %v6072 = vunpack.c.h.b16 %v5783
      %v6073 = vunpack.c.l.b16 %v5784
      %v6074 = vunpack.c.h.b16 %v5784
      %v6075 = vunpack.c.l.b16 %v5785
      %v6076 = vunpack.c.l.b16 %v5786
      %v6077 = vunpack.c.h.b16 %v5786
      %v6078 = vunpack.c.l.b16 %v5787
      %v6079 = vunpack.c.h.b16 %v5787
      %v6080 = vunpack.c.l.b16 %v5788
      %v6081 = vunpack.c.h.b16 %v5788
      %v6082 = vunpack.c.l.b16 %v5789
      %v6083 = vunpack.c.h.b16 %v5789
      %v6084 = vunpack.c.l.b16 %v5790
      %v6085 = vunpack.c.h.b16 %v5790
      %v6086 = vunpack.c.l.b16 %v5791
      %v6087 = vunpack.c.h.b16 %v5791
      %v6088 = vunpack.c.l.b16 %v5792
      %v6089 = vpack.c.b16 %v6050, %v6037
      %v6090 = vpack.c.b16 %v6051, %v6038
      %v6091 = vpack.c.b16 %v6052, %v6039
      %v6092 = vpack.c.b16 %v6053, %v6040
      %v6093 = vpack.c.b16 %v6054, %v6041
      %v6094 = vpack.c.b16 %v6055, %v6042
      %v6095 = vpack.c.b16 %v6056, %v6043
      %v6096 = vpack.c.b16 %v6057, %v6044
      %v6097 = vpack.c.b16 %v6058, %v6045
      %v6098 = vpack.c.b16 %v6059, %v6046
      %v6099 = vpack.c.b16 %v6060, %v6047
      %v6100 = vpack.c.b16 %v6061, %v6048
      %v6101 = vpack.c.b16 %v6062, %v6049
      %v6102 = vpack.c.b16 %v6076, %v6063
      %v6103 = vpack.c.b16 %v6077, %v6064
      %v6104 = vpack.c.b16 %v6078, %v6065
      %v6105 = vpack.c.b16 %v6079, %v6066
      %v6106 = vpack.c.b16 %v6080, %v6067
      %v6107 = vpack.c.b16 %v6081, %v6068
      %v6108 = vpack.c.b16 %v6082, %v6069
      %v6109 = vpack.c.b16 %v6083, %v6070
      %v6110 = vpack.c.b16 %v6084, %v6071
      %v6111 = vpack.c.b16 %v6085, %v6072
      %v6112 = vpack.c.b16 %v6086, %v6073
      %v6113 = vpack.c.b16 %v6087, %v6074
      %v6114 = vpack.c.b16 %v6088, %v6075
      %v6140 = vsel %vm656, %v6101, 0
      %v6143 = vsel %vm656, %v6114, 0
      %6145 = vmatprep.subr.bf16.mxu0 %v5794
      %6146 = vmatpush1.bf16.msra.mxu0 %v5793
      %6147 = vmatprep.subr.bf16.mxu0 %v5796
      %6148 = vmatpush1.bf16.msra.mxu0 %v5795
      %6149 = vmatprep.subr.bf16.mxu0 %v5798
      %6150 = vmatpush1.bf16.msra.mxu0 %v5797
      %6151 = vmatprep.subr.bf16.mxu0 %v5800
      %6152 = vmatpush1.bf16.msra.mxu0 %v5799
      %6153 = vmatprep.subr.bf16.mxu0 %v5802
      %6154 = vmatpush1.bf16.msra.mxu0 %v5801
      %6155 = vmatprep.subr.bf16.mxu0 %v5804
      %6156 = vmatpush1.bf16.msra.mxu0 %v5803
      %6157 = vmatprep.subr.bf16.mxu0 %v5806
      %6158 = vmatpush1.bf16.msra.mxu0 %v5805
      %6159 = vmatprep.subr.bf16.mxu0 %v5808
      %6160 = vmatpush1.bf16.msra.mxu0 %v5807
      %6161 = vmatprep.subr.bf16.mxu0 %v5810
      %6162 = vmatpush1.bf16.msra.mxu0 %v5809
      %6163 = vmatprep.subr.bf16.mxu0 %v5812
      %6164 = vmatpush1.bf16.msra.mxu0 %v5811
      %6165 = vmatprep.subr.bf16.mxu0 %v5814
      %6166 = vmatpush1.bf16.msra.mxu0 %v5813
      %6167 = vmatprep.subr.bf16.mxu0 %v5816
      %6168 = vmatpush1.bf16.msra.mxu0 %v5815
      %6169 = vmatprep.subr.bf16.mxu0 %v5818
      %6170 = vmatpush1.bf16.msra.mxu0 %v5817
      %6171 = vmatprep.subr.bf16.mxu0 %v5820
      %6172 = vmatpush1.bf16.msra.mxu0 %v5819
      %6173 = vmatprep.subr.bf16.mxu0 %v5822
      %6174 = vmatpush1.bf16.msra.mxu0 %v5821
      %6175 = vmatprep.subr.bf16.mxu0 %v5824
      %6176 = vmatpush1.bf16.msra.mxu0 %v5823
      %6177 = vmatprep.mubr.bf16.mxu0 %v6090
      %6178 = vmatmul.mubr.bf16.gmra.mrb[0].mxu0 %v6089
      %v6179 = vpop.f32.mrb[0].mxu0
      %v6180 = vadd.f32 %v5992, %v6179
      %v6181 = vpop.f32.mrb[0].mxu0
      %v6182 = vadd.f32 %v5992, %v6181
      %v6183 = vpop.f32.mrb[0].mxu0
      %v6184 = vadd.f32 %v5997, %v6183
      %v6185 = vpop.f32.mrb[0].mxu0
      %v6186 = vadd.f32 %v5997, %v6185
      %6187 = vmatprep.mubr.bf16.mxu0 %v6103
      %6188 = vmatmul.mubr.bf16.gmra.mrb[0].mxu0 %v6102
      %v6189 = vpop.f32.mrb[0].mxu0
      %v6190 = vadd.f32 %v6002, %v6189
      %v6191 = vpop.f32.mrb[0].mxu0
      %v6192 = vadd.f32 %v6002, %v6191
      %v6193 = vpop.f32.mrb[0].mxu0
      %v6194 = vadd.f32 %v6007, %v6193
      %v6195 = vpop.f32.mrb[0].mxu0
      %v6196 = vadd.f32 %v6007, %v6195
      %6197 = vdwg.mxu0
      %6198 = vmatprep.subr.bf16.mxu0 %v5826
      %6199 = vmatpush1.bf16.msra.mxu0 %v5825
      %6200 = vmatprep.subr.bf16.mxu0 %v5828
      %6201 = vmatpush1.bf16.msra.mxu0 %v5827
      %6202 = vmatprep.subr.bf16.mxu0 %v5830
      %6203 = vmatpush1.bf16.msra.mxu0 %v5829
      %6204 = vmatprep.subr.bf16.mxu0 %v5832
      %6205 = vmatpush1.bf16.msra.mxu0 %v5831
      %6206 = vmatprep.subr.bf16.mxu0 %v5834
      %6207 = vmatpush1.bf16.msra.mxu0 %v5833
      %6208 = vmatprep.subr.bf16.mxu0 %v5836
      %6209 = vmatpush1.bf16.msra.mxu0 %v5835
      %6210 = vmatprep.subr.bf16.mxu0 %v5838
      %6211 = vmatpush1.bf16.msra.mxu0 %v5837
      %6212 = vmatprep.subr.bf16.mxu0 %v5840
      %6213 = vmatpush1.bf16.msra.mxu0 %v5839
      %6214 = vmatprep.subr.bf16.mxu0 %v5842
      %6215 = vmatpush1.bf16.msra.mxu0 %v5841
      %6216 = vmatprep.subr.bf16.mxu0 %v5844
      %6217 = vmatpush1.bf16.msra.mxu0 %v5843
      %6218 = vmatprep.subr.bf16.mxu0 %v5846
      %6219 = vmatpush1.bf16.msra.mxu0 %v5845
      %6220 = vmatprep.subr.bf16.mxu0 %v5848
      %6221 = vmatpush1.bf16.msra.mxu0 %v5847
      %6222 = vmatprep.subr.bf16.mxu0 %v5850
      %6223 = vmatpush1.bf16.msra.mxu0 %v5849
      %6224 = vmatprep.subr.bf16.mxu0 %v5852
      %6225 = vmatpush1.bf16.msra.mxu0 %v5851
      %6226 = vmatprep.subr.bf16.mxu0 %v5854
      %6227 = vmatpush1.bf16.msra.mxu0 %v5853
      %6228 = vmatprep.subr.bf16.mxu0 %v5856
      %6229 = vmatpush1.bf16.msra.mxu0 %v5855
      %6230 = vmatprep.mubr.bf16.mxu0 %v6092
      %6231 = vmatmul.mubr.bf16.gmra.mrb[0].mxu0 %v6091
      %v6232 = vpop.f32.mrb[0].mxu0
      %v6233 = vadd.f32 %v6180, %v6232
      %v6234 = vpop.f32.mrb[0].mxu0
      %v6235 = vadd.f32 %v6182, %v6234
      %v6236 = vpop.f32.mrb[0].mxu0
      %v6237 = vadd.f32 %v6184, %v6236
      %v6238 = vpop.f32.mrb[0].mxu0
      %v6239 = vadd.f32 %v6186, %v6238
      %6240 = vmatprep.mubr.bf16.mxu0 %v6105
      %6241 = vmatmul.mubr.bf16.gmra.mrb[0].mxu0 %v6104
      %v6242 = vpop.f32.mrb[0].mxu0
      %v6243 = vadd.f32 %v6190, %v6242
      %v6244 = vpop.f32.mrb[0].mxu0
      %v6245 = vadd.f32 %v6192, %v6244
      %v6246 = vpop.f32.mrb[0].mxu0
      %v6247 = vadd.f32 %v6194, %v6246
      %v6248 = vpop.f32.mrb[0].mxu0
      %v6249 = vadd.f32 %v6196, %v6248
      %6250 = vdwg.mxu0
      %6251 = vmatprep.subr.bf16.mxu0 %v5858
      %6252 = vmatpush1.bf16.msra.mxu0 %v5857
      %6253 = vmatprep.subr.bf16.mxu0 %v5860
      %6254 = vmatpush1.bf16.msra.mxu0 %v5859
      %6255 = vmatprep.subr.bf16.mxu0 %v5862
      %6256 = vmatpush1.bf16.msra.mxu0 %v5861
      %6257 = vmatprep.subr.bf16.mxu0 %v5864
      %6258 = vmatpush1.bf16.msra.mxu0 %v5863
      %6259 = vmatprep.subr.bf16.mxu0 %v5866
      %6260 = vmatpush1.bf16.msra.mxu0 %v5865
      %6261 = vmatprep.subr.bf16.mxu0 %v5868
      %6262 = vmatpush1.bf16.msra.mxu0 %v5867
      %6263 = vmatprep.subr.bf16.mxu0 %v5870
      %6264 = vmatpush1.bf16.msra.mxu0 %v5869
      %6265 = vmatprep.subr.bf16.mxu0 %v5872
      %6266 = vmatpush1.bf16.msra.mxu0 %v5871
      %6267 = vmatprep.subr.bf16.mxu0 %v5874
      %6268 = vmatpush1.bf16.msra.mxu0 %v5873
      %6269 = vmatprep.subr.bf16.mxu0 %v5876
      %6270 = vmatpush1.bf16.msra.mxu0 %v5875
      %6271 = vmatprep.subr.bf16.mxu0 %v5878
      %6272 = vmatpush1.bf16.msra.mxu0 %v5877
      %6273 = vmatprep.subr.bf16.mxu0 %v5880
      %6274 = vmatpush1.bf16.msra.mxu0 %v5879
      %6275 = vmatprep.subr.bf16.mxu0 %v5882
      %6276 = vmatpush1.bf16.msra.mxu0 %v5881
      %6277 = vmatprep.subr.bf16.mxu0 %v5884
      %6278 = vmatpush1.bf16.msra.mxu0 %v5883
      %6279 = vmatprep.subr.bf16.mxu0 %v5886
      %6280 = vmatpush1.bf16.msra.mxu0 %v5885
      %6281 = vmatprep.subr.bf16.mxu0 %v5888
      %6282 = vmatpush1.bf16.msra.mxu0 %v5887
      %6283 = vmatprep.mubr.bf16.mxu0 %v6094
      %6284 = vmatmul.mubr.bf16.gmra.mrb[0].mxu0 %v6093
      %v6285 = vpop.f32.mrb[0].mxu0
      %v6286 = vadd.f32 %v6233, %v6285
      %v6287 = vpop.f32.mrb[0].mxu0
      %v6288 = vadd.f32 %v6235, %v6287
      %v6289 = vpop.f32.mrb[0].mxu0
      %v6290 = vadd.f32 %v6237, %v6289
      %v6291 = vpop.f32.mrb[0].mxu0
      %v6292 = vadd.f32 %v6239, %v6291
      %6293 = vmatprep.mubr.bf16.mxu0 %v6107
      %6294 = vmatmul.mubr.bf16.gmra.mrb[0].mxu0 %v6106
      %v6295 = vpop.f32.mrb[0].mxu0
      %v6296 = vadd.f32 %v6243, %v6295
      %v6297 = vpop.f32.mrb[0].mxu0
      %v6298 = vadd.f32 %v6245, %v6297
      %v6299 = vpop.f32.mrb[0].mxu0
      %v6300 = vadd.f32 %v6247, %v6299
      %v6301 = vpop.f32.mrb[0].mxu0
      %v6302 = vadd.f32 %v6249, %v6301
      %6303 = vdwg.mxu0
      %6304 = vmatprep.subr.bf16.mxu0 %v5890
      %6305 = vmatpush1.bf16.msra.mxu0 %v5889
      %6306 = vmatprep.subr.bf16.mxu0 %v5892
      %6307 = vmatpush1.bf16.msra.mxu0 %v5891
      %6308 = vmatprep.subr.bf16.mxu0 %v5894
      %6309 = vmatpush1.bf16.msra.mxu0 %v5893
      %6310 = vmatprep.subr.bf16.mxu0 %v5896
      %6311 = vmatpush1.bf16.msra.mxu0 %v5895
      %6312 = vmatprep.subr.bf16.mxu0 %v5898
      %6313 = vmatpush1.bf16.msra.mxu0 %v5897
      %6314 = vmatprep.subr.bf16.mxu0 %v5900
      %6315 = vmatpush1.bf16.msra.mxu0 %v5899
      %6316 = vmatprep.subr.bf16.mxu0 %v5902
      %6317 = vmatpush1.bf16.msra.mxu0 %v5901
      %6318 = vmatprep.subr.bf16.mxu0 %v5904
      %6319 = vmatpush1.bf16.msra.mxu0 %v5903
      %6320 = vmatprep.subr.bf16.mxu0 %v5906
      %6321 = vmatpush1.bf16.msra.mxu0 %v5905
      %6322 = vmatprep.subr.bf16.mxu0 %v5908
      %6323 = vmatpush1.bf16.msra.mxu0 %v5907
      %6324 = vmatprep.subr.bf16.mxu0 %v5910
      %6325 = vmatpush1.bf16.msra.mxu0 %v5909
      %6326 = vmatprep.subr.bf16.mxu0 %v5912
      %6327 = vmatpush1.bf16.msra.mxu0 %v5911
      %6328 = vmatprep.subr.bf16.mxu0 %v5914
      %6329 = vmatpush1.bf16.msra.mxu0 %v5913
      %6330 = vmatprep.subr.bf16.mxu0 %v5916
      %6331 = vmatpush1.bf16.msra.mxu0 %v5915
      %6332 = vmatprep.subr.bf16.mxu0 %v5918
      %6333 = vmatpush1.bf16.msra.mxu0 %v5917
      %6334 = vmatprep.subr.bf16.mxu0 %v5920
      %6335 = vmatpush1.bf16.msra.mxu0 %v5919
      %6336 = vmatprep.mubr.bf16.mxu0 %v6096
      %6337 = vmatmul.mubr.bf16.gmra.mrb[0].mxu0 %v6095
      %v6338 = vpop.f32.mrb[0].mxu0
      %v6339 = vadd.f32 %v6286, %v6338
      %v6340 = vpop.f32.mrb[0].mxu0
      %v6341 = vadd.f32 %v6288, %v6340
      %v6342 = vpop.f32.mrb[0].mxu0
      %v6343 = vadd.f32 %v6290, %v6342
      %v6344 = vpop.f32.mrb[0].mxu0
      %v6345 = vadd.f32 %v6292, %v6344
      %6346 = vmatprep.mubr.bf16.mxu0 %v6109
      %6347 = vmatmul.mubr.bf16.gmra.mrb[0].mxu0 %v6108
      %v6348 = vpop.f32.mrb[0].mxu0
      %v6349 = vadd.f32 %v6296, %v6348
      %v6350 = vpop.f32.mrb[0].mxu0
      %v6351 = vadd.f32 %v6298, %v6350
      %v6352 = vpop.f32.mrb[0].mxu0
      %v6353 = vadd.f32 %v6300, %v6352
      %v6354 = vpop.f32.mrb[0].mxu0
      %v6355 = vadd.f32 %v6302, %v6354
      %6356 = vdwg.mxu0
      %6357 = vmatprep.subr.bf16.mxu0 %v5922
      %6358 = vmatpush1.bf16.msra.mxu0 %v5921
      %6359 = vmatprep.subr.bf16.mxu0 %v5924
      %6360 = vmatpush1.bf16.msra.mxu0 %v5923
      %6361 = vmatprep.subr.bf16.mxu0 %v5926
      %6362 = vmatpush1.bf16.msra.mxu0 %v5925
      %6363 = vmatprep.subr.bf16.mxu0 %v5928
      %6364 = vmatpush1.bf16.msra.mxu0 %v5927
      %6365 = vmatprep.subr.bf16.mxu0 %v5930
      %6366 = vmatpush1.bf16.msra.mxu0 %v5929
      %6367 = vmatprep.subr.bf16.mxu0 %v5932
      %6368 = vmatpush1.bf16.msra.mxu0 %v5931
      %6369 = vmatprep.subr.bf16.mxu0 %v5934
      %6370 = vmatpush1.bf16.msra.mxu0 %v5933
      %6371 = vmatprep.subr.bf16.mxu0 %v5936
      %6372 = vmatpush1.bf16.msra.mxu0 %v5935
      %6373 = vmatprep.subr.bf16.mxu0 %v5938
      %6374 = vmatpush1.bf16.msra.mxu0 %v5937
      %6375 = vmatprep.subr.bf16.mxu0 %v5940
      %6376 = vmatpush1.bf16.msra.mxu0 %v5939
      %6377 = vmatprep.subr.bf16.mxu0 %v5942
      %6378 = vmatpush1.bf16.msra.mxu0 %v5941
      %6379 = vmatprep.subr.bf16.mxu0 %v5944
      %6380 = vmatpush1.bf16.msra.mxu0 %v5943
      %6381 = vmatprep.subr.bf16.mxu0 %v5946
      %6382 = vmatpush1.bf16.msra.mxu0 %v5945
      %6383 = vmatprep.subr.bf16.mxu0 %v5948
      %6384 = vmatpush1.bf16.msra.mxu0 %v5947
      %6385 = vmatprep.subr.bf16.mxu0 %v5950
      %6386 = vmatpush1.bf16.msra.mxu0 %v5949
      %6387 = vmatprep.subr.bf16.mxu0 %v5952
      %6388 = vmatpush1.bf16.msra.mxu0 %v5951
      %6389 = vmatprep.mubr.bf16.mxu0 %v6098
      %6390 = vmatmul.mubr.bf16.gmra.mrb[0].mxu0 %v6097
      %v6391 = vpop.f32.mrb[0].mxu0
      %v6392 = vadd.f32 %v6339, %v6391
      %v6393 = vpop.f32.mrb[0].mxu0
      %v6394 = vadd.f32 %v6341, %v6393
      %v6395 = vpop.f32.mrb[0].mxu0
      %v6396 = vadd.f32 %v6343, %v6395
      %v6397 = vpop.f32.mrb[0].mxu0
      %v6398 = vadd.f32 %v6345, %v6397
      %6399 = vmatprep.mubr.bf16.mxu0 %v6111
      %6400 = vmatmul.mubr.bf16.gmra.mrb[0].mxu0 %v6110
      %v6401 = vpop.f32.mrb[0].mxu0
      %v6402 = vadd.f32 %v6349, %v6401
      %v6403 = vpop.f32.mrb[0].mxu0
      %v6404 = vadd.f32 %v6351, %v6403
      %v6405 = vpop.f32.mrb[0].mxu0
      %v6406 = vadd.f32 %v6353, %v6405
      %v6407 = vpop.f32.mrb[0].mxu0
      %v6408 = vadd.f32 %v6355, %v6407
      %6409 = vdwg.mxu0
      %6410 = vmatprep.subr.bf16.mxu0 %v5954
      %6411 = vmatpush1.bf16.msra.mxu0 %v5953
      %6412 = vmatprep.subr.bf16.mxu0 %v5956
      %6413 = vmatpush1.bf16.msra.mxu0 %v5955
      %6414 = vmatprep.subr.bf16.mxu0 %v5958
      %6415 = vmatpush1.bf16.msra.mxu0 %v5957
      %6416 = vmatprep.subr.bf16.mxu0 %v5960
      %6417 = vmatpush1.bf16.msra.mxu0 %v5959
      %6418 = vmatprep.subr.bf16.mxu0 %v5962
      %6419 = vmatpush1.bf16.msra.mxu0 %v5961
      %6420 = vmatprep.subr.bf16.mxu0 %v5964
      %6421 = vmatpush1.bf16.msra.mxu0 %v5963
      %6422 = vmatprep.subr.bf16.mxu0 %v5966
      %6423 = vmatpush1.bf16.msra.mxu0 %v5965
      %6424 = vmatprep.subr.bf16.mxu0 %v5968
      %6425 = vmatpush1.bf16.msra.mxu0 %v5967
      %6426 = vmatprep.subr.bf16.mxu0 %v5970
      %6427 = vmatpush1.bf16.msra.mxu0 %v5969
      %6428 = vmatprep.subr.bf16.mxu0 %v5972
      %6429 = vmatpush1.bf16.msra.mxu0 %v5971
      %6430 = vmatprep.subr.bf16.mxu0 %v5974
      %6431 = vmatpush1.bf16.msra.mxu0 %v5973
      %6432 = vmatprep.subr.bf16.mxu0 %v5976
      %6433 = vmatpush1.bf16.msra.mxu0 %v5975
      %6434 = vmatprep.subr.bf16.mxu0 %v5978
      %6435 = vmatpush1.bf16.msra.mxu0 %v5977
      %6436 = vmatprep.subr.bf16.mxu0 %v5980
      %6437 = vmatpush1.bf16.msra.mxu0 %v5979
      %6438 = vmatprep.subr.bf16.mxu0 %v5982
      %6439 = vmatpush1.bf16.msra.mxu0 %v5981
      %6440 = vmatprep.subr.bf16.mxu0 %v5984
      %6441 = vmatpush1.bf16.msra.mxu0 %v5983
      %6442 = vmatprep.mubr.bf16.mxu0 %v6100
      %6443 = vmatmul.mubr.bf16.gmra.mrb[0].mxu0 %v6099
      %v6444 = vpop.f32.mrb[0].mxu0
      %v6445 = vadd.f32 %v6392, %v6444
      %v6446 = vpop.f32.mrb[0].mxu0
      %v6447 = vadd.f32 %v6394, %v6446
      %v6448 = vpop.f32.mrb[0].mxu0
      %v6449 = vadd.f32 %v6396, %v6448
      %v6450 = vpop.f32.mrb[0].mxu0
      %v6451 = vadd.f32 %v6398, %v6450
      %6452 = vmatprep.mubr.bf16.mxu0 %v6113
      %6453 = vmatmul.mubr.bf16.gmra.mrb[0].mxu0 %v6112
      %v6454 = vpop.f32.mrb[0].mxu0
      %v6455 = vadd.f32 %v6402, %v6454
      %v6456 = vpop.f32.mrb[0].mxu0
      %v6457 = vadd.f32 %v6404, %v6456
      %v6458 = vpop.f32.mrb[0].mxu0
      %v6459 = vadd.f32 %v6406, %v6458
      %v6460 = vpop.f32.mrb[0].mxu0
      %v6461 = vadd.f32 %v6408, %v6460
      %6462 = vdwg.mxu0
      %6463 = vmatprep.subr.bf16.mxu0 %v5986
      %6464 = vmatpush1.bf16.msra.mxu0 %v5985
      %6465 = vmatprep.subr.bf16.mxu0 %v5988
      %6466 = vmatpush1.bf16.msra.mxu0 %v5987
      %6467 = vmatprep.subr.bf16.mxu0 0
      %6468 = vmatpush1.bf16.msra.mxu0 0
      %6469 = vmatprep.subr.bf16.mxu0 0
      %6470 = vmatpush1.bf16.msra.mxu0 0
      %6471 = vmatprep.subr.bf16.mxu0 0
      %6472 = vmatpush1.bf16.msra.mxu0 0
      %6473 = vmatprep.subr.bf16.mxu0 0
      %6474 = vmatpush1.bf16.msra.mxu0 0
      %6475 = vmatprep.subr.bf16.mxu0 0
      %6476 = vmatpush1.bf16.msra.mxu0 0
      %6477 = vmatprep.subr.bf16.mxu0 0
      %6478 = vmatpush1.bf16.msra.mxu0 0
      %6479 = vmatprep.subr.bf16.mxu0 0
      %6480 = vmatpush1.bf16.msra.mxu0 0
      %6481 = vmatprep.subr.bf16.mxu0 0
      %6482 = vmatpush1.bf16.msra.mxu0 0
      %6483 = vmatprep.subr.bf16.mxu0 0
      %6484 = vmatpush1.bf16.msra.mxu0 0
      %6485 = vmatprep.subr.bf16.mxu0 0
      %6486 = vmatpush1.bf16.msra.mxu0 0
      %6487 = vmatprep.subr.bf16.mxu0 0
      %6488 = vmatpush1.bf16.msra.mxu0 0
      %6489 = vmatprep.subr.bf16.mxu0 0
      %6490 = vmatpush1.bf16.msra.mxu0 0
      %6491 = vmatprep.subr.bf16.mxu0 0
      %6492 = vmatpush1.bf16.msra.mxu0 0
      %6493 = vmatprep.subr.bf16.mxu0 0
      %6494 = vmatpush1.bf16.msra.mxu0 0
      %6495 = vmatprep.mubr.bf16.mxu0 0
      %6496 = vmatmul.mubr.bf16.gmra.mrb[0].mxu0 %v6140
      %v6497 = vpop.f32.mrb[0].mxu0
      %v6498 = vadd.f32 %v6445, %v6497
      %v6499 = vpop.f32.mrb[0].mxu0
      %v6500 = vadd.f32 %v6447, %v6499
      %v6501 = vpop.f32.mrb[0].mxu0
      %v6502 = vadd.f32 %v6449, %v6501
      %v6503 = vpop.f32.mrb[0].mxu0
      %v6504 = vadd.f32 %v6451, %v6503
      %6505 = vmatprep.mubr.bf16.mxu0 0
      %6506 = vmatmul.mubr.bf16.gmra.mrb[0].mxu0 %v6143
      %v6507 = vpop.f32.mrb[0].mxu0
      %v6508 = vadd.f32 %v6455, %v6507
      %v6509 = vpop.f32.mrb[0].mxu0
      %v6510 = vadd.f32 %v6457, %v6509
      %v6511 = vpop.f32.mrb[0].mxu0
      %v6512 = vadd.f32 %v6459, %v6511
      %v6513 = vpop.f32.mrb[0].mxu0
      %v6514 = vadd.f32 %v6461, %v6513
      %6515 = vdwg.mxu0
      %s6516 = scalar_lea.vmem [#allocation5], 128
      %6517 = vst [vmem:[%s6516] sm:$0xff] %v6498
      %6518 = vst [vmem:[%s6516 + $0x8] sm:$0xff] %v6500
      %6519 = vst [vmem:[%s6516 + $0x10] sm:$0xff] %v6502
      %6520 = vst [vmem:[%s6516 + $0x18] sm:$0xff] %v6504
      %6521 = vst [vmem:[%s6516 + $0x20] sm:$0xff] %v6508
      %6522 = vst [vmem:[%s6516 + $0x28] sm:$0xff] %v6510
      %6523 = vst [vmem:[%s6516 + $0x30] sm:$0xff] %v6512
      %6524 = vst [vmem:[%s6516 + $0x38] sm:$0xff] %v6514
      %v6525 = vld [vmem:[#allocation5] sm:$0xff]
      %v6526 = vld [vmem:[#allocation5 + $0x8] sm:$0xff]
      %v6527 = vld [vmem:[#allocation5 + $0x10] sm:$0xff]
      %v6528 = vld [vmem:[#allocation5 + $0x18] sm:$0xff]
      %v6529 = vld [vmem:[#allocation5 + $0x20] sm:$0xff]
      %v6530 = vld [vmem:[#allocation5 + $0x28] sm:$0xff]
      %v6531 = vld [vmem:[#allocation5 + $0x30] sm:$0xff]
      %v6532 = vld [vmem:[#allocation5 + $0x38] sm:$0xff]
      %v6533 = vld [vmem:[%s3194] sm:$0xff]
      %v6534 = vld [vmem:[%s3194 + $0x8] sm:$0xff]
      %v6535 = vld [vmem:[%s3194 + $0x10] sm:$0xff]
      %v6536 = vld [vmem:[%s3194 + $0x18] sm:$0xff]
      %v6537 = vld [vmem:[%s3194 + $0x20] sm:$0xff]
      %v6538 = vld [vmem:[%s3194 + $0x28] sm:$0xff]
      %v6539 = vld [vmem:[%s3194 + $0x30] sm:$0xff]
      %v6540 = vld [vmem:[%s3194 + $0x38] sm:$0xff]
      %v6541 = vadd.f32 %v6525, %v6533
      %v6542 = vadd.f32 %v6526, %v6534
      %v6543 = vadd.f32 %v6527, %v6535
      %v6544 = vadd.f32 %v6528, %v6536
      %v6545 = vadd.f32 %v6529, %v6537
      %v6546 = vadd.f32 %v6530, %v6538
      %v6547 = vadd.f32 %v6531, %v6539
      %v6548 = vadd.f32 %v6532, %v6540
      %v6549 = vld [vmem:[%s6516] sm:$0xff]
      %v6550 = vld [vmem:[%s6516 + $0x8] sm:$0xff]
      %v6551 = vld [vmem:[%s6516 + $0x10] sm:$0xff]
      %v6552 = vld [vmem:[%s6516 + $0x18] sm:$0xff]
      %v6553 = vld [vmem:[%s6516 + $0x20] sm:$0xff]
      %v6554 = vld [vmem:[%s6516 + $0x28] sm:$0xff]
      %v6555 = vld [vmem:[%s6516 + $0x30] sm:$0xff]
      %v6556 = vld [vmem:[%s6516 + $0x38] sm:$0xff]
      %v6557 = vadd.f32 %v6541, %v6549
      %v6558 = vadd.f32 %v6542, %v6550
      %v6559 = vadd.f32 %v6543, %v6551
      %v6560 = vadd.f32 %v6544, %v6552
      %v6561 = vadd.f32 %v6545, %v6553
      %v6562 = vadd.f32 %v6546, %v6554
      %v6563 = vadd.f32 %v6547, %v6555
      %v6564 = vadd.f32 %v6548, %v6556
      %v6565 = vadd.f32 %v6557, %v6558
      %6566 = vadd.xlane.f32.xlu0 %v6565
      %v6567 = vpop.xlane.xlu0 %6566
      %v6568 = vadd.f32 %v6559, %v6560
      %6569 = vadd.xlane.f32.xlu0 %v6568
      %v6570 = vpop.xlane.xlu0 %6569
      %v6571 = vadd.f32 %v6561, %v6562
      %6572 = vadd.xlane.f32.xlu0 %v6571
      %v6573 = vpop.xlane.xlu0 %6572
      %v6574 = vadd.f32 %v6563, %v6564
      %6575 = vadd.xlane.f32.xlu0 %v6574
      %v6576 = vpop.xlane.xlu0 %6575
      %v6577 = vrcp.pop 256.0
      %v6578 = vmul.f32 %v6567, %v6577
      %v6579 = vmul.f32 %v6570, %v6577
      %v6580 = vmul.f32 %v6573, %v6577
      %v6581 = vmul.f32 %v6576, %v6577
      %s6582 = smul.u32 %s30, 16
      %s6583 = scalar_lea.vmem %s8, %s6582
      %v6584 = vld [vmem:[%s6583] sm:$0xff]
      %v6585 = vld [vmem:[%s6583 + $0x8] sm:$0xff]
      %s6586 = scalar_lea.vmem %s9, %s6582
      %v6587 = vld [vmem:[%s6586] sm:$0xff]
      %v6588 = vld [vmem:[%s6586 + $0x8] sm:$0xff]
      %v6590 = vsel %vm656, %v6584, 0
      %v6593 = vsel %vm656, %v6585, 0
      %6595 = vmatprep.subr.mxu0 0.0
      %6596 = vmatpush1.msra.mxu0 %v6578
      %6597 = vmatprep.subr.mxu0 0.0
      %6598 = vmatpush1.msra.mxu0 %v6579
      %6599 = vmatprep.subr.mxu0 0.0
      %6600 = vmatpush1.msra.mxu0 %v6580
      %6601 = vmatprep.subr.mxu0 0.0
      %6602 = vmatpush1.msra.mxu0 %v6581
      %6603 = vmatprep.subr.mxu0 0.0
      %6604 = vmatpush1.msra.mxu0 0.0
      %6605 = vmatprep.subr.mxu0 0.0
      %6606 = vmatpush1.msra.mxu0 0.0
      %6607 = vmatprep.subr.mxu0 0.0
      %6608 = vmatpush1.msra.mxu0 0.0
      %6609 = vmatprep.subr.mxu0 0.0
      %6610 = vmatpush1.msra.mxu0 0.0
      %6611 = vmatprep.subr.mxu0 0.0
      %6612 = vmatpush1.msra.mxu0 0.0
      %6613 = vmatprep.subr.mxu0 0.0
      %6614 = vmatpush1.msra.mxu0 0.0
      %6615 = vmatprep.subr.mxu0 0.0
      %6616 = vmatpush1.msra.mxu0 0.0
      %6617 = vmatprep.subr.mxu0 0.0
      %6618 = vmatpush1.msra.mxu0 0.0
      %6619 = vmatprep.subr.mxu0 0.0
      %6620 = vmatpush1.msra.mxu0 0.0
      %6621 = vmatprep.subr.mxu0 0.0
      %6622 = vmatpush1.msra.mxu0 0.0
      %6623 = vmatprep.subr.mxu0 0.0
      %6624 = vmatpush1.msra.mxu0 0.0
      %6625 = vmatprep.subr.mxu0 0.0
      %6626 = vmatpush1.msra.mxu0 0.0
      %6627 = vmatprep.subr.mxu0 0.0
      %6628 = vmatpush1.msra.mxu0 0.0
      %6629 = vmatprep.subr.mxu0 0.0
      %6630 = vmatpush1.msra.mxu0 0.0
      %6631 = vmatprep.subr.mxu0 0.0
      %6632 = vmatpush1.msra.mxu0 0.0
      %6633 = vmatprep.subr.mxu0 0.0
      %6634 = vmatpush1.msra.mxu0 0.0
      %6635 = vmatprep.subr.mxu0 0.0
      %6636 = vmatpush1.msra.mxu0 0.0
      %6637 = vmatprep.subr.mxu0 0.0
      %6638 = vmatpush1.msra.mxu0 0.0
      %6639 = vmatprep.subr.mxu0 0.0
      %6640 = vmatpush1.msra.mxu0 0.0
      %6641 = vmatprep.subr.mxu0 0.0
      %6642 = vmatpush1.msra.mxu0 0.0
      %6643 = vmatprep.subr.mxu0 0.0
      %6644 = vmatpush1.msra.mxu0 0.0
      %6645 = vmatprep.subr.mxu0 0.0
      %6646 = vmatpush1.msra.mxu0 0.0
      %6647 = vmatprep.subr.mxu0 0.0
      %6648 = vmatpush1.msra.mxu0 0.0
      %6649 = vmatprep.subr.mxu0 0.0
      %6650 = vmatpush1.msra.mxu0 0.0
      %6651 = vmatprep.subr.mxu0 0.0
      %6652 = vmatpush1.msra.mxu0 0.0
      %6653 = vmatprep.subr.mxu0 0.0
      %6654 = vmatpush1.msra.mxu0 0.0
      %6655 = vmatprep.subr.mxu0 0.0
      %6656 = vmatpush1.msra.mxu0 0.0
      %6657 = vmatprep.subr.mxu0 0.0
      %6658 = vmatpush1.msra.mxu0 0.0
      %6659 = vmatprep.mubr.f32.mxu0 0.0
      %6660 = vmatmul.mubr.f32.gmra.mrb[0].mxu0 %v6590
      %v6661 = vpop.f32.mrb[0].mxu0
      %v6662 = vadd.f32 %v6587, %v6661
      %v6663 = vpop.f32.mrb[0].mxu0
      %6664 = vmatprep.mubr.f32.mxu0 0.0
      %6665 = vmatmul.mubr.f32.gmra.mrb[0].mxu0 %v6593
      %v6666 = vpop.f32.mrb[0].mxu0
      %v6667 = vadd.f32 %v6588, %v6666
      %v6668 = vpop.f32.mrb[0].mxu0
      %6669 = vdwg.mxu0
      %v6670 = vmax.f32 %v6662, 0.0
      %v6671 = vmax.f32 %v6667, 0.0
      %s6672 = scalar_lea.vmem %s10, %s552
      %v6673 = vld [vmem:[%s6672] sm:$0xff]
      %v6674 = vld [vmem:[%s6672 + $0x8] sm:$0xff]
      %v6675 = vld [vmem:[%s6672 + $0x10] sm:$0xff]
      %v6676 = vld [vmem:[%s6672 + $0x18] sm:$0xff]
      %v6677 = vld [vmem:[%s6672 + $0x20] sm:$0xff]
      %v6678 = vld [vmem:[%s6672 + $0x28] sm:$0xff]
      %v6679 = vld [vmem:[%s6672 + $0x30] sm:$0xff]
      %v6680 = vld [vmem:[%s6672 + $0x38] sm:$0xff]
      %v6681 = vld [vmem:[%s6672 + $0x40] sm:$0xff]
      %v6682 = vld [vmem:[%s6672 + $0x48] sm:$0xff]
      %v6683 = vld [vmem:[%s6672 + $0x50] sm:$0xff]
      %v6684 = vld [vmem:[%s6672 + $0x58] sm:$0xff]
      %s6685 = scalar_lea.vmem %s11, %s552
      %v6686 = vld [vmem:[%s6685] sm:$0xff]
      %v6687 = vld [vmem:[%s6685 + $0x8] sm:$0xff]
      %v6688 = vld [vmem:[%s6685 + $0x10] sm:$0xff]
      %v6689 = vld [vmem:[%s6685 + $0x18] sm:$0xff]
      %v6690 = vld [vmem:[%s6685 + $0x20] sm:$0xff]
      %v6691 = vld [vmem:[%s6685 + $0x28] sm:$0xff]
      %v6692 = vld [vmem:[%s6685 + $0x30] sm:$0xff]
      %v6693 = vld [vmem:[%s6685 + $0x38] sm:$0xff]
      %v6694 = vld [vmem:[%s6685 + $0x40] sm:$0xff]
      %v6695 = vld [vmem:[%s6685 + $0x48] sm:$0xff]
      %v6696 = vld [vmem:[%s6685 + $0x50] sm:$0xff]
      %v6697 = vld [vmem:[%s6685 + $0x58] sm:$0xff]
      %vm6698 = vcmask 130048
      %v6700 = vsel %vm6698, %v6673, 0
      %v6703 = vsel %vm6698, %v6674, 0
      %v6706 = vsel %vm6698, %v6675, 0
      %v6709 = vsel %vm6698, %v6676, 0
      %6711 = vmatprep.subr.mxu0 0.0
      %6712 = vmatpush1.msra.mxu0 %v6670
      %6713 = vmatprep.subr.mxu0 0.0
      %6714 = vmatpush1.msra.mxu0 %v6671
      %6715 = vmatprep.subr.mxu0 0.0
      %6716 = vmatpush1.msra.mxu0 0.0
      %6717 = vmatprep.subr.mxu0 0.0
      %6718 = vmatpush1.msra.mxu0 0.0
      %6719 = vmatprep.subr.mxu0 0.0
      %6720 = vmatpush1.msra.mxu0 0.0
      %6721 = vmatprep.subr.mxu0 0.0
      %6722 = vmatpush1.msra.mxu0 0.0
      %6723 = vmatprep.subr.mxu0 0.0
      %6724 = vmatpush1.msra.mxu0 0.0
      %6725 = vmatprep.subr.mxu0 0.0
      %6726 = vmatpush1.msra.mxu0 0.0
      %6727 = vmatprep.subr.mxu0 0.0
      %6728 = vmatpush1.msra.mxu0 0.0
      %6729 = vmatprep.subr.mxu0 0.0
      %6730 = vmatpush1.msra.mxu0 0.0
      %6731 = vmatprep.subr.mxu0 0.0
      %6732 = vmatpush1.msra.mxu0 0.0
      %6733 = vmatprep.subr.mxu0 0.0
      %6734 = vmatpush1.msra.mxu0 0.0
      %6735 = vmatprep.subr.mxu0 0.0
      %6736 = vmatpush1.msra.mxu0 0.0
      %6737 = vmatprep.subr.mxu0 0.0
      %6738 = vmatpush1.msra.mxu0 0.0
      %6739 = vmatprep.subr.mxu0 0.0
      %6740 = vmatpush1.msra.mxu0 0.0
      %6741 = vmatprep.subr.mxu0 0.0
      %6742 = vmatpush1.msra.mxu0 0.0
      %6743 = vmatprep.subr.mxu0 0.0
      %6744 = vmatpush1.msra.mxu0 0.0
      %6745 = vmatprep.subr.mxu0 0.0
      %6746 = vmatpush1.msra.mxu0 0.0
      %6747 = vmatprep.subr.mxu0 0.0
      %6748 = vmatpush1.msra.mxu0 0.0
      %6749 = vmatprep.subr.mxu0 0.0
      %6750 = vmatpush1.msra.mxu0 0.0
      %6751 = vmatprep.subr.mxu0 0.0
      %6752 = vmatpush1.msra.mxu0 0.0
      %6753 = vmatprep.subr.mxu0 0.0
      %6754 = vmatpush1.msra.mxu0 0.0
      %6755 = vmatprep.subr.mxu0 0.0
      %6756 = vmatpush1.msra.mxu0 0.0
      %6757 = vmatprep.subr.mxu0 0.0
      %6758 = vmatpush1.msra.mxu0 0.0
      %6759 = vmatprep.subr.mxu0 0.0
      %6760 = vmatpush1.msra.mxu0 0.0
      %6761 = vmatprep.subr.mxu0 0.0
      %6762 = vmatpush1.msra.mxu0 0.0
      %6763 = vmatprep.subr.mxu0 0.0
      %6764 = vmatpush1.msra.mxu0 0.0
      %6765 = vmatprep.subr.mxu0 0.0
      %6766 = vmatpush1.msra.mxu0 0.0
      %6767 = vmatprep.subr.mxu0 0.0
      %6768 = vmatpush1.msra.mxu0 0.0
      %6769 = vmatprep.subr.mxu0 0.0
      %6770 = vmatpush1.msra.mxu0 0.0
      %6771 = vmatprep.subr.mxu0 0.0
      %6772 = vmatpush1.msra.mxu0 0.0
      %6773 = vmatprep.subr.mxu0 0.0
      %6774 = vmatpush1.msra.mxu0 0.0
      %6775 = vmatprep.mubr.f32.mxu0 0.0
      %6776 = vmatmul.mubr.f32.gmra.mrb[0].mxu0 %v6700
      %v6777 = vpop.f32.mrb[0].mxu0
      %v6778 = vadd.f32 %v6686, %v6777
      %v6779 = vpop.f32.mrb[0].mxu0
      %6780 = vmatprep.mubr.f32.mxu0 0.0
      %6781 = vmatmul.mubr.f32.gmra.mrb[0].mxu0 %v6703
      %v6782 = vpop.f32.mrb[0].mxu0
      %v6783 = vadd.f32 %v6687, %v6782
      %v6784 = vpop.f32.mrb[0].mxu0
      %6785 = vmatprep.mubr.f32.mxu0 0.0
      %6786 = vmatmul.mubr.f32.gmra.mrb[0].mxu0 %v6706
      %v6787 = vpop.f32.mrb[0].mxu0
      %v6788 = vadd.f32 %v6688, %v6787
      %v6789 = vpop.f32.mrb[0].mxu0
      %6790 = vmatprep.mubr.f32.mxu0 0.0
      %6791 = vmatmul.mubr.f32.gmra.mrb[0].mxu0 %v6709
      %v6792 = vpop.f32.mrb[0].mxu0
      %v6793 = vadd.f32 %v6689, %v6792
      %v6794 = vpop.f32.mrb[0].mxu0
      %6795 = vdwg.mxu0
      %vm6796 = vcmask 7168
      %v6797 = vsel %vm6796, %v6778, -inf
      %v6798 = vsel %vm6796, %v6783, -inf
      %v6799 = vsel %vm6796, %v6788, -inf
      %v6800 = vsel %vm6796, %v6793, -inf
      %v6801 = vmax.f32 %v6797, %v6798
      %v6802 = vmax.f32 %v6799, %v6800
      %v6803 = vmax.f32 %v6801, %v6802
      %v6804 = vrot.slane %v6803, 4
      %v6805 = vmax.f32 %v6803, %v6804
      %v6806 = vrot.slane %v6805, 2
      %v6807 = vmax.f32 %v6805, %v6806
      %v6808 = vrot.slane %v6807, 1
      %v6809 = vmax.f32 %v6807, %v6808
      %v6810 = vsub.f32 %v6778, %v6809
      %v6811 = vsub.f32 %v6783, %v6809
      %v6812 = vsub.f32 %v6788, %v6809
      %v6813 = vsub.f32 %v6793, %v6809
      %v6814 = vmul.f32 %v6810, 1.442695
      %v6815 = vpow.pop %v6814
      %v6816 = vmul.f32 %v6811, 1.442695
      %v6817 = vpow.pop %v6816
      %v6818 = vmul.f32 %v6812, 1.442695
      %v6819 = vpow.pop %v6818
      %v6820 = vmul.f32 %v6813, 1.442695
      %v6821 = vpow.pop %v6820
      %v6822 = vsel %vm6796, %v6815, 0.0
      %v6823 = vsel %vm6796, %v6817, 0.0
      %v6824 = vadd.f32 %v6822, %v6823
      %v6825 = vsel %vm6796, %v6819, 0.0
      %v6826 = vadd.f32 %v6824, %v6825
      %v6827 = vsel %vm6796, %v6821, 0.0
      %v6828 = vadd.f32 %v6826, %v6827
      %v6829 = vrot.slane %v6828, 4
      %v6830 = vadd.f32 %v6828, %v6829
      %v6831 = vrot.slane %v6830, 2
      %v6832 = vadd.f32 %v6830, %v6831
      %v6833 = vrot.slane %v6832, 1
      %v6834 = vadd.f32 %v6832, %v6833
      %v6835 = vrcp.pop %v6834
      %v6836 = vmul.f32 %v6815, %v6835
      %v6837 = vmul.f32 %v6817, %v6835
      %v6838 = vmul.f32 %v6819, %v6835
      %v6839 = vmul.f32 %v6821, %v6835
      %6841 = vset.pattern.permute.xlu0 0
      %6842 = vperm.xlu0 %6841, %v6836
      %v6843 = vpop.permute.xlu0 %6842
      %6846 = vset.pattern.permute.xlu0 0
      %6847 = vperm.xlu0 %6846, %v6837
      %v6848 = vpop.permute.xlu0 %6847
      %6851 = vset.pattern.permute.xlu0 0
      %6852 = vperm.xlu0 %6851, %v6838
      %v6853 = vpop.permute.xlu0 %6852
      %6856 = vset.pattern.permute.xlu0 0
      %6857 = vperm.xlu0 %6856, %v6839
      %v6858 = vpop.permute.xlu0 %6857
      %v6860 = vmul.f32 %v6843, %v6525
      %v6861 = vmul.f32 %v6843, %v6526
      %v6862 = vmul.f32 %v6848, %v6527
      %v6863 = vmul.f32 %v6848, %v6528
      %v6864 = vmul.f32 %v6853, %v6529
      %v6865 = vmul.f32 %v6853, %v6530
      %v6866 = vmul.f32 %v6858, %v6531
      %v6867 = vmul.f32 %v6858, %v6532
      %v6869 = vsel %vm6698, %v6677, 0
      %v6872 = vsel %vm6698, %v6678, 0
      %v6875 = vsel %vm6698, %v6679, 0
      %v6878 = vsel %vm6698, %v6680, 0
      %6880 = vmatprep.subr.mxu0 0.0
      %6881 = vmatpush1.msra.mxu0 %v6670
      %6882 = vmatprep.subr.mxu0 0.0
      %6883 = vmatpush1.msra.mxu0 %v6671
      %6884 = vmatprep.subr.mxu0 0.0
      %6885 = vmatpush1.msra.mxu0 0.0
      %6886 = vmatprep.subr.mxu0 0.0
      %6887 = vmatpush1.msra.mxu0 0.0
      %6888 = vmatprep.subr.mxu0 0.0
      %6889 = vmatpush1.msra.mxu0 0.0
      %6890 = vmatprep.subr.mxu0 0.0
      %6891 = vmatpush1.msra.mxu0 0.0
      %6892 = vmatprep.subr.mxu0 0.0
      %6893 = vmatpush1.msra.mxu0 0.0
      %6894 = vmatprep.subr.mxu0 0.0
      %6895 = vmatpush1.msra.mxu0 0.0
      %6896 = vmatprep.subr.mxu0 0.0
      %6897 = vmatpush1.msra.mxu0 0.0
      %6898 = vmatprep.subr.mxu0 0.0
      %6899 = vmatpush1.msra.mxu0 0.0
      %6900 = vmatprep.subr.mxu0 0.0
      %6901 = vmatpush1.msra.mxu0 0.0
      %6902 = vmatprep.subr.mxu0 0.0
      %6903 = vmatpush1.msra.mxu0 0.0
      %6904 = vmatprep.subr.mxu0 0.0
      %6905 = vmatpush1.msra.mxu0 0.0
      %6906 = vmatprep.subr.mxu0 0.0
      %6907 = vmatpush1.msra.mxu0 0.0
      %6908 = vmatprep.subr.mxu0 0.0
      %6909 = vmatpush1.msra.mxu0 0.0
      %6910 = vmatprep.subr.mxu0 0.0
      %6911 = vmatpush1.msra.mxu0 0.0
      %6912 = vmatprep.subr.mxu0 0.0
      %6913 = vmatpush1.msra.mxu0 0.0
      %6914 = vmatprep.subr.mxu0 0.0
      %6915 = vmatpush1.msra.mxu0 0.0
      %6916 = vmatprep.subr.mxu0 0.0
      %6917 = vmatpush1.msra.mxu0 0.0
      %6918 = vmatprep.subr.mxu0 0.0
      %6919 = vmatpush1.msra.mxu0 0.0
      %6920 = vmatprep.subr.mxu0 0.0
      %6921 = vmatpush1.msra.mxu0 0.0
      %6922 = vmatprep.subr.mxu0 0.0
      %6923 = vmatpush1.msra.mxu0 0.0
      %6924 = vmatprep.subr.mxu0 0.0
      %6925 = vmatpush1.msra.mxu0 0.0
      %6926 = vmatprep.subr.mxu0 0.0
      %6927 = vmatpush1.msra.mxu0 0.0
      %6928 = vmatprep.subr.mxu0 0.0
      %6929 = vmatpush1.msra.mxu0 0.0
      %6930 = vmatprep.subr.mxu0 0.0
      %6931 = vmatpush1.msra.mxu0 0.0
      %6932 = vmatprep.subr.mxu0 0.0
      %6933 = vmatpush1.msra.mxu0 0.0
      %6934 = vmatprep.subr.mxu0 0.0
      %6935 = vmatpush1.msra.mxu0 0.0
      %6936 = vmatprep.subr.mxu0 0.0
      %6937 = vmatpush1.msra.mxu0 0.0
      %6938 = vmatprep.subr.mxu0 0.0
      %6939 = vmatpush1.msra.mxu0 0.0
      %6940 = vmatprep.subr.mxu0 0.0
      %6941 = vmatpush1.msra.mxu0 0.0
      %6942 = vmatprep.subr.mxu0 0.0
      %6943 = vmatpush1.msra.mxu0 0.0
      %6944 = vmatprep.mubr.f32.mxu0 0.0
      %6945 = vmatmul.mubr.f32.gmra.mrb[0].mxu0 %v6869
      %v6946 = vpop.f32.mrb[0].mxu0
      %v6947 = vadd.f32 %v6690, %v6946
      %v6948 = vpop.f32.mrb[0].mxu0
      %6949 = vmatprep.mubr.f32.mxu0 0.0
      %6950 = vmatmul.mubr.f32.gmra.mrb[0].mxu0 %v6872
      %v6951 = vpop.f32.mrb[0].mxu0
      %v6952 = vadd.f32 %v6691, %v6951
      %v6953 = vpop.f32.mrb[0].mxu0
      %6954 = vmatprep.mubr.f32.mxu0 0.0
      %6955 = vmatmul.mubr.f32.gmra.mrb[0].mxu0 %v6875
      %v6956 = vpop.f32.mrb[0].mxu0
      %v6957 = vadd.f32 %v6692, %v6956
      %v6958 = vpop.f32.mrb[0].mxu0
      %6959 = vmatprep.mubr.f32.mxu0 0.0
      %6960 = vmatmul.mubr.f32.gmra.mrb[0].mxu0 %v6878
      %v6961 = vpop.f32.mrb[0].mxu0
      %v6962 = vadd.f32 %v6693, %v6961
      %v6963 = vpop.f32.mrb[0].mxu0
      %6964 = vdwg.mxu0
      %v6965 = vsel %vm6796, %v6947, -inf
      %v6966 = vsel %vm6796, %v6952, -inf
      %v6967 = vsel %vm6796, %v6957, -inf
      %v6968 = vsel %vm6796, %v6962, -inf
      %v6969 = vmax.f32 %v6965, %v6966
      %v6970 = vmax.f32 %v6967, %v6968
      %v6971 = vmax.f32 %v6969, %v6970
      %v6972 = vrot.slane %v6971, 4
      %v6973 = vmax.f32 %v6971, %v6972
      %v6974 = vrot.slane %v6973, 2
      %v6975 = vmax.f32 %v6973, %v6974
      %v6976 = vrot.slane %v6975, 1
      %v6977 = vmax.f32 %v6975, %v6976
      %v6978 = vsub.f32 %v6947, %v6977
      %v6979 = vsub.f32 %v6952, %v6977
      %v6980 = vsub.f32 %v6957, %v6977
      %v6981 = vsub.f32 %v6962, %v6977
      %v6982 = vmul.f32 %v6978, 1.442695
      %v6983 = vpow.pop %v6982
      %v6984 = vmul.f32 %v6979, 1.442695
      %v6985 = vpow.pop %v6984
      %v6986 = vmul.f32 %v6980, 1.442695
      %v6987 = vpow.pop %v6986
      %v6988 = vmul.f32 %v6981, 1.442695
      %v6989 = vpow.pop %v6988
      %v6990 = vsel %vm6796, %v6983, 0.0
      %v6991 = vsel %vm6796, %v6985, 0.0
      %v6992 = vadd.f32 %v6990, %v6991
      %v6993 = vsel %vm6796, %v6987, 0.0
      %v6994 = vadd.f32 %v6992, %v6993
      %v6995 = vsel %vm6796, %v6989, 0.0
      %v6996 = vadd.f32 %v6994, %v6995
      %v6997 = vrot.slane %v6996, 4
      %v6998 = vadd.f32 %v6996, %v6997
      %v6999 = vrot.slane %v6998, 2
      %v7000 = vadd.f32 %v6998, %v6999
      %v7001 = vrot.slane %v7000, 1
      %v7002 = vadd.f32 %v7000, %v7001
      %v7003 = vrcp.pop %v7002
      %v7004 = vmul.f32 %v6983, %v7003
      %v7005 = vmul.f32 %v6985, %v7003
      %v7006 = vmul.f32 %v6987, %v7003
      %v7007 = vmul.f32 %v6989, %v7003
      %7009 = vset.pattern.permute.xlu0 0
      %7010 = vperm.xlu0 %7009, %v7004
      %v7011 = vpop.permute.xlu0 %7010
      %7014 = vset.pattern.permute.xlu0 0
      %7015 = vperm.xlu0 %7014, %v7005
      %v7016 = vpop.permute.xlu0 %7015
      %7019 = vset.pattern.permute.xlu0 0
      %7020 = vperm.xlu0 %7019, %v7006
      %v7021 = vpop.permute.xlu0 %7020
      %7024 = vset.pattern.permute.xlu0 0
      %7025 = vperm.xlu0 %7024, %v7007
      %v7026 = vpop.permute.xlu0 %7025
      %v7028 = vmul.f32 %v7011, %v6533
      %v7029 = vmul.f32 %v7011, %v6534
      %v7030 = vmul.f32 %v7016, %v6535
      %v7031 = vmul.f32 %v7016, %v6536
      %v7032 = vmul.f32 %v7021, %v6537
      %v7033 = vmul.f32 %v7021, %v6538
      %v7034 = vmul.f32 %v7026, %v6539
      %v7035 = vmul.f32 %v7026, %v6540
      %v7036 = vadd.f32 %v6860, %v7028
      %v7037 = vadd.f32 %v6861, %v7029
      %v7038 = vadd.f32 %v6862, %v7030
      %v7039 = vadd.f32 %v6863, %v7031
      %v7040 = vadd.f32 %v6864, %v7032
      %v7041 = vadd.f32 %v6865, %v7033
      %v7042 = vadd.f32 %v6866, %v7034
      %v7043 = vadd.f32 %v6867, %v7035
      %v7045 = vsel %vm6698, %v6681, 0
      %v7048 = vsel %vm6698, %v6682, 0
      %v7051 = vsel %vm6698, %v6683, 0
      %v7054 = vsel %vm6698, %v6684, 0
      %7056 = vmatprep.subr.mxu0 0.0
      %7057 = vmatpush1.msra.mxu0 %v6670
      %7058 = vmatprep.subr.mxu0 0.0
      %7059 = vmatpush1.msra.mxu0 %v6671
      %7060 = vmatprep.subr.mxu0 0.0
      %7061 = vmatpush1.msra.mxu0 0.0
      %7062 = vmatprep.subr.mxu0 0.0
      %7063 = vmatpush1.msra.mxu0 0.0
      %7064 = vmatprep.subr.mxu0 0.0
      %7065 = vmatpush1.msra.mxu0 0.0
      %7066 = vmatprep.subr.mxu0 0.0
      %7067 = vmatpush1.msra.mxu0 0.0
      %7068 = vmatprep.subr.mxu0 0.0
      %7069 = vmatpush1.msra.mxu0 0.0
      %7070 = vmatprep.subr.mxu0 0.0
      %7071 = vmatpush1.msra.mxu0 0.0
      %7072 = vmatprep.subr.mxu0 0.0
      %7073 = vmatpush1.msra.mxu0 0.0
      %7074 = vmatprep.subr.mxu0 0.0
      %7075 = vmatpush1.msra.mxu0 0.0
      %7076 = vmatprep.subr.mxu0 0.0
      %7077 = vmatpush1.msra.mxu0 0.0
      %7078 = vmatprep.subr.mxu0 0.0
      %7079 = vmatpush1.msra.mxu0 0.0
      %7080 = vmatprep.subr.mxu0 0.0
      %7081 = vmatpush1.msra.mxu0 0.0
      %7082 = vmatprep.subr.mxu0 0.0
      %7083 = vmatpush1.msra.mxu0 0.0
      %7084 = vmatprep.subr.mxu0 0.0
      %7085 = vmatpush1.msra.mxu0 0.0
      %7086 = vmatprep.subr.mxu0 0.0
      %7087 = vmatpush1.msra.mxu0 0.0
      %7088 = vmatprep.subr.mxu0 0.0
      %7089 = vmatpush1.msra.mxu0 0.0
      %7090 = vmatprep.subr.mxu0 0.0
      %7091 = vmatpush1.msra.mxu0 0.0
      %7092 = vmatprep.subr.mxu0 0.0
      %7093 = vmatpush1.msra.mxu0 0.0
      %7094 = vmatprep.subr.mxu0 0.0
      %7095 = vmatpush1.msra.mxu0 0.0
      %7096 = vmatprep.subr.mxu0 0.0
      %7097 = vmatpush1.msra.mxu0 0.0
      %7098 = vmatprep.subr.mxu0 0.0
      %7099 = vmatpush1.msra.mxu0 0.0
      %7100 = vmatprep.subr.mxu0 0.0
      %7101 = vmatpush1.msra.mxu0 0.0
      %7102 = vmatprep.subr.mxu0 0.0
      %7103 = vmatpush1.msra.mxu0 0.0
      %7104 = vmatprep.subr.mxu0 0.0
      %7105 = vmatpush1.msra.mxu0 0.0
      %7106 = vmatprep.subr.mxu0 0.0
      %7107 = vmatpush1.msra.mxu0 0.0
      %7108 = vmatprep.subr.mxu0 0.0
      %7109 = vmatpush1.msra.mxu0 0.0
      %7110 = vmatprep.subr.mxu0 0.0
      %7111 = vmatpush1.msra.mxu0 0.0
      %7112 = vmatprep.subr.mxu0 0.0
      %7113 = vmatpush1.msra.mxu0 0.0
      %7114 = vmatprep.subr.mxu0 0.0
      %7115 = vmatpush1.msra.mxu0 0.0
      %7116 = vmatprep.subr.mxu0 0.0
      %7117 = vmatpush1.msra.mxu0 0.0
      %7118 = vmatprep.subr.mxu0 0.0
      %7119 = vmatpush1.msra.mxu0 0.0
      %7120 = vmatprep.mubr.f32.mxu0 0.0
      %7121 = vmatmul.mubr.f32.gmra.mrb[0].mxu0 %v7045
      %v7122 = vpop.f32.mrb[0].mxu0
      %v7123 = vadd.f32 %v6694, %v7122
      %v7124 = vpop.f32.mrb[0].mxu0
      %7125 = vmatprep.mubr.f32.mxu0 0.0
      %7126 = vmatmul.mubr.f32.gmra.mrb[0].mxu0 %v7048
      %v7127 = vpop.f32.mrb[0].mxu0
      %v7128 = vadd.f32 %v6695, %v7127
      %v7129 = vpop.f32.mrb[0].mxu0
      %7130 = vmatprep.mubr.f32.mxu0 0.0
      %7131 = vmatmul.mubr.f32.gmra.mrb[0].mxu0 %v7051
      %v7132 = vpop.f32.mrb[0].mxu0
      %v7133 = vadd.f32 %v6696, %v7132
      %v7134 = vpop.f32.mrb[0].mxu0
      %7135 = vmatprep.mubr.f32.mxu0 0.0
      %7136 = vmatmul.mubr.f32.gmra.mrb[0].mxu0 %v7054
      %v7137 = vpop.f32.mrb[0].mxu0
      %v7138 = vadd.f32 %v6697, %v7137
      %v7139 = vpop.f32.mrb[0].mxu0
      %7140 = vdwg.mxu0
      %v7141 = vsel %vm6796, %v7123, -inf
      %v7142 = vsel %vm6796, %v7128, -inf
      %v7143 = vsel %vm6796, %v7133, -inf
      %v7144 = vsel %vm6796, %v7138, -inf
      %v7145 = vmax.f32 %v7141, %v7142
      %v7146 = vmax.f32 %v7143, %v7144
      %v7147 = vmax.f32 %v7145, %v7146
      %v7148 = vrot.slane %v7147, 4
      %v7149 = vmax.f32 %v7147, %v7148
      %v7150 = vrot.slane %v7149, 2
      %v7151 = vmax.f32 %v7149, %v7150
      %v7152 = vrot.slane %v7151, 1
      %v7153 = vmax.f32 %v7151, %v7152
      %v7154 = vsub.f32 %v7123, %v7153
      %v7155 = vsub.f32 %v7128, %v7153
      %v7156 = vsub.f32 %v7133, %v7153
      %v7157 = vsub.f32 %v7138, %v7153
      %v7158 = vmul.f32 %v7154, 1.442695
      %v7159 = vpow.pop %v7158
      %v7160 = vmul.f32 %v7155, 1.442695
      %v7161 = vpow.pop %v7160
      %v7162 = vmul.f32 %v7156, 1.442695
      %v7163 = vpow.pop %v7162
      %v7164 = vmul.f32 %v7157, 1.442695
      %v7165 = vpow.pop %v7164
      %v7166 = vsel %vm6796, %v7159, 0.0
      %v7167 = vsel %vm6796, %v7161, 0.0
      %v7168 = vadd.f32 %v7166, %v7167
      %v7169 = vsel %vm6796, %v7163, 0.0
      %v7170 = vadd.f32 %v7168, %v7169
      %v7171 = vsel %vm6796, %v7165, 0.0
      %v7172 = vadd.f32 %v7170, %v7171
      %v7173 = vrot.slane %v7172, 4
      %v7174 = vadd.f32 %v7172, %v7173
      %v7175 = vrot.slane %v7174, 2
      %v7176 = vadd.f32 %v7174, %v7175
      %v7177 = vrot.slane %v7176, 1
      %v7178 = vadd.f32 %v7176, %v7177
      %v7179 = vrcp.pop %v7178
      %v7180 = vmul.f32 %v7159, %v7179
      %v7181 = vmul.f32 %v7161, %v7179
      %v7182 = vmul.f32 %v7163, %v7179
      %v7183 = vmul.f32 %v7165, %v7179
      %7185 = vset.pattern.permute.xlu0 0
      %7186 = vperm.xlu0 %7185, %v7180
      %v7187 = vpop.permute.xlu0 %7186
      %7190 = vset.pattern.permute.xlu0 0
      %7191 = vperm.xlu0 %7190, %v7181
      %v7192 = vpop.permute.xlu0 %7191
      %7195 = vset.pattern.permute.xlu0 0
      %7196 = vperm.xlu0 %7195, %v7182
      %v7197 = vpop.permute.xlu0 %7196
      %7200 = vset.pattern.permute.xlu0 0
      %7201 = vperm.xlu0 %7200, %v7183
      %v7202 = vpop.permute.xlu0 %7201
      %v7204 = vmul.f32 %v7187, %v6549
      %v7205 = vmul.f32 %v7187, %v6550
      %v7206 = vmul.f32 %v7192, %v6551
      %v7207 = vmul.f32 %v7192, %v6552
      %v7208 = vmul.f32 %v7197, %v6553
      %v7209 = vmul.f32 %v7197, %v6554
      %v7210 = vmul.f32 %v7202, %v6555
      %v7211 = vmul.f32 %v7202, %v6556
      %v7212 = vadd.f32 %v7036, %v7204
      %v7213 = vadd.f32 %v7037, %v7205
      %v7214 = vadd.f32 %v7038, %v7206
      %v7215 = vadd.f32 %v7039, %v7207
      %v7216 = vadd.f32 %v7040, %v7208
      %v7217 = vadd.f32 %v7041, %v7209
      %v7218 = vadd.f32 %v7042, %v7210
      %v7219 = vadd.f32 %v7043, %v7211
      %v7220 = vld [vmem:[#allocation2] sm:$0xff]
      %v7221 = vld [vmem:[#allocation2 + $0x8] sm:$0xff]
      %v7222 = vld [vmem:[#allocation2 + $0x10] sm:$0xff]
      %v7223 = vld [vmem:[#allocation2 + $0x18] sm:$0xff]
      %v7224 = vld [vmem:[#allocation2 + $0x20] sm:$0xff]
      %v7225 = vld [vmem:[#allocation2 + $0x28] sm:$0xff]
      %v7226 = vld [vmem:[#allocation2 + $0x30] sm:$0xff]
      %v7227 = vld [vmem:[#allocation2 + $0x38] sm:$0xff]
      %s7228 = smul.u32 %s30, 4
      %s7229 = smul.addr %s7228, 4
      %s7230 = scalar_lea.vmem %s12, %s7229
      %v7231 = vld [vmem:[%s7230] sm:$0xf]
      %v7232 = vld [vmem:[%s7230 + $0x4] sm:$0xf]
      %v7233 = vld [vmem:[%s7230 + $0x8] sm:$0xf]
      %v7234 = vld [vmem:[%s7230 + $0xc] sm:$0xf]
      %v7235 = vpack.c.bf16 %v7214, %v7212
      %v7236 = vpack.c.bf16 %v7215, %v7213
      %v7237 = vpack.c.bf16 %v7218, %v7216
      %v7238 = vpack.c.bf16 %v7219, %v7217
      %v7243 = vunpack.c.l.b16 %v7231
      %v7244 = vunpack.c.l.b16 %v7232
      %v7245 = vunpack.c.l.b16 %v7233
      %v7246 = vunpack.c.l.b16 %v7234
      %v7247 = vpack.c.b16 %v7244, %v7243
      %v7248 = vpack.c.b16 %v7246, %v7245
      %v7250 = vsel %vm656, %v7247, 0
      %v7253 = vsel %vm656, %v7248, 0
      %7255 = vmatprep.subr.bf16.mxu0 %v7236
      %7256 = vmatpush1.bf16.msra.mxu0 %v7235
      %7257 = vmatprep.subr.bf16.mxu0 %v7238
      %7258 = vmatpush1.bf16.msra.mxu0 %v7237
      %7259 = vmatprep.subr.bf16.mxu0 0
      %7260 = vmatpush1.bf16.msra.mxu0 0
      %7261 = vmatprep.subr.bf16.mxu0 0
      %7262 = vmatpush1.bf16.msra.mxu0 0
      %7263 = vmatprep.subr.bf16.mxu0 0
      %7264 = vmatpush1.bf16.msra.mxu0 0
      %7265 = vmatprep.subr.bf16.mxu0 0
      %7266 = vmatpush1.bf16.msra.mxu0 0
      %7267 = vmatprep.subr.bf16.mxu0 0
      %7268 = vmatpush1.bf16.msra.mxu0 0
      %7269 = vmatprep.subr.bf16.mxu0 0
      %7270 = vmatpush1.bf16.msra.mxu0 0
      %7271 = vmatprep.subr.bf16.mxu0 0
      %7272 = vmatpush1.bf16.msra.mxu0 0
      %7273 = vmatprep.subr.bf16.mxu0 0
      %7274 = vmatpush1.bf16.msra.mxu0 0
      %7275 = vmatprep.subr.bf16.mxu0 0
      %7276 = vmatpush1.bf16.msra.mxu0 0
      %7277 = vmatprep.subr.bf16.mxu0 0
      %7278 = vmatpush1.bf16.msra.mxu0 0
      %7279 = vmatprep.subr.bf16.mxu0 0
      %7280 = vmatpush1.bf16.msra.mxu0 0
      %7281 = vmatprep.subr.bf16.mxu0 0
      %7282 = vmatpush1.bf16.msra.mxu0 0
      %7283 = vmatprep.subr.bf16.mxu0 0
      %7284 = vmatpush1.bf16.msra.mxu0 0
      %7285 = vmatprep.subr.bf16.mxu0 0
      %7286 = vmatpush1.bf16.msra.mxu0 0
      %7287 = vmatprep.mubr.bf16.mxu0 0
      %7288 = vmatmul.mubr.bf16.gmra.mrb[0].mxu0 %v7250
      %v7289 = vpop.f32.mrb[0].mxu0
      %v7290 = vadd.f32 0.0, %v7289
      %v7291 = vpop.f32.mrb[0].mxu0
      %v7292 = vadd.f32 0.0, %v7291
      %v7293 = vpop.f32.mrb[0].mxu0
      %v7294 = vadd.f32 0.0, %v7293
      %v7295 = vpop.f32.mrb[0].mxu0
      %v7296 = vadd.f32 0.0, %v7295
      %7297 = vmatprep.mubr.bf16.mxu0 0
      %7298 = vmatmul.mubr.bf16.gmra.mrb[0].mxu0 %v7253
      %v7299 = vpop.f32.mrb[0].mxu0
      %v7300 = vadd.f32 0.0, %v7299
      %v7301 = vpop.f32.mrb[0].mxu0
      %v7302 = vadd.f32 0.0, %v7301
      %v7303 = vpop.f32.mrb[0].mxu0
      %v7304 = vadd.f32 0.0, %v7303
      %v7305 = vpop.f32.mrb[0].mxu0
      %v7306 = vadd.f32 0.0, %v7305
      %7307 = vdwg.mxu0
      %v7308 = vadd.f32 %v7220, %v7290
      %v7309 = vadd.f32 %v7221, %v7292
      %v7310 = vadd.f32 %v7222, %v7294
      %v7311 = vadd.f32 %v7223, %v7296
      %v7312 = vadd.f32 %v7224, %v7300
      %v7313 = vadd.f32 %v7225, %v7302
      %v7314 = vadd.f32 %v7226, %v7304
      %v7315 = vadd.f32 %v7227, %v7306
      %7316 = vst [vmem:[#allocation2] sm:$0xff] %v7308
      %7317 = vst [vmem:[#allocation2 + $0x8] sm:$0xff] %v7309
      %7318 = vst [vmem:[#allocation2 + $0x10] sm:$0xff] %v7310
      %7319 = vst [vmem:[#allocation2 + $0x18] sm:$0xff] %v7311
      %7320 = vst [vmem:[#allocation2 + $0x20] sm:$0xff] %v7312
      %7321 = vst [vmem:[#allocation2 + $0x28] sm:$0xff] %v7313
      %7322 = vst [vmem:[#allocation2 + $0x30] sm:$0xff] %v7314
      %7323 = vst [vmem:[#allocation2 + $0x38] sm:$0xff] %v7315
      %p7324 = scmp.eq.s32.totalorder %s30, 1
      // Predicated region
      $region81: #{resnest_block.1} parent=75 // pred_check
        %p7325 = pneg %p7324
      $region82: #{resnest_block.1} parent=75 // pred_check_branch
        %7327 = sbr.rel (%p7325) target = $region84
      $region83: #{resnest_block.1} parent=75 // pred_region
        %v7328 = vld [vmem:[#allocation2] sm:$0xff]
        %v7329 = vld [vmem:[#allocation2 + $0x8] sm:$0xff]
        %v7330 = vld [vmem:[#allocation2 + $0x10] sm:$0xff]
        %v7331 = vld [vmem:[#allocation2 + $0x18] sm:$0xff]
        %v7332 = vld [vmem:[#allocation2 + $0x20] sm:$0xff]
        %v7333 = vld [vmem:[#allocation2 + $0x28] sm:$0xff]
        %v7334 = vld [vmem:[#allocation2 + $0x30] sm:$0xff]
        %v7335 = vld [vmem:[#allocation2 + $0x38] sm:$0xff]
        %7336 = vst [vmem:[%s479] sm:$0xff] %v7328
        %7337 = vst [vmem:[%s479 + $0x8] sm:$0xff] %v7329
        %7338 = vst [vmem:[%s479 + $0x10] sm:$0xff] %v7330
        %7339 = vst [vmem:[%s479 + $0x18] sm:$0xff] %v7331
        %7340 = vst [vmem:[%s479 + $0x20] sm:$0xff] %v7332
        %7341 = vst [vmem:[%s479 + $0x28] sm:$0xff] %v7333
        %7342 = vst [vmem:[%s479 + $0x30] sm:$0xff] %v7334
        %7343 = vst [vmem:[%s479 + $0x38] sm:$0xff] %v7335
      $region84: #{resnest_block.1} parent=75 // pred_fallthru
        _
      %p7344 = scmp.lt.s32.totalorder %s29, 1
      %s7345 = scalar_select %p7344, %s29, 1
      %s7346 = smul.addr %s7345, 8
      %s7347 = smul.addr %s7346, 8
      %s7348 = scalar_lea.vmem %s14, %s7347
      // Predicated region
      $region85: #{resnest_block.1} parent=75 // pred_check
        %p7349 = pneg %p354
      $region86: #{resnest_block.1} parent=75 // pred_check_branch
        %7351 = sbr.rel (%p7349) target = $region88
      $region87: #{resnest_block.1} parent=75 // pred_region
        _
      $region88: #{resnest_block.1} parent=75 // pred_fallthru
        _
    $region76: #{resnest_block.1} parent=5 // pred_fallthru
      _
    %p7352 = scmp.le.s32.totalorder 2, %s20
    // Predicated region
    $region89: #{resnest_block.1} parent=5 // pred_check
      %p7353 = pneg %p7352
    $region90: #{resnest_block.1} parent=5 // pred_check_branch
      %7355 = sbr.rel (%p7353) target = $region92
    $region91: #{resnest_block.1} parent=5 // pred_region
      %s7356 = ssub.s32 %s20, 2
      // Predicated region
      $region93: #{resnest_block.1} parent=91 // pred_check
        %p7357 = pneg %p360
      $region94: #{resnest_block.1} parent=91 // pred_check_branch
        %7359 = sbr.rel (%p7357) target = $region96
      $region95: #{resnest_block.1} parent=91 // pred_region
        %p7360 = scmp.lt.s32.totalorder %s31, 1
        %s7361 = scalar_select %p7360, %s31, 1
        %s7362 = smul.addr %s7361, 8
        %s7363 = smul.addr %s7362, 8
        %s7364 = scalar_lea.vmem %s14, %s7363
      $region96: #{resnest_block.1} parent=91 // pred_fallthru
        _
    $region92: #{resnest_block.1} parent=5 // pred_fallthru
      _
  $region6: #{resnest_block.1} parent=0 // loop_footer
    %s24 = sadd.s32 1, %s20
  $region7: #{resnest_block.1} parent=0 // loop_footer_branch
    %19 = sbr.rel target = $region3
  $region8: #{resnest_block.1} parent=0 // loop_exit
    _

</llo_original>
